<compile_context>
chip_gen: v6e
topology: v6e:2x2x1
jax: 0.10.0
libtpu: 0.0.40
codegen_flags: <defaults>
</compile_context>

<pallas_src>
import functools

import jax
import jax.numpy as jnp
from jax import lax
from jax.experimental import pallas as pl
from jax.experimental.pallas import tpu as pltpu

_VMEM_LIMIT_BYTES = 64 * 1024 * 1024


# ---------------------------------------------------------------------------
# Kernels
# ---------------------------------------------------------------------------

def _pointwise_bn_relu_kernel(x_ref, w_ref, scale_ref, bias_ref, o_ref):
    """1x1 conv + folded BN + ReLU on a row tile.

    x_ref: (TR, C_in)  w_ref: (C_in, C_out)  scale/bias: (1, C_out)  o_ref: (TR, C_out)
    """
    x = x_ref[...].astype(jnp.float32)
    y = jnp.dot(x, w_ref[...], preferred_element_type=jnp.float32)
    y = y * scale_ref[...] + bias_ref[...]
    o_ref[...] = jnp.maximum(y, 0.0).astype(o_ref.dtype)


def _conv3x3_bn_relu_kernel(xp_ref, w_ref, scale_ref, bias_ref, o_ref, acc_ref,
                            *, dilation, base):
    """3x3 dilated conv + folded BN + ReLU; one image per grid row, C_in tiled.

    xp_ref: (1, Hp, Wp, TCi)  spatially pre-padded input slab (pad >= dilation)
    w_ref:  (9, TCi, C_out)   taps, [ky*3+kx] == weight[:, :, ky, kx].T
    scale/bias: (1, C_out)    o_ref: (1, H, W, C_out)
    acc_ref: VMEM (H*W, C_out) f32 accumulator across the C_in reduction axis.
    """
    ci = pl.program_id(1)
    _, H, W, C_out = o_ref.shape

    @pl.when(ci == 0)
    def _():
        acc_ref[...] = jnp.zeros_like(acc_ref)

    xp = xp_ref[0].astype(jnp.float32)                 # (Hp, Wp, TCi)
    acc = acc_ref[...]
    for ky in range(3):
        for kx in range(3):
            r0 = base + ky * dilation
            c0 = base + kx * dilation
            patch = xp[r0:r0 + H, c0:c0 + W, :]        # (H, W, TCi)
            # (H, W, TCi) -> (H*W, TCi); layout-preserving when W % 8 == 0.
            patch = patch.reshape(H * W, patch.shape[-1])
            acc = acc + jnp.dot(patch, w_ref[ky * 3 + kx],
                                preferred_element_type=jnp.float32)
    acc_ref[...] = acc

    @pl.when(ci == pl.num_programs(1) - 1)
    def _():
        y = acc_ref[...] * scale_ref[...] + bias_ref[...]
        y = jnp.maximum(y, 0.0)
        o_ref[0] = y.reshape(H, W, C_out).astype(o_ref.dtype)


def _image_pool_kernel(x_ref, w_ref, scale_ref, bias_ref, o_ref, acc_ref, *, inv_hw):
    """_ImagePool head: tiled global average pool + 1x1 conv + BN + ReLU.

    The H*W reduction is tiled on grid axis 1; the per-tile body is a single
    f32 partial sum.  The 1x1 conv / BN / ReLU run exactly once (pl.when-gated
    on the last reduction step).  The bilinear upsample of the resulting 1x1
    map is an exact broadcast and is done by XLA outside (fused into the
    concat) instead of being written from Pallas.

    x_ref: (1, TR, C_in)  w_ref: (C_in, C_out)  scale/bias: (1, C_out)
    o_ref: (1, 1, C_out)  acc_ref: VMEM (1, C_in) f32
    """
    t = pl.program_id(1)

    @pl.when(t == 0)
    def _():
        acc_ref[...] = jnp.zeros_like(acc_ref)

    xt = x_ref[0].astype(jnp.float32)                       # (TR, C_in)
    acc_ref[...] += jnp.sum(xt, axis=0, keepdims=True)      # (1, C_in)

    @pl.when(t == pl.num_programs(1) - 1)
    def _():
        pooled = acc_ref[...] * inv_hw                      # mean, applied once
        h = jnp.dot(pooled, w_ref[...], preferred_element_type=jnp.float32)
        h = h * scale_ref[...] + bias_ref[...]
        o_ref[0] = jnp.maximum(h, 0.0).astype(o_ref.dtype)


# ---------------------------------------------------------------------------
# Tile pickers / param folding
# ---------------------------------------------------------------------------

def _pick_row_tile(rows, target=1024):
    if rows <= target:
        return rows
    for t in (target, 512, 256, 128):
        if rows % t == 0:
            return t
    return rows


def _pick_channel_tile(c):
    for t in (512, 256, 128):
        if c > t and c % t == 0:
            return t
    return c


def _pick_pool_tile(hw):
    for t in (512, 256, 128):
        if hw > t and hw % t == 0:
            return t
    return hw


def _fold_bn(gamma, beta, mean, var, eps):
    scale = (gamma.astype(jnp.float32) / jnp.sqrt(var.astype(jnp.float32) + eps))
    bias = beta.astype(jnp.float32) - mean.astype(jnp.float32) * scale
    return scale.reshape(1, -1), bias.reshape(1, -1)


# ---------------------------------------------------------------------------
# Branch wrappers (each one pallas_call)
# ---------------------------------------------------------------------------

def _conv1x1_bn_relu(x_nhwc, w, scale, bias):
    N, H, W, C_in = x_nhwc.shape
    C_out = w.shape[1]
    rows = N * H * W
    tr = _pick_row_tile(rows)
    assert rows % tr == 0
    x_rows = x_nhwc.reshape(rows, C_in)
    out = pl.pallas_call(
        _pointwise_bn_relu_kernel,
        out_shape=jax.ShapeDtypeStruct((rows, C_out), x_nhwc.dtype),
        grid=(rows // tr,),
        in_specs=[
            pl.BlockSpec((tr, C_in), lambda i: (i, 0)),
            pl.BlockSpec((C_in, C_out), lambda i: (0, 0)),
            pl.BlockSpec((1, C_out), lambda i: (0, 0)),
            pl.BlockSpec((1, C_out), lambda i: (0, 0)),
        ],
        out_specs=pl.BlockSpec((tr, C_out), lambda i: (i, 0)),
        compiler_params=pltpu.CompilerParams(
            dimension_semantics=("parallel",),
            vmem_limit_bytes=_VMEM_LIMIT_BYTES),
    )(x_rows, w, scale, bias)
    return out.reshape(N, H, W, C_out)


def _conv3x3_bn_relu(xp_nhwc, w_taps, scale, bias, *, dilation, pad, out_hw):
    N, Hp, Wp, C_in = xp_nhwc.shape
    H, W = out_hw
    C_out = w_taps.shape[2]
    assert pad >= dilation and Hp == H + 2 * pad and Wp == W + 2 * pad
    tci = _pick_channel_tile(C_in)
    assert C_in % tci == 0
    # TODO(synk): very large H*W would additionally need spatial (halo) tiling;
    # only the C_in reduction axis is tiled here.
    kernel = functools.partial(_conv3x3_bn_relu_kernel,
                               dilation=dilation, base=pad - dilation)
    return pl.pallas_call(
        kernel,
        out_shape=jax.ShapeDtypeStruct((N, H, W, C_out), xp_nhwc.dtype),
        grid=(N, C_in // tci),
        in_specs=[
            pl.BlockSpec((1, Hp, Wp, tci), lambda n, c: (n, 0, 0, c)),
            pl.BlockSpec((9, tci, C_out), lambda n, c: (0, c, 0)),
            pl.BlockSpec((1, C_out), lambda n, c: (0, 0)),
            pl.BlockSpec((1, C_out), lambda n, c: (0, 0)),
        ],
        out_specs=pl.BlockSpec((1, H, W, C_out), lambda n, c: (n, 0, 0, 0)),
        scratch_shapes=[pltpu.VMEM((H * W, C_out), jnp.float32)],
        compiler_params=pltpu.CompilerParams(
            dimension_semantics=("parallel", "arbitrary"),
            vmem_limit_bytes=_VMEM_LIMIT_BYTES),
    )(xp_nhwc, w_taps, scale, bias)


def _image_pool_branch(x_nhwc, w, scale, bias):
    N, H, W, C_in = x_nhwc.shape
    C_out = w.shape[1]
    hw = H * W
    tr = _pick_pool_tile(hw)
    assert hw % tr == 0
    x_rows = x_nhwc.reshape(N, hw, C_in)
    kernel = functools.partial(_image_pool_kernel, inv_hw=1.0 / float(hw))
    out = pl.pallas_call(
        kernel,
        out_shape=jax.ShapeDtypeStruct((N, 1, C_out), x_nhwc.dtype),
        grid=(N, hw // tr),
        in_specs=[
            pl.BlockSpec((1, tr, C_in), lambda n, t: (n, t, 0)),
            pl.BlockSpec((C_in, C_out), lambda n, t: (0, 0)),
            pl.BlockSpec((1, C_out), lambda n, t: (0, 0)),
            pl.BlockSpec((1, C_out), lambda n, t: (0, 0)),
        ],
        out_specs=pl.BlockSpec((1, 1, C_out), lambda n, t: (n, 0, 0)),
        scratch_shapes=[pltpu.VMEM((1, C_in), jnp.float32)],
        compiler_params=pltpu.CompilerParams(
            dimension_semantics=("parallel", "arbitrary"),
            vmem_limit_bytes=_VMEM_LIMIT_BYTES),
    )(x_rows, w, scale, bias)
    return out[:, 0, :]                                    # (N, C_out)


# ---------------------------------------------------------------------------
# Full _ASPP forward
# ---------------------------------------------------------------------------

def aspp_forward(x, stage_params, rates=(1, 3, 6), eps=1e-5):
    """x: (N, C_in, H, W) NCHW.  Returns (N, 4*C_out, H, W).

    stage_params: list of 4 dicts with keys 'w','gamma','beta','mean','var'
    for [1x1, 3x3 rate=rates[0], 3x3 rate=rates[1], image-pool], matching the
    PyTorch ModuleList order.
    """
    # TODO(synk): training-mode BatchNorm (batch statistics + momentum update)
    # is not implemented; inference-mode running-stat BN is folded into scale/bias.
    N, C_in, H, W = x.shape
    C_out = stage_params[0]['w'].shape[0]

    # One channels-last layout pass, reused by all four branches (native dtype,
    # no extra f32 up-cast copy of the activations).
    x_nhwc = jnp.transpose(x, (0, 2, 3, 1))                # (N, H, W, C_in)

    def folded(p):
        return _fold_bn(p['gamma'], p['beta'], p['mean'], p['var'], eps)

    outs = []

    # --- stage 0: 1x1 conv + BN + ReLU ---
    p = stage_params[0]
    w = p['w'].reshape(C_out, C_in).T.astype(jnp.float32)
    s, b = folded(p)
    outs.append(_conv1x1_bn_relu(x_nhwc, w, s, b))

    # --- stages 1, 2: 3x3 dilated conv + BN + ReLU (shared padded slab) ---
    pad = max(int(rates[0]), int(rates[1]))
    xp = jnp.pad(x_nhwc, ((0, 0), (pad, pad), (pad, pad), (0, 0)))
    for idx, rate in ((1, int(rates[0])), (2, int(rates[1]))):
        p = stage_params[idx]
        w_taps = jnp.transpose(p['w'], (2, 3, 1, 0)).reshape(9, C_in, C_out)
        w_taps = w_taps.astype(jnp.float32)
        s, b = folded(p)
        outs.append(_conv3x3_bn_relu(xp, w_taps, s, b,
                                     dilation=rate, pad=pad, out_hw=(H, W)))

    # --- stage 3: image-pool branch ---
    p = stage_params[3]
    w = p['w'].reshape(C_out, C_in).T.astype(jnp.float32)
    s, b = folded(p)
    pooled = _image_pool_branch(x_nhwc, w, s, b)           # (N, C_out)
    # Bilinear upsample of a 1x1 map (align_corners=False) is an exact
    # broadcast; left to XLA so it fuses into the concat (no HBM write pass).
    outs.append(jnp.broadcast_to(pooled[:, None, None, :], (N, H, W, C_out)))

    y = jnp.concatenate(outs, axis=-1)                     # (N, H, W, 4*C_out)
    return jnp.transpose(y, (0, 3, 1, 2))                  # back to NCHW


# ---------------------------------------------------------------------------
# Pure-JAX reference and self-check
# ---------------------------------------------------------------------------

def _aspp_reference(x, stage_params, rates=(1, 3, 6), eps=1e-5):
    def bn_relu(y, p):
        scale = p['gamma'] / jnp.sqrt(p['var'] + eps)
        bias = p['beta'] - p['mean'] * scale
        y = y * scale[None, :, None, None] + bias[None, :, None, None]
        return jnp.maximum(y, 0.0)

    def conv(inp, w, dilation, padding):
        return lax.conv_general_dilated(
            inp, w, window_strides=(1, 1),
            padding=((padding, padding), (padding, padding)),
            rhs_dilation=(dilation, dilation),
            dimension_numbers=('NCHW', 'OIHW', 'NCHW'),
            precision=lax.Precision.HIGHEST)

    N, C_in, H, W = x.shape
    outs = [
        bn_relu(conv(x, stage_params[0]['w'], 1, 0), stage_params[0]),
        bn_relu(conv(x, stage_params[1]['w'], int(rates[0]), int(rates[0])),
                stage_params[1]),
        bn_relu(conv(x, stage_params[2]['w'], int(rates[1]), int(rates[1])),
                stage_params[2]),
    ]
    pooled = jnp.mean(x, axis=(2, 3), keepdims=True)
    h = bn_relu(conv(pooled, stage_params[3]['w'], 1, 0), stage_params[3])
    outs.append(jnp.broadcast_to(h, (N, h.shape[1], H, W)))
    return jnp.concatenate(outs, axis=1)


if __name__ == "__main__":
    key = jax.random.PRNGKey(0)
    N, C_in, C_out, H, W = 2, 4, 8, 16, 16
    rates = (1, 3, 6)

    keys = jax.random.split(key, 21)

    def make_stage(i, ksize):
        kw, kg, kb, km, kv = keys[5 * i:5 * i + 5]
        return dict(
            w=jax.random.normal(kw, (C_out, C_in, ksize, ksize), jnp.float32) * 0.1,
            gamma=jax.random.uniform(kg, (C_out,), jnp.float32, 0.5, 1.5),
            beta=jax.random.normal(kb, (C_out,), jnp.float32) * 0.1,
            mean=jax.random.normal(km, (C_out,), jnp.float32) * 0.1,
            var=jax.random.uniform(kv, (C_out,), jnp.float32, 0.5, 1.5),
        )

    stage_params = [make_stage(0, 1), make_stage(1, 3), make_stage(2, 3),
                    make_stage(3, 1)]
    x = jax.random.normal(keys[20], (N, C_in, H, W), dtype=jnp.float32)

    aspp_jit = jax.jit(lambda xx, sp: aspp_forward(xx, sp, rates=rates))
    y = aspp_jit(x, stage_params)
    y = jax.block_until_ready(y)

    y_ref = _aspp_reference(x, stage_params, rates=rates)
    assert y.shape == (N, 4 * C_out, H, W)
    max_err = float(jnp.max(jnp.abs(y - y_ref)))
    # MXU f32 matmuls may use bf16 passes at default precision; tolerance reflects that.
    assert jnp.allclose(y, y_ref, atol=1e-2, rtol=1e-2), f"max_err={max_err}"

    print("KERNEL_OK")
</pallas_src>

<mosaic_0001>
module attributes {stable_mosaic.version = 11 : i64} {
  func.func @_conv3x3_bn_relu_kernel(%arg0: i32, %arg1: i32, %arg2: memref<1x22x22x4xf32, #tpu.memory_space<vmem>>, %arg3: memref<9x4x8xf32, #tpu.memory_space<vmem>>, %arg4: memref<1x8xf32, #tpu.memory_space<vmem>>, %arg5: memref<1x8xf32, #tpu.memory_space<vmem>>, %arg6: memref<1x16x16x8xf32, #tpu.memory_space<vmem>>, %arg7: memref<256x8xf32, #tpu.memory_space<vmem>>) attributes {dimension_semantics = [#tpu.dimension_semantics<parallel>, #tpu.dimension_semantics<arbitrary>], iteration_bounds = array<i64: 2, 1>, scalar_prefetch = 0 : i64, scratch_operands = 1 : i64, tpu.core_type = #tpu.core_type<tc>, window_params = [{transform_indices = @transform_0, window_bounds = array<i64: 1, 22, 22, 4>}, {transform_indices = @transform_1, window_bounds = array<i64: 9, 4, 8>}, {pipeline_mode = #tpu.pipeline_mode<synchronous>, transform_indices = @transform_2, window_bounds = array<i64: 1, 8>}, {pipeline_mode = #tpu.pipeline_mode<synchronous>, transform_indices = @transform_3, window_bounds = array<i64: 1, 8>}, {transform_indices = @transform_4, window_bounds = array<i64: 1, 16, 16, 8>}]} {
    %c0_i32 = arith.constant 0 : i32
    %0 = arith.cmpi eq, %arg1, %c0_i32 : i32
    %1 = arith.extui %0 : i1 to i32
    %c0_i32_0 = arith.constant 0 : i32
    %2 = arith.cmpi ne, %1, %c0_i32_0 : i32
    scf.if %2 {
      %cst_37 = arith.constant 0.000000e+00 : f32
      %64 = vector.broadcast %cst_37 : f32 to vector<256x8xf32>
      %c0_38 = arith.constant 0 : index
      %c0_39 = arith.constant 0 : index
      %65 = vector.load %arg7[%c0_38, %c0_39] : memref<256x8xf32, #tpu.memory_space<vmem>>, vector<256x8xf32>
      tpu.vector_store %arg7[%c0_38, %c0_39], %64 {strides = array<i32>} : memref<256x8xf32, #tpu.memory_space<vmem>>, vector<256x8xf32>,
    } else {
    }
    %c0 = arith.constant 0 : index
    %c0_1 = arith.constant 0 : index
    %c0_2 = arith.constant 0 : index
    %c0_3 = arith.constant 0 : index
    %3 = vector.load %arg2[%c0, %c0_1, %c0_2, %c0_3] : memref<1x22x22x4xf32, #tpu.memory_space<vmem>>, vector<1x22x22x4xf32>
    %4 = vector.shape_cast %3 : vector<1x22x22x4xf32> to vector<22x22x4xf32>
    %c0_4 = arith.constant 0 : index
    %c0_5 = arith.constant 0 : index
    %5 = vector.load %arg7[%c0_4, %c0_5] : memref<256x8xf32, #tpu.memory_space<vmem>>, vector<256x8xf32>
    %6 = vector.extract_strided_slice %4 {offsets = [2, 2, 0], sizes = [16, 16, 4], strides = [1, 1, 1]} : vector<22x22x4xf32> to vector<16x16x4xf32>
    %7 = vector.shape_cast %6 : vector<16x16x4xf32> to vector<256x4xf32>
    %c0_6 = arith.constant 0 : index
    %c0_7 = arith.constant 0 : index
    %c0_8 = arith.constant 0 : index
    %8 = vector.load %arg3[%c0_6, %c0_7, %c0_8] : memref<9x4x8xf32, #tpu.memory_space<vmem>>, vector<1x4x8xf32>
    %9 = vector.shape_cast %8 : vector<1x4x8xf32> to vector<4x8xf32>
    %cst = arith.constant dense<0.000000e+00> : vector<256x8xf32>
    %10 = tpu.matmul %7, %9, %cst {dimension_numbers = #tpu.dot_dimension_numbers<[1], [0], [0], [1], [0, 0, 1, 1], [], []>} : vector<256x4xf32>, vector<4x8xf32>, vector<256x8xf32> -> vector<256x8xf32>
    %11 = arith.addf %5, %10 : vector<256x8xf32>
    %12 = vector.extract_strided_slice %4 {offsets = [2, 3, 0], sizes = [16, 16, 4], strides = [1, 1, 1]} : vector<22x22x4xf32> to vector<16x16x4xf32>
    %13 = vector.shape_cast %12 : vector<16x16x4xf32> to vector<256x4xf32>
    %c1 = arith.constant 1 : index
    %c0_9 = arith.constant 0 : index
    %c0_10 = arith.constant 0 : index
    %14 = vector.load %arg3[%c1, %c0_9, %c0_10] : memref<9x4x8xf32, #tpu.memory_space<vmem>>, vector<1x4x8xf32>
    %15 = vector.shape_cast %14 : vector<1x4x8xf32> to vector<4x8xf32>
    %cst_11 = arith.constant dense<0.000000e+00> : vector<256x8xf32>
    %16 = tpu.matmul %13, %15, %cst_11 {dimension_numbers = #tpu.dot_dimension_numbers<[1], [0], [0], [1], [0, 0, 1, 1], [], []>} : vector<256x4xf32>, vector<4x8xf32>, vector<256x8xf32> -> vector<256x8xf32>
    %17 = arith.addf %11, %16 : vector<256x8xf32>
    %18 = vector.extract_strided_slice %4 {offsets = [2, 4, 0], sizes = [16, 16, 4], strides = [1, 1, 1]} : vector<22x22x4xf32> to vector<16x16x4xf32>
    %19 = vector.shape_cast %18 : vector<16x16x4xf32> to vector<256x4xf32>
    %c2 = arith.constant 2 : index
    %c0_12 = arith.constant 0 : index
    %c0_13 = arith.constant 0 : index
    %20 = vector.load %arg3[%c2, %c0_12, %c0_13] : memref<9x4x8xf32, #tpu.memory_space<vmem>>, vector<1x4x8xf32>
    %21 = vector.shape_cast %20 : vector<1x4x8xf32> to vector<4x8xf32>
    %cst_14 = arith.constant dense<0.000000e+00> : vector<256x8xf32>
    %22 = tpu.matmul %19, %21, %cst_14 {dimension_numbers = #tpu.dot_dimension_numbers<[1], [0], [0], [1], [0, 0, 1, 1], [], []>} : vector<256x4xf32>, vector<4x8xf32>, vector<256x8xf32> -> vector<256x8xf32>
    %23 = arith.addf %17, %22 : vector<256x8xf32>
    %24 = vector.extract_strided_slice %4 {offsets = [3, 2, 0], sizes = [16, 16, 4], strides = [1, 1, 1]} : vector<22x22x4xf32> to vector<16x16x4xf32>
    %25 = vector.shape_cast %24 : vector<16x16x4xf32> to vector<256x4xf32>
    %c3 = arith.constant 3 : index
    %c0_15 = arith.constant 0 : index
    %c0_16 = arith.constant 0 : index
    %26 = vector.load %arg3[%c3, %c0_15, %c0_16] : memref<9x4x8xf32, #tpu.memory_space<vmem>>, vector<1x4x8xf32>
    %27 = vector.shape_cast %26 : vector<1x4x8xf32> to vector<4x8xf32>
    %cst_17 = arith.constant dense<0.000000e+00> : vector<256x8xf32>
    %28 = tpu.matmul %25, %27, %cst_17 {dimension_numbers = #tpu.dot_dimension_numbers<[1], [0], [0], [1], [0, 0, 1, 1], [], []>} : vector<256x4xf32>, vector<4x8xf32>, vector<256x8xf32> -> vector<256x8xf32>
    %29 = arith.addf %23, %28 : vector<256x8xf32>
    %30 = vector.extract_strided_slice %4 {offsets = [3, 3, 0], sizes = [16, 16, 4], strides = [1, 1, 1]} : vector<22x22x4xf32> to vector<16x16x4xf32>
    %31 = vector.shape_cast %30 : vector<16x16x4xf32> to vector<256x4xf32>
    %c4 = arith.constant 4 : index
    %c0_18 = arith.constant 0 : index
    %c0_19 = arith.constant 0 : index
    %32 = vector.load %arg3[%c4, %c0_18, %c0_19] : memref<9x4x8xf32, #tpu.memory_space<vmem>>, vector<1x4x8xf32>
    %33 = vector.shape_cast %32 : vector<1x4x8xf32> to vector<4x8xf32>
    %cst_20 = arith.constant dense<0.000000e+00> : vector<256x8xf32>
    %34 = tpu.matmul %31, %33, %cst_20 {dimension_numbers = #tpu.dot_dimension_numbers<[1], [0], [0], [1], [0, 0, 1, 1], [], []>} : vector<256x4xf32>, vector<4x8xf32>, vector<256x8xf32> -> vector<256x8xf32>
    %35 = arith.addf %29, %34 : vector<256x8xf32>
    %36 = vector.extract_strided_slice %4 {offsets = [3, 4, 0], sizes = [16, 16, 4], strides = [1, 1, 1]} : vector<22x22x4xf32> to vector<16x16x4xf32>
    %37 = vector.shape_cast %36 : vector<16x16x4xf32> to vector<256x4xf32>
    %c5 = arith.constant 5 : index
    %c0_21 = arith.constant 0 : index
    %c0_22 = arith.constant 0 : index
    %38 = vector.load %arg3[%c5, %c0_21, %c0_22] : memref<9x4x8xf32, #tpu.memory_space<vmem>>, vector<1x4x8xf32>
    %39 = vector.shape_cast %38 : vector<1x4x8xf32> to vector<4x8xf32>
    %cst_23 = arith.constant dense<0.000000e+00> : vector<256x8xf32>
    %40 = tpu.matmul %37, %39, %cst_23 {dimension_numbers = #tpu.dot_dimension_numbers<[1], [0], [0], [1], [0, 0, 1, 1], [], []>} : vector<256x4xf32>, vector<4x8xf32>, vector<256x8xf32> -> vector<256x8xf32>
    %41 = arith.addf %35, %40 : vector<256x8xf32>
    %42 = vector.extract_strided_slice %4 {offsets = [4, 2, 0], sizes = [16, 16, 4], strides = [1, 1, 1]} : vector<22x22x4xf32> to vector<16x16x4xf32>
    %43 = vector.shape_cast %42 : vector<16x16x4xf32> to vector<256x4xf32>
    %c6 = arith.constant 6 : index
    %c0_24 = arith.constant 0 : index
    %c0_25 = arith.constant 0 : index
    %44 = vector.load %arg3[%c6, %c0_24, %c0_25] : memref<9x4x8xf32, #tpu.memory_space<vmem>>, vector<1x4x8xf32>
    %45 = vector.shape_cast %44 : vector<1x4x8xf32> to vector<4x8xf32>
    %cst_26 = arith.constant dense<0.000000e+00> : vector<256x8xf32>
    %46 = tpu.matmul %43, %45, %cst_26 {dimension_numbers = #tpu.dot_dimension_numbers<[1], [0], [0], [1], [0, 0, 1, 1], [], []>} : vector<256x4xf32>, vector<4x8xf32>, vector<256x8xf32> -> vector<256x8xf32>
    %47 = arith.addf %41, %46 : vector<256x8xf32>
    %48 = vector.extract_strided_slice %4 {offsets = [4, 3, 0], sizes = [16, 16, 4], strides = [1, 1, 1]} : vector<22x22x4xf32> to vector<16x16x4xf32>
    %49 = vector.shape_cast %48 : vector<16x16x4xf32> to vector<256x4xf32>
    %c7 = arith.constant 7 : index
    %c0_27 = arith.constant 0 : index
    %c0_28 = arith.constant 0 : index
    %50 = vector.load %arg3[%c7, %c0_27, %c0_28] : memref<9x4x8xf32, #tpu.memory_space<vmem>>, vector<1x4x8xf32>
    %51 = vector.shape_cast %50 : vector<1x4x8xf32> to vector<4x8xf32>
    %cst_29 = arith.constant dense<0.000000e+00> : vector<256x8xf32>
    %52 = tpu.matmul %49, %51, %cst_29 {dimension_numbers = #tpu.dot_dimension_numbers<[1], [0], [0], [1], [0, 0, 1, 1], [], []>} : vector<256x4xf32>, vector<4x8xf32>, vector<256x8xf32> -> vector<256x8xf32>
    %53 = arith.addf %47, %52 : vector<256x8xf32>
    %54 = vector.extract_strided_slice %4 {offsets = [4, 4, 0], sizes = [16, 16, 4], strides = [1, 1, 1]} : vector<22x22x4xf32> to vector<16x16x4xf32>
    %55 = vector.shape_cast %54 : vector<16x16x4xf32> to vector<256x4xf32>
    %c8 = arith.constant 8 : index
    %c0_30 = arith.constant 0 : index
    %c0_31 = arith.constant 0 : index
    %56 = vector.load %arg3[%c8, %c0_30, %c0_31] : memref<9x4x8xf32, #tpu.memory_space<vmem>>, vector<1x4x8xf32>
    %57 = vector.shape_cast %56 : vector<1x4x8xf32> to vector<4x8xf32>
    %cst_32 = arith.constant dense<0.000000e+00> : vector<256x8xf32>
    %58 = tpu.matmul %55, %57, %cst_32 {dimension_numbers = #tpu.dot_dimension_numbers<[1], [0], [0], [1], [0, 0, 1, 1], [], []>} : vector<256x4xf32>, vector<4x8xf32>, vector<256x8xf32> -> vector<256x8xf32>
    %59 = arith.addf %53, %58 : vector<256x8xf32>
    %c0_33 = arith.constant 0 : index
    %c0_34 = arith.constant 0 : index
    %60 = vector.load %arg7[%c0_33, %c0_34] : memref<256x8xf32, #tpu.memory_space<vmem>>, vector<256x8xf32>
    tpu.vector_store %arg7[%c0_33, %c0_34], %59 {strides = array<i32>} : memref<256x8xf32, #tpu.memory_space<vmem>>, vector<256x8xf32>,
    %c0_i32_35 = arith.constant 0 : i32
    %61 = arith.cmpi eq, %arg1, %c0_i32_35 : i32
    %62 = arith.extui %61 : i1 to i32
    %c0_i32_36 = arith.constant 0 : i32
    %63 = arith.cmpi ne, %62, %c0_i32_36 : i32
    scf.if %63 {
      %c0_37 = arith.constant 0 : index
      %c0_38 = arith.constant 0 : index
      %64 = vector.load %arg7[%c0_37, %c0_38] : memref<256x8xf32, #tpu.memory_space<vmem>>, vector<256x8xf32>
      %c0_39 = arith.constant 0 : index
      %c0_40 = arith.constant 0 : index
      %65 = vector.load %arg4[%c0_39, %c0_40] : memref<1x8xf32, #tpu.memory_space<vmem>>, vector<1x8xf32>
      %66 = vector.broadcast %65 : vector<1x8xf32> to vector<256x8xf32>
      %67 = arith.mulf %64, %66 : vector<256x8xf32>
      %c0_41 = arith.constant 0 : index
      %c0_42 = arith.constant 0 : index
      %68 = vector.load %arg5[%c0_41, %c0_42] : memref<1x8xf32, #tpu.memory_space<vmem>>, vector<1x8xf32>
      %69 = vector.broadcast %68 : vector<1x8xf32> to vector<256x8xf32>
      %70 = arith.addf %67, %69 : vector<256x8xf32>
      %cst_43 = arith.constant 0.000000e+00 : f32
      %71 = vector.broadcast %cst_43 : f32 to vector<256x8xf32>
      %72 = arith.maximumf %70, %71 : vector<256x8xf32>
      %73 = vector.shape_cast %72 : vector<256x8xf32> to vector<16x16x8xf32>
      %c0_44 = arith.constant 0 : index
      %c0_45 = arith.constant 0 : index
      %c0_46 = arith.constant 0 : index
      %c0_47 = arith.constant 0 : index
      %74 = vector.load %arg6[%c0_44, %c0_45, %c0_46, %c0_47] : memref<1x16x16x8xf32, #tpu.memory_space<vmem>>, vector<1x16x16x8xf32>
      %75 = vector.shape_cast %74 : vector<1x16x16x8xf32> to vector<16x16x8xf32>
      %76 = vector.shape_cast %73 : vector<16x16x8xf32> to vector<1x16x16x8xf32>
      tpu.vector_store %arg6[%c0_44, %c0_45, %c0_46, %c0_47], %76 {strides = array<i32>} : memref<1x16x16x8xf32, #tpu.memory_space<vmem>>, vector<1x16x16x8xf32>,
    } else {
    }
    return
  }
  func.func @transform_0(%arg0: i32, %arg1: i32) -> (i32, i32, i32, i32) {
    %c0_i32 = arith.constant 0 : i32
    %c0_i32_0 = arith.constant 0 : i32
    %c0_i32_1 = arith.constant 0 : i32
    return %arg0, %c0_i32, %c0_i32_0, %arg1 : i32, i32, i32, i32
  }
  func.func @transform_1(%arg0: i32, %arg1: i32) -> (i32, i32, i32) {
    %c0_i32 = arith.constant 0 : i32
    %c0_i32_0 = arith.constant 0 : i32
    %c0_i32_1 = arith.constant 0 : i32
    return %c0_i32, %arg1, %c0_i32_0 : i32, i32, i32
  }
  func.func @transform_2(%arg0: i32, %arg1: i32) -> (i32, i32) {
    %c0_i32 = arith.constant 0 : i32
    %c0_i32_0 = arith.constant 0 : i32
    %c0_i32_1 = arith.constant 0 : i32
    return %c0_i32, %c0_i32_0 : i32, i32
  }
  func.func @transform_3(%arg0: i32, %arg1: i32) -> (i32, i32) {
    %c0_i32 = arith.constant 0 : i32
    %c0_i32_0 = arith.constant 0 : i32
    %c0_i32_1 = arith.constant 0 : i32
    return %c0_i32, %c0_i32_0 : i32, i32
  }
  func.func @transform_4(%arg0: i32, %arg1: i32) -> (i32, i32, i32, i32) {
    %c0_i32 = arith.constant 0 : i32
    %c0_i32_0 = arith.constant 0 : i32
    %c0_i32_1 = arith.constant 0 : i32
    %c0_i32_2 = arith.constant 0 : i32
    return %arg0, %c0_i32, %c0_i32_0, %c0_i32_1 : i32, i32, i32, i32
  }
}

module attributes {stable_mosaic.version = 11 : i64} {
  func.func @_conv3x3_bn_relu_kernel(%arg0: i32, %arg1: i32, %arg2: memref<1x22x22x4xf32, #tpu.memory_space<vmem>>, %arg3: memref<9x4x8xf32, #tpu.memory_space<vmem>>, %arg4: memref<1x8xf32, #tpu.memory_space<vmem>>, %arg5: memref<1x8xf32, #tpu.memory_space<vmem>>, %arg6: memref<1x16x16x8xf32, #tpu.memory_space<vmem>>, %arg7: memref<256x8xf32, #tpu.memory_space<vmem>>) attributes {dimension_semantics = [#tpu.dimension_semantics<parallel>, #tpu.dimension_semantics<arbitrary>], iteration_bounds = array<i64: 2, 1>, scalar_prefetch = 0 : i64, scratch_operands = 1 : i64, tpu.core_type = #tpu.core_type<tc>, window_params = [{transform_indices = @transform_0, window_bounds = array<i64: 1, 22, 22, 4>}, {transform_indices = @transform_1, window_bounds = array<i64: 9, 4, 8>}, {pipeline_mode = #tpu.pipeline_mode<synchronous>, transform_indices = @transform_2, window_bounds = array<i64: 1, 8>}, {pipeline_mode = #tpu.pipeline_mode<synchronous>, transform_indices = @transform_3, window_bounds = array<i64: 1, 8>}, {transform_indices = @transform_4, window_bounds = array<i64: 1, 16, 16, 8>}]} {
    %c0_i32 = arith.constant 0 : i32
    %0 = arith.cmpi eq, %arg1, %c0_i32 : i32
    %1 = arith.extui %0 : i1 to i32
    %c0_i32_0 = arith.constant 0 : i32
    %2 = arith.cmpi ne, %1, %c0_i32_0 : i32
    scf.if %2 {
      %cst_37 = arith.constant 0.000000e+00 : f32
      %64 = vector.broadcast %cst_37 : f32 to vector<256x8xf32>
      %c0_38 = arith.constant 0 : index
      %c0_39 = arith.constant 0 : index
      %65 = vector.load %arg7[%c0_38, %c0_39] : memref<256x8xf32, #tpu.memory_space<vmem>>, vector<256x8xf32>
      tpu.vector_store %arg7[%c0_38, %c0_39], %64 {strides = array<i32>} : memref<256x8xf32, #tpu.memory_space<vmem>>, vector<256x8xf32>,
    } else {
    }
    %c0 = arith.constant 0 : index
    %c0_1 = arith.constant 0 : index
    %c0_2 = arith.constant 0 : index
    %c0_3 = arith.constant 0 : index
    %3 = vector.load %arg2[%c0, %c0_1, %c0_2, %c0_3] : memref<1x22x22x4xf32, #tpu.memory_space<vmem>>, vector<1x22x22x4xf32>
    %4 = vector.shape_cast %3 : vector<1x22x22x4xf32> to vector<22x22x4xf32>
    %c0_4 = arith.constant 0 : index
    %c0_5 = arith.constant 0 : index
    %5 = vector.load %arg7[%c0_4, %c0_5] : memref<256x8xf32, #tpu.memory_space<vmem>>, vector<256x8xf32>
    %6 = vector.extract_strided_slice %4 {offsets = [0, 0, 0], sizes = [16, 16, 4], strides = [1, 1, 1]} : vector<22x22x4xf32> to vector<16x16x4xf32>
    %7 = vector.shape_cast %6 : vector<16x16x4xf32> to vector<256x4xf32>
    %c0_6 = arith.constant 0 : index
    %c0_7 = arith.constant 0 : index
    %c0_8 = arith.constant 0 : index
    %8 = vector.load %arg3[%c0_6, %c0_7, %c0_8] : memref<9x4x8xf32, #tpu.memory_space<vmem>>, vector<1x4x8xf32>
    %9 = vector.shape_cast %8 : vector<1x4x8xf32> to vector<4x8xf32>
    %cst = arith.constant dense<0.000000e+00> : vector<256x8xf32>
    %10 = tpu.matmul %7, %9, %cst {dimension_numbers = #tpu.dot_dimension_numbers<[1], [0], [0], [1], [0, 0, 1, 1], [], []>} : vector<256x4xf32>, vector<4x8xf32>, vector<256x8xf32> -> vector<256x8xf32>
    %11 = arith.addf %5, %10 : vector<256x8xf32>
    %12 = vector.extract_strided_slice %4 {offsets = [0, 3, 0], sizes = [16, 16, 4], strides = [1, 1, 1]} : vector<22x22x4xf32> to vector<16x16x4xf32>
    %13 = vector.shape_cast %12 : vector<16x16x4xf32> to vector<256x4xf32>
    %c1 = arith.constant 1 : index
    %c0_9 = arith.constant 0 : index
    %c0_10 = arith.constant 0 : index
    %14 = vector.load %arg3[%c1, %c0_9, %c0_10] : memref<9x4x8xf32, #tpu.memory_space<vmem>>, vector<1x4x8xf32>
    %15 = vector.shape_cast %14 : vector<1x4x8xf32> to vector<4x8xf32>
    %cst_11 = arith.constant dense<0.000000e+00> : vector<256x8xf32>
    %16 = tpu.matmul %13, %15, %cst_11 {dimension_numbers = #tpu.dot_dimension_numbers<[1], [0], [0], [1], [0, 0, 1, 1], [], []>} : vector<256x4xf32>, vector<4x8xf32>, vector<256x8xf32> -> vector<256x8xf32>
    %17 = arith.addf %11, %16 : vector<256x8xf32>
    %18 = vector.extract_strided_slice %4 {offsets = [0, 6, 0], sizes = [16, 16, 4], strides = [1, 1, 1]} : vector<22x22x4xf32> to vector<16x16x4xf32>
    %19 = vector.shape_cast %18 : vector<16x16x4xf32> to vector<256x4xf32>
    %c2 = arith.constant 2 : index
    %c0_12 = arith.constant 0 : index
    %c0_13 = arith.constant 0 : index
    %20 = vector.load %arg3[%c2, %c0_12, %c0_13] : memref<9x4x8xf32, #tpu.memory_space<vmem>>, vector<1x4x8xf32>
    %21 = vector.shape_cast %20 : vector<1x4x8xf32> to vector<4x8xf32>
    %cst_14 = arith.constant dense<0.000000e+00> : vector<256x8xf32>
    %22 = tpu.matmul %19, %21, %cst_14 {dimension_numbers = #tpu.dot_dimension_numbers<[1], [0], [0], [1], [0, 0, 1, 1], [], []>} : vector<256x4xf32>, vector<4x8xf32>, vector<256x8xf32> -> vector<256x8xf32>
    %23 = arith.addf %17, %22 : vector<256x8xf32>
    %24 = vector.extract_strided_slice %4 {offsets = [3, 0, 0], sizes = [16, 16, 4], strides = [1, 1, 1]} : vector<22x22x4xf32> to vector<16x16x4xf32>
    %25 = vector.shape_cast %24 : vector<16x16x4xf32> to vector<256x4xf32>
    %c3 = arith.constant 3 : index
    %c0_15 = arith.constant 0 : index
    %c0_16 = arith.constant 0 : index
    %26 = vector.load %arg3[%c3, %c0_15, %c0_16] : memref<9x4x8xf32, #tpu.memory_space<vmem>>, vector<1x4x8xf32>
    %27 = vector.shape_cast %26 : vector<1x4x8xf32> to vector<4x8xf32>
    %cst_17 = arith.constant dense<0.000000e+00> : vector<256x8xf32>
    %28 = tpu.matmul %25, %27, %cst_17 {dimension_numbers = #tpu.dot_dimension_numbers<[1], [0], [0], [1], [0, 0, 1, 1], [], []>} : vector<256x4xf32>, vector<4x8xf32>, vector<256x8xf32> -> vector<256x8xf32>
    %29 = arith.addf %23, %28 : vector<256x8xf32>
    %30 = vector.extract_strided_slice %4 {offsets = [3, 3, 0], sizes = [16, 16, 4], strides = [1, 1, 1]} : vector<22x22x4xf32> to vector<16x16x4xf32>
    %31 = vector.shape_cast %30 : vector<16x16x4xf32> to vector<256x4xf32>
    %c4 = arith.constant 4 : index
    %c0_18 = arith.constant 0 : index
    %c0_19 = arith.constant 0 : index
    %32 = vector.load %arg3[%c4, %c0_18, %c0_19] : memref<9x4x8xf32, #tpu.memory_space<vmem>>, vector<1x4x8xf32>
    %33 = vector.shape_cast %32 : vector<1x4x8xf32> to vector<4x8xf32>
    %cst_20 = arith.constant dense<0.000000e+00> : vector<256x8xf32>
    %34 = tpu.matmul %31, %33, %cst_20 {dimension_numbers = #tpu.dot_dimension_numbers<[1], [0], [0], [1], [0, 0, 1, 1], [], []>} : vector<256x4xf32>, vector<4x8xf32>, vector<256x8xf32> -> vector<256x8xf32>
    %35 = arith.addf %29, %34 : vector<256x8xf32>
    %36 = vector.extract_strided_slice %4 {offsets = [3, 6, 0], sizes = [16, 16, 4], strides = [1, 1, 1]} : vector<22x22x4xf32> to vector<16x16x4xf32>
    %37 = vector.shape_cast %36 : vector<16x16x4xf32> to vector<256x4xf32>
    %c5 = arith.constant 5 : index
    %c0_21 = arith.constant 0 : index
    %c0_22 = arith.constant 0 : index
    %38 = vector.load %arg3[%c5, %c0_21, %c0_22] : memref<9x4x8xf32, #tpu.memory_space<vmem>>, vector<1x4x8xf32>
    %39 = vector.shape_cast %38 : vector<1x4x8xf32> to vector<4x8xf32>
    %cst_23 = arith.constant dense<0.000000e+00> : vector<256x8xf32>
    %40 = tpu.matmul %37, %39, %cst_23 {dimension_numbers = #tpu.dot_dimension_numbers<[1], [0], [0], [1], [0, 0, 1, 1], [], []>} : vector<256x4xf32>, vector<4x8xf32>, vector<256x8xf32> -> vector<256x8xf32>
    %41 = arith.addf %35, %40 : vector<256x8xf32>
    %42 = vector.extract_strided_slice %4 {offsets = [6, 0, 0], sizes = [16, 16, 4], strides = [1, 1, 1]} : vector<22x22x4xf32> to vector<16x16x4xf32>
    %43 = vector.shape_cast %42 : vector<16x16x4xf32> to vector<256x4xf32>
    %c6 = arith.constant 6 : index
    %c0_24 = arith.constant 0 : index
    %c0_25 = arith.constant 0 : index
    %44 = vector.load %arg3[%c6, %c0_24, %c0_25] : memref<9x4x8xf32, #tpu.memory_space<vmem>>, vector<1x4x8xf32>
    %45 = vector.shape_cast %44 : vector<1x4x8xf32> to vector<4x8xf32>
    %cst_26 = arith.constant dense<0.000000e+00> : vector<256x8xf32>
    %46 = tpu.matmul %43, %45, %cst_26 {dimension_numbers = #tpu.dot_dimension_numbers<[1], [0], [0], [1], [0, 0, 1, 1], [], []>} : vector<256x4xf32>, vector<4x8xf32>, vector<256x8xf32> -> vector<256x8xf32>
    %47 = arith.addf %41, %46 : vector<256x8xf32>
    %48 = vector.extract_strided_slice %4 {offsets = [6, 3, 0], sizes = [16, 16, 4], strides = [1, 1, 1]} : vector<22x22x4xf32> to vector<16x16x4xf32>
    %49 = vector.shape_cast %48 : vector<16x16x4xf32> to vector<256x4xf32>
    %c7 = arith.constant 7 : index
    %c0_27 = arith.constant 0 : index
    %c0_28 = arith.constant 0 : index
    %50 = vector.load %arg3[%c7, %c0_27, %c0_28] : memref<9x4x8xf32, #tpu.memory_space<vmem>>, vector<1x4x8xf32>
    %51 = vector.shape_cast %50 : vector<1x4x8xf32> to vector<4x8xf32>
    %cst_29 = arith.constant dense<0.000000e+00> : vector<256x8xf32>
    %52 = tpu.matmul %49, %51, %cst_29 {dimension_numbers = #tpu.dot_dimension_numbers<[1], [0], [0], [1], [0, 0, 1, 1], [], []>} : vector<256x4xf32>, vector<4x8xf32>, vector<256x8xf32> -> vector<256x8xf32>
    %53 = arith.addf %47, %52 : vector<256x8xf32>
    %54 = vector.extract_strided_slice %4 {offsets = [6, 6, 0], sizes = [16, 16, 4], strides = [1, 1, 1]} : vector<22x22x4xf32> to vector<16x16x4xf32>
    %55 = vector.shape_cast %54 : vector<16x16x4xf32> to vector<256x4xf32>
    %c8 = arith.constant 8 : index
    %c0_30 = arith.constant 0 : index
    %c0_31 = arith.constant 0 : index
    %56 = vector.load %arg3[%c8, %c0_30, %c0_31] : memref<9x4x8xf32, #tpu.memory_space<vmem>>, vector<1x4x8xf32>
    %57 = vector.shape_cast %56 : vector<1x4x8xf32> to vector<4x8xf32>
    %cst_32 = arith.constant dense<0.000000e+00> : vector<256x8xf32>
    %58 = tpu.matmul %55, %57, %cst_32 {dimension_numbers = #tpu.dot_dimension_numbers<[1], [0], [0], [1], [0, 0, 1, 1], [], []>} : vector<256x4xf32>, vector<4x8xf32>, vector<256x8xf32> -> vector<256x8xf32>
    %59 = arith.addf %53, %58 : vector<256x8xf32>
    %c0_33 = arith.constant 0 : index
    %c0_34 = arith.constant 0 : index
    %60 = vector.load %arg7[%c0_33, %c0_34] : memref<256x8xf32, #tpu.memory_space<vmem>>, vector<256x8xf32>
    tpu.vector_store %arg7[%c0_33, %c0_34], %59 {strides = array<i32>} : memref<256x8xf32, #tpu.memory_space<vmem>>, vector<256x8xf32>,
    %c0_i32_35 = arith.constant 0 : i32
    %61 = arith.cmpi eq, %arg1, %c0_i32_35 : i32
    %62 = arith.extui %61 : i1 to i32
    %c0_i32_36 = arith.constant 0 : i32
    %63 = arith.cmpi ne, %62, %c0_i32_36 : i32
    scf.if %63 {
      %c0_37 = arith.constant 0 : index
      %c0_38 = arith.constant 0 : index
      %64 = vector.load %arg7[%c0_37, %c0_38] : memref<256x8xf32, #tpu.memory_space<vmem>>, vector<256x8xf32>
      %c0_39 = arith.constant 0 : index
      %c0_40 = arith.constant 0 : index
      %65 = vector.load %arg4[%c0_39, %c0_40] : memref<1x8xf32, #tpu.memory_space<vmem>>, vector<1x8xf32>
      %66 = vector.broadcast %65 : vector<1x8xf32> to vector<256x8xf32>
      %67 = arith.mulf %64, %66 : vector<256x8xf32>
      %c0_41 = arith.constant 0 : index
      %c0_42 = arith.constant 0 : index
      %68 = vector.load %arg5[%c0_41, %c0_42] : memref<1x8xf32, #tpu.memory_space<vmem>>, vector<1x8xf32>
      %69 = vector.broadcast %68 : vector<1x8xf32> to vector<256x8xf32>
      %70 = arith.addf %67, %69 : vector<256x8xf32>
      %cst_43 = arith.constant 0.000000e+00 : f32
      %71 = vector.broadcast %cst_43 : f32 to vector<256x8xf32>
      %72 = arith.maximumf %70, %71 : vector<256x8xf32>
      %73 = vector.shape_cast %72 : vector<256x8xf32> to vector<16x16x8xf32>
      %c0_44 = arith.constant 0 : index
      %c0_45 = arith.constant 0 : index
      %c0_46 = arith.constant 0 : index
      %c0_47 = arith.constant 0 : index
      %74 = vector.load %arg6[%c0_44, %c0_45, %c0_46, %c0_47] : memref<1x16x16x8xf32, #tpu.memory_space<vmem>>, vector<1x16x16x8xf32>
      %75 = vector.shape_cast %74 : vector<1x16x16x8xf32> to vector<16x16x8xf32>
      %76 = vector.shape_cast %73 : vector<16x16x8xf32> to vector<1x16x16x8xf32>
      tpu.vector_store %arg6[%c0_44, %c0_45, %c0_46, %c0_47], %76 {strides = array<i32>} : memref<1x16x16x8xf32, #tpu.memory_space<vmem>>, vector<1x16x16x8xf32>,
    } else {
    }
    return
  }
  func.func @transform_0(%arg0: i32, %arg1: i32) -> (i32, i32, i32, i32) {
    %c0_i32 = arith.constant 0 : i32
    %c0_i32_0 = arith.constant 0 : i32
    %c0_i32_1 = arith.constant 0 : i32
    return %arg0, %c0_i32, %c0_i32_0, %arg1 : i32, i32, i32, i32
  }
  func.func @transform_1(%arg0: i32, %arg1: i32) -> (i32, i32, i32) {
    %c0_i32 = arith.constant 0 : i32
    %c0_i32_0 = arith.constant 0 : i32
    %c0_i32_1 = arith.constant 0 : i32
    return %c0_i32, %arg1, %c0_i32_0 : i32, i32, i32
  }
  func.func @transform_2(%arg0: i32, %arg1: i32) -> (i32, i32) {
    %c0_i32 = arith.constant 0 : i32
    %c0_i32_0 = arith.constant 0 : i32
    %c0_i32_1 = arith.constant 0 : i32
    return %c0_i32, %c0_i32_0 : i32, i32
  }
  func.func @transform_3(%arg0: i32, %arg1: i32) -> (i32, i32) {
    %c0_i32 = arith.constant 0 : i32
    %c0_i32_0 = arith.constant 0 : i32
    %c0_i32_1 = arith.constant 0 : i32
    return %c0_i32, %c0_i32_0 : i32, i32
  }
  func.func @transform_4(%arg0: i32, %arg1: i32) -> (i32, i32, i32, i32) {
    %c0_i32 = arith.constant 0 : i32
    %c0_i32_0 = arith.constant 0 : i32
    %c0_i32_1 = arith.constant 0 : i32
    %c0_i32_2 = arith.constant 0 : i32
    return %arg0, %c0_i32, %c0_i32_0, %c0_i32_1 : i32, i32, i32, i32
  }
}

module attributes {stable_mosaic.version = 11 : i64} {
  func.func @_pointwise_bn_relu_kernel(%arg0: i32, %arg1: memref<512x4xf32, #tpu.memory_space<vmem>>, %arg2: memref<4x8xf32, #tpu.memory_space<vmem>>, %arg3: memref<1x8xf32, #tpu.memory_space<vmem>>, %arg4: memref<1x8xf32, #tpu.memory_space<vmem>>, %arg5: memref<512x8xf32, #tpu.memory_space<vmem>>) attributes {dimension_semantics = [#tpu.dimension_semantics<parallel>], iteration_bounds = array<i64: 1>, scalar_prefetch = 0 : i64, scratch_operands = 0 : i64, tpu.core_type = #tpu.core_type<tc>, window_params = [{transform_indices = @transform_0, window_bounds = array<i64: 512, 4>}, {pipeline_mode = #tpu.pipeline_mode<synchronous>, transform_indices = @transform_1, window_bounds = array<i64: 4, 8>}, {pipeline_mode = #tpu.pipeline_mode<synchronous>, transform_indices = @transform_2, window_bounds = array<i64: 1, 8>}, {pipeline_mode = #tpu.pipeline_mode<synchronous>, transform_indices = @transform_3, window_bounds = array<i64: 1, 8>}, {transform_indices = @transform_4, window_bounds = array<i64: 512, 8>}]} {
    %c0 = arith.constant 0 : index
    %c0_0 = arith.constant 0 : index
    %0 = vector.load %arg1[%c0, %c0_0] : memref<512x4xf32, #tpu.memory_space<vmem>>, vector<512x4xf32>
    %c0_1 = arith.constant 0 : index
    %c0_2 = arith.constant 0 : index
    %1 = vector.load %arg2[%c0_1, %c0_2] : memref<4x8xf32, #tpu.memory_space<vmem>>, vector<4x8xf32>
    %cst = arith.constant dense<0.000000e+00> : vector<512x8xf32>
    %2 = tpu.matmul %0, %1, %cst {dimension_numbers = #tpu.dot_dimension_numbers<[1], [0], [0], [1], [0, 0, 1, 1], [], []>} : vector<512x4xf32>, vector<4x8xf32>, vector<512x8xf32> -> vector<512x8xf32>
    %c0_3 = arith.constant 0 : index
    %c0_4 = arith.constant 0 : index
    %3 = vector.load %arg3[%c0_3, %c0_4] : memref<1x8xf32, #tpu.memory_space<vmem>>, vector<1x8xf32>
    %4 = vector.broadcast %3 : vector<1x8xf32> to vector<512x8xf32>
    %5 = arith.mulf %2, %4 : vector<512x8xf32>
    %c0_5 = arith.constant 0 : index
    %c0_6 = arith.constant 0 : index
    %6 = vector.load %arg4[%c0_5, %c0_6] : memref<1x8xf32, #tpu.memory_space<vmem>>, vector<1x8xf32>
    %7 = vector.broadcast %6 : vector<1x8xf32> to vector<512x8xf32>
    %8 = arith.addf %5, %7 : vector<512x8xf32>
    %cst_7 = arith.constant 0.000000e+00 : f32
    %9 = vector.broadcast %cst_7 : f32 to vector<512x8xf32>
    %10 = arith.maximumf %8, %9 : vector<512x8xf32>
    %c0_8 = arith.constant 0 : index
    %c0_9 = arith.constant 0 : index
    %11 = vector.load %arg5[%c0_8, %c0_9] : memref<512x8xf32, #tpu.memory_space<vmem>>, vector<512x8xf32>
    tpu.vector_store %arg5[%c0_8, %c0_9], %10 {strides = array<i32>} : memref<512x8xf32, #tpu.memory_space<vmem>>, vector<512x8xf32>,
    return
  }
  func.func @transform_0(%arg0: i32) -> (i32, i32) {
    %c0_i32 = arith.constant 0 : i32
    %c0_i32_0 = arith.constant 0 : i32
    return %arg0, %c0_i32 : i32, i32
  }
  func.func @transform_1(%arg0: i32) -> (i32, i32) {
    %c0_i32 = arith.constant 0 : i32
    %c0_i32_0 = arith.constant 0 : i32
    %c0_i32_1 = arith.constant 0 : i32
    return %c0_i32, %c0_i32_0 : i32, i32
  }
  func.func @transform_2(%arg0: i32) -> (i32, i32) {
    %c0_i32 = arith.constant 0 : i32
    %c0_i32_0 = arith.constant 0 : i32
    %c0_i32_1 = arith.constant 0 : i32
    return %c0_i32, %c0_i32_0 : i32, i32
  }
  func.func @transform_3(%arg0: i32) -> (i32, i32) {
    %c0_i32 = arith.constant 0 : i32
    %c0_i32_0 = arith.constant 0 : i32
    %c0_i32_1 = arith.constant 0 : i32
    return %c0_i32, %c0_i32_0 : i32, i32
  }
  func.func @transform_4(%arg0: i32) -> (i32, i32) {
    %c0_i32 = arith.constant 0 : i32
    %c0_i32_0 = arith.constant 0 : i32
    return %arg0, %c0_i32 : i32, i32
  }
}

module attributes {stable_mosaic.version = 11 : i64} {
  func.func @_image_pool_kernel(%arg0: i32, %arg1: i32, %arg2: memref<1x128x4xf32, #tpu.memory_space<vmem>>, %arg3: memref<4x8xf32, #tpu.memory_space<vmem>>, %arg4: memref<1x8xf32, #tpu.memory_space<vmem>>, %arg5: memref<1x8xf32, #tpu.memory_space<vmem>>, %arg6: memref<1x1x8xf32, #tpu.memory_space<vmem>>, %arg7: memref<1x4xf32, #tpu.memory_space<vmem>>) attributes {dimension_semantics = [#tpu.dimension_semantics<parallel>, #tpu.dimension_semantics<arbitrary>], iteration_bounds = array<i64: 2, 2>, scalar_prefetch = 0 : i64, scratch_operands = 1 : i64, tpu.core_type = #tpu.core_type<tc>, window_params = [{transform_indices = @transform_0, window_bounds = array<i64: 1, 128, 4>}, {pipeline_mode = #tpu.pipeline_mode<synchronous>, transform_indices = @transform_1, window_bounds = array<i64: 4, 8>}, {pipeline_mode = #tpu.pipeline_mode<synchronous>, transform_indices = @transform_2, window_bounds = array<i64: 1, 8>}, {pipeline_mode = #tpu.pipeline_mode<synchronous>, transform_indices = @transform_3, window_bounds = array<i64: 1, 8>}, {transform_indices = @transform_4, window_bounds = array<i64: 1, 1, 8>}]} {
    %c0_i32 = arith.constant 0 : i32
    %0 = arith.cmpi eq, %arg1, %c0_i32 : i32
    %1 = arith.extui %0 : i1 to i32
    %c0_i32_0 = arith.constant 0 : i32
    %2 = arith.cmpi ne, %1, %c0_i32_0 : i32
    scf.if %2 {
      %cst_8 = arith.constant 0.000000e+00 : f32
      %13 = vector.broadcast %cst_8 : f32 to vector<1x4xf32>
      %c0_9 = arith.constant 0 : index
      %c0_10 = arith.constant 0 : index
      %14 = vector.load %arg7[%c0_9, %c0_10] : memref<1x4xf32, #tpu.memory_space<vmem>>, vector<1x4xf32>
      tpu.vector_store %arg7[%c0_9, %c0_10], %13 {strides = array<i32>} : memref<1x4xf32, #tpu.memory_space<vmem>>, vector<1x4xf32>,
    } else {
    }
    %c0 = arith.constant 0 : index
    %c0_1 = arith.constant 0 : index
    %c0_2 = arith.constant 0 : index
    %3 = vector.load %arg2[%c0, %c0_1, %c0_2] : memref<1x128x4xf32, #tpu.memory_space<vmem>>, vector<1x128x4xf32>
    %4 = vector.shape_cast %3 : vector<1x128x4xf32> to vector<128x4xf32>
    %c0_3 = arith.constant 0 : index
    %c0_4 = arith.constant 0 : index
    %5 = vector.load %arg7[%c0_3, %c0_4] : memref<1x4xf32, #tpu.memory_space<vmem>>, vector<1x4xf32>
    %cst = arith.constant dense<0.000000e+00> : vector<4xf32>
    %6 = vector.multi_reduction <add>, %4, %cst [0] : vector<128x4xf32> to vector<4xf32>
    %7 = vector.shape_cast %6 : vector<4xf32> to vector<1x4xf32>
    %8 = arith.addf %5, %7 : vector<1x4xf32>
    %c0_5 = arith.constant 0 : index
    %c0_6 = arith.constant 0 : index
    %9 = vector.load %arg7[%c0_5, %c0_6] : memref<1x4xf32, #tpu.memory_space<vmem>>, vector<1x4xf32>
    tpu.vector_store %arg7[%c0_5, %c0_6], %8 {strides = array<i32>} : memref<1x4xf32, #tpu.memory_space<vmem>>, vector<1x4xf32>,
    %c1_i32 = arith.constant 1 : i32
    %10 = arith.cmpi eq, %arg1, %c1_i32 : i32
    %11 = arith.extui %10 : i1 to i32
    %c0_i32_7 = arith.constant 0 : i32
    %12 = arith.cmpi ne, %11, %c0_i32_7 : i32
    scf.if %12 {
      %c0_8 = arith.constant 0 : index
      %c0_9 = arith.constant 0 : index
      %13 = vector.load %arg7[%c0_8, %c0_9] : memref<1x4xf32, #tpu.memory_space<vmem>>, vector<1x4xf32>
      %cst_10 = arith.constant 3.906250e-03 : f32
      %14 = vector.broadcast %cst_10 : f32 to vector<1x4xf32>
      %15 = arith.mulf %13, %14 : vector<1x4xf32>
      %c0_11 = arith.constant 0 : index
      %c0_12 = arith.constant 0 : index
      %16 = vector.load %arg3[%c0_11, %c0_12] : memref<4x8xf32, #tpu.memory_space<vmem>>, vector<4x8xf32>
      %cst_13 = arith.constant dense<0.000000e+00> : vector<1x8xf32>
      %17 = tpu.matmul %15, %16, %cst_13 {dimension_numbers = #tpu.dot_dimension_numbers<[1], [0], [0], [1], [0, 0, 1, 1], [], []>} : vector<1x4xf32>, vector<4x8xf32>, vector<1x8xf32> -> vector<1x8xf32>
      %c0_14 = arith.constant 0 : index
      %c0_15 = arith.constant 0 : index
      %18 = vector.load %arg4[%c0_14, %c0_15] : memref<1x8xf32, #tpu.memory_space<vmem>>, vector<1x8xf32>
      %19 = arith.mulf %17, %18 : vector<1x8xf32>
      %c0_16 = arith.constant 0 : index
      %c0_17 = arith.constant 0 : index
      %20 = vector.load %arg5[%c0_16, %c0_17] : memref<1x8xf32, #tpu.memory_space<vmem>>, vector<1x8xf32>
      %21 = arith.addf %19, %20 : vector<1x8xf32>
      %cst_18 = arith.constant 0.000000e+00 : f32
      %22 = vector.broadcast %cst_18 : f32 to vector<1x8xf32>
      %23 = arith.maximumf %21, %22 : vector<1x8xf32>
      %c0_19 = arith.constant 0 : index
      %c0_20 = arith.constant 0 : index
      %c0_21 = arith.constant 0 : index
      %24 = vector.load %arg6[%c0_19, %c0_20, %c0_21] : memref<1x1x8xf32, #tpu.memory_space<vmem>>, vector<1x1x8xf32>
      %25 = vector.shape_cast %24 : vector<1x1x8xf32> to vector<1x8xf32>
      %26 = vector.shape_cast %23 : vector<1x8xf32> to vector<1x1x8xf32>
      tpu.vector_store %arg6[%c0_19, %c0_20, %c0_21], %26 {strides = array<i32>} : memref<1x1x8xf32, #tpu.memory_space<vmem>>, vector<1x1x8xf32>,
    } else {
    }
    return
  }
  func.func @transform_0(%arg0: i32, %arg1: i32) -> (i32, i32, i32) {
    %c0_i32 = arith.constant 0 : i32
    %c0_i32_0 = arith.constant 0 : i32
    return %arg0, %arg1, %c0_i32 : i32, i32, i32
  }
  func.func @transform_1(%arg0: i32, %arg1: i32) -> (i32, i32) {
    %c0_i32 = arith.constant 0 : i32
    %c0_i32_0 = arith.constant 0 : i32
    %c0_i32_1 = arith.constant 0 : i32
    return %c0_i32, %c0_i32_0 : i32, i32
  }
  func.func @transform_2(%arg0: i32, %arg1: i32) -> (i32, i32) {
    %c0_i32 = arith.constant 0 : i32
    %c0_i32_0 = arith.constant 0 : i32
    %c0_i32_1 = arith.constant 0 : i32
    return %c0_i32, %c0_i32_0 : i32, i32
  }
  func.func @transform_3(%arg0: i32, %arg1: i32) -> (i32, i32) {
    %c0_i32 = arith.constant 0 : i32
    %c0_i32_0 = arith.constant 0 : i32
    %c0_i32_1 = arith.constant 0 : i32
    return %c0_i32, %c0_i32_0 : i32, i32
  }
  func.func @transform_4(%arg0: i32, %arg1: i32) -> (i32, i32, i32) {
    %c0_i32 = arith.constant 0 : i32
    %c0_i32_0 = arith.constant 0 : i32
    %c0_i32_1 = arith.constant 0 : i32
    return %arg0, %c0_i32, %c0_i32_0 : i32, i32, i32
  }
}

</mosaic_0001>

<llo_original>
// kernel: _lambda_.7
$region0: #{_lambda_.7}
  #allocation0 [shape = 'u32[]', space=smem, size = 0x4, offset = 0x4, fixed_abs, tag = 'smem constant byte address 0x4 - core index']
  #allocation1 [shape = 'u32[144,128]{1,0:T(1,128)}', space=vmem, size = 0x12000, scoped, tag = 'internal scratch']
  #allocation2 [shape = 'f32[1,4]{1,0:T(1,128)}', space=vmem, size = 0x200, scoped, tag = 'scratch operand']
  %s0 = inlined_call_operand.vmem [shape: f32[2,256,4], index: 0, kind: input, shape index: {}]
  %s1 = inlined_call_operand.vmem [shape: f32[4,8], index: 1, kind: input, shape index: {}]
  %s2 = inlined_call_operand.vmem [shape: f32[1,8], index: 2, kind: input, shape index: {}]
  %s3 = inlined_call_operand.vmem [shape: f32[1,8], index: 3, kind: input, shape index: {}]
  %s4 = inlined_call_operand.vmem [shape: f32[2,1,8], index: 4, kind: output, shape index: {}]
  %s5 = sld [smem:[#allocation0]]
  $region57: #{_lambda_.7} parent=0
    _
  %s7 = ssub.s32 1, %s5
  %s8 = scalar_select 0, %s7, %s5
  loop: start=0, step=1, limit=6
  $region2: #{_lambda_.7} parent=0 // loop_pre_header
    _
  $region3: #{_lambda_.7} parent=0 // loop_header
    %s10 = sphi 0, %s14
    %p11 = scmp.ge.s32.totalorder %s10, 6
    %s17 = sphi 0, %s29
    %s18 = sphi 0, %s25
    %s19 = sphi 0, %s17
    %s20 = sphi 0, %s18
    %s21 = sphi 0, %s19
    %s22 = sphi 0, %s20
    %s34 = sphi 0, %s36
    %s37 = sphi 0, %s34
    %s38 = sphi 0, %s37
    %s54 = sphi 0, %s38
    %s58 = sphi 0, %s58
    %s60 = sphi 0, %s58
    %s61 = sphi 0, %s60
    %s75 = sphi 0, %s61
    %s79 = sphi 0, %s79
    %s81 = sphi 0, %s79
    %s82 = sphi 0, %s81
    %s96 = sphi 0, %s82
    %s100 = sphi 0, %s100
    %s102 = sphi 0, %s100
    %s103 = sphi 0, %s102
    %s117 = sphi 0, %s103
    %s123 = sphi 0, %s125
    %s126 = sphi 0, %s123
    %s127 = sphi 0, %s126
    %s143 = sphi 0, %s127
  $region4: #{_lambda_.7} parent=0 // loop_header_branch
    %13 = sbr.rel (%p11) target = $region8
  $region5: #{_lambda_.7} parent=0 // loop_body
    %s15 = ssub.s32 %s10, 1
    %s16 = ssub.s32 %s10, 2
    %s23 = sadd.s32 1, %s18
    %p24 = scmp.ge.s32.totalorder %s23, 2
    %s25 = scalar_select %p24, 0, %s23
    %s26 = sadd.s32 1, %s17
    %s27 = scalar_select %p24, %s26, %s17
    %p28 = scmp.ge.s32.totalorder %s27, 2
    %s29 = scalar_select %p28, 0, %s27
    %s30 = ssub.s32 %s17, %s29
    %s31 = ssub.s32 %s18, %s25
    %s32 = sor.u32 %s30, %s31
    %p33 = scmp.eq.s32.totalorder %s32, 0
    %s35 = sadd.s32 %s34, 1
    %s36 = scalar_select %p33, %s34, %s35
    %p39 = pneg %p33
    %p40 = scmp.eq.s32.totalorder %s10, 3
    %p41 = por %p39, %p40
    %p42 = scmp.ne.s32.totalorder %s34, %s37
    %p43 = scmp.eq.s32.totalorder %s10, 0
    %p44 = por %p42, %p43
    %p45 = scmp.ne.s32.totalorder %s34, %s37
    %p46 = scmp.eq.s32.totalorder %s15, 3
    %p47 = por %p45, %p46
    %p48 = scmp.ne.s32.totalorder %s37, %s38
    %p49 = scmp.eq.s32.totalorder %s15, 0
    %p50 = por %p48, %p49
    %p51 = scmp.ne.s32.totalorder %s37, %s38
    %p52 = scmp.eq.s32.totalorder %s16, 3
    %p53 = por %p51, %p52
    %p55 = scmp.ne.s32.totalorder %s38, %s54
    %p56 = scmp.eq.s32.totalorder %s16, 0
    %p57 = por %p55, %p56
    %s59 = sadd.s32 %s58, 1
    %p62 = scmp.eq.s32.totalorder %s10, 3
    %p63 = scmp.ne.s32.totalorder %s58, %s60
    %p64 = scmp.eq.s32.totalorder %s10, 0
    %p65 = por %p63, %p64
    %p66 = scmp.ne.s32.totalorder %s58, %s60
    %p67 = scmp.eq.s32.totalorder %s15, 3
    %p68 = por %p66, %p67
    %p69 = scmp.ne.s32.totalorder %s60, %s61
    %p70 = scmp.eq.s32.totalorder %s15, 0
    %p71 = por %p69, %p70
    %p72 = scmp.ne.s32.totalorder %s60, %s61
    %p73 = scmp.eq.s32.totalorder %s16, 3
    %p74 = por %p72, %p73
    %p76 = scmp.ne.s32.totalorder %s61, %s75
    %p77 = scmp.eq.s32.totalorder %s16, 0
    %p78 = por %p76, %p77
    %s80 = sadd.s32 %s79, 1
    %p83 = scmp.eq.s32.totalorder %s10, 3
    %p84 = scmp.ne.s32.totalorder %s79, %s81
    %p85 = scmp.eq.s32.totalorder %s10, 0
    %p86 = por %p84, %p85
    %p87 = scmp.ne.s32.totalorder %s79, %s81
    %p88 = scmp.eq.s32.totalorder %s15, 3
    %p89 = por %p87, %p88
    %p90 = scmp.ne.s32.totalorder %s81, %s82
    %p91 = scmp.eq.s32.totalorder %s15, 0
    %p92 = por %p90, %p91
    %p93 = scmp.ne.s32.totalorder %s81, %s82
    %p94 = scmp.eq.s32.totalorder %s16, 3
    %p95 = por %p93, %p94
    %p97 = scmp.ne.s32.totalorder %s82, %s96
    %p98 = scmp.eq.s32.totalorder %s16, 0
    %p99 = por %p97, %p98
    %s101 = sadd.s32 %s100, 1
    %p104 = scmp.eq.s32.totalorder %s10, 3
    %p105 = scmp.ne.s32.totalorder %s100, %s102
    %p106 = scmp.eq.s32.totalorder %s10, 0
    %p107 = por %p105, %p106
    %p108 = scmp.ne.s32.totalorder %s100, %s102
    %p109 = scmp.eq.s32.totalorder %s15, 3
    %p110 = por %p108, %p109
    %p111 = scmp.ne.s32.totalorder %s102, %s103
    %p112 = scmp.eq.s32.totalorder %s15, 0
    %p113 = por %p111, %p112
    %p114 = scmp.ne.s32.totalorder %s102, %s103
    %p115 = scmp.eq.s32.totalorder %s16, 3
    %p116 = por %p114, %p115
    %p118 = scmp.ne.s32.totalorder %s103, %s117
    %p119 = scmp.eq.s32.totalorder %s16, 0
    %p120 = por %p118, %p119
    %s121 = ssub.s32 %s17, %s29
    %p122 = scmp.eq.s32.totalorder %s121, 0
    %s124 = sadd.s32 %s123, 1
    %s125 = scalar_select %p122, %s123, %s124
    %p128 = pneg %p122
    %p129 = scmp.eq.s32.totalorder %s10, 3
    %p130 = por %p128, %p129
    %p131 = scmp.ne.s32.totalorder %s123, %s126
    %p132 = scmp.eq.s32.totalorder %s10, 0
    %p133 = por %p131, %p132
    %p134 = scmp.ne.s32.totalorder %s123, %s126
    %p135 = scmp.eq.s32.totalorder %s15, 3
    %p136 = por %p134, %p135
    %p137 = scmp.ne.s32.totalorder %s126, %s127
    %p138 = scmp.eq.s32.totalorder %s15, 0
    %p139 = por %p137, %p138
    %p140 = scmp.ne.s32.totalorder %s126, %s127
    %p141 = scmp.eq.s32.totalorder %s16, 3
    %p142 = por %p140, %p141
    %p144 = scmp.ne.s32.totalorder %s127, %s143
    %p145 = scmp.eq.s32.totalorder %s16, 0
    %p146 = por %p144, %p145
    %p147 = scmp.le.s32.totalorder 1, %s10
    %p148 = scmp.lt.s32.totalorder %s10, 5
    %p149 = pnand %p147, %p148
    %p150 = pneg %p149
    // Predicated region
    $region9: #{_lambda_.7} parent=5 // pred_check
      _
    $region10: #{_lambda_.7} parent=5 // pred_check_branch
      %152 = sbr.rel (%p149) target = $region12
    $region11: #{_lambda_.7} parent=5 // pred_region
      %s153 = ssub.s32 %s10, 1
      // Predicated region
      $region13: #{_lambda_.7} parent=11 // pred_check
        %p154 = pneg %p71
      $region14: #{_lambda_.7} parent=11 // pred_check_branch
        %156 = sbr.rel (%p154) target = $region16
      $region15: #{_lambda_.7} parent=11 // pred_region
        _
      $region16: #{_lambda_.7} parent=11 // pred_fallthru
        _
      // Predicated region
      $region17: #{_lambda_.7} parent=11 // pred_check
        %p157 = pneg %p92
      $region18: #{_lambda_.7} parent=11 // pred_check_branch
        %159 = sbr.rel (%p157) target = $region20
      $region19: #{_lambda_.7} parent=11 // pred_region
        _
      $region20: #{_lambda_.7} parent=11 // pred_fallthru
        _
      // Predicated region
      $region21: #{_lambda_.7} parent=11 // pred_check
        %p160 = pneg %p113
      $region22: #{_lambda_.7} parent=11 // pred_check_branch
        %162 = sbr.rel (%p160) target = $region24
      $region23: #{_lambda_.7} parent=11 // pred_region
        _
      $region24: #{_lambda_.7} parent=11 // pred_fallthru
        _
    $region12: #{_lambda_.7} parent=5 // pred_fallthru
      _
    %p163 = scmp.lt.s32.totalorder %s10, 4
    // Predicated region
    $region25: #{_lambda_.7} parent=5 // pred_check
      %p164 = pneg %p163
    $region26: #{_lambda_.7} parent=5 // pred_check_branch
      %166 = sbr.rel (%p164) target = $region28
    $region27: #{_lambda_.7} parent=5 // pred_region
      // Predicated region
      $region29: #{_lambda_.7} parent=27 // pred_check
        %p167 = pneg %p44
      $region30: #{_lambda_.7} parent=27 // pred_check_branch
        %169 = sbr.rel (%p167) target = $region32
      $region31: #{_lambda_.7} parent=27 // pred_region
        %s170 = smul.u32 16, %s18
        %p171 = scmp.lt.s32.totalorder %s17, 1
        %s172 = scalar_select %p171, %s17, 1
        %p173 = scmp.lt.s32.totalorder %s170, 31
        %s174 = scalar_select %p173, %s170, 31
        %s175 = smul.addr %s172, 32
        %s176 = sadd.s32 %s174, %s175
        %s177 = smul.addr %s176, 8
        %s178 = scalar_lea.vmem %s0, %s177
        %s179 = smul.u32 16, %s18
      $region32: #{_lambda_.7} parent=27 // pred_fallthru
        _
    $region28: #{_lambda_.7} parent=5 // pred_fallthru
      _
    %p180 = scmp.le.s32.totalorder 1, %s10
    %p181 = scmp.lt.s32.totalorder %s10, 5
    %p182 = pnand %p180, %p181
    %p183 = pneg %p182
    // Predicated region
    $region33: #{_lambda_.7} parent=5 // pred_check
      _
    $region34: #{_lambda_.7} parent=5 // pred_check_branch
      %185 = sbr.rel (%p182) target = $region36
    $region35: #{_lambda_.7} parent=5 // pred_region
      %s186 = ssub.s32 %s10, 1
      %s187 = smul.u32 16, %s20
      %p188 = scmp.lt.s32.totalorder %s19, 1
      %s189 = scalar_select %p188, %s19, 1
      %p190 = scmp.lt.s32.totalorder %s187, 31
      %s191 = scalar_select %p190, %s187, 31
      %s192 = smul.addr %s189, 32
      %s193 = sadd.s32 %s191, %s192
      %s194 = smul.addr %s193, 8
      %s195 = scalar_lea.vmem %s0, %s194
      %p196 = pneg %p50
      %p197 = pneg %p47
      %p198 = pneg %p71
      %p199 = pneg %p68
      %p200 = pneg %p92
      %p201 = pneg %p89
      %p202 = pneg %p113
      %p203 = pneg %p110
      %p204 = pneg %p139
      %p205 = pneg %p136
      %p206 = scmp.lt.s32.totalorder %s19, 1
      %s207 = scalar_select %p206, %s19, 1
      %s208 = scalar_lea.vmem %s4, %s207
      %s209 = smul.u32 16, %s20
      %p210 = scmp.lt.s32.totalorder %s19, 1
      %s211 = scalar_select %p210, %s19, 1
      %p212 = scmp.lt.s32.totalorder %s209, 31
      %s213 = scalar_select %p212, %s209, 31
      %s214 = smul.addr %s211, 32
      %s215 = sadd.s32 %s213, %s214
      %s216 = smul.addr %s215, 8
      %s217 = scalar_lea.vmem %s0, %s216
      %s218 = smul.u32 16, %s20
      %p219 = scmp.lt.s32.totalorder %s19, 1
      %s220 = scalar_select %p219, %s19, 1
      %s221 = scalar_lea.vmem %s4, %s220
      %p222 = scmp.eq.s32.totalorder %s20, 0
      // Predicated region
      $region37: #{_lambda_.7} parent=35 // pred_check
        %p223 = pneg %p222
      $region38: #{_lambda_.7} parent=35 // pred_check_branch
        %225 = sbr.rel (%p223) target = $region40
      $region39: #{_lambda_.7} parent=35 // pred_region
        %vm226 = vcmask 24576
        %227 = vst.msk [vmem:[#allocation2] sm:$0x1] %vm226, 0.0
      $region40: #{_lambda_.7} parent=35 // pred_fallthru
        _
      %v228 = vld [vmem:[%s217] sm:$0xff]
      %v229 = vld [vmem:[%s217 + $0x8] sm:$0xff]
      %v230 = vld [vmem:[%s217 + $0x10] sm:$0xff]
      %v231 = vld [vmem:[%s217 + $0x18] sm:$0xff]
      %v232 = vld [vmem:[%s217 + $0x20] sm:$0xff]
      %v233 = vld [vmem:[%s217 + $0x28] sm:$0xff]
      %v234 = vld [vmem:[%s217 + $0x30] sm:$0xff]
      %v235 = vld [vmem:[%s217 + $0x38] sm:$0xff]
      %v236 = vld [vmem:[%s217 + $0x40] sm:$0xff]
      %v237 = vld [vmem:[%s217 + $0x48] sm:$0xff]
      %v238 = vld [vmem:[%s217 + $0x50] sm:$0xff]
      %v239 = vld [vmem:[%s217 + $0x58] sm:$0xff]
      %v240 = vld [vmem:[%s217 + $0x60] sm:$0xff]
      %v241 = vld [vmem:[%s217 + $0x68] sm:$0xff]
      %v242 = vld [vmem:[%s217 + $0x70] sm:$0xff]
      %v243 = vld [vmem:[%s217 + $0x78] sm:$0xff]
      %v244 = vld [vmem:[#allocation2] sm:$0x1]
      %vm245 = vcmask 31744
      %v246 = vsel %vm245, %v228, 0.0
      %v247 = vsel %vm245, %v229, 0.0
      %v248 = vadd.f32 %v246, %v247
      %v249 = vsel %vm245, %v230, 0.0
      %v250 = vadd.f32 %v248, %v249
      %v251 = vsel %vm245, %v231, 0.0
      %v252 = vadd.f32 %v250, %v251
      %v253 = vsel %vm245, %v232, 0.0
      %v254 = vadd.f32 %v252, %v253
      %v255 = vsel %vm245, %v233, 0.0
      %v256 = vadd.f32 %v254, %v255
      %v257 = vsel %vm245, %v234, 0.0
      %v258 = vadd.f32 %v256, %v257
      %v259 = vsel %vm245, %v235, 0.0
      %v260 = vadd.f32 %v258, %v259
      %v261 = vsel %vm245, %v236, 0.0
      %v262 = vadd.f32 %v260, %v261
      %v263 = vsel %vm245, %v237, 0.0
      %v264 = vadd.f32 %v262, %v263
      %v265 = vsel %vm245, %v238, 0.0
      %v266 = vadd.f32 %v264, %v265
      %v267 = vsel %vm245, %v239, 0.0
      %v268 = vadd.f32 %v266, %v267
      %v269 = vsel %vm245, %v240, 0.0
      %v270 = vadd.f32 %v268, %v269
      %v271 = vsel %vm245, %v241, 0.0
      %v272 = vadd.f32 %v270, %v271
      %v273 = vsel %vm245, %v242, 0.0
      %v274 = vadd.f32 %v272, %v273
      %v275 = vsel %vm245, %v243, 0.0
      %v276 = vadd.f32 %v274, %v275
      %v277 = vrot.slane %v276, 4
      %v278 = vadd.f32 %v276, %v277
      %v279 = vrot.slane %v278, 2
      %v280 = vadd.f32 %v278, %v279
      %v281 = vrot.slane %v280, 1
      %v282 = vadd.f32 %v280, %v281
      %v283 = vadd.f32 %v244, %v282
      %vm284 = vcmask 24576
      %285 = vst.msk [vmem:[#allocation2] sm:$0x1] %vm284, %v283
      %p286 = scmp.eq.s32.totalorder %s20, 1
      // Predicated region
      $region41: #{_lambda_.7} parent=35 // pred_check
        %p287 = pneg %p286
      $region42: #{_lambda_.7} parent=35 // pred_check_branch
        %289 = sbr.rel (%p287) target = $region44
      $region43: #{_lambda_.7} parent=35 // pred_region
        %v290 = vld [vmem:[#allocation2] sm:$0x1]
        %v291 = vmul.f32 %v290, 0.00390625
        %v292 = vld [vmem:[%s1] sm:$0xf]
        %v294 = vsel %vm245, %v291, 0
        %vm296 = vcmask 1043456
        %v298 = vsel %vm296, %v292, 0
        %300 = vmatprep.subr.mxu0 0.0
        %301 = vmatpush1.msra.mxu0 0.0
        %302 = vmatprep.subr.mxu0 0.0
        %303 = vmatpush1.msra.mxu0 0.0
        %304 = vmatprep.subr.mxu0 0.0
        %305 = vmatpush1.msra.mxu0 0.0
        %306 = vmatprep.subr.mxu0 0.0
        %307 = vmatpush1.msra.mxu0 0.0
        %308 = vmatprep.subr.mxu0 0.0
        %309 = vmatpush1.msra.mxu0 0.0
        %310 = vmatprep.subr.mxu0 0.0
        %311 = vmatpush1.msra.mxu0 0.0
        %312 = vmatprep.subr.mxu0 0.0
        %313 = vmatpush1.msra.mxu0 0.0
        %314 = vmatprep.subr.mxu0 0.0
        %315 = vmatpush1.msra.mxu0 0.0
        %316 = vmatprep.subr.mxu0 0.0
        %317 = vmatpush1.msra.mxu0 0.0
        %318 = vmatprep.subr.mxu0 0.0
        %319 = vmatpush1.msra.mxu0 0.0
        %320 = vmatprep.subr.mxu0 0.0
        %321 = vmatpush1.msra.mxu0 0.0
        %322 = vmatprep.subr.mxu0 0.0
        %323 = vmatpush1.msra.mxu0 0.0
        %324 = vmatprep.subr.mxu0 0.0
        %325 = vmatpush1.msra.mxu0 0.0
        %326 = vmatprep.subr.mxu0 0.0
        %327 = vmatpush1.msra.mxu0 0.0
        %328 = vmatprep.subr.mxu0 0.0
        %329 = vmatpush1.msra.mxu0 0.0
        %330 = vmatprep.subr.mxu0 0.0
        %331 = vmatpush1.msra.mxu0 %v298
        %332 = vmatprep.subr.mxu0 0.0
        %333 = vmatpush2.msra.mxu0 0.0
        %334 = vmatprep.subr.mxu0 0.0
        %335 = vmatpush2.msra.mxu0 0.0
        %336 = vmatprep.subr.mxu0 0.0
        %337 = vmatpush2.msra.mxu0 0.0
        %338 = vmatprep.subr.mxu0 0.0
        %339 = vmatpush2.msra.mxu0 0.0
        %340 = vmatprep.subr.mxu0 0.0
        %341 = vmatpush2.msra.mxu0 0.0
        %342 = vmatprep.subr.mxu0 0.0
        %343 = vmatpush2.msra.mxu0 0.0
        %344 = vmatprep.subr.mxu0 0.0
        %345 = vmatpush2.msra.mxu0 0.0
        %346 = vmatprep.subr.mxu0 0.0
        %347 = vmatpush2.msra.mxu0 0.0
        %348 = vmatprep.subr.mxu0 0.0
        %349 = vmatpush2.msra.mxu0 0.0
        %350 = vmatprep.subr.mxu0 0.0
        %351 = vmatpush2.msra.mxu0 0.0
        %352 = vmatprep.subr.mxu0 0.0
        %353 = vmatpush2.msra.mxu0 0.0
        %354 = vmatprep.subr.mxu0 0.0
        %355 = vmatpush2.msra.mxu0 0.0
        %356 = vmatprep.subr.mxu0 0.0
        %357 = vmatpush2.msra.mxu0 0.0
        %358 = vmatprep.subr.mxu0 0.0
        %359 = vmatpush2.msra.mxu0 0.0
        %360 = vmatprep.subr.mxu0 0.0
        %361 = vmatpush2.msra.mxu0 0.0
        %362 = vmatprep.subr.mxu0 0.0
        %363 = vmatpush2.msra.mxu0 0.0
        %364 = vmatprep.mubr.f32.mxu0 0.0
        %365 = vmatmul.mubr.f32.gmra.mxu0 %v294
        %v366 = vpop.f32.mrf.mxu0
        %v367 = vadd.f32 0.0, %v366
        %v368 = vpop.f32.mrf.mxu0
        %369 = vdwg.mxu0
        %v370 = vld [vmem:[%s2] sm:$0x1]
        %v371 = vmul.f32 %v367, %v370
        %v372 = vld [vmem:[%s3] sm:$0x1]
        %v373 = vadd.f32 %v371, %v372
        %v374 = vmax.f32 %v373, 0.0
        %vm375 = vcmask 57344
        %376 = vst.msk [vmem:[%s221] sm:$0x1] %vm375, %v374
      $region44: #{_lambda_.7} parent=35 // pred_fallthru
        _
      %p377 = scmp.lt.s32.totalorder %s19, 1
      %s378 = scalar_select %p377, %s19, 1
      %s379 = scalar_lea.vmem %s4, %s378
      // Predicated region
      $region45: #{_lambda_.7} parent=35 // pred_check
        %p380 = pneg %p136
      $region46: #{_lambda_.7} parent=35 // pred_check_branch
        %382 = sbr.rel (%p380) target = $region48
      $region47: #{_lambda_.7} parent=35 // pred_region
        _
      $region48: #{_lambda_.7} parent=35 // pred_fallthru
        _
    $region36: #{_lambda_.7} parent=5 // pred_fallthru
      _
    %p383 = scmp.le.s32.totalorder 2, %s10
    // Predicated region
    $region49: #{_lambda_.7} parent=5 // pred_check
      %p384 = pneg %p383
    $region50: #{_lambda_.7} parent=5 // pred_check_branch
      %386 = sbr.rel (%p384) target = $region52
    $region51: #{_lambda_.7} parent=5 // pred_region
      %s387 = ssub.s32 %s10, 2
      // Predicated region
      $region53: #{_lambda_.7} parent=51 // pred_check
        %p388 = pneg %p142
      $region54: #{_lambda_.7} parent=51 // pred_check_branch
        %390 = sbr.rel (%p388) target = $region56
      $region55: #{_lambda_.7} parent=51 // pred_region
        %p391 = scmp.lt.s32.totalorder %s21, 1
        %s392 = scalar_select %p391, %s21, 1
        %s393 = scalar_lea.vmem %s4, %s392
      $region56: #{_lambda_.7} parent=51 // pred_fallthru
        _
    $region52: #{_lambda_.7} parent=5 // pred_fallthru
      _
  $region6: #{_lambda_.7} parent=0 // loop_footer
    %s14 = sadd.s32 1, %s10
  $region7: #{_lambda_.7} parent=0 // loop_footer_branch
    %9 = sbr.rel target = $region3
  $region8: #{_lambda_.7} parent=0 // loop_exit
    _

// kernel: _lambda_.4
$region0: #{_lambda_.4}
  #allocation0 [shape = 'u32[]', space=smem, size = 0x4, offset = 0x4, fixed_abs, tag = 'smem constant byte address 0x4 - core index']
  #allocation1 [shape = 'u32[144,128]{1,0:T(1,128)}', space=vmem, size = 0x12000, scoped, tag = 'internal scratch']
  %s0 = inlined_call_operand.vmem [shape: f32[512,4], index: 0, kind: input, shape index: {}]
  %s1 = inlined_call_operand.vmem [shape: f32[4,8], index: 1, kind: input, shape index: {}]
  %s2 = inlined_call_operand.vmem [shape: f32[1,8], index: 2, kind: input, shape index: {}]
  %s3 = inlined_call_operand.vmem [shape: f32[1,8], index: 3, kind: input, shape index: {}]
  %s4 = inlined_call_operand.vmem [shape: f32[512,8], index: 4, kind: output, shape index: {}]
  %s5 = sld [smem:[#allocation0]]
  $region26: #{_lambda_.4} parent=0
    _
  %s7 = ssub.s32 1, %s5
  %s8 = scalar_select 0, %s7, %s5
  // Predicated region
  $region2: #{_lambda_.4} parent=0 // pred_check
    _
  $region3: #{_lambda_.4} parent=0 // pred_check_branch
    %10 = sbr.rel (0) target = $region5
  $region4: #{_lambda_.4} parent=0 // pred_region
    _
  $region5: #{_lambda_.4} parent=0 // pred_fallthru
    _
  // Predicated region
  $region6: #{_lambda_.4} parent=0 // pred_check
    _
  $region7: #{_lambda_.4} parent=0 // pred_check_branch
    %12 = sbr.rel (0) target = $region9
  $region8: #{_lambda_.4} parent=0 // pred_region
    _
  $region9: #{_lambda_.4} parent=0 // pred_fallthru
    _
  // Predicated region
  $region10: #{_lambda_.4} parent=0 // pred_check
    _
  $region11: #{_lambda_.4} parent=0 // pred_check_branch
    %14 = sbr.rel (0) target = $region13
  $region12: #{_lambda_.4} parent=0 // pred_region
    _
  $region13: #{_lambda_.4} parent=0 // pred_fallthru
    _
  // Predicated region
  $region14: #{_lambda_.4} parent=0 // pred_check
    _
  $region15: #{_lambda_.4} parent=0 // pred_check_branch
    %16 = sbr.rel (0) target = $region17
  $region16: #{_lambda_.4} parent=0 // pred_region
    _
  $region17: #{_lambda_.4} parent=0 // pred_fallthru
    _
  %v17 = vld [vmem:[%s0] sm:$0xff]
  %v18 = vld [vmem:[%s0 + $0x8] sm:$0xff]
  %v19 = vld [vmem:[%s0 + $0x10] sm:$0xff]
  %v20 = vld [vmem:[%s0 + $0x18] sm:$0xff]
  %v21 = vld [vmem:[%s0 + $0x20] sm:$0xff]
  %v22 = vld [vmem:[%s0 + $0x28] sm:$0xff]
  %v23 = vld [vmem:[%s0 + $0x30] sm:$0xff]
  %v24 = vld [vmem:[%s0 + $0x38] sm:$0xff]
  %v25 = vld [vmem:[%s0 + $0x40] sm:$0xff]
  %v26 = vld [vmem:[%s0 + $0x48] sm:$0xff]
  %v27 = vld [vmem:[%s0 + $0x50] sm:$0xff]
  %v28 = vld [vmem:[%s0 + $0x58] sm:$0xff]
  %v29 = vld [vmem:[%s0 + $0x60] sm:$0xff]
  %v30 = vld [vmem:[%s0 + $0x68] sm:$0xff]
  %v31 = vld [vmem:[%s0 + $0x70] sm:$0xff]
  %v32 = vld [vmem:[%s0 + $0x78] sm:$0xff]
  %v33 = vld [vmem:[%s0 + $0x80] sm:$0xff]
  %v34 = vld [vmem:[%s0 + $0x88] sm:$0xff]
  %v35 = vld [vmem:[%s0 + $0x90] sm:$0xff]
  %v36 = vld [vmem:[%s0 + $0x98] sm:$0xff]
  %v37 = vld [vmem:[%s0 + $0xa0] sm:$0xff]
  %v38 = vld [vmem:[%s0 + $0xa8] sm:$0xff]
  %v39 = vld [vmem:[%s0 + $0xb0] sm:$0xff]
  %v40 = vld [vmem:[%s0 + $0xb8] sm:$0xff]
  %v41 = vld [vmem:[%s0 + $0xc0] sm:$0xff]
  %v42 = vld [vmem:[%s0 + $0xc8] sm:$0xff]
  %v43 = vld [vmem:[%s0 + $0xd0] sm:$0xff]
  %v44 = vld [vmem:[%s0 + $0xd8] sm:$0xff]
  %v45 = vld [vmem:[%s0 + $0xe0] sm:$0xff]
  %v46 = vld [vmem:[%s0 + $0xe8] sm:$0xff]
  %v47 = vld [vmem:[%s0 + $0xf0] sm:$0xff]
  %v48 = vld [vmem:[%s0 + $0xf8] sm:$0xff]
  %v49 = vld [vmem:[%s0 + $0x100] sm:$0xff]
  %v50 = vld [vmem:[%s0 + $0x108] sm:$0xff]
  %v51 = vld [vmem:[%s0 + $0x110] sm:$0xff]
  %v52 = vld [vmem:[%s0 + $0x118] sm:$0xff]
  %v53 = vld [vmem:[%s0 + $0x120] sm:$0xff]
  %v54 = vld [vmem:[%s0 + $0x128] sm:$0xff]
  %v55 = vld [vmem:[%s0 + $0x130] sm:$0xff]
  %v56 = vld [vmem:[%s0 + $0x138] sm:$0xff]
  %v57 = vld [vmem:[%s0 + $0x140] sm:$0xff]
  %v58 = vld [vmem:[%s0 + $0x148] sm:$0xff]
  %v59 = vld [vmem:[%s0 + $0x150] sm:$0xff]
  %v60 = vld [vmem:[%s0 + $0x158] sm:$0xff]
  %v61 = vld [vmem:[%s0 + $0x160] sm:$0xff]
  %v62 = vld [vmem:[%s0 + $0x168] sm:$0xff]
  %v63 = vld [vmem:[%s0 + $0x170] sm:$0xff]
  %v64 = vld [vmem:[%s0 + $0x178] sm:$0xff]
  %v65 = vld [vmem:[%s0 + $0x180] sm:$0xff]
  %v66 = vld [vmem:[%s0 + $0x188] sm:$0xff]
  %v67 = vld [vmem:[%s0 + $0x190] sm:$0xff]
  %v68 = vld [vmem:[%s0 + $0x198] sm:$0xff]
  %v69 = vld [vmem:[%s0 + $0x1a0] sm:$0xff]
  %v70 = vld [vmem:[%s0 + $0x1a8] sm:$0xff]
  %v71 = vld [vmem:[%s0 + $0x1b0] sm:$0xff]
  %v72 = vld [vmem:[%s0 + $0x1b8] sm:$0xff]
  %v73 = vld [vmem:[%s0 + $0x1c0] sm:$0xff]
  %v74 = vld [vmem:[%s0 + $0x1c8] sm:$0xff]
  %v75 = vld [vmem:[%s0 + $0x1d0] sm:$0xff]
  %v76 = vld [vmem:[%s0 + $0x1d8] sm:$0xff]
  %v77 = vld [vmem:[%s0 + $0x1e0] sm:$0xff]
  %v78 = vld [vmem:[%s0 + $0x1e8] sm:$0xff]
  %v79 = vld [vmem:[%s0 + $0x1f0] sm:$0xff]
  %v80 = vld [vmem:[%s0 + $0x1f8] sm:$0xff]
  %v81 = vld [vmem:[%s1] sm:$0xf]
  %vm82 = vcmask 31744
  %v84 = vsel %vm82, %v17, 0
  %v87 = vsel %vm82, %v18, 0
  %v90 = vsel %vm82, %v19, 0
  %v93 = vsel %vm82, %v20, 0
  %v96 = vsel %vm82, %v21, 0
  %v99 = vsel %vm82, %v22, 0
  %v102 = vsel %vm82, %v23, 0
  %v105 = vsel %vm82, %v24, 0
  %v108 = vsel %vm82, %v25, 0
  %v111 = vsel %vm82, %v26, 0
  %v114 = vsel %vm82, %v27, 0
  %v117 = vsel %vm82, %v28, 0
  %v120 = vsel %vm82, %v29, 0
  %v123 = vsel %vm82, %v30, 0
  %v126 = vsel %vm82, %v31, 0
  %v129 = vsel %vm82, %v32, 0
  %v132 = vsel %vm82, %v33, 0
  %v135 = vsel %vm82, %v34, 0
  %v138 = vsel %vm82, %v35, 0
  %v141 = vsel %vm82, %v36, 0
  %v144 = vsel %vm82, %v37, 0
  %v147 = vsel %vm82, %v38, 0
  %v150 = vsel %vm82, %v39, 0
  %v153 = vsel %vm82, %v40, 0
  %v156 = vsel %vm82, %v41, 0
  %v159 = vsel %vm82, %v42, 0
  %v162 = vsel %vm82, %v43, 0
  %v165 = vsel %vm82, %v44, 0
  %v168 = vsel %vm82, %v45, 0
  %v171 = vsel %vm82, %v46, 0
  %v174 = vsel %vm82, %v47, 0
  %v177 = vsel %vm82, %v48, 0
  %v180 = vsel %vm82, %v49, 0
  %v183 = vsel %vm82, %v50, 0
  %v186 = vsel %vm82, %v51, 0
  %v189 = vsel %vm82, %v52, 0
  %v192 = vsel %vm82, %v53, 0
  %v195 = vsel %vm82, %v54, 0
  %v198 = vsel %vm82, %v55, 0
  %v201 = vsel %vm82, %v56, 0
  %v204 = vsel %vm82, %v57, 0
  %v207 = vsel %vm82, %v58, 0
  %v210 = vsel %vm82, %v59, 0
  %v213 = vsel %vm82, %v60, 0
  %v216 = vsel %vm82, %v61, 0
  %v219 = vsel %vm82, %v62, 0
  %v222 = vsel %vm82, %v63, 0
  %v225 = vsel %vm82, %v64, 0
  %v228 = vsel %vm82, %v65, 0
  %v231 = vsel %vm82, %v66, 0
  %v234 = vsel %vm82, %v67, 0
  %v237 = vsel %vm82, %v68, 0
  %v240 = vsel %vm82, %v69, 0
  %v243 = vsel %vm82, %v70, 0
  %v246 = vsel %vm82, %v71, 0
  %v249 = vsel %vm82, %v72, 0
  %v252 = vsel %vm82, %v73, 0
  %v255 = vsel %vm82, %v74, 0
  %v258 = vsel %vm82, %v75, 0
  %v261 = vsel %vm82, %v76, 0
  %v264 = vsel %vm82, %v77, 0
  %v267 = vsel %vm82, %v78, 0
  %v270 = vsel %vm82, %v79, 0
  %v273 = vsel %vm82, %v80, 0
  %vm275 = vcmask 1043456
  %v277 = vsel %vm275, %v81, 0
  %279 = vmatprep.subr.mxu0 0.0
  %280 = vmatpush1.msra.mxu0 0.0
  %281 = vmatprep.subr.mxu0 0.0
  %282 = vmatpush1.msra.mxu0 0.0
  %283 = vmatprep.subr.mxu0 0.0
  %284 = vmatpush1.msra.mxu0 0.0
  %285 = vmatprep.subr.mxu0 0.0
  %286 = vmatpush1.msra.mxu0 0.0
  %287 = vmatprep.subr.mxu0 0.0
  %288 = vmatpush1.msra.mxu0 0.0
  %289 = vmatprep.subr.mxu0 0.0
  %290 = vmatpush1.msra.mxu0 0.0
  %291 = vmatprep.subr.mxu0 0.0
  %292 = vmatpush1.msra.mxu0 0.0
  %293 = vmatprep.subr.mxu0 0.0
  %294 = vmatpush1.msra.mxu0 0.0
  %295 = vmatprep.subr.mxu0 0.0
  %296 = vmatpush1.msra.mxu0 0.0
  %297 = vmatprep.subr.mxu0 0.0
  %298 = vmatpush1.msra.mxu0 0.0
  %299 = vmatprep.subr.mxu0 0.0
  %300 = vmatpush1.msra.mxu0 0.0
  %301 = vmatprep.subr.mxu0 0.0
  %302 = vmatpush1.msra.mxu0 0.0
  %303 = vmatprep.subr.mxu0 0.0
  %304 = vmatpush1.msra.mxu0 0.0
  %305 = vmatprep.subr.mxu0 0.0
  %306 = vmatpush1.msra.mxu0 0.0
  %307 = vmatprep.subr.mxu0 0.0
  %308 = vmatpush1.msra.mxu0 0.0
  %309 = vmatprep.subr.mxu0 0.0
  %310 = vmatpush1.msra.mxu0 %v277
  %311 = vmatprep.subr.mxu0 0.0
  %312 = vmatpush2.msra.mxu0 0.0
  %313 = vmatprep.subr.mxu0 0.0
  %314 = vmatpush2.msra.mxu0 0.0
  %315 = vmatprep.subr.mxu0 0.0
  %316 = vmatpush2.msra.mxu0 0.0
  %317 = vmatprep.subr.mxu0 0.0
  %318 = vmatpush2.msra.mxu0 0.0
  %319 = vmatprep.subr.mxu0 0.0
  %320 = vmatpush2.msra.mxu0 0.0
  %321 = vmatprep.subr.mxu0 0.0
  %322 = vmatpush2.msra.mxu0 0.0
  %323 = vmatprep.subr.mxu0 0.0
  %324 = vmatpush2.msra.mxu0 0.0
  %325 = vmatprep.subr.mxu0 0.0
  %326 = vmatpush2.msra.mxu0 0.0
  %327 = vmatprep.subr.mxu0 0.0
  %328 = vmatpush2.msra.mxu0 0.0
  %329 = vmatprep.subr.mxu0 0.0
  %330 = vmatpush2.msra.mxu0 0.0
  %331 = vmatprep.subr.mxu0 0.0
  %332 = vmatpush2.msra.mxu0 0.0
  %333 = vmatprep.subr.mxu0 0.0
  %334 = vmatpush2.msra.mxu0 0.0
  %335 = vmatprep.subr.mxu0 0.0
  %336 = vmatpush2.msra.mxu0 0.0
  %337 = vmatprep.subr.mxu0 0.0
  %338 = vmatpush2.msra.mxu0 0.0
  %339 = vmatprep.subr.mxu0 0.0
  %340 = vmatpush2.msra.mxu0 0.0
  %341 = vmatprep.subr.mxu0 0.0
  %342 = vmatpush2.msra.mxu0 0.0
  %343 = vmatprep.mubr.f32.mxu0 0.0
  %344 = vmatmul.mubr.f32.gmra.mxu0 %v84
  %v345 = vpop.f32.mrf.mxu0
  %v346 = vadd.f32 0.0, %v345
  %v347 = vpop.f32.mrf.mxu0
  %348 = vmatprep.mubr.f32.mxu0 0.0
  %349 = vmatmul.mubr.f32.gmra.mxu0 %v87
  %v350 = vpop.f32.mrf.mxu0
  %v351 = vadd.f32 0.0, %v350
  %v352 = vpop.f32.mrf.mxu0
  %353 = vmatprep.mubr.f32.mxu0 0.0
  %354 = vmatmul.mubr.f32.gmra.mxu0 %v90
  %v355 = vpop.f32.mrf.mxu0
  %v356 = vadd.f32 0.0, %v355
  %v357 = vpop.f32.mrf.mxu0
  %358 = vmatprep.mubr.f32.mxu0 0.0
  %359 = vmatmul.mubr.f32.gmra.mxu0 %v93
  %v360 = vpop.f32.mrf.mxu0
  %v361 = vadd.f32 0.0, %v360
  %v362 = vpop.f32.mrf.mxu0
  %363 = vmatprep.mubr.f32.mxu0 0.0
  %364 = vmatmul.mubr.f32.gmra.mxu0 %v96
  %v365 = vpop.f32.mrf.mxu0
  %v366 = vadd.f32 0.0, %v365
  %v367 = vpop.f32.mrf.mxu0
  %368 = vmatprep.mubr.f32.mxu0 0.0
  %369 = vmatmul.mubr.f32.gmra.mxu0 %v99
  %v370 = vpop.f32.mrf.mxu0
  %v371 = vadd.f32 0.0, %v370
  %v372 = vpop.f32.mrf.mxu0
  %373 = vmatprep.mubr.f32.mxu0 0.0
  %374 = vmatmul.mubr.f32.gmra.mxu0 %v102
  %v375 = vpop.f32.mrf.mxu0
  %v376 = vadd.f32 0.0, %v375
  %v377 = vpop.f32.mrf.mxu0
  %378 = vmatprep.mubr.f32.mxu0 0.0
  %379 = vmatmul.mubr.f32.gmra.mxu0 %v105
  %v380 = vpop.f32.mrf.mxu0
  %v381 = vadd.f32 0.0, %v380
  %v382 = vpop.f32.mrf.mxu0
  %383 = vmatprep.mubr.f32.mxu0 0.0
  %384 = vmatmul.mubr.f32.gmra.mxu0 %v108
  %v385 = vpop.f32.mrf.mxu0
  %v386 = vadd.f32 0.0, %v385
  %v387 = vpop.f32.mrf.mxu0
  %388 = vmatprep.mubr.f32.mxu0 0.0
  %389 = vmatmul.mubr.f32.gmra.mxu0 %v111
  %v390 = vpop.f32.mrf.mxu0
  %v391 = vadd.f32 0.0, %v390
  %v392 = vpop.f32.mrf.mxu0
  %393 = vmatprep.mubr.f32.mxu0 0.0
  %394 = vmatmul.mubr.f32.gmra.mxu0 %v114
  %v395 = vpop.f32.mrf.mxu0
  %v396 = vadd.f32 0.0, %v395
  %v397 = vpop.f32.mrf.mxu0
  %398 = vmatprep.mubr.f32.mxu0 0.0
  %399 = vmatmul.mubr.f32.gmra.mxu0 %v117
  %v400 = vpop.f32.mrf.mxu0
  %v401 = vadd.f32 0.0, %v400
  %v402 = vpop.f32.mrf.mxu0
  %403 = vmatprep.mubr.f32.mxu0 0.0
  %404 = vmatmul.mubr.f32.gmra.mxu0 %v120
  %v405 = vpop.f32.mrf.mxu0
  %v406 = vadd.f32 0.0, %v405
  %v407 = vpop.f32.mrf.mxu0
  %408 = vmatprep.mubr.f32.mxu0 0.0
  %409 = vmatmul.mubr.f32.gmra.mxu0 %v123
  %v410 = vpop.f32.mrf.mxu0
  %v411 = vadd.f32 0.0, %v410
  %v412 = vpop.f32.mrf.mxu0
  %413 = vmatprep.mubr.f32.mxu0 0.0
  %414 = vmatmul.mubr.f32.gmra.mxu0 %v126
  %v415 = vpop.f32.mrf.mxu0
  %v416 = vadd.f32 0.0, %v415
  %v417 = vpop.f32.mrf.mxu0
  %418 = vmatprep.mubr.f32.mxu0 0.0
  %419 = vmatmul.mubr.f32.gmra.mxu0 %v129
  %v420 = vpop.f32.mrf.mxu0
  %v421 = vadd.f32 0.0, %v420
  %v422 = vpop.f32.mrf.mxu0
  %423 = vmatprep.mubr.f32.mxu0 0.0
  %424 = vmatmul.mubr.f32.gmra.mxu0 %v132
  %v425 = vpop.f32.mrf.mxu0
  %v426 = vadd.f32 0.0, %v425
  %v427 = vpop.f32.mrf.mxu0
  %428 = vmatprep.mubr.f32.mxu0 0.0
  %429 = vmatmul.mubr.f32.gmra.mxu0 %v135
  %v430 = vpop.f32.mrf.mxu0
  %v431 = vadd.f32 0.0, %v430
  %v432 = vpop.f32.mrf.mxu0
  %433 = vmatprep.mubr.f32.mxu0 0.0
  %434 = vmatmul.mubr.f32.gmra.mxu0 %v138
  %v435 = vpop.f32.mrf.mxu0
  %v436 = vadd.f32 0.0, %v435
  %v437 = vpop.f32.mrf.mxu0
  %438 = vmatprep.mubr.f32.mxu0 0.0
  %439 = vmatmul.mubr.f32.gmra.mxu0 %v141
  %v440 = vpop.f32.mrf.mxu0
  %v441 = vadd.f32 0.0, %v440
  %v442 = vpop.f32.mrf.mxu0
  %443 = vmatprep.mubr.f32.mxu0 0.0
  %444 = vmatmul.mubr.f32.gmra.mxu0 %v144
  %v445 = vpop.f32.mrf.mxu0
  %v446 = vadd.f32 0.0, %v445
  %v447 = vpop.f32.mrf.mxu0
  %448 = vmatprep.mubr.f32.mxu0 0.0
  %449 = vmatmul.mubr.f32.gmra.mxu0 %v147
  %v450 = vpop.f32.mrf.mxu0
  %v451 = vadd.f32 0.0, %v450
  %v452 = vpop.f32.mrf.mxu0
  %453 = vmatprep.mubr.f32.mxu0 0.0
  %454 = vmatmul.mubr.f32.gmra.mxu0 %v150
  %v455 = vpop.f32.mrf.mxu0
  %v456 = vadd.f32 0.0, %v455
  %v457 = vpop.f32.mrf.mxu0
  %458 = vmatprep.mubr.f32.mxu0 0.0
  %459 = vmatmul.mubr.f32.gmra.mxu0 %v153
  %v460 = vpop.f32.mrf.mxu0
  %v461 = vadd.f32 0.0, %v460
  %v462 = vpop.f32.mrf.mxu0
  %463 = vmatprep.mubr.f32.mxu0 0.0
  %464 = vmatmul.mubr.f32.gmra.mxu0 %v156
  %v465 = vpop.f32.mrf.mxu0
  %v466 = vadd.f32 0.0, %v465
  %v467 = vpop.f32.mrf.mxu0
  %468 = vmatprep.mubr.f32.mxu0 0.0
  %469 = vmatmul.mubr.f32.gmra.mxu0 %v159
  %v470 = vpop.f32.mrf.mxu0
  %v471 = vadd.f32 0.0, %v470
  %v472 = vpop.f32.mrf.mxu0
  %473 = vmatprep.mubr.f32.mxu0 0.0
  %474 = vmatmul.mubr.f32.gmra.mxu0 %v162
  %v475 = vpop.f32.mrf.mxu0
  %v476 = vadd.f32 0.0, %v475
  %v477 = vpop.f32.mrf.mxu0
  %478 = vmatprep.mubr.f32.mxu0 0.0
  %479 = vmatmul.mubr.f32.gmra.mxu0 %v165
  %v480 = vpop.f32.mrf.mxu0
  %v481 = vadd.f32 0.0, %v480
  %v482 = vpop.f32.mrf.mxu0
  %483 = vmatprep.mubr.f32.mxu0 0.0
  %484 = vmatmul.mubr.f32.gmra.mxu0 %v168
  %v485 = vpop.f32.mrf.mxu0
  %v486 = vadd.f32 0.0, %v485
  %v487 = vpop.f32.mrf.mxu0
  %488 = vmatprep.mubr.f32.mxu0 0.0
  %489 = vmatmul.mubr.f32.gmra.mxu0 %v171
  %v490 = vpop.f32.mrf.mxu0
  %v491 = vadd.f32 0.0, %v490
  %v492 = vpop.f32.mrf.mxu0
  %493 = vmatprep.mubr.f32.mxu0 0.0
  %494 = vmatmul.mubr.f32.gmra.mxu0 %v174
  %v495 = vpop.f32.mrf.mxu0
  %v496 = vadd.f32 0.0, %v495
  %v497 = vpop.f32.mrf.mxu0
  %498 = vmatprep.mubr.f32.mxu0 0.0
  %499 = vmatmul.mubr.f32.gmra.mxu0 %v177
  %v500 = vpop.f32.mrf.mxu0
  %v501 = vadd.f32 0.0, %v500
  %v502 = vpop.f32.mrf.mxu0
  %503 = vmatprep.mubr.f32.mxu0 0.0
  %504 = vmatmul.mubr.f32.gmra.mxu0 %v180
  %v505 = vpop.f32.mrf.mxu0
  %v506 = vadd.f32 0.0, %v505
  %v507 = vpop.f32.mrf.mxu0
  %508 = vmatprep.mubr.f32.mxu0 0.0
  %509 = vmatmul.mubr.f32.gmra.mxu0 %v183
  %v510 = vpop.f32.mrf.mxu0
  %v511 = vadd.f32 0.0, %v510
  %v512 = vpop.f32.mrf.mxu0
  %513 = vmatprep.mubr.f32.mxu0 0.0
  %514 = vmatmul.mubr.f32.gmra.mxu0 %v186
  %v515 = vpop.f32.mrf.mxu0
  %v516 = vadd.f32 0.0, %v515
  %v517 = vpop.f32.mrf.mxu0
  %518 = vmatprep.mubr.f32.mxu0 0.0
  %519 = vmatmul.mubr.f32.gmra.mxu0 %v189
  %v520 = vpop.f32.mrf.mxu0
  %v521 = vadd.f32 0.0, %v520
  %v522 = vpop.f32.mrf.mxu0
  %523 = vmatprep.mubr.f32.mxu0 0.0
  %524 = vmatmul.mubr.f32.gmra.mxu0 %v192
  %v525 = vpop.f32.mrf.mxu0
  %v526 = vadd.f32 0.0, %v525
  %v527 = vpop.f32.mrf.mxu0
  %528 = vmatprep.mubr.f32.mxu0 0.0
  %529 = vmatmul.mubr.f32.gmra.mxu0 %v195
  %v530 = vpop.f32.mrf.mxu0
  %v531 = vadd.f32 0.0, %v530
  %v532 = vpop.f32.mrf.mxu0
  %533 = vmatprep.mubr.f32.mxu0 0.0
  %534 = vmatmul.mubr.f32.gmra.mxu0 %v198
  %v535 = vpop.f32.mrf.mxu0
  %v536 = vadd.f32 0.0, %v535
  %v537 = vpop.f32.mrf.mxu0
  %538 = vmatprep.mubr.f32.mxu0 0.0
  %539 = vmatmul.mubr.f32.gmra.mxu0 %v201
  %v540 = vpop.f32.mrf.mxu0
  %v541 = vadd.f32 0.0, %v540
  %v542 = vpop.f32.mrf.mxu0
  %543 = vmatprep.mubr.f32.mxu0 0.0
  %544 = vmatmul.mubr.f32.gmra.mxu0 %v204
  %v545 = vpop.f32.mrf.mxu0
  %v546 = vadd.f32 0.0, %v545
  %v547 = vpop.f32.mrf.mxu0
  %548 = vmatprep.mubr.f32.mxu0 0.0
  %549 = vmatmul.mubr.f32.gmra.mxu0 %v207
  %v550 = vpop.f32.mrf.mxu0
  %v551 = vadd.f32 0.0, %v550
  %v552 = vpop.f32.mrf.mxu0
  %553 = vmatprep.mubr.f32.mxu0 0.0
  %554 = vmatmul.mubr.f32.gmra.mxu0 %v210
  %v555 = vpop.f32.mrf.mxu0
  %v556 = vadd.f32 0.0, %v555
  %v557 = vpop.f32.mrf.mxu0
  %558 = vmatprep.mubr.f32.mxu0 0.0
  %559 = vmatmul.mubr.f32.gmra.mxu0 %v213
  %v560 = vpop.f32.mrf.mxu0
  %v561 = vadd.f32 0.0, %v560
  %v562 = vpop.f32.mrf.mxu0
  %563 = vmatprep.mubr.f32.mxu0 0.0
  %564 = vmatmul.mubr.f32.gmra.mxu0 %v216
  %v565 = vpop.f32.mrf.mxu0
  %v566 = vadd.f32 0.0, %v565
  %v567 = vpop.f32.mrf.mxu0
  %568 = vmatprep.mubr.f32.mxu0 0.0
  %569 = vmatmul.mubr.f32.gmra.mxu0 %v219
  %v570 = vpop.f32.mrf.mxu0
  %v571 = vadd.f32 0.0, %v570
  %v572 = vpop.f32.mrf.mxu0
  %573 = vmatprep.mubr.f32.mxu0 0.0
  %574 = vmatmul.mubr.f32.gmra.mxu0 %v222
  %v575 = vpop.f32.mrf.mxu0
  %v576 = vadd.f32 0.0, %v575
  %v577 = vpop.f32.mrf.mxu0
  %578 = vmatprep.mubr.f32.mxu0 0.0
  %579 = vmatmul.mubr.f32.gmra.mxu0 %v225
  %v580 = vpop.f32.mrf.mxu0
  %v581 = vadd.f32 0.0, %v580
  %v582 = vpop.f32.mrf.mxu0
  %583 = vmatprep.mubr.f32.mxu0 0.0
  %584 = vmatmul.mubr.f32.gmra.mxu0 %v228
  %v585 = vpop.f32.mrf.mxu0
  %v586 = vadd.f32 0.0, %v585
  %v587 = vpop.f32.mrf.mxu0
  %588 = vmatprep.mubr.f32.mxu0 0.0
  %589 = vmatmul.mubr.f32.gmra.mxu0 %v231
  %v590 = vpop.f32.mrf.mxu0
  %v591 = vadd.f32 0.0, %v590
  %v592 = vpop.f32.mrf.mxu0
  %593 = vmatprep.mubr.f32.mxu0 0.0
  %594 = vmatmul.mubr.f32.gmra.mxu0 %v234
  %v595 = vpop.f32.mrf.mxu0
  %v596 = vadd.f32 0.0, %v595
  %v597 = vpop.f32.mrf.mxu0
  %598 = vmatprep.mubr.f32.mxu0 0.0
  %599 = vmatmul.mubr.f32.gmra.mxu0 %v237
  %v600 = vpop.f32.mrf.mxu0
  %v601 = vadd.f32 0.0, %v600
  %v602 = vpop.f32.mrf.mxu0
  %603 = vmatprep.mubr.f32.mxu0 0.0
  %604 = vmatmul.mubr.f32.gmra.mxu0 %v240
  %v605 = vpop.f32.mrf.mxu0
  %v606 = vadd.f32 0.0, %v605
  %v607 = vpop.f32.mrf.mxu0
  %608 = vmatprep.mubr.f32.mxu0 0.0
  %609 = vmatmul.mubr.f32.gmra.mxu0 %v243
  %v610 = vpop.f32.mrf.mxu0
  %v611 = vadd.f32 0.0, %v610
  %v612 = vpop.f32.mrf.mxu0
  %613 = vmatprep.mubr.f32.mxu0 0.0
  %614 = vmatmul.mubr.f32.gmra.mxu0 %v246
  %v615 = vpop.f32.mrf.mxu0
  %v616 = vadd.f32 0.0, %v615
  %v617 = vpop.f32.mrf.mxu0
  %618 = vmatprep.mubr.f32.mxu0 0.0
  %619 = vmatmul.mubr.f32.gmra.mxu0 %v249
  %v620 = vpop.f32.mrf.mxu0
  %v621 = vadd.f32 0.0, %v620
  %v622 = vpop.f32.mrf.mxu0
  %623 = vmatprep.mubr.f32.mxu0 0.0
  %624 = vmatmul.mubr.f32.gmra.mxu0 %v252
  %v625 = vpop.f32.mrf.mxu0
  %v626 = vadd.f32 0.0, %v625
  %v627 = vpop.f32.mrf.mxu0
  %628 = vmatprep.mubr.f32.mxu0 0.0
  %629 = vmatmul.mubr.f32.gmra.mxu0 %v255
  %v630 = vpop.f32.mrf.mxu0
  %v631 = vadd.f32 0.0, %v630
  %v632 = vpop.f32.mrf.mxu0
  %633 = vmatprep.mubr.f32.mxu0 0.0
  %634 = vmatmul.mubr.f32.gmra.mxu0 %v258
  %v635 = vpop.f32.mrf.mxu0
  %v636 = vadd.f32 0.0, %v635
  %v637 = vpop.f32.mrf.mxu0
  %638 = vmatprep.mubr.f32.mxu0 0.0
  %639 = vmatmul.mubr.f32.gmra.mxu0 %v261
  %v640 = vpop.f32.mrf.mxu0
  %v641 = vadd.f32 0.0, %v640
  %v642 = vpop.f32.mrf.mxu0
  %643 = vmatprep.mubr.f32.mxu0 0.0
  %644 = vmatmul.mubr.f32.gmra.mxu0 %v264
  %v645 = vpop.f32.mrf.mxu0
  %v646 = vadd.f32 0.0, %v645
  %v647 = vpop.f32.mrf.mxu0
  %648 = vmatprep.mubr.f32.mxu0 0.0
  %649 = vmatmul.mubr.f32.gmra.mxu0 %v267
  %v650 = vpop.f32.mrf.mxu0
  %v651 = vadd.f32 0.0, %v650
  %v652 = vpop.f32.mrf.mxu0
  %653 = vmatprep.mubr.f32.mxu0 0.0
  %654 = vmatmul.mubr.f32.gmra.mxu0 %v270
  %v655 = vpop.f32.mrf.mxu0
  %v656 = vadd.f32 0.0, %v655
  %v657 = vpop.f32.mrf.mxu0
  %658 = vmatprep.mubr.f32.mxu0 0.0
  %659 = vmatmul.mubr.f32.gmra.mxu0 %v273
  %v660 = vpop.f32.mrf.mxu0
  %v661 = vadd.f32 0.0, %v660
  %v662 = vpop.f32.mrf.mxu0
  %663 = vdwg.mxu0
  %v664 = vld [vmem:[%s2] sm:$0x1]
  %v666 = vlaneseq
  %v667 = vshrl.u32 %v666, 7
  %v668 = vsub.s32 0, %v667
  %v669 = vrot.slane %v664, %v668
  %v671 = vmul.f32 %v346, %v669
  %v672 = vmul.f32 %v351, %v669
  %v673 = vmul.f32 %v356, %v669
  %v674 = vmul.f32 %v361, %v669
  %v675 = vmul.f32 %v366, %v669
  %v676 = vmul.f32 %v371, %v669
  %v677 = vmul.f32 %v376, %v669
  %v678 = vmul.f32 %v381, %v669
  %v679 = vmul.f32 %v386, %v669
  %v680 = vmul.f32 %v391, %v669
  %v681 = vmul.f32 %v396, %v669
  %v682 = vmul.f32 %v401, %v669
  %v683 = vmul.f32 %v406, %v669
  %v684 = vmul.f32 %v411, %v669
  %v685 = vmul.f32 %v416, %v669
  %v686 = vmul.f32 %v421, %v669
  %v687 = vmul.f32 %v426, %v669
  %v688 = vmul.f32 %v431, %v669
  %v689 = vmul.f32 %v436, %v669
  %v690 = vmul.f32 %v441, %v669
  %v691 = vmul.f32 %v446, %v669
  %v692 = vmul.f32 %v451, %v669
  %v693 = vmul.f32 %v456, %v669
  %v694 = vmul.f32 %v461, %v669
  %v695 = vmul.f32 %v466, %v669
  %v696 = vmul.f32 %v471, %v669
  %v697 = vmul.f32 %v476, %v669
  %v698 = vmul.f32 %v481, %v669
  %v699 = vmul.f32 %v486, %v669
  %v700 = vmul.f32 %v491, %v669
  %v701 = vmul.f32 %v496, %v669
  %v702 = vmul.f32 %v501, %v669
  %v703 = vmul.f32 %v506, %v669
  %v704 = vmul.f32 %v511, %v669
  %v705 = vmul.f32 %v516, %v669
  %v706 = vmul.f32 %v521, %v669
  %v707 = vmul.f32 %v526, %v669
  %v708 = vmul.f32 %v531, %v669
  %v709 = vmul.f32 %v536, %v669
  %v710 = vmul.f32 %v541, %v669
  %v711 = vmul.f32 %v546, %v669
  %v712 = vmul.f32 %v551, %v669
  %v713 = vmul.f32 %v556, %v669
  %v714 = vmul.f32 %v561, %v669
  %v715 = vmul.f32 %v566, %v669
  %v716 = vmul.f32 %v571, %v669
  %v717 = vmul.f32 %v576, %v669
  %v718 = vmul.f32 %v581, %v669
  %v719 = vmul.f32 %v586, %v669
  %v720 = vmul.f32 %v591, %v669
  %v721 = vmul.f32 %v596, %v669
  %v722 = vmul.f32 %v601, %v669
  %v723 = vmul.f32 %v606, %v669
  %v724 = vmul.f32 %v611, %v669
  %v725 = vmul.f32 %v616, %v669
  %v726 = vmul.f32 %v621, %v669
  %v727 = vmul.f32 %v626, %v669
  %v728 = vmul.f32 %v631, %v669
  %v729 = vmul.f32 %v636, %v669
  %v730 = vmul.f32 %v641, %v669
  %v731 = vmul.f32 %v646, %v669
  %v732 = vmul.f32 %v651, %v669
  %v733 = vmul.f32 %v656, %v669
  %v734 = vmul.f32 %v661, %v669
  %v735 = vld [vmem:[%s3] sm:$0x1]
  %v737 = vlaneseq
  %v738 = vshrl.u32 %v737, 7
  %v739 = vsub.s32 0, %v738
  %v740 = vrot.slane %v735, %v739
  %v742 = vadd.f32 %v671, %v740
  %v743 = vadd.f32 %v672, %v740
  %v744 = vadd.f32 %v673, %v740
  %v745 = vadd.f32 %v674, %v740
  %v746 = vadd.f32 %v675, %v740
  %v747 = vadd.f32 %v676, %v740
  %v748 = vadd.f32 %v677, %v740
  %v749 = vadd.f32 %v678, %v740
  %v750 = vadd.f32 %v679, %v740
  %v751 = vadd.f32 %v680, %v740
  %v752 = vadd.f32 %v681, %v740
  %v753 = vadd.f32 %v682, %v740
  %v754 = vadd.f32 %v683, %v740
  %v755 = vadd.f32 %v684, %v740
  %v756 = vadd.f32 %v685, %v740
  %v757 = vadd.f32 %v686, %v740
  %v758 = vadd.f32 %v687, %v740
  %v759 = vadd.f32 %v688, %v740
  %v760 = vadd.f32 %v689, %v740
  %v761 = vadd.f32 %v690, %v740
  %v762 = vadd.f32 %v691, %v740
  %v763 = vadd.f32 %v692, %v740
  %v764 = vadd.f32 %v693, %v740
  %v765 = vadd.f32 %v694, %v740
  %v766 = vadd.f32 %v695, %v740
  %v767 = vadd.f32 %v696, %v740
  %v768 = vadd.f32 %v697, %v740
  %v769 = vadd.f32 %v698, %v740
  %v770 = vadd.f32 %v699, %v740
  %v771 = vadd.f32 %v700, %v740
  %v772 = vadd.f32 %v701, %v740
  %v773 = vadd.f32 %v702, %v740
  %v774 = vadd.f32 %v703, %v740
  %v775 = vadd.f32 %v704, %v740
  %v776 = vadd.f32 %v705, %v740
  %v777 = vadd.f32 %v706, %v740
  %v778 = vadd.f32 %v707, %v740
  %v779 = vadd.f32 %v708, %v740
  %v780 = vadd.f32 %v709, %v740
  %v781 = vadd.f32 %v710, %v740
  %v782 = vadd.f32 %v711, %v740
  %v783 = vadd.f32 %v712, %v740
  %v784 = vadd.f32 %v713, %v740
  %v785 = vadd.f32 %v714, %v740
  %v786 = vadd.f32 %v715, %v740
  %v787 = vadd.f32 %v716, %v740
  %v788 = vadd.f32 %v717, %v740
  %v789 = vadd.f32 %v718, %v740
  %v790 = vadd.f32 %v719, %v740
  %v791 = vadd.f32 %v720, %v740
  %v792 = vadd.f32 %v721, %v740
  %v793 = vadd.f32 %v722, %v740
  %v794 = vadd.f32 %v723, %v740
  %v795 = vadd.f32 %v724, %v740
  %v796 = vadd.f32 %v725, %v740
  %v797 = vadd.f32 %v726, %v740
  %v798 = vadd.f32 %v727, %v740
  %v799 = vadd.f32 %v728, %v740
  %v800 = vadd.f32 %v729, %v740
  %v801 = vadd.f32 %v730, %v740
  %v802 = vadd.f32 %v731, %v740
  %v803 = vadd.f32 %v732, %v740
  %v804 = vadd.f32 %v733, %v740
  %v805 = vadd.f32 %v734, %v740
  %v806 = vmax.f32 %v742, 0.0
  %v807 = vmax.f32 %v743, 0.0
  %v808 = vmax.f32 %v744, 0.0
  %v809 = vmax.f32 %v745, 0.0
  %v810 = vmax.f32 %v746, 0.0
  %v811 = vmax.f32 %v747, 0.0
  %v812 = vmax.f32 %v748, 0.0
  %v813 = vmax.f32 %v749, 0.0
  %v814 = vmax.f32 %v750, 0.0
  %v815 = vmax.f32 %v751, 0.0
  %v816 = vmax.f32 %v752, 0.0
  %v817 = vmax.f32 %v753, 0.0
  %v818 = vmax.f32 %v754, 0.0
  %v819 = vmax.f32 %v755, 0.0
  %v820 = vmax.f32 %v756, 0.0
  %v821 = vmax.f32 %v757, 0.0
  %v822 = vmax.f32 %v758, 0.0
  %v823 = vmax.f32 %v759, 0.0
  %v824 = vmax.f32 %v760, 0.0
  %v825 = vmax.f32 %v761, 0.0
  %v826 = vmax.f32 %v762, 0.0
  %v827 = vmax.f32 %v763, 0.0
  %v828 = vmax.f32 %v764, 0.0
  %v829 = vmax.f32 %v765, 0.0
  %v830 = vmax.f32 %v766, 0.0
  %v831 = vmax.f32 %v767, 0.0
  %v832 = vmax.f32 %v768, 0.0
  %v833 = vmax.f32 %v769, 0.0
  %v834 = vmax.f32 %v770, 0.0
  %v835 = vmax.f32 %v771, 0.0
  %v836 = vmax.f32 %v772, 0.0
  %v837 = vmax.f32 %v773, 0.0
  %v838 = vmax.f32 %v774, 0.0
  %v839 = vmax.f32 %v775, 0.0
  %v840 = vmax.f32 %v776, 0.0
  %v841 = vmax.f32 %v777, 0.0
  %v842 = vmax.f32 %v778, 0.0
  %v843 = vmax.f32 %v779, 0.0
  %v844 = vmax.f32 %v780, 0.0
  %v845 = vmax.f32 %v781, 0.0
  %v846 = vmax.f32 %v782, 0.0
  %v847 = vmax.f32 %v783, 0.0
  %v848 = vmax.f32 %v784, 0.0
  %v849 = vmax.f32 %v785, 0.0
  %v850 = vmax.f32 %v786, 0.0
  %v851 = vmax.f32 %v787, 0.0
  %v852 = vmax.f32 %v788, 0.0
  %v853 = vmax.f32 %v789, 0.0
  %v854 = vmax.f32 %v790, 0.0
  %v855 = vmax.f32 %v791, 0.0
  %v856 = vmax.f32 %v792, 0.0
  %v857 = vmax.f32 %v793, 0.0
  %v858 = vmax.f32 %v794, 0.0
  %v859 = vmax.f32 %v795, 0.0
  %v860 = vmax.f32 %v796, 0.0
  %v861 = vmax.f32 %v797, 0.0
  %v862 = vmax.f32 %v798, 0.0
  %v863 = vmax.f32 %v799, 0.0
  %v864 = vmax.f32 %v800, 0.0
  %v865 = vmax.f32 %v801, 0.0
  %v866 = vmax.f32 %v802, 0.0
  %v867 = vmax.f32 %v803, 0.0
  %v868 = vmax.f32 %v804, 0.0
  %v869 = vmax.f32 %v805, 0.0
  %vm870 = vcmask 64512
  %871 = vst.msk [vmem:[%s4] sm:$0xff] %vm870, %v806
  %872 = vst.msk [vmem:[%s4 + $0x8] sm:$0xff] %vm870, %v807
  %873 = vst.msk [vmem:[%s4 + $0x10] sm:$0xff] %vm870, %v808
  %874 = vst.msk [vmem:[%s4 + $0x18] sm:$0xff] %vm870, %v809
  %875 = vst.msk [vmem:[%s4 + $0x20] sm:$0xff] %vm870, %v810
  %876 = vst.msk [vmem:[%s4 + $0x28] sm:$0xff] %vm870, %v811
  %877 = vst.msk [vmem:[%s4 + $0x30] sm:$0xff] %vm870, %v812
  %878 = vst.msk [vmem:[%s4 + $0x38] sm:$0xff] %vm870, %v813
  %879 = vst.msk [vmem:[%s4 + $0x40] sm:$0xff] %vm870, %v814
  %880 = vst.msk [vmem:[%s4 + $0x48] sm:$0xff] %vm870, %v815
  %881 = vst.msk [vmem:[%s4 + $0x50] sm:$0xff] %vm870, %v816
  %882 = vst.msk [vmem:[%s4 + $0x58] sm:$0xff] %vm870, %v817
  %883 = vst.msk [vmem:[%s4 + $0x60] sm:$0xff] %vm870, %v818
  %884 = vst.msk [vmem:[%s4 + $0x68] sm:$0xff] %vm870, %v819
  %885 = vst.msk [vmem:[%s4 + $0x70] sm:$0xff] %vm870, %v820
  %886 = vst.msk [vmem:[%s4 + $0x78] sm:$0xff] %vm870, %v821
  %887 = vst.msk [vmem:[%s4 + $0x80] sm:$0xff] %vm870, %v822
  %888 = vst.msk [vmem:[%s4 + $0x88] sm:$0xff] %vm870, %v823
  %889 = vst.msk [vmem:[%s4 + $0x90] sm:$0xff] %vm870, %v824
  %890 = vst.msk [vmem:[%s4 + $0x98] sm:$0xff] %vm870, %v825
  %891 = vst.msk [vmem:[%s4 + $0xa0] sm:$0xff] %vm870, %v826
  %892 = vst.msk [vmem:[%s4 + $0xa8] sm:$0xff] %vm870, %v827
  %893 = vst.msk [vmem:[%s4 + $0xb0] sm:$0xff] %vm870, %v828
  %894 = vst.msk [vmem:[%s4 + $0xb8] sm:$0xff] %vm870, %v829
  %895 = vst.msk [vmem:[%s4 + $0xc0] sm:$0xff] %vm870, %v830
  %896 = vst.msk [vmem:[%s4 + $0xc8] sm:$0xff] %vm870, %v831
  %897 = vst.msk [vmem:[%s4 + $0xd0] sm:$0xff] %vm870, %v832
  %898 = vst.msk [vmem:[%s4 + $0xd8] sm:$0xff] %vm870, %v833
  %899 = vst.msk [vmem:[%s4 + $0xe0] sm:$0xff] %vm870, %v834
  %900 = vst.msk [vmem:[%s4 + $0xe8] sm:$0xff] %vm870, %v835
  %901 = vst.msk [vmem:[%s4 + $0xf0] sm:$0xff] %vm870, %v836
  %902 = vst.msk [vmem:[%s4 + $0xf8] sm:$0xff] %vm870, %v837
  %903 = vst.msk [vmem:[%s4 + $0x100] sm:$0xff] %vm870, %v838
  %904 = vst.msk [vmem:[%s4 + $0x108] sm:$0xff] %vm870, %v839
  %905 = vst.msk [vmem:[%s4 + $0x110] sm:$0xff] %vm870, %v840
  %906 = vst.msk [vmem:[%s4 + $0x118] sm:$0xff] %vm870, %v841
  %907 = vst.msk [vmem:[%s4 + $0x120] sm:$0xff] %vm870, %v842
  %908 = vst.msk [vmem:[%s4 + $0x128] sm:$0xff] %vm870, %v843
  %909 = vst.msk [vmem:[%s4 + $0x130] sm:$0xff] %vm870, %v844
  %910 = vst.msk [vmem:[%s4 + $0x138] sm:$0xff] %vm870, %v845
  %911 = vst.msk [vmem:[%s4 + $0x140] sm:$0xff] %vm870, %v846
  %912 = vst.msk [vmem:[%s4 + $0x148] sm:$0xff] %vm870, %v847
  %913 = vst.msk [vmem:[%s4 + $0x150] sm:$0xff] %vm870, %v848
  %914 = vst.msk [vmem:[%s4 + $0x158] sm:$0xff] %vm870, %v849
  %915 = vst.msk [vmem:[%s4 + $0x160] sm:$0xff] %vm870, %v850
  %916 = vst.msk [vmem:[%s4 + $0x168] sm:$0xff] %vm870, %v851
  %917 = vst.msk [vmem:[%s4 + $0x170] sm:$0xff] %vm870, %v852
  %918 = vst.msk [vmem:[%s4 + $0x178] sm:$0xff] %vm870, %v853
  %919 = vst.msk [vmem:[%s4 + $0x180] sm:$0xff] %vm870, %v854
  %920 = vst.msk [vmem:[%s4 + $0x188] sm:$0xff] %vm870, %v855
  %921 = vst.msk [vmem:[%s4 + $0x190] sm:$0xff] %vm870, %v856
  %922 = vst.msk [vmem:[%s4 + $0x198] sm:$0xff] %vm870, %v857
  %923 = vst.msk [vmem:[%s4 + $0x1a0] sm:$0xff] %vm870, %v858
  %924 = vst.msk [vmem:[%s4 + $0x1a8] sm:$0xff] %vm870, %v859
  %925 = vst.msk [vmem:[%s4 + $0x1b0] sm:$0xff] %vm870, %v860
  %926 = vst.msk [vmem:[%s4 + $0x1b8] sm:$0xff] %vm870, %v861
  %927 = vst.msk [vmem:[%s4 + $0x1c0] sm:$0xff] %vm870, %v862
  %928 = vst.msk [vmem:[%s4 + $0x1c8] sm:$0xff] %vm870, %v863
  %929 = vst.msk [vmem:[%s4 + $0x1d0] sm:$0xff] %vm870, %v864
  %930 = vst.msk [vmem:[%s4 + $0x1d8] sm:$0xff] %vm870, %v865
  %931 = vst.msk [vmem:[%s4 + $0x1e0] sm:$0xff] %vm870, %v866
  %932 = vst.msk [vmem:[%s4 + $0x1e8] sm:$0xff] %vm870, %v867
  %933 = vst.msk [vmem:[%s4 + $0x1f0] sm:$0xff] %vm870, %v868
  %934 = vst.msk [vmem:[%s4 + $0x1f8] sm:$0xff] %vm870, %v869
  // Predicated region
  $region18: #{_lambda_.4} parent=0 // pred_check
    _
  $region19: #{_lambda_.4} parent=0 // pred_check_branch
    %936 = sbr.rel (0) target = $region21
  $region20: #{_lambda_.4} parent=0 // pred_region
    _
  $region21: #{_lambda_.4} parent=0 // pred_fallthru
    _
  // Predicated region
  $region22: #{_lambda_.4} parent=0 // pred_check
    _
  $region23: #{_lambda_.4} parent=0 // pred_check_branch
    %938 = sbr.rel (0) target = $region25
  $region24: #{_lambda_.4} parent=0 // pred_region
    _
  $region25: #{_lambda_.4} parent=0 // pred_fallthru
    _

// kernel: _lambda_.5
$region0: #{_lambda_.5}
  #allocation0 [shape = 'u32[]', space=smem, size = 0x4, offset = 0x4, fixed_abs, tag = 'smem constant byte address 0x4 - core index']
  #allocation1 [shape = 'u32[144,128]{1,0:T(1,128)}', space=vmem, size = 0x12000, scoped, tag = 'internal scratch']
  #allocation2 [shape = 'f32[256,8]{1,0:T(8,128)}', space=vmem, size = 0x20000, scoped, tag = 'scratch operand']
  %s0 = inlined_call_operand.vmem [shape: f32[2,22,22,4], index: 0, kind: input, shape index: {}]
  %s1 = inlined_call_operand.vmem [shape: f32[9,4,8], index: 1, kind: input, shape index: {}]
  %s2 = inlined_call_operand.vmem [shape: f32[1,8], index: 2, kind: input, shape index: {}]
  %s3 = inlined_call_operand.vmem [shape: f32[1,8], index: 3, kind: input, shape index: {}]
  %s4 = inlined_call_operand.vmem [shape: f32[2,16,16,8], index: 4, kind: output, shape index: {}]
  %s5 = sld [smem:[#allocation0]]
  $region57: #{_lambda_.5} parent=0
    _
  %s7 = ssub.s32 1, %s5
  %s8 = scalar_select 0, %s7, %s5
  loop: start=0, step=1, limit=4
  $region2: #{_lambda_.5} parent=0 // loop_pre_header
    _
  $region3: #{_lambda_.5} parent=0 // loop_header
    %s10 = sphi 0, %s14
    %p11 = scmp.ge.s32.totalorder %s10, 4
    %s17 = sphi 0, %s29
    %s18 = sphi 0, %s25
    %s19 = sphi 0, %s17
    %s20 = sphi 0, %s18
    %s21 = sphi 0, %s19
    %s22 = sphi 0, %s20
    %s34 = sphi 0, %s36
    %s37 = sphi 0, %s34
    %s38 = sphi 0, %s37
    %s54 = sphi 0, %s38
    %s60 = sphi 0, %s62
    %s63 = sphi 0, %s60
    %s64 = sphi 0, %s63
    %s80 = sphi 0, %s64
    %s84 = sphi 0, %s84
    %s86 = sphi 0, %s84
    %s87 = sphi 0, %s86
    %s101 = sphi 0, %s87
    %s105 = sphi 0, %s105
    %s107 = sphi 0, %s105
    %s108 = sphi 0, %s107
    %s122 = sphi 0, %s108
    %s128 = sphi 0, %s130
    %s131 = sphi 0, %s128
    %s132 = sphi 0, %s131
    %s148 = sphi 0, %s132
  $region4: #{_lambda_.5} parent=0 // loop_header_branch
    %13 = sbr.rel (%p11) target = $region8
  $region5: #{_lambda_.5} parent=0 // loop_body
    %s15 = ssub.s32 %s10, 1
    %s16 = ssub.s32 %s10, 2
    %s23 = sadd.s32 1, %s18
    %p24 = scmp.ge.s32.totalorder %s23, 1
    %s25 = scalar_select %p24, 0, %s23
    %s26 = sadd.s32 1, %s17
    %s27 = scalar_select %p24, %s26, %s17
    %p28 = scmp.ge.s32.totalorder %s27, 2
    %s29 = scalar_select %p28, 0, %s27
    %s30 = ssub.s32 %s17, %s29
    %s31 = ssub.s32 %s18, %s25
    %s32 = sor.u32 %s30, %s31
    %p33 = scmp.eq.s32.totalorder %s32, 0
    %s35 = sadd.s32 %s34, 1
    %s36 = scalar_select %p33, %s34, %s35
    %p39 = pneg %p33
    %p40 = scmp.eq.s32.totalorder %s10, 1
    %p41 = por %p39, %p40
    %p42 = scmp.ne.s32.totalorder %s34, %s37
    %p43 = scmp.eq.s32.totalorder %s10, 0
    %p44 = por %p42, %p43
    %p45 = scmp.ne.s32.totalorder %s34, %s37
    %p46 = scmp.eq.s32.totalorder %s15, 1
    %p47 = por %p45, %p46
    %p48 = scmp.ne.s32.totalorder %s37, %s38
    %p49 = scmp.eq.s32.totalorder %s15, 0
    %p50 = por %p48, %p49
    %p51 = scmp.ne.s32.totalorder %s37, %s38
    %p52 = scmp.eq.s32.totalorder %s16, 1
    %p53 = por %p51, %p52
    %p55 = scmp.ne.s32.totalorder %s38, %s54
    %p56 = scmp.eq.s32.totalorder %s16, 0
    %p57 = por %p55, %p56
    %s58 = ssub.s32 %s18, %s25
    %p59 = scmp.eq.s32.totalorder %s58, 0
    %s61 = sadd.s32 %s60, 1
    %s62 = scalar_select %p59, %s60, %s61
    %p65 = pneg %p59
    %p66 = scmp.eq.s32.totalorder %s10, 1
    %p67 = por %p65, %p66
    %p68 = scmp.ne.s32.totalorder %s60, %s63
    %p69 = scmp.eq.s32.totalorder %s10, 0
    %p70 = por %p68, %p69
    %p71 = scmp.ne.s32.totalorder %s60, %s63
    %p72 = scmp.eq.s32.totalorder %s15, 1
    %p73 = por %p71, %p72
    %p74 = scmp.ne.s32.totalorder %s63, %s64
    %p75 = scmp.eq.s32.totalorder %s15, 0
    %p76 = por %p74, %p75
    %p77 = scmp.ne.s32.totalorder %s63, %s64
    %p78 = scmp.eq.s32.totalorder %s16, 1
    %p79 = por %p77, %p78
    %p81 = scmp.ne.s32.totalorder %s64, %s80
    %p82 = scmp.eq.s32.totalorder %s16, 0
    %p83 = por %p81, %p82
    %s85 = sadd.s32 %s84, 1
    %p88 = scmp.eq.s32.totalorder %s10, 1
    %p89 = scmp.ne.s32.totalorder %s84, %s86
    %p90 = scmp.eq.s32.totalorder %s10, 0
    %p91 = por %p89, %p90
    %p92 = scmp.ne.s32.totalorder %s84, %s86
    %p93 = scmp.eq.s32.totalorder %s15, 1
    %p94 = por %p92, %p93
    %p95 = scmp.ne.s32.totalorder %s86, %s87
    %p96 = scmp.eq.s32.totalorder %s15, 0
    %p97 = por %p95, %p96
    %p98 = scmp.ne.s32.totalorder %s86, %s87
    %p99 = scmp.eq.s32.totalorder %s16, 1
    %p100 = por %p98, %p99
    %p102 = scmp.ne.s32.totalorder %s87, %s101
    %p103 = scmp.eq.s32.totalorder %s16, 0
    %p104 = por %p102, %p103
    %s106 = sadd.s32 %s105, 1
    %p109 = scmp.eq.s32.totalorder %s10, 1
    %p110 = scmp.ne.s32.totalorder %s105, %s107
    %p111 = scmp.eq.s32.totalorder %s10, 0
    %p112 = por %p110, %p111
    %p113 = scmp.ne.s32.totalorder %s105, %s107
    %p114 = scmp.eq.s32.totalorder %s15, 1
    %p115 = por %p113, %p114
    %p116 = scmp.ne.s32.totalorder %s107, %s108
    %p117 = scmp.eq.s32.totalorder %s15, 0
    %p118 = por %p116, %p117
    %p119 = scmp.ne.s32.totalorder %s107, %s108
    %p120 = scmp.eq.s32.totalorder %s16, 1
    %p121 = por %p119, %p120
    %p123 = scmp.ne.s32.totalorder %s108, %s122
    %p124 = scmp.eq.s32.totalorder %s16, 0
    %p125 = por %p123, %p124
    %s126 = ssub.s32 %s17, %s29
    %p127 = scmp.eq.s32.totalorder %s126, 0
    %s129 = sadd.s32 %s128, 1
    %s130 = scalar_select %p127, %s128, %s129
    %p133 = pneg %p127
    %p134 = scmp.eq.s32.totalorder %s10, 1
    %p135 = por %p133, %p134
    %p136 = scmp.ne.s32.totalorder %s128, %s131
    %p137 = scmp.eq.s32.totalorder %s10, 0
    %p138 = por %p136, %p137
    %p139 = scmp.ne.s32.totalorder %s128, %s131
    %p140 = scmp.eq.s32.totalorder %s15, 1
    %p141 = por %p139, %p140
    %p142 = scmp.ne.s32.totalorder %s131, %s132
    %p143 = scmp.eq.s32.totalorder %s15, 0
    %p144 = por %p142, %p143
    %p145 = scmp.ne.s32.totalorder %s131, %s132
    %p146 = scmp.eq.s32.totalorder %s16, 1
    %p147 = por %p145, %p146
    %p149 = scmp.ne.s32.totalorder %s132, %s148
    %p150 = scmp.eq.s32.totalorder %s16, 0
    %p151 = por %p149, %p150
    %p152 = scmp.le.s32.totalorder 1, %s10
    %p153 = scmp.lt.s32.totalorder %s10, 3
    %p154 = pnand %p152, %p153
    %p155 = pneg %p154
    // Predicated region
    $region9: #{_lambda_.5} parent=5 // pred_check
      _
    $region10: #{_lambda_.5} parent=5 // pred_check_branch
      %157 = sbr.rel (%p154) target = $region12
    $region11: #{_lambda_.5} parent=5 // pred_region
      %s158 = ssub.s32 %s10, 1
      // Predicated region
      $region13: #{_lambda_.5} parent=11 // pred_check
        %p159 = pneg %p76
      $region14: #{_lambda_.5} parent=11 // pred_check_branch
        %161 = sbr.rel (%p159) target = $region16
      $region15: #{_lambda_.5} parent=11 // pred_region
        %p162 = scmp.lt.s32.totalorder %s20, 0
        %s163 = scalar_select %p162, %s20, 0
        %s164 = smul.addr %s163, 4
        %s165 = scalar_lea.vmem %s1, %s164
      $region16: #{_lambda_.5} parent=11 // pred_fallthru
        _
      // Predicated region
      $region17: #{_lambda_.5} parent=11 // pred_check
        %p166 = pneg %p97
      $region18: #{_lambda_.5} parent=11 // pred_check_branch
        %168 = sbr.rel (%p166) target = $region20
      $region19: #{_lambda_.5} parent=11 // pred_region
        _
      $region20: #{_lambda_.5} parent=11 // pred_fallthru
        _
      // Predicated region
      $region21: #{_lambda_.5} parent=11 // pred_check
        %p169 = pneg %p118
      $region22: #{_lambda_.5} parent=11 // pred_check_branch
        %171 = sbr.rel (%p169) target = $region24
      $region23: #{_lambda_.5} parent=11 // pred_region
        _
      $region24: #{_lambda_.5} parent=11 // pred_fallthru
        _
    $region12: #{_lambda_.5} parent=5 // pred_fallthru
      _
    %p172 = scmp.lt.s32.totalorder %s10, 2
    // Predicated region
    $region25: #{_lambda_.5} parent=5 // pred_check
      %p173 = pneg %p172
    $region26: #{_lambda_.5} parent=5 // pred_check_branch
      %175 = sbr.rel (%p173) target = $region28
    $region27: #{_lambda_.5} parent=5 // pred_region
      // Predicated region
      $region29: #{_lambda_.5} parent=27 // pred_check
        %p176 = pneg %p44
      $region30: #{_lambda_.5} parent=27 // pred_check_branch
        %178 = sbr.rel (%p176) target = $region32
      $region31: #{_lambda_.5} parent=27 // pred_region
        %p179 = scmp.lt.s32.totalorder %s17, 1
        %s180 = scalar_select %p179, %s17, 1
        %p181 = scmp.lt.s32.totalorder %s18, 0
        %s182 = scalar_select %p181, %s18, 0
        %s183 = smul.addr %s180, 66
        %s184 = sadd.s32 %s182, %s183
        %s185 = smul.addr %s184, 8
        %s186 = scalar_lea.vmem %s0, %s185
      $region32: #{_lambda_.5} parent=27 // pred_fallthru
        _
    $region28: #{_lambda_.5} parent=5 // pred_fallthru
      _
    %p187 = scmp.le.s32.totalorder 1, %s10
    %p188 = scmp.lt.s32.totalorder %s10, 3
    %p189 = pnand %p187, %p188
    %p190 = pneg %p189
    // Predicated region
    $region33: #{_lambda_.5} parent=5 // pred_check
      _
    $region34: #{_lambda_.5} parent=5 // pred_check_branch
      %192 = sbr.rel (%p189) target = $region36
    $region35: #{_lambda_.5} parent=5 // pred_region
      %s193 = ssub.s32 %s10, 1
      %p194 = scmp.lt.s32.totalorder %s19, 1
      %s195 = scalar_select %p194, %s19, 1
      %p196 = scmp.lt.s32.totalorder %s20, 0
      %s197 = scalar_select %p196, %s20, 0
      %s198 = smul.addr %s195, 66
      %s199 = sadd.s32 %s197, %s198
      %s200 = smul.addr %s199, 8
      %s201 = scalar_lea.vmem %s0, %s200
      %p202 = pneg %p50
      %p203 = pneg %p47
      %p204 = scmp.lt.s32.totalorder %s20, 0
      %s205 = scalar_select %p204, %s20, 0
      %s206 = smul.addr %s205, 4
      %s207 = scalar_lea.vmem %s1, %s206
      %p208 = pneg %p76
      %p209 = pneg %p73
      %p210 = pneg %p97
      %p211 = pneg %p94
      %p212 = pneg %p118
      %p213 = pneg %p115
      %p214 = pneg %p144
      %p215 = pneg %p141
      %p216 = scmp.lt.s32.totalorder %s19, 1
      %s217 = scalar_select %p216, %s19, 1
      %s218 = smul.addr %s217, 32
      %s219 = smul.addr %s218, 8
      %s220 = scalar_lea.vmem %s4, %s219
      %p221 = scmp.lt.s32.totalorder %s19, 1
      %s222 = scalar_select %p221, %s19, 1
      %p223 = scmp.lt.s32.totalorder %s20, 0
      %s224 = scalar_select %p223, %s20, 0
      %s225 = smul.addr %s222, 66
      %s226 = sadd.s32 %s224, %s225
      %s227 = smul.addr %s226, 8
      %s228 = scalar_lea.vmem %s0, %s227
      %p229 = scmp.lt.s32.totalorder %s20, 0
      %s230 = scalar_select %p229, %s20, 0
      %s231 = smul.addr %s230, 4
      %s232 = scalar_lea.vmem %s1, %s231
      %p233 = scmp.lt.s32.totalorder %s19, 1
      %s234 = scalar_select %p233, %s19, 1
      %s235 = smul.addr %s234, 32
      %s236 = smul.addr %s235, 8
      %s237 = scalar_lea.vmem %s4, %s236
      %p238 = scmp.eq.s32.totalorder %s20, 0
      // Predicated region
      $region37: #{_lambda_.5} parent=35 // pred_check
        %p239 = pneg %p238
      $region38: #{_lambda_.5} parent=35 // pred_check_branch
        %241 = sbr.rel (%p239) target = $region40
      $region39: #{_lambda_.5} parent=35 // pred_region
        %vm242 = vcmask 64512
        %243 = vst.msk [vmem:[#allocation2] sm:$0xff] %vm242, 0.0
        %244 = vst.msk [vmem:[#allocation2 + $0x8] sm:$0xff] %vm242, 0.0
        %245 = vst.msk [vmem:[#allocation2 + $0x10] sm:$0xff] %vm242, 0.0
        %246 = vst.msk [vmem:[#allocation2 + $0x18] sm:$0xff] %vm242, 0.0
        %247 = vst.msk [vmem:[#allocation2 + $0x20] sm:$0xff] %vm242, 0.0
        %248 = vst.msk [vmem:[#allocation2 + $0x28] sm:$0xff] %vm242, 0.0
        %249 = vst.msk [vmem:[#allocation2 + $0x30] sm:$0xff] %vm242, 0.0
        %250 = vst.msk [vmem:[#allocation2 + $0x38] sm:$0xff] %vm242, 0.0
        %251 = vst.msk [vmem:[#allocation2 + $0x40] sm:$0xff] %vm242, 0.0
        %252 = vst.msk [vmem:[#allocation2 + $0x48] sm:$0xff] %vm242, 0.0
        %253 = vst.msk [vmem:[#allocation2 + $0x50] sm:$0xff] %vm242, 0.0
        %254 = vst.msk [vmem:[#allocation2 + $0x58] sm:$0xff] %vm242, 0.0
        %255 = vst.msk [vmem:[#allocation2 + $0x60] sm:$0xff] %vm242, 0.0
        %256 = vst.msk [vmem:[#allocation2 + $0x68] sm:$0xff] %vm242, 0.0
        %257 = vst.msk [vmem:[#allocation2 + $0x70] sm:$0xff] %vm242, 0.0
        %258 = vst.msk [vmem:[#allocation2 + $0x78] sm:$0xff] %vm242, 0.0
        %259 = vst.msk [vmem:[#allocation2 + $0x80] sm:$0xff] %vm242, 0.0
        %260 = vst.msk [vmem:[#allocation2 + $0x88] sm:$0xff] %vm242, 0.0
        %261 = vst.msk [vmem:[#allocation2 + $0x90] sm:$0xff] %vm242, 0.0
        %262 = vst.msk [vmem:[#allocation2 + $0x98] sm:$0xff] %vm242, 0.0
        %263 = vst.msk [vmem:[#allocation2 + $0xa0] sm:$0xff] %vm242, 0.0
        %264 = vst.msk [vmem:[#allocation2 + $0xa8] sm:$0xff] %vm242, 0.0
        %265 = vst.msk [vmem:[#allocation2 + $0xb0] sm:$0xff] %vm242, 0.0
        %266 = vst.msk [vmem:[#allocation2 + $0xb8] sm:$0xff] %vm242, 0.0
        %267 = vst.msk [vmem:[#allocation2 + $0xc0] sm:$0xff] %vm242, 0.0
        %268 = vst.msk [vmem:[#allocation2 + $0xc8] sm:$0xff] %vm242, 0.0
        %269 = vst.msk [vmem:[#allocation2 + $0xd0] sm:$0xff] %vm242, 0.0
        %270 = vst.msk [vmem:[#allocation2 + $0xd8] sm:$0xff] %vm242, 0.0
        %271 = vst.msk [vmem:[#allocation2 + $0xe0] sm:$0xff] %vm242, 0.0
        %272 = vst.msk [vmem:[#allocation2 + $0xe8] sm:$0xff] %vm242, 0.0
        %273 = vst.msk [vmem:[#allocation2 + $0xf0] sm:$0xff] %vm242, 0.0
        %274 = vst.msk [vmem:[#allocation2 + $0xf8] sm:$0xff] %vm242, 0.0
      $region40: #{_lambda_.5} parent=35 // pred_fallthru
        _
      %v275 = vld [vmem:[%s228 + $0x30] sm:$0xff]
      %v276 = vld [vmem:[%s228 + $0x38] sm:$0xff]
      %v277 = vld [vmem:[%s228 + $0x40] sm:$0x3f]
      %v278 = vld [vmem:[%s228 + $0x48] sm:$0xff]
      %v279 = vld [vmem:[%s228 + $0x50] sm:$0xff]
      %v280 = vld [vmem:[%s228 + $0x58] sm:$0x3f]
      %v281 = vld [vmem:[%s228 + $0x60] sm:$0xff]
      %v282 = vld [vmem:[%s228 + $0x68] sm:$0xff]
      %v283 = vld [vmem:[%s228 + $0x70] sm:$0x3f]
      %v284 = vld [vmem:[%s228 + $0x78] sm:$0xff]
      %v285 = vld [vmem:[%s228 + $0x80] sm:$0xff]
      %v286 = vld [vmem:[%s228 + $0x88] sm:$0x3f]
      %v287 = vld [vmem:[%s228 + $0x90] sm:$0xff]
      %v288 = vld [vmem:[%s228 + $0x98] sm:$0xff]
      %v289 = vld [vmem:[%s228 + $0xa0] sm:$0x3f]
      %v290 = vld [vmem:[%s228 + $0xa8] sm:$0xff]
      %v291 = vld [vmem:[%s228 + $0xb0] sm:$0xff]
      %v292 = vld [vmem:[%s228 + $0xb8] sm:$0x3f]
      %v293 = vld [vmem:[%s228 + $0xc0] sm:$0xff]
      %v294 = vld [vmem:[%s228 + $0xc8] sm:$0xff]
      %v295 = vld [vmem:[%s228 + $0xd0] sm:$0x3f]
      %v296 = vld [vmem:[%s228 + $0xd8] sm:$0xff]
      %v297 = vld [vmem:[%s228 + $0xe0] sm:$0xff]
      %v298 = vld [vmem:[%s228 + $0xe8] sm:$0x3f]
      %v299 = vld [vmem:[%s228 + $0xf0] sm:$0xff]
      %v300 = vld [vmem:[%s228 + $0xf8] sm:$0xff]
      %v301 = vld [vmem:[%s228 + $0x100] sm:$0x3f]
      %v302 = vld [vmem:[%s228 + $0x108] sm:$0xff]
      %v303 = vld [vmem:[%s228 + $0x110] sm:$0xff]
      %v304 = vld [vmem:[%s228 + $0x118] sm:$0x3f]
      %v305 = vld [vmem:[%s228 + $0x120] sm:$0xff]
      %v306 = vld [vmem:[%s228 + $0x128] sm:$0xff]
      %v307 = vld [vmem:[%s228 + $0x130] sm:$0x3f]
      %v308 = vld [vmem:[%s228 + $0x138] sm:$0xff]
      %v309 = vld [vmem:[%s228 + $0x140] sm:$0xff]
      %v310 = vld [vmem:[%s228 + $0x148] sm:$0x3f]
      %v311 = vld [vmem:[%s228 + $0x150] sm:$0xff]
      %v312 = vld [vmem:[%s228 + $0x158] sm:$0xff]
      %v313 = vld [vmem:[%s228 + $0x160] sm:$0x3f]
      %v314 = vld [vmem:[%s228 + $0x168] sm:$0xff]
      %v315 = vld [vmem:[%s228 + $0x170] sm:$0xff]
      %v316 = vld [vmem:[%s228 + $0x178] sm:$0x3f]
      %v317 = vld [vmem:[%s228 + $0x180] sm:$0xff]
      %v318 = vld [vmem:[%s228 + $0x188] sm:$0xff]
      %v319 = vld [vmem:[%s228 + $0x190] sm:$0x3f]
      %v320 = vld [vmem:[%s228 + $0x198] sm:$0xff]
      %v321 = vld [vmem:[%s228 + $0x1a0] sm:$0xff]
      %v322 = vld [vmem:[%s228 + $0x1a8] sm:$0x3f]
      %v323 = vld [vmem:[%s228 + $0x1b0] sm:$0xff]
      %v324 = vld [vmem:[%s228 + $0x1b8] sm:$0xff]
      %v325 = vld [vmem:[%s228 + $0x1c0] sm:$0x3f]
      %v326 = vld [vmem:[%s228 + $0x1c8] sm:$0xff]
      %v327 = vld [vmem:[%s228 + $0x1d0] sm:$0xff]
      %v328 = vld [vmem:[%s228 + $0x1d8] sm:$0x3f]
      %v329 = vld [vmem:[#allocation2] sm:$0xff]
      %v330 = vld [vmem:[#allocation2 + $0x8] sm:$0xff]
      %v331 = vld [vmem:[#allocation2 + $0x10] sm:$0xff]
      %v332 = vld [vmem:[#allocation2 + $0x18] sm:$0xff]
      %v333 = vld [vmem:[#allocation2 + $0x20] sm:$0xff]
      %v334 = vld [vmem:[#allocation2 + $0x28] sm:$0xff]
      %v335 = vld [vmem:[#allocation2 + $0x30] sm:$0xff]
      %v336 = vld [vmem:[#allocation2 + $0x38] sm:$0xff]
      %v337 = vld [vmem:[#allocation2 + $0x40] sm:$0xff]
      %v338 = vld [vmem:[#allocation2 + $0x48] sm:$0xff]
      %v339 = vld [vmem:[#allocation2 + $0x50] sm:$0xff]
      %v340 = vld [vmem:[#allocation2 + $0x58] sm:$0xff]
      %v341 = vld [vmem:[#allocation2 + $0x60] sm:$0xff]
      %v342 = vld [vmem:[#allocation2 + $0x68] sm:$0xff]
      %v343 = vld [vmem:[#allocation2 + $0x70] sm:$0xff]
      %v344 = vld [vmem:[#allocation2 + $0x78] sm:$0xff]
      %v345 = vld [vmem:[#allocation2 + $0x80] sm:$0xff]
      %v346 = vld [vmem:[#allocation2 + $0x88] sm:$0xff]
      %v347 = vld [vmem:[#allocation2 + $0x90] sm:$0xff]
      %v348 = vld [vmem:[#allocation2 + $0x98] sm:$0xff]
      %v349 = vld [vmem:[#allocation2 + $0xa0] sm:$0xff]
      %v350 = vld [vmem:[#allocation2 + $0xa8] sm:$0xff]
      %v351 = vld [vmem:[#allocation2 + $0xb0] sm:$0xff]
      %v352 = vld [vmem:[#allocation2 + $0xb8] sm:$0xff]
      %v353 = vld [vmem:[#allocation2 + $0xc0] sm:$0xff]
      %v354 = vld [vmem:[#allocation2 + $0xc8] sm:$0xff]
      %v355 = vld [vmem:[#allocation2 + $0xd0] sm:$0xff]
      %v356 = vld [vmem:[#allocation2 + $0xd8] sm:$0xff]
      %v357 = vld [vmem:[#allocation2 + $0xe0] sm:$0xff]
      %v358 = vld [vmem:[#allocation2 + $0xe8] sm:$0xff]
      %v359 = vld [vmem:[#allocation2 + $0xf0] sm:$0xff]
      %v360 = vld [vmem:[#allocation2 + $0xf8] sm:$0xff]
      %vm409 = vcmask 1045504
      %v410 = vrot.slane %v275, 2
      %v411 = vrot.slane %v276, 2
      %v412 = vsel %vm409, %v410, %v411
      %v413 = vrot.slane %v277, 2
      %v414 = vsel %vm409, %v411, %v413
      %v415 = vrot.slane %v278, 2
      %v416 = vrot.slane %v279, 2
      %v417 = vsel %vm409, %v415, %v416
      %v418 = vrot.slane %v280, 2
      %v419 = vsel %vm409, %v416, %v418
      %v420 = vrot.slane %v281, 2
      %v421 = vrot.slane %v282, 2
      %v422 = vsel %vm409, %v420, %v421
      %v423 = vrot.slane %v283, 2
      %v424 = vsel %vm409, %v421, %v423
      %v425 = vrot.slane %v284, 2
      %v426 = vrot.slane %v285, 2
      %v427 = vsel %vm409, %v425, %v426
      %v428 = vrot.slane %v286, 2
      %v429 = vsel %vm409, %v426, %v428
      %v430 = vrot.slane %v287, 2
      %v431 = vrot.slane %v288, 2
      %v432 = vsel %vm409, %v430, %v431
      %v433 = vrot.slane %v289, 2
      %v434 = vsel %vm409, %v431, %v433
      %v435 = vrot.slane %v290, 2
      %v436 = vrot.slane %v291, 2
      %v437 = vsel %vm409, %v435, %v436
      %v438 = vrot.slane %v292, 2
      %v439 = vsel %vm409, %v436, %v438
      %v440 = vrot.slane %v293, 2
      %v441 = vrot.slane %v294, 2
      %v442 = vsel %vm409, %v440, %v441
      %v443 = vrot.slane %v295, 2
      %v444 = vsel %vm409, %v441, %v443
      %v445 = vrot.slane %v296, 2
      %v446 = vrot.slane %v297, 2
      %v447 = vsel %vm409, %v445, %v446
      %v448 = vrot.slane %v298, 2
      %v449 = vsel %vm409, %v446, %v448
      %v450 = vrot.slane %v299, 2
      %v451 = vrot.slane %v300, 2
      %v452 = vsel %vm409, %v450, %v451
      %v453 = vrot.slane %v301, 2
      %v454 = vsel %vm409, %v451, %v453
      %v455 = vrot.slane %v302, 2
      %v456 = vrot.slane %v303, 2
      %v457 = vsel %vm409, %v455, %v456
      %v458 = vrot.slane %v304, 2
      %v459 = vsel %vm409, %v456, %v458
      %v460 = vrot.slane %v305, 2
      %v461 = vrot.slane %v306, 2
      %v462 = vsel %vm409, %v460, %v461
      %v463 = vrot.slane %v307, 2
      %v464 = vsel %vm409, %v461, %v463
      %v465 = vrot.slane %v308, 2
      %v466 = vrot.slane %v309, 2
      %v467 = vsel %vm409, %v465, %v466
      %v468 = vrot.slane %v310, 2
      %v469 = vsel %vm409, %v466, %v468
      %v470 = vrot.slane %v311, 2
      %v471 = vrot.slane %v312, 2
      %v472 = vsel %vm409, %v470, %v471
      %v473 = vrot.slane %v313, 2
      %v474 = vsel %vm409, %v471, %v473
      %v475 = vrot.slane %v314, 2
      %v476 = vrot.slane %v315, 2
      %v477 = vsel %vm409, %v475, %v476
      %v478 = vrot.slane %v316, 2
      %v479 = vsel %vm409, %v476, %v478
      %v480 = vrot.slane %v317, 2
      %v481 = vrot.slane %v318, 2
      %v482 = vsel %vm409, %v480, %v481
      %v483 = vrot.slane %v319, 2
      %v484 = vsel %vm409, %v481, %v483
      %v485 = vrot.slane %v320, 2
      %v486 = vrot.slane %v321, 2
      %v487 = vsel %vm409, %v485, %v486
      %v488 = vrot.slane %v322, 2
      %v489 = vsel %vm409, %v486, %v488
      %v490 = vld [vmem:[%s232] sm:$0xf]
      %vm491 = vcmask 31744
      %v492 = vsel %vm491, %v412, 0
      %v494 = vsel %vm491, %v414, 0
      %v496 = vsel %vm491, %v417, 0
      %v498 = vsel %vm491, %v419, 0
      %v500 = vsel %vm491, %v422, 0
      %v502 = vsel %vm491, %v424, 0
      %v504 = vsel %vm491, %v427, 0
      %v506 = vsel %vm491, %v429, 0
      %v508 = vsel %vm491, %v432, 0
      %v510 = vsel %vm491, %v434, 0
      %v512 = vsel %vm491, %v437, 0
      %v514 = vsel %vm491, %v439, 0
      %v516 = vsel %vm491, %v442, 0
      %v518 = vsel %vm491, %v444, 0
      %v520 = vsel %vm491, %v447, 0
      %v522 = vsel %vm491, %v449, 0
      %v524 = vsel %vm491, %v452, 0
      %v526 = vsel %vm491, %v454, 0
      %v528 = vsel %vm491, %v457, 0
      %v530 = vsel %vm491, %v459, 0
      %v532 = vsel %vm491, %v462, 0
      %v534 = vsel %vm491, %v464, 0
      %v536 = vsel %vm491, %v467, 0
      %v538 = vsel %vm491, %v469, 0
      %v540 = vsel %vm491, %v472, 0
      %v542 = vsel %vm491, %v474, 0
      %v544 = vsel %vm491, %v477, 0
      %v546 = vsel %vm491, %v479, 0
      %v548 = vsel %vm491, %v482, 0
      %v550 = vsel %vm491, %v484, 0
      %v552 = vsel %vm491, %v487, 0
      %v554 = vsel %vm491, %v489, 0
      %vm556 = vcmask 1043456
      %v558 = vsel %vm556, %v490, 0
      %560 = vmatprep.subr.mxu0 0.0
      %561 = vmatpush1.msra.mxu0 0.0
      %562 = vmatprep.subr.mxu0 0.0
      %563 = vmatpush1.msra.mxu0 0.0
      %564 = vmatprep.subr.mxu0 0.0
      %565 = vmatpush1.msra.mxu0 0.0
      %566 = vmatprep.subr.mxu0 0.0
      %567 = vmatpush1.msra.mxu0 0.0
      %568 = vmatprep.subr.mxu0 0.0
      %569 = vmatpush1.msra.mxu0 0.0
      %570 = vmatprep.subr.mxu0 0.0
      %571 = vmatpush1.msra.mxu0 0.0
      %572 = vmatprep.subr.mxu0 0.0
      %573 = vmatpush1.msra.mxu0 0.0
      %574 = vmatprep.subr.mxu0 0.0
      %575 = vmatpush1.msra.mxu0 0.0
      %576 = vmatprep.subr.mxu0 0.0
      %577 = vmatpush1.msra.mxu0 0.0
      %578 = vmatprep.subr.mxu0 0.0
      %579 = vmatpush1.msra.mxu0 0.0
      %580 = vmatprep.subr.mxu0 0.0
      %581 = vmatpush1.msra.mxu0 0.0
      %582 = vmatprep.subr.mxu0 0.0
      %583 = vmatpush1.msra.mxu0 0.0
      %584 = vmatprep.subr.mxu0 0.0
      %585 = vmatpush1.msra.mxu0 0.0
      %586 = vmatprep.subr.mxu0 0.0
      %587 = vmatpush1.msra.mxu0 0.0
      %588 = vmatprep.subr.mxu0 0.0
      %589 = vmatpush1.msra.mxu0 0.0
      %590 = vmatprep.subr.mxu0 0.0
      %591 = vmatpush1.msra.mxu0 %v558
      %592 = vmatprep.subr.mxu0 0.0
      %593 = vmatpush2.msra.mxu0 0.0
      %594 = vmatprep.subr.mxu0 0.0
      %595 = vmatpush2.msra.mxu0 0.0
      %596 = vmatprep.subr.mxu0 0.0
      %597 = vmatpush2.msra.mxu0 0.0
      %598 = vmatprep.subr.mxu0 0.0
      %599 = vmatpush2.msra.mxu0 0.0
      %600 = vmatprep.subr.mxu0 0.0
      %601 = vmatpush2.msra.mxu0 0.0
      %602 = vmatprep.subr.mxu0 0.0
      %603 = vmatpush2.msra.mxu0 0.0
      %604 = vmatprep.subr.mxu0 0.0
      %605 = vmatpush2.msra.mxu0 0.0
      %606 = vmatprep.subr.mxu0 0.0
      %607 = vmatpush2.msra.mxu0 0.0
      %608 = vmatprep.subr.mxu0 0.0
      %609 = vmatpush2.msra.mxu0 0.0
      %610 = vmatprep.subr.mxu0 0.0
      %611 = vmatpush2.msra.mxu0 0.0
      %612 = vmatprep.subr.mxu0 0.0
      %613 = vmatpush2.msra.mxu0 0.0
      %614 = vmatprep.subr.mxu0 0.0
      %615 = vmatpush2.msra.mxu0 0.0
      %616 = vmatprep.subr.mxu0 0.0
      %617 = vmatpush2.msra.mxu0 0.0
      %618 = vmatprep.subr.mxu0 0.0
      %619 = vmatpush2.msra.mxu0 0.0
      %620 = vmatprep.subr.mxu0 0.0
      %621 = vmatpush2.msra.mxu0 0.0
      %622 = vmatprep.subr.mxu0 0.0
      %623 = vmatpush2.msra.mxu0 0.0
      %624 = vmatprep.mubr.f32.mxu0 0.0
      %625 = vmatmul.mubr.f32.gmra.mxu0 %v492
      %v626 = vpop.f32.mrf.mxu0
      %v627 = vadd.f32 0.0, %v626
      %v628 = vpop.f32.mrf.mxu0
      %629 = vmatprep.mubr.f32.mxu0 0.0
      %630 = vmatmul.mubr.f32.gmra.mxu0 %v494
      %v631 = vpop.f32.mrf.mxu0
      %v632 = vadd.f32 0.0, %v631
      %v633 = vpop.f32.mrf.mxu0
      %634 = vmatprep.mubr.f32.mxu0 0.0
      %635 = vmatmul.mubr.f32.gmra.mxu0 %v496
      %v636 = vpop.f32.mrf.mxu0
      %v637 = vadd.f32 0.0, %v636
      %v638 = vpop.f32.mrf.mxu0
      %639 = vmatprep.mubr.f32.mxu0 0.0
      %640 = vmatmul.mubr.f32.gmra.mxu0 %v498
      %v641 = vpop.f32.mrf.mxu0
      %v642 = vadd.f32 0.0, %v641
      %v643 = vpop.f32.mrf.mxu0
      %644 = vmatprep.mubr.f32.mxu0 0.0
      %645 = vmatmul.mubr.f32.gmra.mxu0 %v500
      %v646 = vpop.f32.mrf.mxu0
      %v647 = vadd.f32 0.0, %v646
      %v648 = vpop.f32.mrf.mxu0
      %649 = vmatprep.mubr.f32.mxu0 0.0
      %650 = vmatmul.mubr.f32.gmra.mxu0 %v502
      %v651 = vpop.f32.mrf.mxu0
      %v652 = vadd.f32 0.0, %v651
      %v653 = vpop.f32.mrf.mxu0
      %654 = vmatprep.mubr.f32.mxu0 0.0
      %655 = vmatmul.mubr.f32.gmra.mxu0 %v504
      %v656 = vpop.f32.mrf.mxu0
      %v657 = vadd.f32 0.0, %v656
      %v658 = vpop.f32.mrf.mxu0
      %659 = vmatprep.mubr.f32.mxu0 0.0
      %660 = vmatmul.mubr.f32.gmra.mxu0 %v506
      %v661 = vpop.f32.mrf.mxu0
      %v662 = vadd.f32 0.0, %v661
      %v663 = vpop.f32.mrf.mxu0
      %664 = vmatprep.mubr.f32.mxu0 0.0
      %665 = vmatmul.mubr.f32.gmra.mxu0 %v508
      %v666 = vpop.f32.mrf.mxu0
      %v667 = vadd.f32 0.0, %v666
      %v668 = vpop.f32.mrf.mxu0
      %669 = vmatprep.mubr.f32.mxu0 0.0
      %670 = vmatmul.mubr.f32.gmra.mxu0 %v510
      %v671 = vpop.f32.mrf.mxu0
      %v672 = vadd.f32 0.0, %v671
      %v673 = vpop.f32.mrf.mxu0
      %674 = vmatprep.mubr.f32.mxu0 0.0
      %675 = vmatmul.mubr.f32.gmra.mxu0 %v512
      %v676 = vpop.f32.mrf.mxu0
      %v677 = vadd.f32 0.0, %v676
      %v678 = vpop.f32.mrf.mxu0
      %679 = vmatprep.mubr.f32.mxu0 0.0
      %680 = vmatmul.mubr.f32.gmra.mxu0 %v514
      %v681 = vpop.f32.mrf.mxu0
      %v682 = vadd.f32 0.0, %v681
      %v683 = vpop.f32.mrf.mxu0
      %684 = vmatprep.mubr.f32.mxu0 0.0
      %685 = vmatmul.mubr.f32.gmra.mxu0 %v516
      %v686 = vpop.f32.mrf.mxu0
      %v687 = vadd.f32 0.0, %v686
      %v688 = vpop.f32.mrf.mxu0
      %689 = vmatprep.mubr.f32.mxu0 0.0
      %690 = vmatmul.mubr.f32.gmra.mxu0 %v518
      %v691 = vpop.f32.mrf.mxu0
      %v692 = vadd.f32 0.0, %v691
      %v693 = vpop.f32.mrf.mxu0
      %694 = vmatprep.mubr.f32.mxu0 0.0
      %695 = vmatmul.mubr.f32.gmra.mxu0 %v520
      %v696 = vpop.f32.mrf.mxu0
      %v697 = vadd.f32 0.0, %v696
      %v698 = vpop.f32.mrf.mxu0
      %699 = vmatprep.mubr.f32.mxu0 0.0
      %700 = vmatmul.mubr.f32.gmra.mxu0 %v522
      %v701 = vpop.f32.mrf.mxu0
      %v702 = vadd.f32 0.0, %v701
      %v703 = vpop.f32.mrf.mxu0
      %704 = vmatprep.mubr.f32.mxu0 0.0
      %705 = vmatmul.mubr.f32.gmra.mxu0 %v524
      %v706 = vpop.f32.mrf.mxu0
      %v707 = vadd.f32 0.0, %v706
      %v708 = vpop.f32.mrf.mxu0
      %709 = vmatprep.mubr.f32.mxu0 0.0
      %710 = vmatmul.mubr.f32.gmra.mxu0 %v526
      %v711 = vpop.f32.mrf.mxu0
      %v712 = vadd.f32 0.0, %v711
      %v713 = vpop.f32.mrf.mxu0
      %714 = vmatprep.mubr.f32.mxu0 0.0
      %715 = vmatmul.mubr.f32.gmra.mxu0 %v528
      %v716 = vpop.f32.mrf.mxu0
      %v717 = vadd.f32 0.0, %v716
      %v718 = vpop.f32.mrf.mxu0
      %719 = vmatprep.mubr.f32.mxu0 0.0
      %720 = vmatmul.mubr.f32.gmra.mxu0 %v530
      %v721 = vpop.f32.mrf.mxu0
      %v722 = vadd.f32 0.0, %v721
      %v723 = vpop.f32.mrf.mxu0
      %724 = vmatprep.mubr.f32.mxu0 0.0
      %725 = vmatmul.mubr.f32.gmra.mxu0 %v532
      %v726 = vpop.f32.mrf.mxu0
      %v727 = vadd.f32 0.0, %v726
      %v728 = vpop.f32.mrf.mxu0
      %729 = vmatprep.mubr.f32.mxu0 0.0
      %730 = vmatmul.mubr.f32.gmra.mxu0 %v534
      %v731 = vpop.f32.mrf.mxu0
      %v732 = vadd.f32 0.0, %v731
      %v733 = vpop.f32.mrf.mxu0
      %734 = vmatprep.mubr.f32.mxu0 0.0
      %735 = vmatmul.mubr.f32.gmra.mxu0 %v536
      %v736 = vpop.f32.mrf.mxu0
      %v737 = vadd.f32 0.0, %v736
      %v738 = vpop.f32.mrf.mxu0
      %739 = vmatprep.mubr.f32.mxu0 0.0
      %740 = vmatmul.mubr.f32.gmra.mxu0 %v538
      %v741 = vpop.f32.mrf.mxu0
      %v742 = vadd.f32 0.0, %v741
      %v743 = vpop.f32.mrf.mxu0
      %744 = vmatprep.mubr.f32.mxu0 0.0
      %745 = vmatmul.mubr.f32.gmra.mxu0 %v540
      %v746 = vpop.f32.mrf.mxu0
      %v747 = vadd.f32 0.0, %v746
      %v748 = vpop.f32.mrf.mxu0
      %749 = vmatprep.mubr.f32.mxu0 0.0
      %750 = vmatmul.mubr.f32.gmra.mxu0 %v542
      %v751 = vpop.f32.mrf.mxu0
      %v752 = vadd.f32 0.0, %v751
      %v753 = vpop.f32.mrf.mxu0
      %754 = vmatprep.mubr.f32.mxu0 0.0
      %755 = vmatmul.mubr.f32.gmra.mxu0 %v544
      %v756 = vpop.f32.mrf.mxu0
      %v757 = vadd.f32 0.0, %v756
      %v758 = vpop.f32.mrf.mxu0
      %759 = vmatprep.mubr.f32.mxu0 0.0
      %760 = vmatmul.mubr.f32.gmra.mxu0 %v546
      %v761 = vpop.f32.mrf.mxu0
      %v762 = vadd.f32 0.0, %v761
      %v763 = vpop.f32.mrf.mxu0
      %764 = vmatprep.mubr.f32.mxu0 0.0
      %765 = vmatmul.mubr.f32.gmra.mxu0 %v548
      %v766 = vpop.f32.mrf.mxu0
      %v767 = vadd.f32 0.0, %v766
      %v768 = vpop.f32.mrf.mxu0
      %769 = vmatprep.mubr.f32.mxu0 0.0
      %770 = vmatmul.mubr.f32.gmra.mxu0 %v550
      %v771 = vpop.f32.mrf.mxu0
      %v772 = vadd.f32 0.0, %v771
      %v773 = vpop.f32.mrf.mxu0
      %774 = vmatprep.mubr.f32.mxu0 0.0
      %775 = vmatmul.mubr.f32.gmra.mxu0 %v552
      %v776 = vpop.f32.mrf.mxu0
      %v777 = vadd.f32 0.0, %v776
      %v778 = vpop.f32.mrf.mxu0
      %779 = vmatprep.mubr.f32.mxu0 0.0
      %780 = vmatmul.mubr.f32.gmra.mxu0 %v554
      %v781 = vpop.f32.mrf.mxu0
      %v782 = vadd.f32 0.0, %v781
      %v783 = vpop.f32.mrf.mxu0
      %784 = vdwg.mxu0
      %v785 = vadd.f32 %v329, %v627
      %v786 = vadd.f32 %v330, %v632
      %v787 = vadd.f32 %v331, %v637
      %v788 = vadd.f32 %v332, %v642
      %v789 = vadd.f32 %v333, %v647
      %v790 = vadd.f32 %v334, %v652
      %v791 = vadd.f32 %v335, %v657
      %v792 = vadd.f32 %v336, %v662
      %v793 = vadd.f32 %v337, %v667
      %v794 = vadd.f32 %v338, %v672
      %v795 = vadd.f32 %v339, %v677
      %v796 = vadd.f32 %v340, %v682
      %v797 = vadd.f32 %v341, %v687
      %v798 = vadd.f32 %v342, %v692
      %v799 = vadd.f32 %v343, %v697
      %v800 = vadd.f32 %v344, %v702
      %v801 = vadd.f32 %v345, %v707
      %v802 = vadd.f32 %v346, %v712
      %v803 = vadd.f32 %v347, %v717
      %v804 = vadd.f32 %v348, %v722
      %v805 = vadd.f32 %v349, %v727
      %v806 = vadd.f32 %v350, %v732
      %v807 = vadd.f32 %v351, %v737
      %v808 = vadd.f32 %v352, %v742
      %v809 = vadd.f32 %v353, %v747
      %v810 = vadd.f32 %v354, %v752
      %v811 = vadd.f32 %v355, %v757
      %v812 = vadd.f32 %v356, %v762
      %v813 = vadd.f32 %v357, %v767
      %v814 = vadd.f32 %v358, %v772
      %v815 = vadd.f32 %v359, %v777
      %v816 = vadd.f32 %v360, %v782
      %vm817 = vcmask 1044480
      %v818 = vrot.slane %v275, 3
      %v819 = vrot.slane %v276, 3
      %v820 = vsel %vm817, %v818, %v819
      %v821 = vrot.slane %v277, 3
      %v822 = vsel %vm817, %v819, %v821
      %v823 = vrot.slane %v278, 3
      %v824 = vrot.slane %v279, 3
      %v825 = vsel %vm817, %v823, %v824
      %v826 = vrot.slane %v280, 3
      %v827 = vsel %vm817, %v824, %v826
      %v828 = vrot.slane %v281, 3
      %v829 = vrot.slane %v282, 3
      %v830 = vsel %vm817, %v828, %v829
      %v831 = vrot.slane %v283, 3
      %v832 = vsel %vm817, %v829, %v831
      %v833 = vrot.slane %v284, 3
      %v834 = vrot.slane %v285, 3
      %v835 = vsel %vm817, %v833, %v834
      %v836 = vrot.slane %v286, 3
      %v837 = vsel %vm817, %v834, %v836
      %v838 = vrot.slane %v287, 3
      %v839 = vrot.slane %v288, 3
      %v840 = vsel %vm817, %v838, %v839
      %v841 = vrot.slane %v289, 3
      %v842 = vsel %vm817, %v839, %v841
      %v843 = vrot.slane %v290, 3
      %v844 = vrot.slane %v291, 3
      %v845 = vsel %vm817, %v843, %v844
      %v846 = vrot.slane %v292, 3
      %v847 = vsel %vm817, %v844, %v846
      %v848 = vrot.slane %v293, 3
      %v849 = vrot.slane %v294, 3
      %v850 = vsel %vm817, %v848, %v849
      %v851 = vrot.slane %v295, 3
      %v852 = vsel %vm817, %v849, %v851
      %v853 = vrot.slane %v296, 3
      %v854 = vrot.slane %v297, 3
      %v855 = vsel %vm817, %v853, %v854
      %v856 = vrot.slane %v298, 3
      %v857 = vsel %vm817, %v854, %v856
      %v858 = vrot.slane %v299, 3
      %v859 = vrot.slane %v300, 3
      %v860 = vsel %vm817, %v858, %v859
      %v861 = vrot.slane %v301, 3
      %v862 = vsel %vm817, %v859, %v861
      %v863 = vrot.slane %v302, 3
      %v864 = vrot.slane %v303, 3
      %v865 = vsel %vm817, %v863, %v864
      %v866 = vrot.slane %v304, 3
      %v867 = vsel %vm817, %v864, %v866
      %v868 = vrot.slane %v305, 3
      %v869 = vrot.slane %v306, 3
      %v870 = vsel %vm817, %v868, %v869
      %v871 = vrot.slane %v307, 3
      %v872 = vsel %vm817, %v869, %v871
      %v873 = vrot.slane %v308, 3
      %v874 = vrot.slane %v309, 3
      %v875 = vsel %vm817, %v873, %v874
      %v876 = vrot.slane %v310, 3
      %v877 = vsel %vm817, %v874, %v876
      %v878 = vrot.slane %v311, 3
      %v879 = vrot.slane %v312, 3
      %v880 = vsel %vm817, %v878, %v879
      %v881 = vrot.slane %v313, 3
      %v882 = vsel %vm817, %v879, %v881
      %v883 = vrot.slane %v314, 3
      %v884 = vrot.slane %v315, 3
      %v885 = vsel %vm817, %v883, %v884
      %v886 = vrot.slane %v316, 3
      %v887 = vsel %vm817, %v884, %v886
      %v888 = vrot.slane %v317, 3
      %v889 = vrot.slane %v318, 3
      %v890 = vsel %vm817, %v888, %v889
      %v891 = vrot.slane %v319, 3
      %v892 = vsel %vm817, %v889, %v891
      %v893 = vrot.slane %v320, 3
      %v894 = vrot.slane %v321, 3
      %v895 = vsel %vm817, %v893, %v894
      %v896 = vrot.slane %v322, 3
      %v897 = vsel %vm817, %v894, %v896
      %s898 = scalar_lea.vmem %s232, 4
      %v899 = vld [vmem:[%s898] sm:$0xf]
      %v900 = vsel %vm491, %v820, 0
      %v902 = vsel %vm491, %v822, 0
      %v904 = vsel %vm491, %v825, 0
      %v906 = vsel %vm491, %v827, 0
      %v908 = vsel %vm491, %v830, 0
      %v910 = vsel %vm491, %v832, 0
      %v912 = vsel %vm491, %v835, 0
      %v914 = vsel %vm491, %v837, 0
      %v916 = vsel %vm491, %v840, 0
      %v918 = vsel %vm491, %v842, 0
      %v920 = vsel %vm491, %v845, 0
      %v922 = vsel %vm491, %v847, 0
      %v924 = vsel %vm491, %v850, 0
      %v926 = vsel %vm491, %v852, 0
      %v928 = vsel %vm491, %v855, 0
      %v930 = vsel %vm491, %v857, 0
      %v932 = vsel %vm491, %v860, 0
      %v934 = vsel %vm491, %v862, 0
      %v936 = vsel %vm491, %v865, 0
      %v938 = vsel %vm491, %v867, 0
      %v940 = vsel %vm491, %v870, 0
      %v942 = vsel %vm491, %v872, 0
      %v944 = vsel %vm491, %v875, 0
      %v946 = vsel %vm491, %v877, 0
      %v948 = vsel %vm491, %v880, 0
      %v950 = vsel %vm491, %v882, 0
      %v952 = vsel %vm491, %v885, 0
      %v954 = vsel %vm491, %v887, 0
      %v956 = vsel %vm491, %v890, 0
      %v958 = vsel %vm491, %v892, 0
      %v960 = vsel %vm491, %v895, 0
      %v962 = vsel %vm491, %v897, 0
      %v965 = vsel %vm556, %v899, 0
      %967 = vmatprep.subr.mxu0 0.0
      %968 = vmatpush1.msra.mxu0 0.0
      %969 = vmatprep.subr.mxu0 0.0
      %970 = vmatpush1.msra.mxu0 0.0
      %971 = vmatprep.subr.mxu0 0.0
      %972 = vmatpush1.msra.mxu0 0.0
      %973 = vmatprep.subr.mxu0 0.0
      %974 = vmatpush1.msra.mxu0 0.0
      %975 = vmatprep.subr.mxu0 0.0
      %976 = vmatpush1.msra.mxu0 0.0
      %977 = vmatprep.subr.mxu0 0.0
      %978 = vmatpush1.msra.mxu0 0.0
      %979 = vmatprep.subr.mxu0 0.0
      %980 = vmatpush1.msra.mxu0 0.0
      %981 = vmatprep.subr.mxu0 0.0
      %982 = vmatpush1.msra.mxu0 0.0
      %983 = vmatprep.subr.mxu0 0.0
      %984 = vmatpush1.msra.mxu0 0.0
      %985 = vmatprep.subr.mxu0 0.0
      %986 = vmatpush1.msra.mxu0 0.0
      %987 = vmatprep.subr.mxu0 0.0
      %988 = vmatpush1.msra.mxu0 0.0
      %989 = vmatprep.subr.mxu0 0.0
      %990 = vmatpush1.msra.mxu0 0.0
      %991 = vmatprep.subr.mxu0 0.0
      %992 = vmatpush1.msra.mxu0 0.0
      %993 = vmatprep.subr.mxu0 0.0
      %994 = vmatpush1.msra.mxu0 0.0
      %995 = vmatprep.subr.mxu0 0.0
      %996 = vmatpush1.msra.mxu0 0.0
      %997 = vmatprep.subr.mxu0 0.0
      %998 = vmatpush1.msra.mxu0 %v965
      %999 = vmatprep.subr.mxu0 0.0
      %1000 = vmatpush2.msra.mxu0 0.0
      %1001 = vmatprep.subr.mxu0 0.0
      %1002 = vmatpush2.msra.mxu0 0.0
      %1003 = vmatprep.subr.mxu0 0.0
      %1004 = vmatpush2.msra.mxu0 0.0
      %1005 = vmatprep.subr.mxu0 0.0
      %1006 = vmatpush2.msra.mxu0 0.0
      %1007 = vmatprep.subr.mxu0 0.0
      %1008 = vmatpush2.msra.mxu0 0.0
      %1009 = vmatprep.subr.mxu0 0.0
      %1010 = vmatpush2.msra.mxu0 0.0
      %1011 = vmatprep.subr.mxu0 0.0
      %1012 = vmatpush2.msra.mxu0 0.0
      %1013 = vmatprep.subr.mxu0 0.0
      %1014 = vmatpush2.msra.mxu0 0.0
      %1015 = vmatprep.subr.mxu0 0.0
      %1016 = vmatpush2.msra.mxu0 0.0
      %1017 = vmatprep.subr.mxu0 0.0
      %1018 = vmatpush2.msra.mxu0 0.0
      %1019 = vmatprep.subr.mxu0 0.0
      %1020 = vmatpush2.msra.mxu0 0.0
      %1021 = vmatprep.subr.mxu0 0.0
      %1022 = vmatpush2.msra.mxu0 0.0
      %1023 = vmatprep.subr.mxu0 0.0
      %1024 = vmatpush2.msra.mxu0 0.0
      %1025 = vmatprep.subr.mxu0 0.0
      %1026 = vmatpush2.msra.mxu0 0.0
      %1027 = vmatprep.subr.mxu0 0.0
      %1028 = vmatpush2.msra.mxu0 0.0
      %1029 = vmatprep.subr.mxu0 0.0
      %1030 = vmatpush2.msra.mxu0 0.0
      %1031 = vmatprep.mubr.f32.mxu0 0.0
      %1032 = vmatmul.mubr.f32.gmra.mxu0 %v900
      %v1033 = vpop.f32.mrf.mxu0
      %v1034 = vadd.f32 0.0, %v1033
      %v1035 = vpop.f32.mrf.mxu0
      %1036 = vmatprep.mubr.f32.mxu0 0.0
      %1037 = vmatmul.mubr.f32.gmra.mxu0 %v902
      %v1038 = vpop.f32.mrf.mxu0
      %v1039 = vadd.f32 0.0, %v1038
      %v1040 = vpop.f32.mrf.mxu0
      %1041 = vmatprep.mubr.f32.mxu0 0.0
      %1042 = vmatmul.mubr.f32.gmra.mxu0 %v904
      %v1043 = vpop.f32.mrf.mxu0
      %v1044 = vadd.f32 0.0, %v1043
      %v1045 = vpop.f32.mrf.mxu0
      %1046 = vmatprep.mubr.f32.mxu0 0.0
      %1047 = vmatmul.mubr.f32.gmra.mxu0 %v906
      %v1048 = vpop.f32.mrf.mxu0
      %v1049 = vadd.f32 0.0, %v1048
      %v1050 = vpop.f32.mrf.mxu0
      %1051 = vmatprep.mubr.f32.mxu0 0.0
      %1052 = vmatmul.mubr.f32.gmra.mxu0 %v908
      %v1053 = vpop.f32.mrf.mxu0
      %v1054 = vadd.f32 0.0, %v1053
      %v1055 = vpop.f32.mrf.mxu0
      %1056 = vmatprep.mubr.f32.mxu0 0.0
      %1057 = vmatmul.mubr.f32.gmra.mxu0 %v910
      %v1058 = vpop.f32.mrf.mxu0
      %v1059 = vadd.f32 0.0, %v1058
      %v1060 = vpop.f32.mrf.mxu0
      %1061 = vmatprep.mubr.f32.mxu0 0.0
      %1062 = vmatmul.mubr.f32.gmra.mxu0 %v912
      %v1063 = vpop.f32.mrf.mxu0
      %v1064 = vadd.f32 0.0, %v1063
      %v1065 = vpop.f32.mrf.mxu0
      %1066 = vmatprep.mubr.f32.mxu0 0.0
      %1067 = vmatmul.mubr.f32.gmra.mxu0 %v914
      %v1068 = vpop.f32.mrf.mxu0
      %v1069 = vadd.f32 0.0, %v1068
      %v1070 = vpop.f32.mrf.mxu0
      %1071 = vmatprep.mubr.f32.mxu0 0.0
      %1072 = vmatmul.mubr.f32.gmra.mxu0 %v916
      %v1073 = vpop.f32.mrf.mxu0
      %v1074 = vadd.f32 0.0, %v1073
      %v1075 = vpop.f32.mrf.mxu0
      %1076 = vmatprep.mubr.f32.mxu0 0.0
      %1077 = vmatmul.mubr.f32.gmra.mxu0 %v918
      %v1078 = vpop.f32.mrf.mxu0
      %v1079 = vadd.f32 0.0, %v1078
      %v1080 = vpop.f32.mrf.mxu0
      %1081 = vmatprep.mubr.f32.mxu0 0.0
      %1082 = vmatmul.mubr.f32.gmra.mxu0 %v920
      %v1083 = vpop.f32.mrf.mxu0
      %v1084 = vadd.f32 0.0, %v1083
      %v1085 = vpop.f32.mrf.mxu0
      %1086 = vmatprep.mubr.f32.mxu0 0.0
      %1087 = vmatmul.mubr.f32.gmra.mxu0 %v922
      %v1088 = vpop.f32.mrf.mxu0
      %v1089 = vadd.f32 0.0, %v1088
      %v1090 = vpop.f32.mrf.mxu0
      %1091 = vmatprep.mubr.f32.mxu0 0.0
      %1092 = vmatmul.mubr.f32.gmra.mxu0 %v924
      %v1093 = vpop.f32.mrf.mxu0
      %v1094 = vadd.f32 0.0, %v1093
      %v1095 = vpop.f32.mrf.mxu0
      %1096 = vmatprep.mubr.f32.mxu0 0.0
      %1097 = vmatmul.mubr.f32.gmra.mxu0 %v926
      %v1098 = vpop.f32.mrf.mxu0
      %v1099 = vadd.f32 0.0, %v1098
      %v1100 = vpop.f32.mrf.mxu0
      %1101 = vmatprep.mubr.f32.mxu0 0.0
      %1102 = vmatmul.mubr.f32.gmra.mxu0 %v928
      %v1103 = vpop.f32.mrf.mxu0
      %v1104 = vadd.f32 0.0, %v1103
      %v1105 = vpop.f32.mrf.mxu0
      %1106 = vmatprep.mubr.f32.mxu0 0.0
      %1107 = vmatmul.mubr.f32.gmra.mxu0 %v930
      %v1108 = vpop.f32.mrf.mxu0
      %v1109 = vadd.f32 0.0, %v1108
      %v1110 = vpop.f32.mrf.mxu0
      %1111 = vmatprep.mubr.f32.mxu0 0.0
      %1112 = vmatmul.mubr.f32.gmra.mxu0 %v932
      %v1113 = vpop.f32.mrf.mxu0
      %v1114 = vadd.f32 0.0, %v1113
      %v1115 = vpop.f32.mrf.mxu0
      %1116 = vmatprep.mubr.f32.mxu0 0.0
      %1117 = vmatmul.mubr.f32.gmra.mxu0 %v934
      %v1118 = vpop.f32.mrf.mxu0
      %v1119 = vadd.f32 0.0, %v1118
      %v1120 = vpop.f32.mrf.mxu0
      %1121 = vmatprep.mubr.f32.mxu0 0.0
      %1122 = vmatmul.mubr.f32.gmra.mxu0 %v936
      %v1123 = vpop.f32.mrf.mxu0
      %v1124 = vadd.f32 0.0, %v1123
      %v1125 = vpop.f32.mrf.mxu0
      %1126 = vmatprep.mubr.f32.mxu0 0.0
      %1127 = vmatmul.mubr.f32.gmra.mxu0 %v938
      %v1128 = vpop.f32.mrf.mxu0
      %v1129 = vadd.f32 0.0, %v1128
      %v1130 = vpop.f32.mrf.mxu0
      %1131 = vmatprep.mubr.f32.mxu0 0.0
      %1132 = vmatmul.mubr.f32.gmra.mxu0 %v940
      %v1133 = vpop.f32.mrf.mxu0
      %v1134 = vadd.f32 0.0, %v1133
      %v1135 = vpop.f32.mrf.mxu0
      %1136 = vmatprep.mubr.f32.mxu0 0.0
      %1137 = vmatmul.mubr.f32.gmra.mxu0 %v942
      %v1138 = vpop.f32.mrf.mxu0
      %v1139 = vadd.f32 0.0, %v1138
      %v1140 = vpop.f32.mrf.mxu0
      %1141 = vmatprep.mubr.f32.mxu0 0.0
      %1142 = vmatmul.mubr.f32.gmra.mxu0 %v944
      %v1143 = vpop.f32.mrf.mxu0
      %v1144 = vadd.f32 0.0, %v1143
      %v1145 = vpop.f32.mrf.mxu0
      %1146 = vmatprep.mubr.f32.mxu0 0.0
      %1147 = vmatmul.mubr.f32.gmra.mxu0 %v946
      %v1148 = vpop.f32.mrf.mxu0
      %v1149 = vadd.f32 0.0, %v1148
      %v1150 = vpop.f32.mrf.mxu0
      %1151 = vmatprep.mubr.f32.mxu0 0.0
      %1152 = vmatmul.mubr.f32.gmra.mxu0 %v948
      %v1153 = vpop.f32.mrf.mxu0
      %v1154 = vadd.f32 0.0, %v1153
      %v1155 = vpop.f32.mrf.mxu0
      %1156 = vmatprep.mubr.f32.mxu0 0.0
      %1157 = vmatmul.mubr.f32.gmra.mxu0 %v950
      %v1158 = vpop.f32.mrf.mxu0
      %v1159 = vadd.f32 0.0, %v1158
      %v1160 = vpop.f32.mrf.mxu0
      %1161 = vmatprep.mubr.f32.mxu0 0.0
      %1162 = vmatmul.mubr.f32.gmra.mxu0 %v952
      %v1163 = vpop.f32.mrf.mxu0
      %v1164 = vadd.f32 0.0, %v1163
      %v1165 = vpop.f32.mrf.mxu0
      %1166 = vmatprep.mubr.f32.mxu0 0.0
      %1167 = vmatmul.mubr.f32.gmra.mxu0 %v954
      %v1168 = vpop.f32.mrf.mxu0
      %v1169 = vadd.f32 0.0, %v1168
      %v1170 = vpop.f32.mrf.mxu0
      %1171 = vmatprep.mubr.f32.mxu0 0.0
      %1172 = vmatmul.mubr.f32.gmra.mxu0 %v956
      %v1173 = vpop.f32.mrf.mxu0
      %v1174 = vadd.f32 0.0, %v1173
      %v1175 = vpop.f32.mrf.mxu0
      %1176 = vmatprep.mubr.f32.mxu0 0.0
      %1177 = vmatmul.mubr.f32.gmra.mxu0 %v958
      %v1178 = vpop.f32.mrf.mxu0
      %v1179 = vadd.f32 0.0, %v1178
      %v1180 = vpop.f32.mrf.mxu0
      %1181 = vmatprep.mubr.f32.mxu0 0.0
      %1182 = vmatmul.mubr.f32.gmra.mxu0 %v960
      %v1183 = vpop.f32.mrf.mxu0
      %v1184 = vadd.f32 0.0, %v1183
      %v1185 = vpop.f32.mrf.mxu0
      %1186 = vmatprep.mubr.f32.mxu0 0.0
      %1187 = vmatmul.mubr.f32.gmra.mxu0 %v962
      %v1188 = vpop.f32.mrf.mxu0
      %v1189 = vadd.f32 0.0, %v1188
      %v1190 = vpop.f32.mrf.mxu0
      %1191 = vdwg.mxu0
      %v1192 = vadd.f32 %v785, %v1034
      %v1193 = vadd.f32 %v786, %v1039
      %v1194 = vadd.f32 %v787, %v1044
      %v1195 = vadd.f32 %v788, %v1049
      %v1196 = vadd.f32 %v789, %v1054
      %v1197 = vadd.f32 %v790, %v1059
      %v1198 = vadd.f32 %v791, %v1064
      %v1199 = vadd.f32 %v792, %v1069
      %v1200 = vadd.f32 %v793, %v1074
      %v1201 = vadd.f32 %v794, %v1079
      %v1202 = vadd.f32 %v795, %v1084
      %v1203 = vadd.f32 %v796, %v1089
      %v1204 = vadd.f32 %v797, %v1094
      %v1205 = vadd.f32 %v798, %v1099
      %v1206 = vadd.f32 %v799, %v1104
      %v1207 = vadd.f32 %v800, %v1109
      %v1208 = vadd.f32 %v801, %v1114
      %v1209 = vadd.f32 %v802, %v1119
      %v1210 = vadd.f32 %v803, %v1124
      %v1211 = vadd.f32 %v804, %v1129
      %v1212 = vadd.f32 %v805, %v1134
      %v1213 = vadd.f32 %v806, %v1139
      %v1214 = vadd.f32 %v807, %v1144
      %v1215 = vadd.f32 %v808, %v1149
      %v1216 = vadd.f32 %v809, %v1154
      %v1217 = vadd.f32 %v810, %v1159
      %v1218 = vadd.f32 %v811, %v1164
      %v1219 = vadd.f32 %v812, %v1169
      %v1220 = vadd.f32 %v813, %v1174
      %v1221 = vadd.f32 %v814, %v1179
      %v1222 = vadd.f32 %v815, %v1184
      %v1223 = vadd.f32 %v816, %v1189
      %v1224 = vrot.slane %v275, 4
      %v1225 = vrot.slane %v276, 4
      %v1226 = vsel %vm556, %v1224, %v1225
      %v1227 = vrot.slane %v277, 4
      %v1228 = vsel %vm556, %v1225, %v1227
      %v1229 = vrot.slane %v278, 4
      %v1230 = vrot.slane %v279, 4
      %v1231 = vsel %vm556, %v1229, %v1230
      %v1232 = vrot.slane %v280, 4
      %v1233 = vsel %vm556, %v1230, %v1232
      %v1234 = vrot.slane %v281, 4
      %v1235 = vrot.slane %v282, 4
      %v1236 = vsel %vm556, %v1234, %v1235
      %v1237 = vrot.slane %v283, 4
      %v1238 = vsel %vm556, %v1235, %v1237
      %v1239 = vrot.slane %v284, 4
      %v1240 = vrot.slane %v285, 4
      %v1241 = vsel %vm556, %v1239, %v1240
      %v1242 = vrot.slane %v286, 4
      %v1243 = vsel %vm556, %v1240, %v1242
      %v1244 = vrot.slane %v287, 4
      %v1245 = vrot.slane %v288, 4
      %v1246 = vsel %vm556, %v1244, %v1245
      %v1247 = vrot.slane %v289, 4
      %v1248 = vsel %vm556, %v1245, %v1247
      %v1249 = vrot.slane %v290, 4
      %v1250 = vrot.slane %v291, 4
      %v1251 = vsel %vm556, %v1249, %v1250
      %v1252 = vrot.slane %v292, 4
      %v1253 = vsel %vm556, %v1250, %v1252
      %v1254 = vrot.slane %v293, 4
      %v1255 = vrot.slane %v294, 4
      %v1256 = vsel %vm556, %v1254, %v1255
      %v1257 = vrot.slane %v295, 4
      %v1258 = vsel %vm556, %v1255, %v1257
      %v1259 = vrot.slane %v296, 4
      %v1260 = vrot.slane %v297, 4
      %v1261 = vsel %vm556, %v1259, %v1260
      %v1262 = vrot.slane %v298, 4
      %v1263 = vsel %vm556, %v1260, %v1262
      %v1264 = vrot.slane %v299, 4
      %v1265 = vrot.slane %v300, 4
      %v1266 = vsel %vm556, %v1264, %v1265
      %v1267 = vrot.slane %v301, 4
      %v1268 = vsel %vm556, %v1265, %v1267
      %v1269 = vrot.slane %v302, 4
      %v1270 = vrot.slane %v303, 4
      %v1271 = vsel %vm556, %v1269, %v1270
      %v1272 = vrot.slane %v304, 4
      %v1273 = vsel %vm556, %v1270, %v1272
      %v1274 = vrot.slane %v305, 4
      %v1275 = vrot.slane %v306, 4
      %v1276 = vsel %vm556, %v1274, %v1275
      %v1277 = vrot.slane %v307, 4
      %v1278 = vsel %vm556, %v1275, %v1277
      %v1279 = vrot.slane %v308, 4
      %v1280 = vrot.slane %v309, 4
      %v1281 = vsel %vm556, %v1279, %v1280
      %v1282 = vrot.slane %v310, 4
      %v1283 = vsel %vm556, %v1280, %v1282
      %v1284 = vrot.slane %v311, 4
      %v1285 = vrot.slane %v312, 4
      %v1286 = vsel %vm556, %v1284, %v1285
      %v1287 = vrot.slane %v313, 4
      %v1288 = vsel %vm556, %v1285, %v1287
      %v1289 = vrot.slane %v314, 4
      %v1290 = vrot.slane %v315, 4
      %v1291 = vsel %vm556, %v1289, %v1290
      %v1292 = vrot.slane %v316, 4
      %v1293 = vsel %vm556, %v1290, %v1292
      %v1294 = vrot.slane %v317, 4
      %v1295 = vrot.slane %v318, 4
      %v1296 = vsel %vm556, %v1294, %v1295
      %v1297 = vrot.slane %v319, 4
      %v1298 = vsel %vm556, %v1295, %v1297
      %v1299 = vrot.slane %v320, 4
      %v1300 = vrot.slane %v321, 4
      %v1301 = vsel %vm556, %v1299, %v1300
      %v1302 = vrot.slane %v322, 4
      %v1303 = vsel %vm556, %v1300, %v1302
      %s1304 = scalar_lea.vmem %s232, 8
      %v1305 = vld [vmem:[%s1304] sm:$0xf]
      %v1306 = vsel %vm491, %v1226, 0
      %v1308 = vsel %vm491, %v1228, 0
      %v1310 = vsel %vm491, %v1231, 0
      %v1312 = vsel %vm491, %v1233, 0
      %v1314 = vsel %vm491, %v1236, 0
      %v1316 = vsel %vm491, %v1238, 0
      %v1318 = vsel %vm491, %v1241, 0
      %v1320 = vsel %vm491, %v1243, 0
      %v1322 = vsel %vm491, %v1246, 0
      %v1324 = vsel %vm491, %v1248, 0
      %v1326 = vsel %vm491, %v1251, 0
      %v1328 = vsel %vm491, %v1253, 0
      %v1330 = vsel %vm491, %v1256, 0
      %v1332 = vsel %vm491, %v1258, 0
      %v1334 = vsel %vm491, %v1261, 0
      %v1336 = vsel %vm491, %v1263, 0
      %v1338 = vsel %vm491, %v1266, 0
      %v1340 = vsel %vm491, %v1268, 0
      %v1342 = vsel %vm491, %v1271, 0
      %v1344 = vsel %vm491, %v1273, 0
      %v1346 = vsel %vm491, %v1276, 0
      %v1348 = vsel %vm491, %v1278, 0
      %v1350 = vsel %vm491, %v1281, 0
      %v1352 = vsel %vm491, %v1283, 0
      %v1354 = vsel %vm491, %v1286, 0
      %v1356 = vsel %vm491, %v1288, 0
      %v1358 = vsel %vm491, %v1291, 0
      %v1360 = vsel %vm491, %v1293, 0
      %v1362 = vsel %vm491, %v1296, 0
      %v1364 = vsel %vm491, %v1298, 0
      %v1366 = vsel %vm491, %v1301, 0
      %v1368 = vsel %vm491, %v1303, 0
      %v1371 = vsel %vm556, %v1305, 0
      %1373 = vmatprep.subr.mxu0 0.0
      %1374 = vmatpush1.msra.mxu0 0.0
      %1375 = vmatprep.subr.mxu0 0.0
      %1376 = vmatpush1.msra.mxu0 0.0
      %1377 = vmatprep.subr.mxu0 0.0
      %1378 = vmatpush1.msra.mxu0 0.0
      %1379 = vmatprep.subr.mxu0 0.0
      %1380 = vmatpush1.msra.mxu0 0.0
      %1381 = vmatprep.subr.mxu0 0.0
      %1382 = vmatpush1.msra.mxu0 0.0
      %1383 = vmatprep.subr.mxu0 0.0
      %1384 = vmatpush1.msra.mxu0 0.0
      %1385 = vmatprep.subr.mxu0 0.0
      %1386 = vmatpush1.msra.mxu0 0.0
      %1387 = vmatprep.subr.mxu0 0.0
      %1388 = vmatpush1.msra.mxu0 0.0
      %1389 = vmatprep.subr.mxu0 0.0
      %1390 = vmatpush1.msra.mxu0 0.0
      %1391 = vmatprep.subr.mxu0 0.0
      %1392 = vmatpush1.msra.mxu0 0.0
      %1393 = vmatprep.subr.mxu0 0.0
      %1394 = vmatpush1.msra.mxu0 0.0
      %1395 = vmatprep.subr.mxu0 0.0
      %1396 = vmatpush1.msra.mxu0 0.0
      %1397 = vmatprep.subr.mxu0 0.0
      %1398 = vmatpush1.msra.mxu0 0.0
      %1399 = vmatprep.subr.mxu0 0.0
      %1400 = vmatpush1.msra.mxu0 0.0
      %1401 = vmatprep.subr.mxu0 0.0
      %1402 = vmatpush1.msra.mxu0 0.0
      %1403 = vmatprep.subr.mxu0 0.0
      %1404 = vmatpush1.msra.mxu0 %v1371
      %1405 = vmatprep.subr.mxu0 0.0
      %1406 = vmatpush2.msra.mxu0 0.0
      %1407 = vmatprep.subr.mxu0 0.0
      %1408 = vmatpush2.msra.mxu0 0.0
      %1409 = vmatprep.subr.mxu0 0.0
      %1410 = vmatpush2.msra.mxu0 0.0
      %1411 = vmatprep.subr.mxu0 0.0
      %1412 = vmatpush2.msra.mxu0 0.0
      %1413 = vmatprep.subr.mxu0 0.0
      %1414 = vmatpush2.msra.mxu0 0.0
      %1415 = vmatprep.subr.mxu0 0.0
      %1416 = vmatpush2.msra.mxu0 0.0
      %1417 = vmatprep.subr.mxu0 0.0
      %1418 = vmatpush2.msra.mxu0 0.0
      %1419 = vmatprep.subr.mxu0 0.0
      %1420 = vmatpush2.msra.mxu0 0.0
      %1421 = vmatprep.subr.mxu0 0.0
      %1422 = vmatpush2.msra.mxu0 0.0
      %1423 = vmatprep.subr.mxu0 0.0
      %1424 = vmatpush2.msra.mxu0 0.0
      %1425 = vmatprep.subr.mxu0 0.0
      %1426 = vmatpush2.msra.mxu0 0.0
      %1427 = vmatprep.subr.mxu0 0.0
      %1428 = vmatpush2.msra.mxu0 0.0
      %1429 = vmatprep.subr.mxu0 0.0
      %1430 = vmatpush2.msra.mxu0 0.0
      %1431 = vmatprep.subr.mxu0 0.0
      %1432 = vmatpush2.msra.mxu0 0.0
      %1433 = vmatprep.subr.mxu0 0.0
      %1434 = vmatpush2.msra.mxu0 0.0
      %1435 = vmatprep.subr.mxu0 0.0
      %1436 = vmatpush2.msra.mxu0 0.0
      %1437 = vmatprep.mubr.f32.mxu0 0.0
      %1438 = vmatmul.mubr.f32.gmra.mxu0 %v1306
      %v1439 = vpop.f32.mrf.mxu0
      %v1440 = vadd.f32 0.0, %v1439
      %v1441 = vpop.f32.mrf.mxu0
      %1442 = vmatprep.mubr.f32.mxu0 0.0
      %1443 = vmatmul.mubr.f32.gmra.mxu0 %v1308
      %v1444 = vpop.f32.mrf.mxu0
      %v1445 = vadd.f32 0.0, %v1444
      %v1446 = vpop.f32.mrf.mxu0
      %1447 = vmatprep.mubr.f32.mxu0 0.0
      %1448 = vmatmul.mubr.f32.gmra.mxu0 %v1310
      %v1449 = vpop.f32.mrf.mxu0
      %v1450 = vadd.f32 0.0, %v1449
      %v1451 = vpop.f32.mrf.mxu0
      %1452 = vmatprep.mubr.f32.mxu0 0.0
      %1453 = vmatmul.mubr.f32.gmra.mxu0 %v1312
      %v1454 = vpop.f32.mrf.mxu0
      %v1455 = vadd.f32 0.0, %v1454
      %v1456 = vpop.f32.mrf.mxu0
      %1457 = vmatprep.mubr.f32.mxu0 0.0
      %1458 = vmatmul.mubr.f32.gmra.mxu0 %v1314
      %v1459 = vpop.f32.mrf.mxu0
      %v1460 = vadd.f32 0.0, %v1459
      %v1461 = vpop.f32.mrf.mxu0
      %1462 = vmatprep.mubr.f32.mxu0 0.0
      %1463 = vmatmul.mubr.f32.gmra.mxu0 %v1316
      %v1464 = vpop.f32.mrf.mxu0
      %v1465 = vadd.f32 0.0, %v1464
      %v1466 = vpop.f32.mrf.mxu0
      %1467 = vmatprep.mubr.f32.mxu0 0.0
      %1468 = vmatmul.mubr.f32.gmra.mxu0 %v1318
      %v1469 = vpop.f32.mrf.mxu0
      %v1470 = vadd.f32 0.0, %v1469
      %v1471 = vpop.f32.mrf.mxu0
      %1472 = vmatprep.mubr.f32.mxu0 0.0
      %1473 = vmatmul.mubr.f32.gmra.mxu0 %v1320
      %v1474 = vpop.f32.mrf.mxu0
      %v1475 = vadd.f32 0.0, %v1474
      %v1476 = vpop.f32.mrf.mxu0
      %1477 = vmatprep.mubr.f32.mxu0 0.0
      %1478 = vmatmul.mubr.f32.gmra.mxu0 %v1322
      %v1479 = vpop.f32.mrf.mxu0
      %v1480 = vadd.f32 0.0, %v1479
      %v1481 = vpop.f32.mrf.mxu0
      %1482 = vmatprep.mubr.f32.mxu0 0.0
      %1483 = vmatmul.mubr.f32.gmra.mxu0 %v1324
      %v1484 = vpop.f32.mrf.mxu0
      %v1485 = vadd.f32 0.0, %v1484
      %v1486 = vpop.f32.mrf.mxu0
      %1487 = vmatprep.mubr.f32.mxu0 0.0
      %1488 = vmatmul.mubr.f32.gmra.mxu0 %v1326
      %v1489 = vpop.f32.mrf.mxu0
      %v1490 = vadd.f32 0.0, %v1489
      %v1491 = vpop.f32.mrf.mxu0
      %1492 = vmatprep.mubr.f32.mxu0 0.0
      %1493 = vmatmul.mubr.f32.gmra.mxu0 %v1328
      %v1494 = vpop.f32.mrf.mxu0
      %v1495 = vadd.f32 0.0, %v1494
      %v1496 = vpop.f32.mrf.mxu0
      %1497 = vmatprep.mubr.f32.mxu0 0.0
      %1498 = vmatmul.mubr.f32.gmra.mxu0 %v1330
      %v1499 = vpop.f32.mrf.mxu0
      %v1500 = vadd.f32 0.0, %v1499
      %v1501 = vpop.f32.mrf.mxu0
      %1502 = vmatprep.mubr.f32.mxu0 0.0
      %1503 = vmatmul.mubr.f32.gmra.mxu0 %v1332
      %v1504 = vpop.f32.mrf.mxu0
      %v1505 = vadd.f32 0.0, %v1504
      %v1506 = vpop.f32.mrf.mxu0
      %1507 = vmatprep.mubr.f32.mxu0 0.0
      %1508 = vmatmul.mubr.f32.gmra.mxu0 %v1334
      %v1509 = vpop.f32.mrf.mxu0
      %v1510 = vadd.f32 0.0, %v1509
      %v1511 = vpop.f32.mrf.mxu0
      %1512 = vmatprep.mubr.f32.mxu0 0.0
      %1513 = vmatmul.mubr.f32.gmra.mxu0 %v1336
      %v1514 = vpop.f32.mrf.mxu0
      %v1515 = vadd.f32 0.0, %v1514
      %v1516 = vpop.f32.mrf.mxu0
      %1517 = vmatprep.mubr.f32.mxu0 0.0
      %1518 = vmatmul.mubr.f32.gmra.mxu0 %v1338
      %v1519 = vpop.f32.mrf.mxu0
      %v1520 = vadd.f32 0.0, %v1519
      %v1521 = vpop.f32.mrf.mxu0
      %1522 = vmatprep.mubr.f32.mxu0 0.0
      %1523 = vmatmul.mubr.f32.gmra.mxu0 %v1340
      %v1524 = vpop.f32.mrf.mxu0
      %v1525 = vadd.f32 0.0, %v1524
      %v1526 = vpop.f32.mrf.mxu0
      %1527 = vmatprep.mubr.f32.mxu0 0.0
      %1528 = vmatmul.mubr.f32.gmra.mxu0 %v1342
      %v1529 = vpop.f32.mrf.mxu0
      %v1530 = vadd.f32 0.0, %v1529
      %v1531 = vpop.f32.mrf.mxu0
      %1532 = vmatprep.mubr.f32.mxu0 0.0
      %1533 = vmatmul.mubr.f32.gmra.mxu0 %v1344
      %v1534 = vpop.f32.mrf.mxu0
      %v1535 = vadd.f32 0.0, %v1534
      %v1536 = vpop.f32.mrf.mxu0
      %1537 = vmatprep.mubr.f32.mxu0 0.0
      %1538 = vmatmul.mubr.f32.gmra.mxu0 %v1346
      %v1539 = vpop.f32.mrf.mxu0
      %v1540 = vadd.f32 0.0, %v1539
      %v1541 = vpop.f32.mrf.mxu0
      %1542 = vmatprep.mubr.f32.mxu0 0.0
      %1543 = vmatmul.mubr.f32.gmra.mxu0 %v1348
      %v1544 = vpop.f32.mrf.mxu0
      %v1545 = vadd.f32 0.0, %v1544
      %v1546 = vpop.f32.mrf.mxu0
      %1547 = vmatprep.mubr.f32.mxu0 0.0
      %1548 = vmatmul.mubr.f32.gmra.mxu0 %v1350
      %v1549 = vpop.f32.mrf.mxu0
      %v1550 = vadd.f32 0.0, %v1549
      %v1551 = vpop.f32.mrf.mxu0
      %1552 = vmatprep.mubr.f32.mxu0 0.0
      %1553 = vmatmul.mubr.f32.gmra.mxu0 %v1352
      %v1554 = vpop.f32.mrf.mxu0
      %v1555 = vadd.f32 0.0, %v1554
      %v1556 = vpop.f32.mrf.mxu0
      %1557 = vmatprep.mubr.f32.mxu0 0.0
      %1558 = vmatmul.mubr.f32.gmra.mxu0 %v1354
      %v1559 = vpop.f32.mrf.mxu0
      %v1560 = vadd.f32 0.0, %v1559
      %v1561 = vpop.f32.mrf.mxu0
      %1562 = vmatprep.mubr.f32.mxu0 0.0
      %1563 = vmatmul.mubr.f32.gmra.mxu0 %v1356
      %v1564 = vpop.f32.mrf.mxu0
      %v1565 = vadd.f32 0.0, %v1564
      %v1566 = vpop.f32.mrf.mxu0
      %1567 = vmatprep.mubr.f32.mxu0 0.0
      %1568 = vmatmul.mubr.f32.gmra.mxu0 %v1358
      %v1569 = vpop.f32.mrf.mxu0
      %v1570 = vadd.f32 0.0, %v1569
      %v1571 = vpop.f32.mrf.mxu0
      %1572 = vmatprep.mubr.f32.mxu0 0.0
      %1573 = vmatmul.mubr.f32.gmra.mxu0 %v1360
      %v1574 = vpop.f32.mrf.mxu0
      %v1575 = vadd.f32 0.0, %v1574
      %v1576 = vpop.f32.mrf.mxu0
      %1577 = vmatprep.mubr.f32.mxu0 0.0
      %1578 = vmatmul.mubr.f32.gmra.mxu0 %v1362
      %v1579 = vpop.f32.mrf.mxu0
      %v1580 = vadd.f32 0.0, %v1579
      %v1581 = vpop.f32.mrf.mxu0
      %1582 = vmatprep.mubr.f32.mxu0 0.0
      %1583 = vmatmul.mubr.f32.gmra.mxu0 %v1364
      %v1584 = vpop.f32.mrf.mxu0
      %v1585 = vadd.f32 0.0, %v1584
      %v1586 = vpop.f32.mrf.mxu0
      %1587 = vmatprep.mubr.f32.mxu0 0.0
      %1588 = vmatmul.mubr.f32.gmra.mxu0 %v1366
      %v1589 = vpop.f32.mrf.mxu0
      %v1590 = vadd.f32 0.0, %v1589
      %v1591 = vpop.f32.mrf.mxu0
      %1592 = vmatprep.mubr.f32.mxu0 0.0
      %1593 = vmatmul.mubr.f32.gmra.mxu0 %v1368
      %v1594 = vpop.f32.mrf.mxu0
      %v1595 = vadd.f32 0.0, %v1594
      %v1596 = vpop.f32.mrf.mxu0
      %1597 = vdwg.mxu0
      %v1598 = vadd.f32 %v1192, %v1440
      %v1599 = vadd.f32 %v1193, %v1445
      %v1600 = vadd.f32 %v1194, %v1450
      %v1601 = vadd.f32 %v1195, %v1455
      %v1602 = vadd.f32 %v1196, %v1460
      %v1603 = vadd.f32 %v1197, %v1465
      %v1604 = vadd.f32 %v1198, %v1470
      %v1605 = vadd.f32 %v1199, %v1475
      %v1606 = vadd.f32 %v1200, %v1480
      %v1607 = vadd.f32 %v1201, %v1485
      %v1608 = vadd.f32 %v1202, %v1490
      %v1609 = vadd.f32 %v1203, %v1495
      %v1610 = vadd.f32 %v1204, %v1500
      %v1611 = vadd.f32 %v1205, %v1505
      %v1612 = vadd.f32 %v1206, %v1510
      %v1613 = vadd.f32 %v1207, %v1515
      %v1614 = vadd.f32 %v1208, %v1520
      %v1615 = vadd.f32 %v1209, %v1525
      %v1616 = vadd.f32 %v1210, %v1530
      %v1617 = vadd.f32 %v1211, %v1535
      %v1618 = vadd.f32 %v1212, %v1540
      %v1619 = vadd.f32 %v1213, %v1545
      %v1620 = vadd.f32 %v1214, %v1550
      %v1621 = vadd.f32 %v1215, %v1555
      %v1622 = vadd.f32 %v1216, %v1560
      %v1623 = vadd.f32 %v1217, %v1565
      %v1624 = vadd.f32 %v1218, %v1570
      %v1625 = vadd.f32 %v1219, %v1575
      %v1626 = vadd.f32 %v1220, %v1580
      %v1627 = vadd.f32 %v1221, %v1585
      %v1628 = vadd.f32 %v1222, %v1590
      %v1629 = vadd.f32 %v1223, %v1595
      %v1633 = vrot.slane %v323, 2
      %v1634 = vrot.slane %v324, 2
      %v1635 = vsel %vm409, %v1633, %v1634
      %v1636 = vrot.slane %v325, 2
      %v1637 = vsel %vm409, %v1634, %v1636
      %s1638 = scalar_lea.vmem %s232, 12
      %v1639 = vld [vmem:[%s1638] sm:$0xf]
      %v1640 = vsel %vm491, %v1635, 0
      %v1642 = vsel %vm491, %v1637, 0
      %v1645 = vsel %vm556, %v1639, 0
      %1647 = vmatprep.subr.mxu0 0.0
      %1648 = vmatpush1.msra.mxu0 0.0
      %1649 = vmatprep.subr.mxu0 0.0
      %1650 = vmatpush1.msra.mxu0 0.0
      %1651 = vmatprep.subr.mxu0 0.0
      %1652 = vmatpush1.msra.mxu0 0.0
      %1653 = vmatprep.subr.mxu0 0.0
      %1654 = vmatpush1.msra.mxu0 0.0
      %1655 = vmatprep.subr.mxu0 0.0
      %1656 = vmatpush1.msra.mxu0 0.0
      %1657 = vmatprep.subr.mxu0 0.0
      %1658 = vmatpush1.msra.mxu0 0.0
      %1659 = vmatprep.subr.mxu0 0.0
      %1660 = vmatpush1.msra.mxu0 0.0
      %1661 = vmatprep.subr.mxu0 0.0
      %1662 = vmatpush1.msra.mxu0 0.0
      %1663 = vmatprep.subr.mxu0 0.0
      %1664 = vmatpush1.msra.mxu0 0.0
      %1665 = vmatprep.subr.mxu0 0.0
      %1666 = vmatpush1.msra.mxu0 0.0
      %1667 = vmatprep.subr.mxu0 0.0
      %1668 = vmatpush1.msra.mxu0 0.0
      %1669 = vmatprep.subr.mxu0 0.0
      %1670 = vmatpush1.msra.mxu0 0.0
      %1671 = vmatprep.subr.mxu0 0.0
      %1672 = vmatpush1.msra.mxu0 0.0
      %1673 = vmatprep.subr.mxu0 0.0
      %1674 = vmatpush1.msra.mxu0 0.0
      %1675 = vmatprep.subr.mxu0 0.0
      %1676 = vmatpush1.msra.mxu0 0.0
      %1677 = vmatprep.subr.mxu0 0.0
      %1678 = vmatpush1.msra.mxu0 %v1645
      %1679 = vmatprep.subr.mxu0 0.0
      %1680 = vmatpush2.msra.mxu0 0.0
      %1681 = vmatprep.subr.mxu0 0.0
      %1682 = vmatpush2.msra.mxu0 0.0
      %1683 = vmatprep.subr.mxu0 0.0
      %1684 = vmatpush2.msra.mxu0 0.0
      %1685 = vmatprep.subr.mxu0 0.0
      %1686 = vmatpush2.msra.mxu0 0.0
      %1687 = vmatprep.subr.mxu0 0.0
      %1688 = vmatpush2.msra.mxu0 0.0
      %1689 = vmatprep.subr.mxu0 0.0
      %1690 = vmatpush2.msra.mxu0 0.0
      %1691 = vmatprep.subr.mxu0 0.0
      %1692 = vmatpush2.msra.mxu0 0.0
      %1693 = vmatprep.subr.mxu0 0.0
      %1694 = vmatpush2.msra.mxu0 0.0
      %1695 = vmatprep.subr.mxu0 0.0
      %1696 = vmatpush2.msra.mxu0 0.0
      %1697 = vmatprep.subr.mxu0 0.0
      %1698 = vmatpush2.msra.mxu0 0.0
      %1699 = vmatprep.subr.mxu0 0.0
      %1700 = vmatpush2.msra.mxu0 0.0
      %1701 = vmatprep.subr.mxu0 0.0
      %1702 = vmatpush2.msra.mxu0 0.0
      %1703 = vmatprep.subr.mxu0 0.0
      %1704 = vmatpush2.msra.mxu0 0.0
      %1705 = vmatprep.subr.mxu0 0.0
      %1706 = vmatpush2.msra.mxu0 0.0
      %1707 = vmatprep.subr.mxu0 0.0
      %1708 = vmatpush2.msra.mxu0 0.0
      %1709 = vmatprep.subr.mxu0 0.0
      %1710 = vmatpush2.msra.mxu0 0.0
      %1711 = vmatprep.mubr.f32.mxu0 0.0
      %1712 = vmatmul.mubr.f32.gmra.mxu0 %v496
      %v1713 = vpop.f32.mrf.mxu0
      %v1714 = vadd.f32 0.0, %v1713
      %v1715 = vpop.f32.mrf.mxu0
      %1716 = vmatprep.mubr.f32.mxu0 0.0
      %1717 = vmatmul.mubr.f32.gmra.mxu0 %v498
      %v1718 = vpop.f32.mrf.mxu0
      %v1719 = vadd.f32 0.0, %v1718
      %v1720 = vpop.f32.mrf.mxu0
      %1721 = vmatprep.mubr.f32.mxu0 0.0
      %1722 = vmatmul.mubr.f32.gmra.mxu0 %v500
      %v1723 = vpop.f32.mrf.mxu0
      %v1724 = vadd.f32 0.0, %v1723
      %v1725 = vpop.f32.mrf.mxu0
      %1726 = vmatprep.mubr.f32.mxu0 0.0
      %1727 = vmatmul.mubr.f32.gmra.mxu0 %v502
      %v1728 = vpop.f32.mrf.mxu0
      %v1729 = vadd.f32 0.0, %v1728
      %v1730 = vpop.f32.mrf.mxu0
      %1731 = vmatprep.mubr.f32.mxu0 0.0
      %1732 = vmatmul.mubr.f32.gmra.mxu0 %v504
      %v1733 = vpop.f32.mrf.mxu0
      %v1734 = vadd.f32 0.0, %v1733
      %v1735 = vpop.f32.mrf.mxu0
      %1736 = vmatprep.mubr.f32.mxu0 0.0
      %1737 = vmatmul.mubr.f32.gmra.mxu0 %v506
      %v1738 = vpop.f32.mrf.mxu0
      %v1739 = vadd.f32 0.0, %v1738
      %v1740 = vpop.f32.mrf.mxu0
      %1741 = vmatprep.mubr.f32.mxu0 0.0
      %1742 = vmatmul.mubr.f32.gmra.mxu0 %v508
      %v1743 = vpop.f32.mrf.mxu0
      %v1744 = vadd.f32 0.0, %v1743
      %v1745 = vpop.f32.mrf.mxu0
      %1746 = vmatprep.mubr.f32.mxu0 0.0
      %1747 = vmatmul.mubr.f32.gmra.mxu0 %v510
      %v1748 = vpop.f32.mrf.mxu0
      %v1749 = vadd.f32 0.0, %v1748
      %v1750 = vpop.f32.mrf.mxu0
      %1751 = vmatprep.mubr.f32.mxu0 0.0
      %1752 = vmatmul.mubr.f32.gmra.mxu0 %v512
      %v1753 = vpop.f32.mrf.mxu0
      %v1754 = vadd.f32 0.0, %v1753
      %v1755 = vpop.f32.mrf.mxu0
      %1756 = vmatprep.mubr.f32.mxu0 0.0
      %1757 = vmatmul.mubr.f32.gmra.mxu0 %v514
      %v1758 = vpop.f32.mrf.mxu0
      %v1759 = vadd.f32 0.0, %v1758
      %v1760 = vpop.f32.mrf.mxu0
      %1761 = vmatprep.mubr.f32.mxu0 0.0
      %1762 = vmatmul.mubr.f32.gmra.mxu0 %v516
      %v1763 = vpop.f32.mrf.mxu0
      %v1764 = vadd.f32 0.0, %v1763
      %v1765 = vpop.f32.mrf.mxu0
      %1766 = vmatprep.mubr.f32.mxu0 0.0
      %1767 = vmatmul.mubr.f32.gmra.mxu0 %v518
      %v1768 = vpop.f32.mrf.mxu0
      %v1769 = vadd.f32 0.0, %v1768
      %v1770 = vpop.f32.mrf.mxu0
      %1771 = vmatprep.mubr.f32.mxu0 0.0
      %1772 = vmatmul.mubr.f32.gmra.mxu0 %v520
      %v1773 = vpop.f32.mrf.mxu0
      %v1774 = vadd.f32 0.0, %v1773
      %v1775 = vpop.f32.mrf.mxu0
      %1776 = vmatprep.mubr.f32.mxu0 0.0
      %1777 = vmatmul.mubr.f32.gmra.mxu0 %v522
      %v1778 = vpop.f32.mrf.mxu0
      %v1779 = vadd.f32 0.0, %v1778
      %v1780 = vpop.f32.mrf.mxu0
      %1781 = vmatprep.mubr.f32.mxu0 0.0
      %1782 = vmatmul.mubr.f32.gmra.mxu0 %v524
      %v1783 = vpop.f32.mrf.mxu0
      %v1784 = vadd.f32 0.0, %v1783
      %v1785 = vpop.f32.mrf.mxu0
      %1786 = vmatprep.mubr.f32.mxu0 0.0
      %1787 = vmatmul.mubr.f32.gmra.mxu0 %v526
      %v1788 = vpop.f32.mrf.mxu0
      %v1789 = vadd.f32 0.0, %v1788
      %v1790 = vpop.f32.mrf.mxu0
      %1791 = vmatprep.mubr.f32.mxu0 0.0
      %1792 = vmatmul.mubr.f32.gmra.mxu0 %v528
      %v1793 = vpop.f32.mrf.mxu0
      %v1794 = vadd.f32 0.0, %v1793
      %v1795 = vpop.f32.mrf.mxu0
      %1796 = vmatprep.mubr.f32.mxu0 0.0
      %1797 = vmatmul.mubr.f32.gmra.mxu0 %v530
      %v1798 = vpop.f32.mrf.mxu0
      %v1799 = vadd.f32 0.0, %v1798
      %v1800 = vpop.f32.mrf.mxu0
      %1801 = vmatprep.mubr.f32.mxu0 0.0
      %1802 = vmatmul.mubr.f32.gmra.mxu0 %v532
      %v1803 = vpop.f32.mrf.mxu0
      %v1804 = vadd.f32 0.0, %v1803
      %v1805 = vpop.f32.mrf.mxu0
      %1806 = vmatprep.mubr.f32.mxu0 0.0
      %1807 = vmatmul.mubr.f32.gmra.mxu0 %v534
      %v1808 = vpop.f32.mrf.mxu0
      %v1809 = vadd.f32 0.0, %v1808
      %v1810 = vpop.f32.mrf.mxu0
      %1811 = vmatprep.mubr.f32.mxu0 0.0
      %1812 = vmatmul.mubr.f32.gmra.mxu0 %v536
      %v1813 = vpop.f32.mrf.mxu0
      %v1814 = vadd.f32 0.0, %v1813
      %v1815 = vpop.f32.mrf.mxu0
      %1816 = vmatprep.mubr.f32.mxu0 0.0
      %1817 = vmatmul.mubr.f32.gmra.mxu0 %v538
      %v1818 = vpop.f32.mrf.mxu0
      %v1819 = vadd.f32 0.0, %v1818
      %v1820 = vpop.f32.mrf.mxu0
      %1821 = vmatprep.mubr.f32.mxu0 0.0
      %1822 = vmatmul.mubr.f32.gmra.mxu0 %v540
      %v1823 = vpop.f32.mrf.mxu0
      %v1824 = vadd.f32 0.0, %v1823
      %v1825 = vpop.f32.mrf.mxu0
      %1826 = vmatprep.mubr.f32.mxu0 0.0
      %1827 = vmatmul.mubr.f32.gmra.mxu0 %v542
      %v1828 = vpop.f32.mrf.mxu0
      %v1829 = vadd.f32 0.0, %v1828
      %v1830 = vpop.f32.mrf.mxu0
      %1831 = vmatprep.mubr.f32.mxu0 0.0
      %1832 = vmatmul.mubr.f32.gmra.mxu0 %v544
      %v1833 = vpop.f32.mrf.mxu0
      %v1834 = vadd.f32 0.0, %v1833
      %v1835 = vpop.f32.mrf.mxu0
      %1836 = vmatprep.mubr.f32.mxu0 0.0
      %1837 = vmatmul.mubr.f32.gmra.mxu0 %v546
      %v1838 = vpop.f32.mrf.mxu0
      %v1839 = vadd.f32 0.0, %v1838
      %v1840 = vpop.f32.mrf.mxu0
      %1841 = vmatprep.mubr.f32.mxu0 0.0
      %1842 = vmatmul.mubr.f32.gmra.mxu0 %v548
      %v1843 = vpop.f32.mrf.mxu0
      %v1844 = vadd.f32 0.0, %v1843
      %v1845 = vpop.f32.mrf.mxu0
      %1846 = vmatprep.mubr.f32.mxu0 0.0
      %1847 = vmatmul.mubr.f32.gmra.mxu0 %v550
      %v1848 = vpop.f32.mrf.mxu0
      %v1849 = vadd.f32 0.0, %v1848
      %v1850 = vpop.f32.mrf.mxu0
      %1851 = vmatprep.mubr.f32.mxu0 0.0
      %1852 = vmatmul.mubr.f32.gmra.mxu0 %v552
      %v1853 = vpop.f32.mrf.mxu0
      %v1854 = vadd.f32 0.0, %v1853
      %v1855 = vpop.f32.mrf.mxu0
      %1856 = vmatprep.mubr.f32.mxu0 0.0
      %1857 = vmatmul.mubr.f32.gmra.mxu0 %v554
      %v1858 = vpop.f32.mrf.mxu0
      %v1859 = vadd.f32 0.0, %v1858
      %v1860 = vpop.f32.mrf.mxu0
      %1861 = vmatprep.mubr.f32.mxu0 0.0
      %1862 = vmatmul.mubr.f32.gmra.mxu0 %v1640
      %v1863 = vpop.f32.mrf.mxu0
      %v1864 = vadd.f32 0.0, %v1863
      %v1865 = vpop.f32.mrf.mxu0
      %1866 = vmatprep.mubr.f32.mxu0 0.0
      %1867 = vmatmul.mubr.f32.gmra.mxu0 %v1642
      %v1868 = vpop.f32.mrf.mxu0
      %v1869 = vadd.f32 0.0, %v1868
      %v1870 = vpop.f32.mrf.mxu0
      %1871 = vdwg.mxu0
      %v1872 = vadd.f32 %v1598, %v1714
      %v1873 = vadd.f32 %v1599, %v1719
      %v1874 = vadd.f32 %v1600, %v1724
      %v1875 = vadd.f32 %v1601, %v1729
      %v1876 = vadd.f32 %v1602, %v1734
      %v1877 = vadd.f32 %v1603, %v1739
      %v1878 = vadd.f32 %v1604, %v1744
      %v1879 = vadd.f32 %v1605, %v1749
      %v1880 = vadd.f32 %v1606, %v1754
      %v1881 = vadd.f32 %v1607, %v1759
      %v1882 = vadd.f32 %v1608, %v1764
      %v1883 = vadd.f32 %v1609, %v1769
      %v1884 = vadd.f32 %v1610, %v1774
      %v1885 = vadd.f32 %v1611, %v1779
      %v1886 = vadd.f32 %v1612, %v1784
      %v1887 = vadd.f32 %v1613, %v1789
      %v1888 = vadd.f32 %v1614, %v1794
      %v1889 = vadd.f32 %v1615, %v1799
      %v1890 = vadd.f32 %v1616, %v1804
      %v1891 = vadd.f32 %v1617, %v1809
      %v1892 = vadd.f32 %v1618, %v1814
      %v1893 = vadd.f32 %v1619, %v1819
      %v1894 = vadd.f32 %v1620, %v1824
      %v1895 = vadd.f32 %v1621, %v1829
      %v1896 = vadd.f32 %v1622, %v1834
      %v1897 = vadd.f32 %v1623, %v1839
      %v1898 = vadd.f32 %v1624, %v1844
      %v1899 = vadd.f32 %v1625, %v1849
      %v1900 = vadd.f32 %v1626, %v1854
      %v1901 = vadd.f32 %v1627, %v1859
      %v1902 = vadd.f32 %v1628, %v1864
      %v1903 = vadd.f32 %v1629, %v1869
      %v1904 = vrot.slane %v323, 3
      %v1905 = vrot.slane %v324, 3
      %v1906 = vsel %vm817, %v1904, %v1905
      %v1907 = vrot.slane %v325, 3
      %v1908 = vsel %vm817, %v1905, %v1907
      %s1909 = scalar_lea.vmem %s232, 16
      %v1910 = vld [vmem:[%s1909] sm:$0xf]
      %v1911 = vsel %vm491, %v1906, 0
      %v1913 = vsel %vm491, %v1908, 0
      %v1916 = vsel %vm556, %v1910, 0
      %1918 = vmatprep.subr.mxu0 0.0
      %1919 = vmatpush1.msra.mxu0 0.0
      %1920 = vmatprep.subr.mxu0 0.0
      %1921 = vmatpush1.msra.mxu0 0.0
      %1922 = vmatprep.subr.mxu0 0.0
      %1923 = vmatpush1.msra.mxu0 0.0
      %1924 = vmatprep.subr.mxu0 0.0
      %1925 = vmatpush1.msra.mxu0 0.0
      %1926 = vmatprep.subr.mxu0 0.0
      %1927 = vmatpush1.msra.mxu0 0.0
      %1928 = vmatprep.subr.mxu0 0.0
      %1929 = vmatpush1.msra.mxu0 0.0
      %1930 = vmatprep.subr.mxu0 0.0
      %1931 = vmatpush1.msra.mxu0 0.0
      %1932 = vmatprep.subr.mxu0 0.0
      %1933 = vmatpush1.msra.mxu0 0.0
      %1934 = vmatprep.subr.mxu0 0.0
      %1935 = vmatpush1.msra.mxu0 0.0
      %1936 = vmatprep.subr.mxu0 0.0
      %1937 = vmatpush1.msra.mxu0 0.0
      %1938 = vmatprep.subr.mxu0 0.0
      %1939 = vmatpush1.msra.mxu0 0.0
      %1940 = vmatprep.subr.mxu0 0.0
      %1941 = vmatpush1.msra.mxu0 0.0
      %1942 = vmatprep.subr.mxu0 0.0
      %1943 = vmatpush1.msra.mxu0 0.0
      %1944 = vmatprep.subr.mxu0 0.0
      %1945 = vmatpush1.msra.mxu0 0.0
      %1946 = vmatprep.subr.mxu0 0.0
      %1947 = vmatpush1.msra.mxu0 0.0
      %1948 = vmatprep.subr.mxu0 0.0
      %1949 = vmatpush1.msra.mxu0 %v1916
      %1950 = vmatprep.subr.mxu0 0.0
      %1951 = vmatpush2.msra.mxu0 0.0
      %1952 = vmatprep.subr.mxu0 0.0
      %1953 = vmatpush2.msra.mxu0 0.0
      %1954 = vmatprep.subr.mxu0 0.0
      %1955 = vmatpush2.msra.mxu0 0.0
      %1956 = vmatprep.subr.mxu0 0.0
      %1957 = vmatpush2.msra.mxu0 0.0
      %1958 = vmatprep.subr.mxu0 0.0
      %1959 = vmatpush2.msra.mxu0 0.0
      %1960 = vmatprep.subr.mxu0 0.0
      %1961 = vmatpush2.msra.mxu0 0.0
      %1962 = vmatprep.subr.mxu0 0.0
      %1963 = vmatpush2.msra.mxu0 0.0
      %1964 = vmatprep.subr.mxu0 0.0
      %1965 = vmatpush2.msra.mxu0 0.0
      %1966 = vmatprep.subr.mxu0 0.0
      %1967 = vmatpush2.msra.mxu0 0.0
      %1968 = vmatprep.subr.mxu0 0.0
      %1969 = vmatpush2.msra.mxu0 0.0
      %1970 = vmatprep.subr.mxu0 0.0
      %1971 = vmatpush2.msra.mxu0 0.0
      %1972 = vmatprep.subr.mxu0 0.0
      %1973 = vmatpush2.msra.mxu0 0.0
      %1974 = vmatprep.subr.mxu0 0.0
      %1975 = vmatpush2.msra.mxu0 0.0
      %1976 = vmatprep.subr.mxu0 0.0
      %1977 = vmatpush2.msra.mxu0 0.0
      %1978 = vmatprep.subr.mxu0 0.0
      %1979 = vmatpush2.msra.mxu0 0.0
      %1980 = vmatprep.subr.mxu0 0.0
      %1981 = vmatpush2.msra.mxu0 0.0
      %1982 = vmatprep.mubr.f32.mxu0 0.0
      %1983 = vmatmul.mubr.f32.gmra.mxu0 %v904
      %v1984 = vpop.f32.mrf.mxu0
      %v1985 = vadd.f32 0.0, %v1984
      %v1986 = vpop.f32.mrf.mxu0
      %1987 = vmatprep.mubr.f32.mxu0 0.0
      %1988 = vmatmul.mubr.f32.gmra.mxu0 %v906
      %v1989 = vpop.f32.mrf.mxu0
      %v1990 = vadd.f32 0.0, %v1989
      %v1991 = vpop.f32.mrf.mxu0
      %1992 = vmatprep.mubr.f32.mxu0 0.0
      %1993 = vmatmul.mubr.f32.gmra.mxu0 %v908
      %v1994 = vpop.f32.mrf.mxu0
      %v1995 = vadd.f32 0.0, %v1994
      %v1996 = vpop.f32.mrf.mxu0
      %1997 = vmatprep.mubr.f32.mxu0 0.0
      %1998 = vmatmul.mubr.f32.gmra.mxu0 %v910
      %v1999 = vpop.f32.mrf.mxu0
      %v2000 = vadd.f32 0.0, %v1999
      %v2001 = vpop.f32.mrf.mxu0
      %2002 = vmatprep.mubr.f32.mxu0 0.0
      %2003 = vmatmul.mubr.f32.gmra.mxu0 %v912
      %v2004 = vpop.f32.mrf.mxu0
      %v2005 = vadd.f32 0.0, %v2004
      %v2006 = vpop.f32.mrf.mxu0
      %2007 = vmatprep.mubr.f32.mxu0 0.0
      %2008 = vmatmul.mubr.f32.gmra.mxu0 %v914
      %v2009 = vpop.f32.mrf.mxu0
      %v2010 = vadd.f32 0.0, %v2009
      %v2011 = vpop.f32.mrf.mxu0
      %2012 = vmatprep.mubr.f32.mxu0 0.0
      %2013 = vmatmul.mubr.f32.gmra.mxu0 %v916
      %v2014 = vpop.f32.mrf.mxu0
      %v2015 = vadd.f32 0.0, %v2014
      %v2016 = vpop.f32.mrf.mxu0
      %2017 = vmatprep.mubr.f32.mxu0 0.0
      %2018 = vmatmul.mubr.f32.gmra.mxu0 %v918
      %v2019 = vpop.f32.mrf.mxu0
      %v2020 = vadd.f32 0.0, %v2019
      %v2021 = vpop.f32.mrf.mxu0
      %2022 = vmatprep.mubr.f32.mxu0 0.0
      %2023 = vmatmul.mubr.f32.gmra.mxu0 %v920
      %v2024 = vpop.f32.mrf.mxu0
      %v2025 = vadd.f32 0.0, %v2024
      %v2026 = vpop.f32.mrf.mxu0
      %2027 = vmatprep.mubr.f32.mxu0 0.0
      %2028 = vmatmul.mubr.f32.gmra.mxu0 %v922
      %v2029 = vpop.f32.mrf.mxu0
      %v2030 = vadd.f32 0.0, %v2029
      %v2031 = vpop.f32.mrf.mxu0
      %2032 = vmatprep.mubr.f32.mxu0 0.0
      %2033 = vmatmul.mubr.f32.gmra.mxu0 %v924
      %v2034 = vpop.f32.mrf.mxu0
      %v2035 = vadd.f32 0.0, %v2034
      %v2036 = vpop.f32.mrf.mxu0
      %2037 = vmatprep.mubr.f32.mxu0 0.0
      %2038 = vmatmul.mubr.f32.gmra.mxu0 %v926
      %v2039 = vpop.f32.mrf.mxu0
      %v2040 = vadd.f32 0.0, %v2039
      %v2041 = vpop.f32.mrf.mxu0
      %2042 = vmatprep.mubr.f32.mxu0 0.0
      %2043 = vmatmul.mubr.f32.gmra.mxu0 %v928
      %v2044 = vpop.f32.mrf.mxu0
      %v2045 = vadd.f32 0.0, %v2044
      %v2046 = vpop.f32.mrf.mxu0
      %2047 = vmatprep.mubr.f32.mxu0 0.0
      %2048 = vmatmul.mubr.f32.gmra.mxu0 %v930
      %v2049 = vpop.f32.mrf.mxu0
      %v2050 = vadd.f32 0.0, %v2049
      %v2051 = vpop.f32.mrf.mxu0
      %2052 = vmatprep.mubr.f32.mxu0 0.0
      %2053 = vmatmul.mubr.f32.gmra.mxu0 %v932
      %v2054 = vpop.f32.mrf.mxu0
      %v2055 = vadd.f32 0.0, %v2054
      %v2056 = vpop.f32.mrf.mxu0
      %2057 = vmatprep.mubr.f32.mxu0 0.0
      %2058 = vmatmul.mubr.f32.gmra.mxu0 %v934
      %v2059 = vpop.f32.mrf.mxu0
      %v2060 = vadd.f32 0.0, %v2059
      %v2061 = vpop.f32.mrf.mxu0
      %2062 = vmatprep.mubr.f32.mxu0 0.0
      %2063 = vmatmul.mubr.f32.gmra.mxu0 %v936
      %v2064 = vpop.f32.mrf.mxu0
      %v2065 = vadd.f32 0.0, %v2064
      %v2066 = vpop.f32.mrf.mxu0
      %2067 = vmatprep.mubr.f32.mxu0 0.0
      %2068 = vmatmul.mubr.f32.gmra.mxu0 %v938
      %v2069 = vpop.f32.mrf.mxu0
      %v2070 = vadd.f32 0.0, %v2069
      %v2071 = vpop.f32.mrf.mxu0
      %2072 = vmatprep.mubr.f32.mxu0 0.0
      %2073 = vmatmul.mubr.f32.gmra.mxu0 %v940
      %v2074 = vpop.f32.mrf.mxu0
      %v2075 = vadd.f32 0.0, %v2074
      %v2076 = vpop.f32.mrf.mxu0
      %2077 = vmatprep.mubr.f32.mxu0 0.0
      %2078 = vmatmul.mubr.f32.gmra.mxu0 %v942
      %v2079 = vpop.f32.mrf.mxu0
      %v2080 = vadd.f32 0.0, %v2079
      %v2081 = vpop.f32.mrf.mxu0
      %2082 = vmatprep.mubr.f32.mxu0 0.0
      %2083 = vmatmul.mubr.f32.gmra.mxu0 %v944
      %v2084 = vpop.f32.mrf.mxu0
      %v2085 = vadd.f32 0.0, %v2084
      %v2086 = vpop.f32.mrf.mxu0
      %2087 = vmatprep.mubr.f32.mxu0 0.0
      %2088 = vmatmul.mubr.f32.gmra.mxu0 %v946
      %v2089 = vpop.f32.mrf.mxu0
      %v2090 = vadd.f32 0.0, %v2089
      %v2091 = vpop.f32.mrf.mxu0
      %2092 = vmatprep.mubr.f32.mxu0 0.0
      %2093 = vmatmul.mubr.f32.gmra.mxu0 %v948
      %v2094 = vpop.f32.mrf.mxu0
      %v2095 = vadd.f32 0.0, %v2094
      %v2096 = vpop.f32.mrf.mxu0
      %2097 = vmatprep.mubr.f32.mxu0 0.0
      %2098 = vmatmul.mubr.f32.gmra.mxu0 %v950
      %v2099 = vpop.f32.mrf.mxu0
      %v2100 = vadd.f32 0.0, %v2099
      %v2101 = vpop.f32.mrf.mxu0
      %2102 = vmatprep.mubr.f32.mxu0 0.0
      %2103 = vmatmul.mubr.f32.gmra.mxu0 %v952
      %v2104 = vpop.f32.mrf.mxu0
      %v2105 = vadd.f32 0.0, %v2104
      %v2106 = vpop.f32.mrf.mxu0
      %2107 = vmatprep.mubr.f32.mxu0 0.0
      %2108 = vmatmul.mubr.f32.gmra.mxu0 %v954
      %v2109 = vpop.f32.mrf.mxu0
      %v2110 = vadd.f32 0.0, %v2109
      %v2111 = vpop.f32.mrf.mxu0
      %2112 = vmatprep.mubr.f32.mxu0 0.0
      %2113 = vmatmul.mubr.f32.gmra.mxu0 %v956
      %v2114 = vpop.f32.mrf.mxu0
      %v2115 = vadd.f32 0.0, %v2114
      %v2116 = vpop.f32.mrf.mxu0
      %2117 = vmatprep.mubr.f32.mxu0 0.0
      %2118 = vmatmul.mubr.f32.gmra.mxu0 %v958
      %v2119 = vpop.f32.mrf.mxu0
      %v2120 = vadd.f32 0.0, %v2119
      %v2121 = vpop.f32.mrf.mxu0
      %2122 = vmatprep.mubr.f32.mxu0 0.0
      %2123 = vmatmul.mubr.f32.gmra.mxu0 %v960
      %v2124 = vpop.f32.mrf.mxu0
      %v2125 = vadd.f32 0.0, %v2124
      %v2126 = vpop.f32.mrf.mxu0
      %2127 = vmatprep.mubr.f32.mxu0 0.0
      %2128 = vmatmul.mubr.f32.gmra.mxu0 %v962
      %v2129 = vpop.f32.mrf.mxu0
      %v2130 = vadd.f32 0.0, %v2129
      %v2131 = vpop.f32.mrf.mxu0
      %2132 = vmatprep.mubr.f32.mxu0 0.0
      %2133 = vmatmul.mubr.f32.gmra.mxu0 %v1911
      %v2134 = vpop.f32.mrf.mxu0
      %v2135 = vadd.f32 0.0, %v2134
      %v2136 = vpop.f32.mrf.mxu0
      %2137 = vmatprep.mubr.f32.mxu0 0.0
      %2138 = vmatmul.mubr.f32.gmra.mxu0 %v1913
      %v2139 = vpop.f32.mrf.mxu0
      %v2140 = vadd.f32 0.0, %v2139
      %v2141 = vpop.f32.mrf.mxu0
      %2142 = vdwg.mxu0
      %v2143 = vadd.f32 %v1872, %v1985
      %v2144 = vadd.f32 %v1873, %v1990
      %v2145 = vadd.f32 %v1874, %v1995
      %v2146 = vadd.f32 %v1875, %v2000
      %v2147 = vadd.f32 %v1876, %v2005
      %v2148 = vadd.f32 %v1877, %v2010
      %v2149 = vadd.f32 %v1878, %v2015
      %v2150 = vadd.f32 %v1879, %v2020
      %v2151 = vadd.f32 %v1880, %v2025
      %v2152 = vadd.f32 %v1881, %v2030
      %v2153 = vadd.f32 %v1882, %v2035
      %v2154 = vadd.f32 %v1883, %v2040
      %v2155 = vadd.f32 %v1884, %v2045
      %v2156 = vadd.f32 %v1885, %v2050
      %v2157 = vadd.f32 %v1886, %v2055
      %v2158 = vadd.f32 %v1887, %v2060
      %v2159 = vadd.f32 %v1888, %v2065
      %v2160 = vadd.f32 %v1889, %v2070
      %v2161 = vadd.f32 %v1890, %v2075
      %v2162 = vadd.f32 %v1891, %v2080
      %v2163 = vadd.f32 %v1892, %v2085
      %v2164 = vadd.f32 %v1893, %v2090
      %v2165 = vadd.f32 %v1894, %v2095
      %v2166 = vadd.f32 %v1895, %v2100
      %v2167 = vadd.f32 %v1896, %v2105
      %v2168 = vadd.f32 %v1897, %v2110
      %v2169 = vadd.f32 %v1898, %v2115
      %v2170 = vadd.f32 %v1899, %v2120
      %v2171 = vadd.f32 %v1900, %v2125
      %v2172 = vadd.f32 %v1901, %v2130
      %v2173 = vadd.f32 %v1902, %v2135
      %v2174 = vadd.f32 %v1903, %v2140
      %v2175 = vrot.slane %v323, 4
      %v2176 = vrot.slane %v324, 4
      %v2177 = vsel %vm556, %v2175, %v2176
      %v2178 = vrot.slane %v325, 4
      %v2179 = vsel %vm556, %v2176, %v2178
      %s2180 = scalar_lea.vmem %s232, 20
      %v2181 = vld [vmem:[%s2180] sm:$0xf]
      %v2182 = vsel %vm491, %v2177, 0
      %v2184 = vsel %vm491, %v2179, 0
      %v2187 = vsel %vm556, %v2181, 0
      %2189 = vmatprep.subr.mxu0 0.0
      %2190 = vmatpush1.msra.mxu0 0.0
      %2191 = vmatprep.subr.mxu0 0.0
      %2192 = vmatpush1.msra.mxu0 0.0
      %2193 = vmatprep.subr.mxu0 0.0
      %2194 = vmatpush1.msra.mxu0 0.0
      %2195 = vmatprep.subr.mxu0 0.0
      %2196 = vmatpush1.msra.mxu0 0.0
      %2197 = vmatprep.subr.mxu0 0.0
      %2198 = vmatpush1.msra.mxu0 0.0
      %2199 = vmatprep.subr.mxu0 0.0
      %2200 = vmatpush1.msra.mxu0 0.0
      %2201 = vmatprep.subr.mxu0 0.0
      %2202 = vmatpush1.msra.mxu0 0.0
      %2203 = vmatprep.subr.mxu0 0.0
      %2204 = vmatpush1.msra.mxu0 0.0
      %2205 = vmatprep.subr.mxu0 0.0
      %2206 = vmatpush1.msra.mxu0 0.0
      %2207 = vmatprep.subr.mxu0 0.0
      %2208 = vmatpush1.msra.mxu0 0.0
      %2209 = vmatprep.subr.mxu0 0.0
      %2210 = vmatpush1.msra.mxu0 0.0
      %2211 = vmatprep.subr.mxu0 0.0
      %2212 = vmatpush1.msra.mxu0 0.0
      %2213 = vmatprep.subr.mxu0 0.0
      %2214 = vmatpush1.msra.mxu0 0.0
      %2215 = vmatprep.subr.mxu0 0.0
      %2216 = vmatpush1.msra.mxu0 0.0
      %2217 = vmatprep.subr.mxu0 0.0
      %2218 = vmatpush1.msra.mxu0 0.0
      %2219 = vmatprep.subr.mxu0 0.0
      %2220 = vmatpush1.msra.mxu0 %v2187
      %2221 = vmatprep.subr.mxu0 0.0
      %2222 = vmatpush2.msra.mxu0 0.0
      %2223 = vmatprep.subr.mxu0 0.0
      %2224 = vmatpush2.msra.mxu0 0.0
      %2225 = vmatprep.subr.mxu0 0.0
      %2226 = vmatpush2.msra.mxu0 0.0
      %2227 = vmatprep.subr.mxu0 0.0
      %2228 = vmatpush2.msra.mxu0 0.0
      %2229 = vmatprep.subr.mxu0 0.0
      %2230 = vmatpush2.msra.mxu0 0.0
      %2231 = vmatprep.subr.mxu0 0.0
      %2232 = vmatpush2.msra.mxu0 0.0
      %2233 = vmatprep.subr.mxu0 0.0
      %2234 = vmatpush2.msra.mxu0 0.0
      %2235 = vmatprep.subr.mxu0 0.0
      %2236 = vmatpush2.msra.mxu0 0.0
      %2237 = vmatprep.subr.mxu0 0.0
      %2238 = vmatpush2.msra.mxu0 0.0
      %2239 = vmatprep.subr.mxu0 0.0
      %2240 = vmatpush2.msra.mxu0 0.0
      %2241 = vmatprep.subr.mxu0 0.0
      %2242 = vmatpush2.msra.mxu0 0.0
      %2243 = vmatprep.subr.mxu0 0.0
      %2244 = vmatpush2.msra.mxu0 0.0
      %2245 = vmatprep.subr.mxu0 0.0
      %2246 = vmatpush2.msra.mxu0 0.0
      %2247 = vmatprep.subr.mxu0 0.0
      %2248 = vmatpush2.msra.mxu0 0.0
      %2249 = vmatprep.subr.mxu0 0.0
      %2250 = vmatpush2.msra.mxu0 0.0
      %2251 = vmatprep.subr.mxu0 0.0
      %2252 = vmatpush2.msra.mxu0 0.0
      %2253 = vmatprep.mubr.f32.mxu0 0.0
      %2254 = vmatmul.mubr.f32.gmra.mxu0 %v1310
      %v2255 = vpop.f32.mrf.mxu0
      %v2256 = vadd.f32 0.0, %v2255
      %v2257 = vpop.f32.mrf.mxu0
      %2258 = vmatprep.mubr.f32.mxu0 0.0
      %2259 = vmatmul.mubr.f32.gmra.mxu0 %v1312
      %v2260 = vpop.f32.mrf.mxu0
      %v2261 = vadd.f32 0.0, %v2260
      %v2262 = vpop.f32.mrf.mxu0
      %2263 = vmatprep.mubr.f32.mxu0 0.0
      %2264 = vmatmul.mubr.f32.gmra.mxu0 %v1314
      %v2265 = vpop.f32.mrf.mxu0
      %v2266 = vadd.f32 0.0, %v2265
      %v2267 = vpop.f32.mrf.mxu0
      %2268 = vmatprep.mubr.f32.mxu0 0.0
      %2269 = vmatmul.mubr.f32.gmra.mxu0 %v1316
      %v2270 = vpop.f32.mrf.mxu0
      %v2271 = vadd.f32 0.0, %v2270
      %v2272 = vpop.f32.mrf.mxu0
      %2273 = vmatprep.mubr.f32.mxu0 0.0
      %2274 = vmatmul.mubr.f32.gmra.mxu0 %v1318
      %v2275 = vpop.f32.mrf.mxu0
      %v2276 = vadd.f32 0.0, %v2275
      %v2277 = vpop.f32.mrf.mxu0
      %2278 = vmatprep.mubr.f32.mxu0 0.0
      %2279 = vmatmul.mubr.f32.gmra.mxu0 %v1320
      %v2280 = vpop.f32.mrf.mxu0
      %v2281 = vadd.f32 0.0, %v2280
      %v2282 = vpop.f32.mrf.mxu0
      %2283 = vmatprep.mubr.f32.mxu0 0.0
      %2284 = vmatmul.mubr.f32.gmra.mxu0 %v1322
      %v2285 = vpop.f32.mrf.mxu0
      %v2286 = vadd.f32 0.0, %v2285
      %v2287 = vpop.f32.mrf.mxu0
      %2288 = vmatprep.mubr.f32.mxu0 0.0
      %2289 = vmatmul.mubr.f32.gmra.mxu0 %v1324
      %v2290 = vpop.f32.mrf.mxu0
      %v2291 = vadd.f32 0.0, %v2290
      %v2292 = vpop.f32.mrf.mxu0
      %2293 = vmatprep.mubr.f32.mxu0 0.0
      %2294 = vmatmul.mubr.f32.gmra.mxu0 %v1326
      %v2295 = vpop.f32.mrf.mxu0
      %v2296 = vadd.f32 0.0, %v2295
      %v2297 = vpop.f32.mrf.mxu0
      %2298 = vmatprep.mubr.f32.mxu0 0.0
      %2299 = vmatmul.mubr.f32.gmra.mxu0 %v1328
      %v2300 = vpop.f32.mrf.mxu0
      %v2301 = vadd.f32 0.0, %v2300
      %v2302 = vpop.f32.mrf.mxu0
      %2303 = vmatprep.mubr.f32.mxu0 0.0
      %2304 = vmatmul.mubr.f32.gmra.mxu0 %v1330
      %v2305 = vpop.f32.mrf.mxu0
      %v2306 = vadd.f32 0.0, %v2305
      %v2307 = vpop.f32.mrf.mxu0
      %2308 = vmatprep.mubr.f32.mxu0 0.0
      %2309 = vmatmul.mubr.f32.gmra.mxu0 %v1332
      %v2310 = vpop.f32.mrf.mxu0
      %v2311 = vadd.f32 0.0, %v2310
      %v2312 = vpop.f32.mrf.mxu0
      %2313 = vmatprep.mubr.f32.mxu0 0.0
      %2314 = vmatmul.mubr.f32.gmra.mxu0 %v1334
      %v2315 = vpop.f32.mrf.mxu0
      %v2316 = vadd.f32 0.0, %v2315
      %v2317 = vpop.f32.mrf.mxu0
      %2318 = vmatprep.mubr.f32.mxu0 0.0
      %2319 = vmatmul.mubr.f32.gmra.mxu0 %v1336
      %v2320 = vpop.f32.mrf.mxu0
      %v2321 = vadd.f32 0.0, %v2320
      %v2322 = vpop.f32.mrf.mxu0
      %2323 = vmatprep.mubr.f32.mxu0 0.0
      %2324 = vmatmul.mubr.f32.gmra.mxu0 %v1338
      %v2325 = vpop.f32.mrf.mxu0
      %v2326 = vadd.f32 0.0, %v2325
      %v2327 = vpop.f32.mrf.mxu0
      %2328 = vmatprep.mubr.f32.mxu0 0.0
      %2329 = vmatmul.mubr.f32.gmra.mxu0 %v1340
      %v2330 = vpop.f32.mrf.mxu0
      %v2331 = vadd.f32 0.0, %v2330
      %v2332 = vpop.f32.mrf.mxu0
      %2333 = vmatprep.mubr.f32.mxu0 0.0
      %2334 = vmatmul.mubr.f32.gmra.mxu0 %v1342
      %v2335 = vpop.f32.mrf.mxu0
      %v2336 = vadd.f32 0.0, %v2335
      %v2337 = vpop.f32.mrf.mxu0
      %2338 = vmatprep.mubr.f32.mxu0 0.0
      %2339 = vmatmul.mubr.f32.gmra.mxu0 %v1344
      %v2340 = vpop.f32.mrf.mxu0
      %v2341 = vadd.f32 0.0, %v2340
      %v2342 = vpop.f32.mrf.mxu0
      %2343 = vmatprep.mubr.f32.mxu0 0.0
      %2344 = vmatmul.mubr.f32.gmra.mxu0 %v1346
      %v2345 = vpop.f32.mrf.mxu0
      %v2346 = vadd.f32 0.0, %v2345
      %v2347 = vpop.f32.mrf.mxu0
      %2348 = vmatprep.mubr.f32.mxu0 0.0
      %2349 = vmatmul.mubr.f32.gmra.mxu0 %v1348
      %v2350 = vpop.f32.mrf.mxu0
      %v2351 = vadd.f32 0.0, %v2350
      %v2352 = vpop.f32.mrf.mxu0
      %2353 = vmatprep.mubr.f32.mxu0 0.0
      %2354 = vmatmul.mubr.f32.gmra.mxu0 %v1350
      %v2355 = vpop.f32.mrf.mxu0
      %v2356 = vadd.f32 0.0, %v2355
      %v2357 = vpop.f32.mrf.mxu0
      %2358 = vmatprep.mubr.f32.mxu0 0.0
      %2359 = vmatmul.mubr.f32.gmra.mxu0 %v1352
      %v2360 = vpop.f32.mrf.mxu0
      %v2361 = vadd.f32 0.0, %v2360
      %v2362 = vpop.f32.mrf.mxu0
      %2363 = vmatprep.mubr.f32.mxu0 0.0
      %2364 = vmatmul.mubr.f32.gmra.mxu0 %v1354
      %v2365 = vpop.f32.mrf.mxu0
      %v2366 = vadd.f32 0.0, %v2365
      %v2367 = vpop.f32.mrf.mxu0
      %2368 = vmatprep.mubr.f32.mxu0 0.0
      %2369 = vmatmul.mubr.f32.gmra.mxu0 %v1356
      %v2370 = vpop.f32.mrf.mxu0
      %v2371 = vadd.f32 0.0, %v2370
      %v2372 = vpop.f32.mrf.mxu0
      %2373 = vmatprep.mubr.f32.mxu0 0.0
      %2374 = vmatmul.mubr.f32.gmra.mxu0 %v1358
      %v2375 = vpop.f32.mrf.mxu0
      %v2376 = vadd.f32 0.0, %v2375
      %v2377 = vpop.f32.mrf.mxu0
      %2378 = vmatprep.mubr.f32.mxu0 0.0
      %2379 = vmatmul.mubr.f32.gmra.mxu0 %v1360
      %v2380 = vpop.f32.mrf.mxu0
      %v2381 = vadd.f32 0.0, %v2380
      %v2382 = vpop.f32.mrf.mxu0
      %2383 = vmatprep.mubr.f32.mxu0 0.0
      %2384 = vmatmul.mubr.f32.gmra.mxu0 %v1362
      %v2385 = vpop.f32.mrf.mxu0
      %v2386 = vadd.f32 0.0, %v2385
      %v2387 = vpop.f32.mrf.mxu0
      %2388 = vmatprep.mubr.f32.mxu0 0.0
      %2389 = vmatmul.mubr.f32.gmra.mxu0 %v1364
      %v2390 = vpop.f32.mrf.mxu0
      %v2391 = vadd.f32 0.0, %v2390
      %v2392 = vpop.f32.mrf.mxu0
      %2393 = vmatprep.mubr.f32.mxu0 0.0
      %2394 = vmatmul.mubr.f32.gmra.mxu0 %v1366
      %v2395 = vpop.f32.mrf.mxu0
      %v2396 = vadd.f32 0.0, %v2395
      %v2397 = vpop.f32.mrf.mxu0
      %2398 = vmatprep.mubr.f32.mxu0 0.0
      %2399 = vmatmul.mubr.f32.gmra.mxu0 %v1368
      %v2400 = vpop.f32.mrf.mxu0
      %v2401 = vadd.f32 0.0, %v2400
      %v2402 = vpop.f32.mrf.mxu0
      %2403 = vmatprep.mubr.f32.mxu0 0.0
      %2404 = vmatmul.mubr.f32.gmra.mxu0 %v2182
      %v2405 = vpop.f32.mrf.mxu0
      %v2406 = vadd.f32 0.0, %v2405
      %v2407 = vpop.f32.mrf.mxu0
      %2408 = vmatprep.mubr.f32.mxu0 0.0
      %2409 = vmatmul.mubr.f32.gmra.mxu0 %v2184
      %v2410 = vpop.f32.mrf.mxu0
      %v2411 = vadd.f32 0.0, %v2410
      %v2412 = vpop.f32.mrf.mxu0
      %2413 = vdwg.mxu0
      %v2414 = vadd.f32 %v2143, %v2256
      %v2415 = vadd.f32 %v2144, %v2261
      %v2416 = vadd.f32 %v2145, %v2266
      %v2417 = vadd.f32 %v2146, %v2271
      %v2418 = vadd.f32 %v2147, %v2276
      %v2419 = vadd.f32 %v2148, %v2281
      %v2420 = vadd.f32 %v2149, %v2286
      %v2421 = vadd.f32 %v2150, %v2291
      %v2422 = vadd.f32 %v2151, %v2296
      %v2423 = vadd.f32 %v2152, %v2301
      %v2424 = vadd.f32 %v2153, %v2306
      %v2425 = vadd.f32 %v2154, %v2311
      %v2426 = vadd.f32 %v2155, %v2316
      %v2427 = vadd.f32 %v2156, %v2321
      %v2428 = vadd.f32 %v2157, %v2326
      %v2429 = vadd.f32 %v2158, %v2331
      %v2430 = vadd.f32 %v2159, %v2336
      %v2431 = vadd.f32 %v2160, %v2341
      %v2432 = vadd.f32 %v2161, %v2346
      %v2433 = vadd.f32 %v2162, %v2351
      %v2434 = vadd.f32 %v2163, %v2356
      %v2435 = vadd.f32 %v2164, %v2361
      %v2436 = vadd.f32 %v2165, %v2366
      %v2437 = vadd.f32 %v2166, %v2371
      %v2438 = vadd.f32 %v2167, %v2376
      %v2439 = vadd.f32 %v2168, %v2381
      %v2440 = vadd.f32 %v2169, %v2386
      %v2441 = vadd.f32 %v2170, %v2391
      %v2442 = vadd.f32 %v2171, %v2396
      %v2443 = vadd.f32 %v2172, %v2401
      %v2444 = vadd.f32 %v2173, %v2406
      %v2445 = vadd.f32 %v2174, %v2411
      %v2449 = vrot.slane %v326, 2
      %v2450 = vrot.slane %v327, 2
      %v2451 = vsel %vm409, %v2449, %v2450
      %v2452 = vrot.slane %v328, 2
      %v2453 = vsel %vm409, %v2450, %v2452
      %s2454 = scalar_lea.vmem %s232, 24
      %v2455 = vld [vmem:[%s2454] sm:$0xf]
      %v2456 = vsel %vm491, %v2451, 0
      %v2458 = vsel %vm491, %v2453, 0
      %v2461 = vsel %vm556, %v2455, 0
      %2463 = vmatprep.subr.mxu0 0.0
      %2464 = vmatpush1.msra.mxu0 0.0
      %2465 = vmatprep.subr.mxu0 0.0
      %2466 = vmatpush1.msra.mxu0 0.0
      %2467 = vmatprep.subr.mxu0 0.0
      %2468 = vmatpush1.msra.mxu0 0.0
      %2469 = vmatprep.subr.mxu0 0.0
      %2470 = vmatpush1.msra.mxu0 0.0
      %2471 = vmatprep.subr.mxu0 0.0
      %2472 = vmatpush1.msra.mxu0 0.0
      %2473 = vmatprep.subr.mxu0 0.0
      %2474 = vmatpush1.msra.mxu0 0.0
      %2475 = vmatprep.subr.mxu0 0.0
      %2476 = vmatpush1.msra.mxu0 0.0
      %2477 = vmatprep.subr.mxu0 0.0
      %2478 = vmatpush1.msra.mxu0 0.0
      %2479 = vmatprep.subr.mxu0 0.0
      %2480 = vmatpush1.msra.mxu0 0.0
      %2481 = vmatprep.subr.mxu0 0.0
      %2482 = vmatpush1.msra.mxu0 0.0
      %2483 = vmatprep.subr.mxu0 0.0
      %2484 = vmatpush1.msra.mxu0 0.0
      %2485 = vmatprep.subr.mxu0 0.0
      %2486 = vmatpush1.msra.mxu0 0.0
      %2487 = vmatprep.subr.mxu0 0.0
      %2488 = vmatpush1.msra.mxu0 0.0
      %2489 = vmatprep.subr.mxu0 0.0
      %2490 = vmatpush1.msra.mxu0 0.0
      %2491 = vmatprep.subr.mxu0 0.0
      %2492 = vmatpush1.msra.mxu0 0.0
      %2493 = vmatprep.subr.mxu0 0.0
      %2494 = vmatpush1.msra.mxu0 %v2461
      %2495 = vmatprep.subr.mxu0 0.0
      %2496 = vmatpush2.msra.mxu0 0.0
      %2497 = vmatprep.subr.mxu0 0.0
      %2498 = vmatpush2.msra.mxu0 0.0
      %2499 = vmatprep.subr.mxu0 0.0
      %2500 = vmatpush2.msra.mxu0 0.0
      %2501 = vmatprep.subr.mxu0 0.0
      %2502 = vmatpush2.msra.mxu0 0.0
      %2503 = vmatprep.subr.mxu0 0.0
      %2504 = vmatpush2.msra.mxu0 0.0
      %2505 = vmatprep.subr.mxu0 0.0
      %2506 = vmatpush2.msra.mxu0 0.0
      %2507 = vmatprep.subr.mxu0 0.0
      %2508 = vmatpush2.msra.mxu0 0.0
      %2509 = vmatprep.subr.mxu0 0.0
      %2510 = vmatpush2.msra.mxu0 0.0
      %2511 = vmatprep.subr.mxu0 0.0
      %2512 = vmatpush2.msra.mxu0 0.0
      %2513 = vmatprep.subr.mxu0 0.0
      %2514 = vmatpush2.msra.mxu0 0.0
      %2515 = vmatprep.subr.mxu0 0.0
      %2516 = vmatpush2.msra.mxu0 0.0
      %2517 = vmatprep.subr.mxu0 0.0
      %2518 = vmatpush2.msra.mxu0 0.0
      %2519 = vmatprep.subr.mxu0 0.0
      %2520 = vmatpush2.msra.mxu0 0.0
      %2521 = vmatprep.subr.mxu0 0.0
      %2522 = vmatpush2.msra.mxu0 0.0
      %2523 = vmatprep.subr.mxu0 0.0
      %2524 = vmatpush2.msra.mxu0 0.0
      %2525 = vmatprep.subr.mxu0 0.0
      %2526 = vmatpush2.msra.mxu0 0.0
      %2527 = vmatprep.mubr.f32.mxu0 0.0
      %2528 = vmatmul.mubr.f32.gmra.mxu0 %v500
      %v2529 = vpop.f32.mrf.mxu0
      %v2530 = vadd.f32 0.0, %v2529
      %v2531 = vpop.f32.mrf.mxu0
      %2532 = vmatprep.mubr.f32.mxu0 0.0
      %2533 = vmatmul.mubr.f32.gmra.mxu0 %v502
      %v2534 = vpop.f32.mrf.mxu0
      %v2535 = vadd.f32 0.0, %v2534
      %v2536 = vpop.f32.mrf.mxu0
      %2537 = vmatprep.mubr.f32.mxu0 0.0
      %2538 = vmatmul.mubr.f32.gmra.mxu0 %v504
      %v2539 = vpop.f32.mrf.mxu0
      %v2540 = vadd.f32 0.0, %v2539
      %v2541 = vpop.f32.mrf.mxu0
      %2542 = vmatprep.mubr.f32.mxu0 0.0
      %2543 = vmatmul.mubr.f32.gmra.mxu0 %v506
      %v2544 = vpop.f32.mrf.mxu0
      %v2545 = vadd.f32 0.0, %v2544
      %v2546 = vpop.f32.mrf.mxu0
      %2547 = vmatprep.mubr.f32.mxu0 0.0
      %2548 = vmatmul.mubr.f32.gmra.mxu0 %v508
      %v2549 = vpop.f32.mrf.mxu0
      %v2550 = vadd.f32 0.0, %v2549
      %v2551 = vpop.f32.mrf.mxu0
      %2552 = vmatprep.mubr.f32.mxu0 0.0
      %2553 = vmatmul.mubr.f32.gmra.mxu0 %v510
      %v2554 = vpop.f32.mrf.mxu0
      %v2555 = vadd.f32 0.0, %v2554
      %v2556 = vpop.f32.mrf.mxu0
      %2557 = vmatprep.mubr.f32.mxu0 0.0
      %2558 = vmatmul.mubr.f32.gmra.mxu0 %v512
      %v2559 = vpop.f32.mrf.mxu0
      %v2560 = vadd.f32 0.0, %v2559
      %v2561 = vpop.f32.mrf.mxu0
      %2562 = vmatprep.mubr.f32.mxu0 0.0
      %2563 = vmatmul.mubr.f32.gmra.mxu0 %v514
      %v2564 = vpop.f32.mrf.mxu0
      %v2565 = vadd.f32 0.0, %v2564
      %v2566 = vpop.f32.mrf.mxu0
      %2567 = vmatprep.mubr.f32.mxu0 0.0
      %2568 = vmatmul.mubr.f32.gmra.mxu0 %v516
      %v2569 = vpop.f32.mrf.mxu0
      %v2570 = vadd.f32 0.0, %v2569
      %v2571 = vpop.f32.mrf.mxu0
      %2572 = vmatprep.mubr.f32.mxu0 0.0
      %2573 = vmatmul.mubr.f32.gmra.mxu0 %v518
      %v2574 = vpop.f32.mrf.mxu0
      %v2575 = vadd.f32 0.0, %v2574
      %v2576 = vpop.f32.mrf.mxu0
      %2577 = vmatprep.mubr.f32.mxu0 0.0
      %2578 = vmatmul.mubr.f32.gmra.mxu0 %v520
      %v2579 = vpop.f32.mrf.mxu0
      %v2580 = vadd.f32 0.0, %v2579
      %v2581 = vpop.f32.mrf.mxu0
      %2582 = vmatprep.mubr.f32.mxu0 0.0
      %2583 = vmatmul.mubr.f32.gmra.mxu0 %v522
      %v2584 = vpop.f32.mrf.mxu0
      %v2585 = vadd.f32 0.0, %v2584
      %v2586 = vpop.f32.mrf.mxu0
      %2587 = vmatprep.mubr.f32.mxu0 0.0
      %2588 = vmatmul.mubr.f32.gmra.mxu0 %v524
      %v2589 = vpop.f32.mrf.mxu0
      %v2590 = vadd.f32 0.0, %v2589
      %v2591 = vpop.f32.mrf.mxu0
      %2592 = vmatprep.mubr.f32.mxu0 0.0
      %2593 = vmatmul.mubr.f32.gmra.mxu0 %v526
      %v2594 = vpop.f32.mrf.mxu0
      %v2595 = vadd.f32 0.0, %v2594
      %v2596 = vpop.f32.mrf.mxu0
      %2597 = vmatprep.mubr.f32.mxu0 0.0
      %2598 = vmatmul.mubr.f32.gmra.mxu0 %v528
      %v2599 = vpop.f32.mrf.mxu0
      %v2600 = vadd.f32 0.0, %v2599
      %v2601 = vpop.f32.mrf.mxu0
      %2602 = vmatprep.mubr.f32.mxu0 0.0
      %2603 = vmatmul.mubr.f32.gmra.mxu0 %v530
      %v2604 = vpop.f32.mrf.mxu0
      %v2605 = vadd.f32 0.0, %v2604
      %v2606 = vpop.f32.mrf.mxu0
      %2607 = vmatprep.mubr.f32.mxu0 0.0
      %2608 = vmatmul.mubr.f32.gmra.mxu0 %v532
      %v2609 = vpop.f32.mrf.mxu0
      %v2610 = vadd.f32 0.0, %v2609
      %v2611 = vpop.f32.mrf.mxu0
      %2612 = vmatprep.mubr.f32.mxu0 0.0
      %2613 = vmatmul.mubr.f32.gmra.mxu0 %v534
      %v2614 = vpop.f32.mrf.mxu0
      %v2615 = vadd.f32 0.0, %v2614
      %v2616 = vpop.f32.mrf.mxu0
      %2617 = vmatprep.mubr.f32.mxu0 0.0
      %2618 = vmatmul.mubr.f32.gmra.mxu0 %v536
      %v2619 = vpop.f32.mrf.mxu0
      %v2620 = vadd.f32 0.0, %v2619
      %v2621 = vpop.f32.mrf.mxu0
      %2622 = vmatprep.mubr.f32.mxu0 0.0
      %2623 = vmatmul.mubr.f32.gmra.mxu0 %v538
      %v2624 = vpop.f32.mrf.mxu0
      %v2625 = vadd.f32 0.0, %v2624
      %v2626 = vpop.f32.mrf.mxu0
      %2627 = vmatprep.mubr.f32.mxu0 0.0
      %2628 = vmatmul.mubr.f32.gmra.mxu0 %v540
      %v2629 = vpop.f32.mrf.mxu0
      %v2630 = vadd.f32 0.0, %v2629
      %v2631 = vpop.f32.mrf.mxu0
      %2632 = vmatprep.mubr.f32.mxu0 0.0
      %2633 = vmatmul.mubr.f32.gmra.mxu0 %v542
      %v2634 = vpop.f32.mrf.mxu0
      %v2635 = vadd.f32 0.0, %v2634
      %v2636 = vpop.f32.mrf.mxu0
      %2637 = vmatprep.mubr.f32.mxu0 0.0
      %2638 = vmatmul.mubr.f32.gmra.mxu0 %v544
      %v2639 = vpop.f32.mrf.mxu0
      %v2640 = vadd.f32 0.0, %v2639
      %v2641 = vpop.f32.mrf.mxu0
      %2642 = vmatprep.mubr.f32.mxu0 0.0
      %2643 = vmatmul.mubr.f32.gmra.mxu0 %v546
      %v2644 = vpop.f32.mrf.mxu0
      %v2645 = vadd.f32 0.0, %v2644
      %v2646 = vpop.f32.mrf.mxu0
      %2647 = vmatprep.mubr.f32.mxu0 0.0
      %2648 = vmatmul.mubr.f32.gmra.mxu0 %v548
      %v2649 = vpop.f32.mrf.mxu0
      %v2650 = vadd.f32 0.0, %v2649
      %v2651 = vpop.f32.mrf.mxu0
      %2652 = vmatprep.mubr.f32.mxu0 0.0
      %2653 = vmatmul.mubr.f32.gmra.mxu0 %v550
      %v2654 = vpop.f32.mrf.mxu0
      %v2655 = vadd.f32 0.0, %v2654
      %v2656 = vpop.f32.mrf.mxu0
      %2657 = vmatprep.mubr.f32.mxu0 0.0
      %2658 = vmatmul.mubr.f32.gmra.mxu0 %v552
      %v2659 = vpop.f32.mrf.mxu0
      %v2660 = vadd.f32 0.0, %v2659
      %v2661 = vpop.f32.mrf.mxu0
      %2662 = vmatprep.mubr.f32.mxu0 0.0
      %2663 = vmatmul.mubr.f32.gmra.mxu0 %v554
      %v2664 = vpop.f32.mrf.mxu0
      %v2665 = vadd.f32 0.0, %v2664
      %v2666 = vpop.f32.mrf.mxu0
      %2667 = vmatprep.mubr.f32.mxu0 0.0
      %2668 = vmatmul.mubr.f32.gmra.mxu0 %v1640
      %v2669 = vpop.f32.mrf.mxu0
      %v2670 = vadd.f32 0.0, %v2669
      %v2671 = vpop.f32.mrf.mxu0
      %2672 = vmatprep.mubr.f32.mxu0 0.0
      %2673 = vmatmul.mubr.f32.gmra.mxu0 %v1642
      %v2674 = vpop.f32.mrf.mxu0
      %v2675 = vadd.f32 0.0, %v2674
      %v2676 = vpop.f32.mrf.mxu0
      %2677 = vmatprep.mubr.f32.mxu0 0.0
      %2678 = vmatmul.mubr.f32.gmra.mxu0 %v2456
      %v2679 = vpop.f32.mrf.mxu0
      %v2680 = vadd.f32 0.0, %v2679
      %v2681 = vpop.f32.mrf.mxu0
      %2682 = vmatprep.mubr.f32.mxu0 0.0
      %2683 = vmatmul.mubr.f32.gmra.mxu0 %v2458
      %v2684 = vpop.f32.mrf.mxu0
      %v2685 = vadd.f32 0.0, %v2684
      %v2686 = vpop.f32.mrf.mxu0
      %2687 = vdwg.mxu0
      %v2688 = vadd.f32 %v2414, %v2530
      %v2689 = vadd.f32 %v2415, %v2535
      %v2690 = vadd.f32 %v2416, %v2540
      %v2691 = vadd.f32 %v2417, %v2545
      %v2692 = vadd.f32 %v2418, %v2550
      %v2693 = vadd.f32 %v2419, %v2555
      %v2694 = vadd.f32 %v2420, %v2560
      %v2695 = vadd.f32 %v2421, %v2565
      %v2696 = vadd.f32 %v2422, %v2570
      %v2697 = vadd.f32 %v2423, %v2575
      %v2698 = vadd.f32 %v2424, %v2580
      %v2699 = vadd.f32 %v2425, %v2585
      %v2700 = vadd.f32 %v2426, %v2590
      %v2701 = vadd.f32 %v2427, %v2595
      %v2702 = vadd.f32 %v2428, %v2600
      %v2703 = vadd.f32 %v2429, %v2605
      %v2704 = vadd.f32 %v2430, %v2610
      %v2705 = vadd.f32 %v2431, %v2615
      %v2706 = vadd.f32 %v2432, %v2620
      %v2707 = vadd.f32 %v2433, %v2625
      %v2708 = vadd.f32 %v2434, %v2630
      %v2709 = vadd.f32 %v2435, %v2635
      %v2710 = vadd.f32 %v2436, %v2640
      %v2711 = vadd.f32 %v2437, %v2645
      %v2712 = vadd.f32 %v2438, %v2650
      %v2713 = vadd.f32 %v2439, %v2655
      %v2714 = vadd.f32 %v2440, %v2660
      %v2715 = vadd.f32 %v2441, %v2665
      %v2716 = vadd.f32 %v2442, %v2670
      %v2717 = vadd.f32 %v2443, %v2675
      %v2718 = vadd.f32 %v2444, %v2680
      %v2719 = vadd.f32 %v2445, %v2685
      %v2720 = vrot.slane %v326, 3
      %v2721 = vrot.slane %v327, 3
      %v2722 = vsel %vm817, %v2720, %v2721
      %v2723 = vrot.slane %v328, 3
      %v2724 = vsel %vm817, %v2721, %v2723
      %s2725 = scalar_lea.vmem %s232, 28
      %v2726 = vld [vmem:[%s2725] sm:$0xf]
      %v2727 = vsel %vm491, %v2722, 0
      %v2729 = vsel %vm491, %v2724, 0
      %v2732 = vsel %vm556, %v2726, 0
      %2734 = vmatprep.subr.mxu0 0.0
      %2735 = vmatpush1.msra.mxu0 0.0
      %2736 = vmatprep.subr.mxu0 0.0
      %2737 = vmatpush1.msra.mxu0 0.0
      %2738 = vmatprep.subr.mxu0 0.0
      %2739 = vmatpush1.msra.mxu0 0.0
      %2740 = vmatprep.subr.mxu0 0.0
      %2741 = vmatpush1.msra.mxu0 0.0
      %2742 = vmatprep.subr.mxu0 0.0
      %2743 = vmatpush1.msra.mxu0 0.0
      %2744 = vmatprep.subr.mxu0 0.0
      %2745 = vmatpush1.msra.mxu0 0.0
      %2746 = vmatprep.subr.mxu0 0.0
      %2747 = vmatpush1.msra.mxu0 0.0
      %2748 = vmatprep.subr.mxu0 0.0
      %2749 = vmatpush1.msra.mxu0 0.0
      %2750 = vmatprep.subr.mxu0 0.0
      %2751 = vmatpush1.msra.mxu0 0.0
      %2752 = vmatprep.subr.mxu0 0.0
      %2753 = vmatpush1.msra.mxu0 0.0
      %2754 = vmatprep.subr.mxu0 0.0
      %2755 = vmatpush1.msra.mxu0 0.0
      %2756 = vmatprep.subr.mxu0 0.0
      %2757 = vmatpush1.msra.mxu0 0.0
      %2758 = vmatprep.subr.mxu0 0.0
      %2759 = vmatpush1.msra.mxu0 0.0
      %2760 = vmatprep.subr.mxu0 0.0
      %2761 = vmatpush1.msra.mxu0 0.0
      %2762 = vmatprep.subr.mxu0 0.0
      %2763 = vmatpush1.msra.mxu0 0.0
      %2764 = vmatprep.subr.mxu0 0.0
      %2765 = vmatpush1.msra.mxu0 %v2732
      %2766 = vmatprep.subr.mxu0 0.0
      %2767 = vmatpush2.msra.mxu0 0.0
      %2768 = vmatprep.subr.mxu0 0.0
      %2769 = vmatpush2.msra.mxu0 0.0
      %2770 = vmatprep.subr.mxu0 0.0
      %2771 = vmatpush2.msra.mxu0 0.0
      %2772 = vmatprep.subr.mxu0 0.0
      %2773 = vmatpush2.msra.mxu0 0.0
      %2774 = vmatprep.subr.mxu0 0.0
      %2775 = vmatpush2.msra.mxu0 0.0
      %2776 = vmatprep.subr.mxu0 0.0
      %2777 = vmatpush2.msra.mxu0 0.0
      %2778 = vmatprep.subr.mxu0 0.0
      %2779 = vmatpush2.msra.mxu0 0.0
      %2780 = vmatprep.subr.mxu0 0.0
      %2781 = vmatpush2.msra.mxu0 0.0
      %2782 = vmatprep.subr.mxu0 0.0
      %2783 = vmatpush2.msra.mxu0 0.0
      %2784 = vmatprep.subr.mxu0 0.0
      %2785 = vmatpush2.msra.mxu0 0.0
      %2786 = vmatprep.subr.mxu0 0.0
      %2787 = vmatpush2.msra.mxu0 0.0
      %2788 = vmatprep.subr.mxu0 0.0
      %2789 = vmatpush2.msra.mxu0 0.0
      %2790 = vmatprep.subr.mxu0 0.0
      %2791 = vmatpush2.msra.mxu0 0.0
      %2792 = vmatprep.subr.mxu0 0.0
      %2793 = vmatpush2.msra.mxu0 0.0
      %2794 = vmatprep.subr.mxu0 0.0
      %2795 = vmatpush2.msra.mxu0 0.0
      %2796 = vmatprep.subr.mxu0 0.0
      %2797 = vmatpush2.msra.mxu0 0.0
      %2798 = vmatprep.mubr.f32.mxu0 0.0
      %2799 = vmatmul.mubr.f32.gmra.mxu0 %v908
      %v2800 = vpop.f32.mrf.mxu0
      %v2801 = vadd.f32 0.0, %v2800
      %v2802 = vpop.f32.mrf.mxu0
      %2803 = vmatprep.mubr.f32.mxu0 0.0
      %2804 = vmatmul.mubr.f32.gmra.mxu0 %v910
      %v2805 = vpop.f32.mrf.mxu0
      %v2806 = vadd.f32 0.0, %v2805
      %v2807 = vpop.f32.mrf.mxu0
      %2808 = vmatprep.mubr.f32.mxu0 0.0
      %2809 = vmatmul.mubr.f32.gmra.mxu0 %v912
      %v2810 = vpop.f32.mrf.mxu0
      %v2811 = vadd.f32 0.0, %v2810
      %v2812 = vpop.f32.mrf.mxu0
      %2813 = vmatprep.mubr.f32.mxu0 0.0
      %2814 = vmatmul.mubr.f32.gmra.mxu0 %v914
      %v2815 = vpop.f32.mrf.mxu0
      %v2816 = vadd.f32 0.0, %v2815
      %v2817 = vpop.f32.mrf.mxu0
      %2818 = vmatprep.mubr.f32.mxu0 0.0
      %2819 = vmatmul.mubr.f32.gmra.mxu0 %v916
      %v2820 = vpop.f32.mrf.mxu0
      %v2821 = vadd.f32 0.0, %v2820
      %v2822 = vpop.f32.mrf.mxu0
      %2823 = vmatprep.mubr.f32.mxu0 0.0
      %2824 = vmatmul.mubr.f32.gmra.mxu0 %v918
      %v2825 = vpop.f32.mrf.mxu0
      %v2826 = vadd.f32 0.0, %v2825
      %v2827 = vpop.f32.mrf.mxu0
      %2828 = vmatprep.mubr.f32.mxu0 0.0
      %2829 = vmatmul.mubr.f32.gmra.mxu0 %v920
      %v2830 = vpop.f32.mrf.mxu0
      %v2831 = vadd.f32 0.0, %v2830
      %v2832 = vpop.f32.mrf.mxu0
      %2833 = vmatprep.mubr.f32.mxu0 0.0
      %2834 = vmatmul.mubr.f32.gmra.mxu0 %v922
      %v2835 = vpop.f32.mrf.mxu0
      %v2836 = vadd.f32 0.0, %v2835
      %v2837 = vpop.f32.mrf.mxu0
      %2838 = vmatprep.mubr.f32.mxu0 0.0
      %2839 = vmatmul.mubr.f32.gmra.mxu0 %v924
      %v2840 = vpop.f32.mrf.mxu0
      %v2841 = vadd.f32 0.0, %v2840
      %v2842 = vpop.f32.mrf.mxu0
      %2843 = vmatprep.mubr.f32.mxu0 0.0
      %2844 = vmatmul.mubr.f32.gmra.mxu0 %v926
      %v2845 = vpop.f32.mrf.mxu0
      %v2846 = vadd.f32 0.0, %v2845
      %v2847 = vpop.f32.mrf.mxu0
      %2848 = vmatprep.mubr.f32.mxu0 0.0
      %2849 = vmatmul.mubr.f32.gmra.mxu0 %v928
      %v2850 = vpop.f32.mrf.mxu0
      %v2851 = vadd.f32 0.0, %v2850
      %v2852 = vpop.f32.mrf.mxu0
      %2853 = vmatprep.mubr.f32.mxu0 0.0
      %2854 = vmatmul.mubr.f32.gmra.mxu0 %v930
      %v2855 = vpop.f32.mrf.mxu0
      %v2856 = vadd.f32 0.0, %v2855
      %v2857 = vpop.f32.mrf.mxu0
      %2858 = vmatprep.mubr.f32.mxu0 0.0
      %2859 = vmatmul.mubr.f32.gmra.mxu0 %v932
      %v2860 = vpop.f32.mrf.mxu0
      %v2861 = vadd.f32 0.0, %v2860
      %v2862 = vpop.f32.mrf.mxu0
      %2863 = vmatprep.mubr.f32.mxu0 0.0
      %2864 = vmatmul.mubr.f32.gmra.mxu0 %v934
      %v2865 = vpop.f32.mrf.mxu0
      %v2866 = vadd.f32 0.0, %v2865
      %v2867 = vpop.f32.mrf.mxu0
      %2868 = vmatprep.mubr.f32.mxu0 0.0
      %2869 = vmatmul.mubr.f32.gmra.mxu0 %v936
      %v2870 = vpop.f32.mrf.mxu0
      %v2871 = vadd.f32 0.0, %v2870
      %v2872 = vpop.f32.mrf.mxu0
      %2873 = vmatprep.mubr.f32.mxu0 0.0
      %2874 = vmatmul.mubr.f32.gmra.mxu0 %v938
      %v2875 = vpop.f32.mrf.mxu0
      %v2876 = vadd.f32 0.0, %v2875
      %v2877 = vpop.f32.mrf.mxu0
      %2878 = vmatprep.mubr.f32.mxu0 0.0
      %2879 = vmatmul.mubr.f32.gmra.mxu0 %v940
      %v2880 = vpop.f32.mrf.mxu0
      %v2881 = vadd.f32 0.0, %v2880
      %v2882 = vpop.f32.mrf.mxu0
      %2883 = vmatprep.mubr.f32.mxu0 0.0
      %2884 = vmatmul.mubr.f32.gmra.mxu0 %v942
      %v2885 = vpop.f32.mrf.mxu0
      %v2886 = vadd.f32 0.0, %v2885
      %v2887 = vpop.f32.mrf.mxu0
      %2888 = vmatprep.mubr.f32.mxu0 0.0
      %2889 = vmatmul.mubr.f32.gmra.mxu0 %v944
      %v2890 = vpop.f32.mrf.mxu0
      %v2891 = vadd.f32 0.0, %v2890
      %v2892 = vpop.f32.mrf.mxu0
      %2893 = vmatprep.mubr.f32.mxu0 0.0
      %2894 = vmatmul.mubr.f32.gmra.mxu0 %v946
      %v2895 = vpop.f32.mrf.mxu0
      %v2896 = vadd.f32 0.0, %v2895
      %v2897 = vpop.f32.mrf.mxu0
      %2898 = vmatprep.mubr.f32.mxu0 0.0
      %2899 = vmatmul.mubr.f32.gmra.mxu0 %v948
      %v2900 = vpop.f32.mrf.mxu0
      %v2901 = vadd.f32 0.0, %v2900
      %v2902 = vpop.f32.mrf.mxu0
      %2903 = vmatprep.mubr.f32.mxu0 0.0
      %2904 = vmatmul.mubr.f32.gmra.mxu0 %v950
      %v2905 = vpop.f32.mrf.mxu0
      %v2906 = vadd.f32 0.0, %v2905
      %v2907 = vpop.f32.mrf.mxu0
      %2908 = vmatprep.mubr.f32.mxu0 0.0
      %2909 = vmatmul.mubr.f32.gmra.mxu0 %v952
      %v2910 = vpop.f32.mrf.mxu0
      %v2911 = vadd.f32 0.0, %v2910
      %v2912 = vpop.f32.mrf.mxu0
      %2913 = vmatprep.mubr.f32.mxu0 0.0
      %2914 = vmatmul.mubr.f32.gmra.mxu0 %v954
      %v2915 = vpop.f32.mrf.mxu0
      %v2916 = vadd.f32 0.0, %v2915
      %v2917 = vpop.f32.mrf.mxu0
      %2918 = vmatprep.mubr.f32.mxu0 0.0
      %2919 = vmatmul.mubr.f32.gmra.mxu0 %v956
      %v2920 = vpop.f32.mrf.mxu0
      %v2921 = vadd.f32 0.0, %v2920
      %v2922 = vpop.f32.mrf.mxu0
      %2923 = vmatprep.mubr.f32.mxu0 0.0
      %2924 = vmatmul.mubr.f32.gmra.mxu0 %v958
      %v2925 = vpop.f32.mrf.mxu0
      %v2926 = vadd.f32 0.0, %v2925
      %v2927 = vpop.f32.mrf.mxu0
      %2928 = vmatprep.mubr.f32.mxu0 0.0
      %2929 = vmatmul.mubr.f32.gmra.mxu0 %v960
      %v2930 = vpop.f32.mrf.mxu0
      %v2931 = vadd.f32 0.0, %v2930
      %v2932 = vpop.f32.mrf.mxu0
      %2933 = vmatprep.mubr.f32.mxu0 0.0
      %2934 = vmatmul.mubr.f32.gmra.mxu0 %v962
      %v2935 = vpop.f32.mrf.mxu0
      %v2936 = vadd.f32 0.0, %v2935
      %v2937 = vpop.f32.mrf.mxu0
      %2938 = vmatprep.mubr.f32.mxu0 0.0
      %2939 = vmatmul.mubr.f32.gmra.mxu0 %v1911
      %v2940 = vpop.f32.mrf.mxu0
      %v2941 = vadd.f32 0.0, %v2940
      %v2942 = vpop.f32.mrf.mxu0
      %2943 = vmatprep.mubr.f32.mxu0 0.0
      %2944 = vmatmul.mubr.f32.gmra.mxu0 %v1913
      %v2945 = vpop.f32.mrf.mxu0
      %v2946 = vadd.f32 0.0, %v2945
      %v2947 = vpop.f32.mrf.mxu0
      %2948 = vmatprep.mubr.f32.mxu0 0.0
      %2949 = vmatmul.mubr.f32.gmra.mxu0 %v2727
      %v2950 = vpop.f32.mrf.mxu0
      %v2951 = vadd.f32 0.0, %v2950
      %v2952 = vpop.f32.mrf.mxu0
      %2953 = vmatprep.mubr.f32.mxu0 0.0
      %2954 = vmatmul.mubr.f32.gmra.mxu0 %v2729
      %v2955 = vpop.f32.mrf.mxu0
      %v2956 = vadd.f32 0.0, %v2955
      %v2957 = vpop.f32.mrf.mxu0
      %2958 = vdwg.mxu0
      %v2959 = vadd.f32 %v2688, %v2801
      %v2960 = vadd.f32 %v2689, %v2806
      %v2961 = vadd.f32 %v2690, %v2811
      %v2962 = vadd.f32 %v2691, %v2816
      %v2963 = vadd.f32 %v2692, %v2821
      %v2964 = vadd.f32 %v2693, %v2826
      %v2965 = vadd.f32 %v2694, %v2831
      %v2966 = vadd.f32 %v2695, %v2836
      %v2967 = vadd.f32 %v2696, %v2841
      %v2968 = vadd.f32 %v2697, %v2846
      %v2969 = vadd.f32 %v2698, %v2851
      %v2970 = vadd.f32 %v2699, %v2856
      %v2971 = vadd.f32 %v2700, %v2861
      %v2972 = vadd.f32 %v2701, %v2866
      %v2973 = vadd.f32 %v2702, %v2871
      %v2974 = vadd.f32 %v2703, %v2876
      %v2975 = vadd.f32 %v2704, %v2881
      %v2976 = vadd.f32 %v2705, %v2886
      %v2977 = vadd.f32 %v2706, %v2891
      %v2978 = vadd.f32 %v2707, %v2896
      %v2979 = vadd.f32 %v2708, %v2901
      %v2980 = vadd.f32 %v2709, %v2906
      %v2981 = vadd.f32 %v2710, %v2911
      %v2982 = vadd.f32 %v2711, %v2916
      %v2983 = vadd.f32 %v2712, %v2921
      %v2984 = vadd.f32 %v2713, %v2926
      %v2985 = vadd.f32 %v2714, %v2931
      %v2986 = vadd.f32 %v2715, %v2936
      %v2987 = vadd.f32 %v2716, %v2941
      %v2988 = vadd.f32 %v2717, %v2946
      %v2989 = vadd.f32 %v2718, %v2951
      %v2990 = vadd.f32 %v2719, %v2956
      %v2991 = vrot.slane %v326, 4
      %v2992 = vrot.slane %v327, 4
      %v2993 = vsel %vm556, %v2991, %v2992
      %v2994 = vrot.slane %v328, 4
      %v2995 = vsel %vm556, %v2992, %v2994
      %s2996 = scalar_lea.vmem %s232, 32
      %v2997 = vld [vmem:[%s2996] sm:$0xf]
      %v2998 = vsel %vm491, %v2993, 0
      %v3000 = vsel %vm491, %v2995, 0
      %v3003 = vsel %vm556, %v2997, 0
      %3005 = vmatprep.subr.mxu0 0.0
      %3006 = vmatpush1.msra.mxu0 0.0
      %3007 = vmatprep.subr.mxu0 0.0
      %3008 = vmatpush1.msra.mxu0 0.0
      %3009 = vmatprep.subr.mxu0 0.0
      %3010 = vmatpush1.msra.mxu0 0.0
      %3011 = vmatprep.subr.mxu0 0.0
      %3012 = vmatpush1.msra.mxu0 0.0
      %3013 = vmatprep.subr.mxu0 0.0
      %3014 = vmatpush1.msra.mxu0 0.0
      %3015 = vmatprep.subr.mxu0 0.0
      %3016 = vmatpush1.msra.mxu0 0.0
      %3017 = vmatprep.subr.mxu0 0.0
      %3018 = vmatpush1.msra.mxu0 0.0
      %3019 = vmatprep.subr.mxu0 0.0
      %3020 = vmatpush1.msra.mxu0 0.0
      %3021 = vmatprep.subr.mxu0 0.0
      %3022 = vmatpush1.msra.mxu0 0.0
      %3023 = vmatprep.subr.mxu0 0.0
      %3024 = vmatpush1.msra.mxu0 0.0
      %3025 = vmatprep.subr.mxu0 0.0
      %3026 = vmatpush1.msra.mxu0 0.0
      %3027 = vmatprep.subr.mxu0 0.0
      %3028 = vmatpush1.msra.mxu0 0.0
      %3029 = vmatprep.subr.mxu0 0.0
      %3030 = vmatpush1.msra.mxu0 0.0
      %3031 = vmatprep.subr.mxu0 0.0
      %3032 = vmatpush1.msra.mxu0 0.0
      %3033 = vmatprep.subr.mxu0 0.0
      %3034 = vmatpush1.msra.mxu0 0.0
      %3035 = vmatprep.subr.mxu0 0.0
      %3036 = vmatpush1.msra.mxu0 %v3003
      %3037 = vmatprep.subr.mxu0 0.0
      %3038 = vmatpush2.msra.mxu0 0.0
      %3039 = vmatprep.subr.mxu0 0.0
      %3040 = vmatpush2.msra.mxu0 0.0
      %3041 = vmatprep.subr.mxu0 0.0
      %3042 = vmatpush2.msra.mxu0 0.0
      %3043 = vmatprep.subr.mxu0 0.0
      %3044 = vmatpush2.msra.mxu0 0.0
      %3045 = vmatprep.subr.mxu0 0.0
      %3046 = vmatpush2.msra.mxu0 0.0
      %3047 = vmatprep.subr.mxu0 0.0
      %3048 = vmatpush2.msra.mxu0 0.0
      %3049 = vmatprep.subr.mxu0 0.0
      %3050 = vmatpush2.msra.mxu0 0.0
      %3051 = vmatprep.subr.mxu0 0.0
      %3052 = vmatpush2.msra.mxu0 0.0
      %3053 = vmatprep.subr.mxu0 0.0
      %3054 = vmatpush2.msra.mxu0 0.0
      %3055 = vmatprep.subr.mxu0 0.0
      %3056 = vmatpush2.msra.mxu0 0.0
      %3057 = vmatprep.subr.mxu0 0.0
      %3058 = vmatpush2.msra.mxu0 0.0
      %3059 = vmatprep.subr.mxu0 0.0
      %3060 = vmatpush2.msra.mxu0 0.0
      %3061 = vmatprep.subr.mxu0 0.0
      %3062 = vmatpush2.msra.mxu0 0.0
      %3063 = vmatprep.subr.mxu0 0.0
      %3064 = vmatpush2.msra.mxu0 0.0
      %3065 = vmatprep.subr.mxu0 0.0
      %3066 = vmatpush2.msra.mxu0 0.0
      %3067 = vmatprep.subr.mxu0 0.0
      %3068 = vmatpush2.msra.mxu0 0.0
      %3069 = vmatprep.mubr.f32.mxu0 0.0
      %3070 = vmatmul.mubr.f32.gmra.mxu0 %v1314
      %v3071 = vpop.f32.mrf.mxu0
      %v3072 = vadd.f32 0.0, %v3071
      %v3073 = vpop.f32.mrf.mxu0
      %3074 = vmatprep.mubr.f32.mxu0 0.0
      %3075 = vmatmul.mubr.f32.gmra.mxu0 %v1316
      %v3076 = vpop.f32.mrf.mxu0
      %v3077 = vadd.f32 0.0, %v3076
      %v3078 = vpop.f32.mrf.mxu0
      %3079 = vmatprep.mubr.f32.mxu0 0.0
      %3080 = vmatmul.mubr.f32.gmra.mxu0 %v1318
      %v3081 = vpop.f32.mrf.mxu0
      %v3082 = vadd.f32 0.0, %v3081
      %v3083 = vpop.f32.mrf.mxu0
      %3084 = vmatprep.mubr.f32.mxu0 0.0
      %3085 = vmatmul.mubr.f32.gmra.mxu0 %v1320
      %v3086 = vpop.f32.mrf.mxu0
      %v3087 = vadd.f32 0.0, %v3086
      %v3088 = vpop.f32.mrf.mxu0
      %3089 = vmatprep.mubr.f32.mxu0 0.0
      %3090 = vmatmul.mubr.f32.gmra.mxu0 %v1322
      %v3091 = vpop.f32.mrf.mxu0
      %v3092 = vadd.f32 0.0, %v3091
      %v3093 = vpop.f32.mrf.mxu0
      %3094 = vmatprep.mubr.f32.mxu0 0.0
      %3095 = vmatmul.mubr.f32.gmra.mxu0 %v1324
      %v3096 = vpop.f32.mrf.mxu0
      %v3097 = vadd.f32 0.0, %v3096
      %v3098 = vpop.f32.mrf.mxu0
      %3099 = vmatprep.mubr.f32.mxu0 0.0
      %3100 = vmatmul.mubr.f32.gmra.mxu0 %v1326
      %v3101 = vpop.f32.mrf.mxu0
      %v3102 = vadd.f32 0.0, %v3101
      %v3103 = vpop.f32.mrf.mxu0
      %3104 = vmatprep.mubr.f32.mxu0 0.0
      %3105 = vmatmul.mubr.f32.gmra.mxu0 %v1328
      %v3106 = vpop.f32.mrf.mxu0
      %v3107 = vadd.f32 0.0, %v3106
      %v3108 = vpop.f32.mrf.mxu0
      %3109 = vmatprep.mubr.f32.mxu0 0.0
      %3110 = vmatmul.mubr.f32.gmra.mxu0 %v1330
      %v3111 = vpop.f32.mrf.mxu0
      %v3112 = vadd.f32 0.0, %v3111
      %v3113 = vpop.f32.mrf.mxu0
      %3114 = vmatprep.mubr.f32.mxu0 0.0
      %3115 = vmatmul.mubr.f32.gmra.mxu0 %v1332
      %v3116 = vpop.f32.mrf.mxu0
      %v3117 = vadd.f32 0.0, %v3116
      %v3118 = vpop.f32.mrf.mxu0
      %3119 = vmatprep.mubr.f32.mxu0 0.0
      %3120 = vmatmul.mubr.f32.gmra.mxu0 %v1334
      %v3121 = vpop.f32.mrf.mxu0
      %v3122 = vadd.f32 0.0, %v3121
      %v3123 = vpop.f32.mrf.mxu0
      %3124 = vmatprep.mubr.f32.mxu0 0.0
      %3125 = vmatmul.mubr.f32.gmra.mxu0 %v1336
      %v3126 = vpop.f32.mrf.mxu0
      %v3127 = vadd.f32 0.0, %v3126
      %v3128 = vpop.f32.mrf.mxu0
      %3129 = vmatprep.mubr.f32.mxu0 0.0
      %3130 = vmatmul.mubr.f32.gmra.mxu0 %v1338
      %v3131 = vpop.f32.mrf.mxu0
      %v3132 = vadd.f32 0.0, %v3131
      %v3133 = vpop.f32.mrf.mxu0
      %3134 = vmatprep.mubr.f32.mxu0 0.0
      %3135 = vmatmul.mubr.f32.gmra.mxu0 %v1340
      %v3136 = vpop.f32.mrf.mxu0
      %v3137 = vadd.f32 0.0, %v3136
      %v3138 = vpop.f32.mrf.mxu0
      %3139 = vmatprep.mubr.f32.mxu0 0.0
      %3140 = vmatmul.mubr.f32.gmra.mxu0 %v1342
      %v3141 = vpop.f32.mrf.mxu0
      %v3142 = vadd.f32 0.0, %v3141
      %v3143 = vpop.f32.mrf.mxu0
      %3144 = vmatprep.mubr.f32.mxu0 0.0
      %3145 = vmatmul.mubr.f32.gmra.mxu0 %v1344
      %v3146 = vpop.f32.mrf.mxu0
      %v3147 = vadd.f32 0.0, %v3146
      %v3148 = vpop.f32.mrf.mxu0
      %3149 = vmatprep.mubr.f32.mxu0 0.0
      %3150 = vmatmul.mubr.f32.gmra.mxu0 %v1346
      %v3151 = vpop.f32.mrf.mxu0
      %v3152 = vadd.f32 0.0, %v3151
      %v3153 = vpop.f32.mrf.mxu0
      %3154 = vmatprep.mubr.f32.mxu0 0.0
      %3155 = vmatmul.mubr.f32.gmra.mxu0 %v1348
      %v3156 = vpop.f32.mrf.mxu0
      %v3157 = vadd.f32 0.0, %v3156
      %v3158 = vpop.f32.mrf.mxu0
      %3159 = vmatprep.mubr.f32.mxu0 0.0
      %3160 = vmatmul.mubr.f32.gmra.mxu0 %v1350
      %v3161 = vpop.f32.mrf.mxu0
      %v3162 = vadd.f32 0.0, %v3161
      %v3163 = vpop.f32.mrf.mxu0
      %3164 = vmatprep.mubr.f32.mxu0 0.0
      %3165 = vmatmul.mubr.f32.gmra.mxu0 %v1352
      %v3166 = vpop.f32.mrf.mxu0
      %v3167 = vadd.f32 0.0, %v3166
      %v3168 = vpop.f32.mrf.mxu0
      %3169 = vmatprep.mubr.f32.mxu0 0.0
      %3170 = vmatmul.mubr.f32.gmra.mxu0 %v1354
      %v3171 = vpop.f32.mrf.mxu0
      %v3172 = vadd.f32 0.0, %v3171
      %v3173 = vpop.f32.mrf.mxu0
      %3174 = vmatprep.mubr.f32.mxu0 0.0
      %3175 = vmatmul.mubr.f32.gmra.mxu0 %v1356
      %v3176 = vpop.f32.mrf.mxu0
      %v3177 = vadd.f32 0.0, %v3176
      %v3178 = vpop.f32.mrf.mxu0
      %3179 = vmatprep.mubr.f32.mxu0 0.0
      %3180 = vmatmul.mubr.f32.gmra.mxu0 %v1358
      %v3181 = vpop.f32.mrf.mxu0
      %v3182 = vadd.f32 0.0, %v3181
      %v3183 = vpop.f32.mrf.mxu0
      %3184 = vmatprep.mubr.f32.mxu0 0.0
      %3185 = vmatmul.mubr.f32.gmra.mxu0 %v1360
      %v3186 = vpop.f32.mrf.mxu0
      %v3187 = vadd.f32 0.0, %v3186
      %v3188 = vpop.f32.mrf.mxu0
      %3189 = vmatprep.mubr.f32.mxu0 0.0
      %3190 = vmatmul.mubr.f32.gmra.mxu0 %v1362
      %v3191 = vpop.f32.mrf.mxu0
      %v3192 = vadd.f32 0.0, %v3191
      %v3193 = vpop.f32.mrf.mxu0
      %3194 = vmatprep.mubr.f32.mxu0 0.0
      %3195 = vmatmul.mubr.f32.gmra.mxu0 %v1364
      %v3196 = vpop.f32.mrf.mxu0
      %v3197 = vadd.f32 0.0, %v3196
      %v3198 = vpop.f32.mrf.mxu0
      %3199 = vmatprep.mubr.f32.mxu0 0.0
      %3200 = vmatmul.mubr.f32.gmra.mxu0 %v1366
      %v3201 = vpop.f32.mrf.mxu0
      %v3202 = vadd.f32 0.0, %v3201
      %v3203 = vpop.f32.mrf.mxu0
      %3204 = vmatprep.mubr.f32.mxu0 0.0
      %3205 = vmatmul.mubr.f32.gmra.mxu0 %v1368
      %v3206 = vpop.f32.mrf.mxu0
      %v3207 = vadd.f32 0.0, %v3206
      %v3208 = vpop.f32.mrf.mxu0
      %3209 = vmatprep.mubr.f32.mxu0 0.0
      %3210 = vmatmul.mubr.f32.gmra.mxu0 %v2182
      %v3211 = vpop.f32.mrf.mxu0
      %v3212 = vadd.f32 0.0, %v3211
      %v3213 = vpop.f32.mrf.mxu0
      %3214 = vmatprep.mubr.f32.mxu0 0.0
      %3215 = vmatmul.mubr.f32.gmra.mxu0 %v2184
      %v3216 = vpop.f32.mrf.mxu0
      %v3217 = vadd.f32 0.0, %v3216
      %v3218 = vpop.f32.mrf.mxu0
      %3219 = vmatprep.mubr.f32.mxu0 0.0
      %3220 = vmatmul.mubr.f32.gmra.mxu0 %v2998
      %v3221 = vpop.f32.mrf.mxu0
      %v3222 = vadd.f32 0.0, %v3221
      %v3223 = vpop.f32.mrf.mxu0
      %3224 = vmatprep.mubr.f32.mxu0 0.0
      %3225 = vmatmul.mubr.f32.gmra.mxu0 %v3000
      %v3226 = vpop.f32.mrf.mxu0
      %v3227 = vadd.f32 0.0, %v3226
      %v3228 = vpop.f32.mrf.mxu0
      %3229 = vdwg.mxu0
      %v3230 = vadd.f32 %v2959, %v3072
      %v3231 = vadd.f32 %v2960, %v3077
      %v3232 = vadd.f32 %v2961, %v3082
      %v3233 = vadd.f32 %v2962, %v3087
      %v3234 = vadd.f32 %v2963, %v3092
      %v3235 = vadd.f32 %v2964, %v3097
      %v3236 = vadd.f32 %v2965, %v3102
      %v3237 = vadd.f32 %v2966, %v3107
      %v3238 = vadd.f32 %v2967, %v3112
      %v3239 = vadd.f32 %v2968, %v3117
      %v3240 = vadd.f32 %v2969, %v3122
      %v3241 = vadd.f32 %v2970, %v3127
      %v3242 = vadd.f32 %v2971, %v3132
      %v3243 = vadd.f32 %v2972, %v3137
      %v3244 = vadd.f32 %v2973, %v3142
      %v3245 = vadd.f32 %v2974, %v3147
      %v3246 = vadd.f32 %v2975, %v3152
      %v3247 = vadd.f32 %v2976, %v3157
      %v3248 = vadd.f32 %v2977, %v3162
      %v3249 = vadd.f32 %v2978, %v3167
      %v3250 = vadd.f32 %v2979, %v3172
      %v3251 = vadd.f32 %v2980, %v3177
      %v3252 = vadd.f32 %v2981, %v3182
      %v3253 = vadd.f32 %v2982, %v3187
      %v3254 = vadd.f32 %v2983, %v3192
      %v3255 = vadd.f32 %v2984, %v3197
      %v3256 = vadd.f32 %v2985, %v3202
      %v3257 = vadd.f32 %v2986, %v3207
      %v3258 = vadd.f32 %v2987, %v3212
      %v3259 = vadd.f32 %v2988, %v3217
      %v3260 = vadd.f32 %v2989, %v3222
      %v3261 = vadd.f32 %v2990, %v3227
      %vm3262 = vcmask 64512
      %3263 = vst.msk [vmem:[#allocation2] sm:$0xff] %vm3262, %v3230
      %3264 = vst.msk [vmem:[#allocation2 + $0x8] sm:$0xff] %vm3262, %v3231
      %3265 = vst.msk [vmem:[#allocation2 + $0x10] sm:$0xff] %vm3262, %v3232
      %3266 = vst.msk [vmem:[#allocation2 + $0x18] sm:$0xff] %vm3262, %v3233
      %3267 = vst.msk [vmem:[#allocation2 + $0x20] sm:$0xff] %vm3262, %v3234
      %3268 = vst.msk [vmem:[#allocation2 + $0x28] sm:$0xff] %vm3262, %v3235
      %3269 = vst.msk [vmem:[#allocation2 + $0x30] sm:$0xff] %vm3262, %v3236
      %3270 = vst.msk [vmem:[#allocation2 + $0x38] sm:$0xff] %vm3262, %v3237
      %3271 = vst.msk [vmem:[#allocation2 + $0x40] sm:$0xff] %vm3262, %v3238
      %3272 = vst.msk [vmem:[#allocation2 + $0x48] sm:$0xff] %vm3262, %v3239
      %3273 = vst.msk [vmem:[#allocation2 + $0x50] sm:$0xff] %vm3262, %v3240
      %3274 = vst.msk [vmem:[#allocation2 + $0x58] sm:$0xff] %vm3262, %v3241
      %3275 = vst.msk [vmem:[#allocation2 + $0x60] sm:$0xff] %vm3262, %v3242
      %3276 = vst.msk [vmem:[#allocation2 + $0x68] sm:$0xff] %vm3262, %v3243
      %3277 = vst.msk [vmem:[#allocation2 + $0x70] sm:$0xff] %vm3262, %v3244
      %3278 = vst.msk [vmem:[#allocation2 + $0x78] sm:$0xff] %vm3262, %v3245
      %3279 = vst.msk [vmem:[#allocation2 + $0x80] sm:$0xff] %vm3262, %v3246
      %3280 = vst.msk [vmem:[#allocation2 + $0x88] sm:$0xff] %vm3262, %v3247
      %3281 = vst.msk [vmem:[#allocation2 + $0x90] sm:$0xff] %vm3262, %v3248
      %3282 = vst.msk [vmem:[#allocation2 + $0x98] sm:$0xff] %vm3262, %v3249
      %3283 = vst.msk [vmem:[#allocation2 + $0xa0] sm:$0xff] %vm3262, %v3250
      %3284 = vst.msk [vmem:[#allocation2 + $0xa8] sm:$0xff] %vm3262, %v3251
      %3285 = vst.msk [vmem:[#allocation2 + $0xb0] sm:$0xff] %vm3262, %v3252
      %3286 = vst.msk [vmem:[#allocation2 + $0xb8] sm:$0xff] %vm3262, %v3253
      %3287 = vst.msk [vmem:[#allocation2 + $0xc0] sm:$0xff] %vm3262, %v3254
      %3288 = vst.msk [vmem:[#allocation2 + $0xc8] sm:$0xff] %vm3262, %v3255
      %3289 = vst.msk [vmem:[#allocation2 + $0xd0] sm:$0xff] %vm3262, %v3256
      %3290 = vst.msk [vmem:[#allocation2 + $0xd8] sm:$0xff] %vm3262, %v3257
      %3291 = vst.msk [vmem:[#allocation2 + $0xe0] sm:$0xff] %vm3262, %v3258
      %3292 = vst.msk [vmem:[#allocation2 + $0xe8] sm:$0xff] %vm3262, %v3259
      %3293 = vst.msk [vmem:[#allocation2 + $0xf0] sm:$0xff] %vm3262, %v3260
      %3294 = vst.msk [vmem:[#allocation2 + $0xf8] sm:$0xff] %vm3262, %v3261
      // Predicated region
      $region41: #{_lambda_.5} parent=35 // pred_check
        %p3295 = pneg %p238
      $region42: #{_lambda_.5} parent=35 // pred_check_branch
        %3297 = sbr.rel (%p3295) target = $region44
      $region43: #{_lambda_.5} parent=35 // pred_region
        %v3298 = vld [vmem:[#allocation2] sm:$0xff]
        %v3299 = vld [vmem:[#allocation2 + $0x8] sm:$0xff]
        %v3300 = vld [vmem:[#allocation2 + $0x10] sm:$0xff]
        %v3301 = vld [vmem:[#allocation2 + $0x18] sm:$0xff]
        %v3302 = vld [vmem:[#allocation2 + $0x20] sm:$0xff]
        %v3303 = vld [vmem:[#allocation2 + $0x28] sm:$0xff]
        %v3304 = vld [vmem:[#allocation2 + $0x30] sm:$0xff]
        %v3305 = vld [vmem:[#allocation2 + $0x38] sm:$0xff]
        %v3306 = vld [vmem:[#allocation2 + $0x40] sm:$0xff]
        %v3307 = vld [vmem:[#allocation2 + $0x48] sm:$0xff]
        %v3308 = vld [vmem:[#allocation2 + $0x50] sm:$0xff]
        %v3309 = vld [vmem:[#allocation2 + $0x58] sm:$0xff]
        %v3310 = vld [vmem:[#allocation2 + $0x60] sm:$0xff]
        %v3311 = vld [vmem:[#allocation2 + $0x68] sm:$0xff]
        %v3312 = vld [vmem:[#allocation2 + $0x70] sm:$0xff]
        %v3313 = vld [vmem:[#allocation2 + $0x78] sm:$0xff]
        %v3314 = vld [vmem:[#allocation2 + $0x80] sm:$0xff]
        %v3315 = vld [vmem:[#allocation2 + $0x88] sm:$0xff]
        %v3316 = vld [vmem:[#allocation2 + $0x90] sm:$0xff]
        %v3317 = vld [vmem:[#allocation2 + $0x98] sm:$0xff]
        %v3318 = vld [vmem:[#allocation2 + $0xa0] sm:$0xff]
        %v3319 = vld [vmem:[#allocation2 + $0xa8] sm:$0xff]
        %v3320 = vld [vmem:[#allocation2 + $0xb0] sm:$0xff]
        %v3321 = vld [vmem:[#allocation2 + $0xb8] sm:$0xff]
        %v3322 = vld [vmem:[#allocation2 + $0xc0] sm:$0xff]
        %v3323 = vld [vmem:[#allocation2 + $0xc8] sm:$0xff]
        %v3324 = vld [vmem:[#allocation2 + $0xd0] sm:$0xff]
        %v3325 = vld [vmem:[#allocation2 + $0xd8] sm:$0xff]
        %v3326 = vld [vmem:[#allocation2 + $0xe0] sm:$0xff]
        %v3327 = vld [vmem:[#allocation2 + $0xe8] sm:$0xff]
        %v3328 = vld [vmem:[#allocation2 + $0xf0] sm:$0xff]
        %v3329 = vld [vmem:[#allocation2 + $0xf8] sm:$0xff]
        %v3330 = vld [vmem:[%s2] sm:$0x1]
        %v3332 = vlaneseq
        %v3333 = vshrl.u32 %v3332, 7
        %v3334 = vsub.s32 0, %v3333
        %v3335 = vrot.slane %v3330, %v3334
        %v3337 = vmul.f32 %v3298, %v3335
        %v3338 = vmul.f32 %v3299, %v3335
        %v3339 = vmul.f32 %v3300, %v3335
        %v3340 = vmul.f32 %v3301, %v3335
        %v3341 = vmul.f32 %v3302, %v3335
        %v3342 = vmul.f32 %v3303, %v3335
        %v3343 = vmul.f32 %v3304, %v3335
        %v3344 = vmul.f32 %v3305, %v3335
        %v3345 = vmul.f32 %v3306, %v3335
        %v3346 = vmul.f32 %v3307, %v3335
        %v3347 = vmul.f32 %v3308, %v3335
        %v3348 = vmul.f32 %v3309, %v3335
        %v3349 = vmul.f32 %v3310, %v3335
        %v3350 = vmul.f32 %v3311, %v3335
        %v3351 = vmul.f32 %v3312, %v3335
        %v3352 = vmul.f32 %v3313, %v3335
        %v3353 = vmul.f32 %v3314, %v3335
        %v3354 = vmul.f32 %v3315, %v3335
        %v3355 = vmul.f32 %v3316, %v3335
        %v3356 = vmul.f32 %v3317, %v3335
        %v3357 = vmul.f32 %v3318, %v3335
        %v3358 = vmul.f32 %v3319, %v3335
        %v3359 = vmul.f32 %v3320, %v3335
        %v3360 = vmul.f32 %v3321, %v3335
        %v3361 = vmul.f32 %v3322, %v3335
        %v3362 = vmul.f32 %v3323, %v3335
        %v3363 = vmul.f32 %v3324, %v3335
        %v3364 = vmul.f32 %v3325, %v3335
        %v3365 = vmul.f32 %v3326, %v3335
        %v3366 = vmul.f32 %v3327, %v3335
        %v3367 = vmul.f32 %v3328, %v3335
        %v3368 = vmul.f32 %v3329, %v3335
        %v3369 = vld [vmem:[%s3] sm:$0x1]
        %v3371 = vlaneseq
        %v3372 = vshrl.u32 %v3371, 7
        %v3373 = vsub.s32 0, %v3372
        %v3374 = vrot.slane %v3369, %v3373
        %v3376 = vadd.f32 %v3337, %v3374
        %v3377 = vadd.f32 %v3338, %v3374
        %v3378 = vadd.f32 %v3339, %v3374
        %v3379 = vadd.f32 %v3340, %v3374
        %v3380 = vadd.f32 %v3341, %v3374
        %v3381 = vadd.f32 %v3342, %v3374
        %v3382 = vadd.f32 %v3343, %v3374
        %v3383 = vadd.f32 %v3344, %v3374
        %v3384 = vadd.f32 %v3345, %v3374
        %v3385 = vadd.f32 %v3346, %v3374
        %v3386 = vadd.f32 %v3347, %v3374
        %v3387 = vadd.f32 %v3348, %v3374
        %v3388 = vadd.f32 %v3349, %v3374
        %v3389 = vadd.f32 %v3350, %v3374
        %v3390 = vadd.f32 %v3351, %v3374
        %v3391 = vadd.f32 %v3352, %v3374
        %v3392 = vadd.f32 %v3353, %v3374
        %v3393 = vadd.f32 %v3354, %v3374
        %v3394 = vadd.f32 %v3355, %v3374
        %v3395 = vadd.f32 %v3356, %v3374
        %v3396 = vadd.f32 %v3357, %v3374
        %v3397 = vadd.f32 %v3358, %v3374
        %v3398 = vadd.f32 %v3359, %v3374
        %v3399 = vadd.f32 %v3360, %v3374
        %v3400 = vadd.f32 %v3361, %v3374
        %v3401 = vadd.f32 %v3362, %v3374
        %v3402 = vadd.f32 %v3363, %v3374
        %v3403 = vadd.f32 %v3364, %v3374
        %v3404 = vadd.f32 %v3365, %v3374
        %v3405 = vadd.f32 %v3366, %v3374
        %v3406 = vadd.f32 %v3367, %v3374
        %v3407 = vadd.f32 %v3368, %v3374
        %v3408 = vmax.f32 %v3376, 0.0
        %v3409 = vmax.f32 %v3377, 0.0
        %v3410 = vmax.f32 %v3378, 0.0
        %v3411 = vmax.f32 %v3379, 0.0
        %v3412 = vmax.f32 %v3380, 0.0
        %v3413 = vmax.f32 %v3381, 0.0
        %v3414 = vmax.f32 %v3382, 0.0
        %v3415 = vmax.f32 %v3383, 0.0
        %v3416 = vmax.f32 %v3384, 0.0
        %v3417 = vmax.f32 %v3385, 0.0
        %v3418 = vmax.f32 %v3386, 0.0
        %v3419 = vmax.f32 %v3387, 0.0
        %v3420 = vmax.f32 %v3388, 0.0
        %v3421 = vmax.f32 %v3389, 0.0
        %v3422 = vmax.f32 %v3390, 0.0
        %v3423 = vmax.f32 %v3391, 0.0
        %v3424 = vmax.f32 %v3392, 0.0
        %v3425 = vmax.f32 %v3393, 0.0
        %v3426 = vmax.f32 %v3394, 0.0
        %v3427 = vmax.f32 %v3395, 0.0
        %v3428 = vmax.f32 %v3396, 0.0
        %v3429 = vmax.f32 %v3397, 0.0
        %v3430 = vmax.f32 %v3398, 0.0
        %v3431 = vmax.f32 %v3399, 0.0
        %v3432 = vmax.f32 %v3400, 0.0
        %v3433 = vmax.f32 %v3401, 0.0
        %v3434 = vmax.f32 %v3402, 0.0
        %v3435 = vmax.f32 %v3403, 0.0
        %v3436 = vmax.f32 %v3404, 0.0
        %v3437 = vmax.f32 %v3405, 0.0
        %v3438 = vmax.f32 %v3406, 0.0
        %v3439 = vmax.f32 %v3407, 0.0
        %3440 = vst.msk [vmem:[%s237] sm:$0xff] %vm3262, %v3408
        %3441 = vst.msk [vmem:[%s237 + $0x8] sm:$0xff] %vm3262, %v3409
        %3442 = vst.msk [vmem:[%s237 + $0x10] sm:$0xff] %vm3262, %v3410
        %3443 = vst.msk [vmem:[%s237 + $0x18] sm:$0xff] %vm3262, %v3411
        %3444 = vst.msk [vmem:[%s237 + $0x20] sm:$0xff] %vm3262, %v3412
        %3445 = vst.msk [vmem:[%s237 + $0x28] sm:$0xff] %vm3262, %v3413
        %3446 = vst.msk [vmem:[%s237 + $0x30] sm:$0xff] %vm3262, %v3414
        %3447 = vst.msk [vmem:[%s237 + $0x38] sm:$0xff] %vm3262, %v3415
        %3448 = vst.msk [vmem:[%s237 + $0x40] sm:$0xff] %vm3262, %v3416
        %3449 = vst.msk [vmem:[%s237 + $0x48] sm:$0xff] %vm3262, %v3417
        %3450 = vst.msk [vmem:[%s237 + $0x50] sm:$0xff] %vm3262, %v3418
        %3451 = vst.msk [vmem:[%s237 + $0x58] sm:$0xff] %vm3262, %v3419
        %3452 = vst.msk [vmem:[%s237 + $0x60] sm:$0xff] %vm3262, %v3420
        %3453 = vst.msk [vmem:[%s237 + $0x68] sm:$0xff] %vm3262, %v3421
        %3454 = vst.msk [vmem:[%s237 + $0x70] sm:$0xff] %vm3262, %v3422
        %3455 = vst.msk [vmem:[%s237 + $0x78] sm:$0xff] %vm3262, %v3423
        %3456 = vst.msk [vmem:[%s237 + $0x80] sm:$0xff] %vm3262, %v3424
        %3457 = vst.msk [vmem:[%s237 + $0x88] sm:$0xff] %vm3262, %v3425
        %3458 = vst.msk [vmem:[%s237 + $0x90] sm:$0xff] %vm3262, %v3426
        %3459 = vst.msk [vmem:[%s237 + $0x98] sm:$0xff] %vm3262, %v3427
        %3460 = vst.msk [vmem:[%s237 + $0xa0] sm:$0xff] %vm3262, %v3428
        %3461 = vst.msk [vmem:[%s237 + $0xa8] sm:$0xff] %vm3262, %v3429
        %3462 = vst.msk [vmem:[%s237 + $0xb0] sm:$0xff] %vm3262, %v3430
        %3463 = vst.msk [vmem:[%s237 + $0xb8] sm:$0xff] %vm3262, %v3431
        %3464 = vst.msk [vmem:[%s237 + $0xc0] sm:$0xff] %vm3262, %v3432
        %3465 = vst.msk [vmem:[%s237 + $0xc8] sm:$0xff] %vm3262, %v3433
        %3466 = vst.msk [vmem:[%s237 + $0xd0] sm:$0xff] %vm3262, %v3434
        %3467 = vst.msk [vmem:[%s237 + $0xd8] sm:$0xff] %vm3262, %v3435
        %3468 = vst.msk [vmem:[%s237 + $0xe0] sm:$0xff] %vm3262, %v3436
        %3469 = vst.msk [vmem:[%s237 + $0xe8] sm:$0xff] %vm3262, %v3437
        %3470 = vst.msk [vmem:[%s237 + $0xf0] sm:$0xff] %vm3262, %v3438
        %3471 = vst.msk [vmem:[%s237 + $0xf8] sm:$0xff] %vm3262, %v3439
      $region44: #{_lambda_.5} parent=35 // pred_fallthru
        _
      %p3472 = scmp.lt.s32.totalorder %s19, 1
      %s3473 = scalar_select %p3472, %s19, 1
      %s3474 = smul.addr %s3473, 32
      %s3475 = smul.addr %s3474, 8
      %s3476 = scalar_lea.vmem %s4, %s3475
      // Predicated region
      $region45: #{_lambda_.5} parent=35 // pred_check
        %p3477 = pneg %p141
      $region46: #{_lambda_.5} parent=35 // pred_check_branch
        %3479 = sbr.rel (%p3477) target = $region48
      $region47: #{_lambda_.5} parent=35 // pred_region
        _
      $region48: #{_lambda_.5} parent=35 // pred_fallthru
        _
    $region36: #{_lambda_.5} parent=5 // pred_fallthru
      _
    %p3480 = scmp.le.s32.totalorder 2, %s10
    // Predicated region
    $region49: #{_lambda_.5} parent=5 // pred_check
      %p3481 = pneg %p3480
    $region50: #{_lambda_.5} parent=5 // pred_check_branch
      %3483 = sbr.rel (%p3481) target = $region52
    $region51: #{_lambda_.5} parent=5 // pred_region
      %s3484 = ssub.s32 %s10, 2
      // Predicated region
      $region53: #{_lambda_.5} parent=51 // pred_check
        %p3485 = pneg %p147
      $region54: #{_lambda_.5} parent=51 // pred_check_branch
        %3487 = sbr.rel (%p3485) target = $region56
      $region55: #{_lambda_.5} parent=51 // pred_region
        %p3488 = scmp.lt.s32.totalorder %s21, 1
        %s3489 = scalar_select %p3488, %s21, 1
        %s3490 = smul.addr %s3489, 32
        %s3491 = smul.addr %s3490, 8
        %s3492 = scalar_lea.vmem %s4, %s3491
      $region56: #{_lambda_.5} parent=51 // pred_fallthru
        _
    $region52: #{_lambda_.5} parent=5 // pred_fallthru
      _
  $region6: #{_lambda_.5} parent=0 // loop_footer
    %s14 = sadd.s32 1, %s10
  $region7: #{_lambda_.5} parent=0 // loop_footer_branch
    %9 = sbr.rel target = $region3
  $region8: #{_lambda_.5} parent=0 // loop_exit
    _

// kernel: _lambda_.6
$region0: #{_lambda_.6}
  #allocation0 [shape = 'u32[]', space=smem, size = 0x4, offset = 0x4, fixed_abs, tag = 'smem constant byte address 0x4 - core index']
  #allocation1 [shape = 'u32[144,128]{1,0:T(1,128)}', space=vmem, size = 0x12000, scoped, tag = 'internal scratch']
  #allocation2 [shape = 'f32[256,8]{1,0:T(8,128)}', space=vmem, size = 0x20000, scoped, tag = 'scratch operand']
  %s0 = inlined_call_operand.vmem [shape: f32[2,22,22,4], index: 0, kind: input, shape index: {}]
  %s1 = inlined_call_operand.vmem [shape: f32[9,4,8], index: 1, kind: input, shape index: {}]
  %s2 = inlined_call_operand.vmem [shape: f32[1,8], index: 2, kind: input, shape index: {}]
  %s3 = inlined_call_operand.vmem [shape: f32[1,8], index: 3, kind: input, shape index: {}]
  %s4 = inlined_call_operand.vmem [shape: f32[2,16,16,8], index: 4, kind: output, shape index: {}]
  %s5 = sld [smem:[#allocation0]]
  $region57: #{_lambda_.6} parent=0
    _
  %s7 = ssub.s32 1, %s5
  %s8 = scalar_select 0, %s7, %s5
  loop: start=0, step=1, limit=4
  $region2: #{_lambda_.6} parent=0 // loop_pre_header
    _
  $region3: #{_lambda_.6} parent=0 // loop_header
    %s10 = sphi 0, %s14
    %p11 = scmp.ge.s32.totalorder %s10, 4
    %s17 = sphi 0, %s29
    %s18 = sphi 0, %s25
    %s19 = sphi 0, %s17
    %s20 = sphi 0, %s18
    %s21 = sphi 0, %s19
    %s22 = sphi 0, %s20
    %s34 = sphi 0, %s36
    %s37 = sphi 0, %s34
    %s38 = sphi 0, %s37
    %s54 = sphi 0, %s38
    %s60 = sphi 0, %s62
    %s63 = sphi 0, %s60
    %s64 = sphi 0, %s63
    %s80 = sphi 0, %s64
    %s84 = sphi 0, %s84
    %s86 = sphi 0, %s84
    %s87 = sphi 0, %s86
    %s101 = sphi 0, %s87
    %s105 = sphi 0, %s105
    %s107 = sphi 0, %s105
    %s108 = sphi 0, %s107
    %s122 = sphi 0, %s108
    %s128 = sphi 0, %s130
    %s131 = sphi 0, %s128
    %s132 = sphi 0, %s131
    %s148 = sphi 0, %s132
  $region4: #{_lambda_.6} parent=0 // loop_header_branch
    %13 = sbr.rel (%p11) target = $region8
  $region5: #{_lambda_.6} parent=0 // loop_body
    %s15 = ssub.s32 %s10, 1
    %s16 = ssub.s32 %s10, 2
    %s23 = sadd.s32 1, %s18
    %p24 = scmp.ge.s32.totalorder %s23, 1
    %s25 = scalar_select %p24, 0, %s23
    %s26 = sadd.s32 1, %s17
    %s27 = scalar_select %p24, %s26, %s17
    %p28 = scmp.ge.s32.totalorder %s27, 2
    %s29 = scalar_select %p28, 0, %s27
    %s30 = ssub.s32 %s17, %s29
    %s31 = ssub.s32 %s18, %s25
    %s32 = sor.u32 %s30, %s31
    %p33 = scmp.eq.s32.totalorder %s32, 0
    %s35 = sadd.s32 %s34, 1
    %s36 = scalar_select %p33, %s34, %s35
    %p39 = pneg %p33
    %p40 = scmp.eq.s32.totalorder %s10, 1
    %p41 = por %p39, %p40
    %p42 = scmp.ne.s32.totalorder %s34, %s37
    %p43 = scmp.eq.s32.totalorder %s10, 0
    %p44 = por %p42, %p43
    %p45 = scmp.ne.s32.totalorder %s34, %s37
    %p46 = scmp.eq.s32.totalorder %s15, 1
    %p47 = por %p45, %p46
    %p48 = scmp.ne.s32.totalorder %s37, %s38
    %p49 = scmp.eq.s32.totalorder %s15, 0
    %p50 = por %p48, %p49
    %p51 = scmp.ne.s32.totalorder %s37, %s38
    %p52 = scmp.eq.s32.totalorder %s16, 1
    %p53 = por %p51, %p52
    %p55 = scmp.ne.s32.totalorder %s38, %s54
    %p56 = scmp.eq.s32.totalorder %s16, 0
    %p57 = por %p55, %p56
    %s58 = ssub.s32 %s18, %s25
    %p59 = scmp.eq.s32.totalorder %s58, 0
    %s61 = sadd.s32 %s60, 1
    %s62 = scalar_select %p59, %s60, %s61
    %p65 = pneg %p59
    %p66 = scmp.eq.s32.totalorder %s10, 1
    %p67 = por %p65, %p66
    %p68 = scmp.ne.s32.totalorder %s60, %s63
    %p69 = scmp.eq.s32.totalorder %s10, 0
    %p70 = por %p68, %p69
    %p71 = scmp.ne.s32.totalorder %s60, %s63
    %p72 = scmp.eq.s32.totalorder %s15, 1
    %p73 = por %p71, %p72
    %p74 = scmp.ne.s32.totalorder %s63, %s64
    %p75 = scmp.eq.s32.totalorder %s15, 0
    %p76 = por %p74, %p75
    %p77 = scmp.ne.s32.totalorder %s63, %s64
    %p78 = scmp.eq.s32.totalorder %s16, 1
    %p79 = por %p77, %p78
    %p81 = scmp.ne.s32.totalorder %s64, %s80
    %p82 = scmp.eq.s32.totalorder %s16, 0
    %p83 = por %p81, %p82
    %s85 = sadd.s32 %s84, 1
    %p88 = scmp.eq.s32.totalorder %s10, 1
    %p89 = scmp.ne.s32.totalorder %s84, %s86
    %p90 = scmp.eq.s32.totalorder %s10, 0
    %p91 = por %p89, %p90
    %p92 = scmp.ne.s32.totalorder %s84, %s86
    %p93 = scmp.eq.s32.totalorder %s15, 1
    %p94 = por %p92, %p93
    %p95 = scmp.ne.s32.totalorder %s86, %s87
    %p96 = scmp.eq.s32.totalorder %s15, 0
    %p97 = por %p95, %p96
    %p98 = scmp.ne.s32.totalorder %s86, %s87
    %p99 = scmp.eq.s32.totalorder %s16, 1
    %p100 = por %p98, %p99
    %p102 = scmp.ne.s32.totalorder %s87, %s101
    %p103 = scmp.eq.s32.totalorder %s16, 0
    %p104 = por %p102, %p103
    %s106 = sadd.s32 %s105, 1
    %p109 = scmp.eq.s32.totalorder %s10, 1
    %p110 = scmp.ne.s32.totalorder %s105, %s107
    %p111 = scmp.eq.s32.totalorder %s10, 0
    %p112 = por %p110, %p111
    %p113 = scmp.ne.s32.totalorder %s105, %s107
    %p114 = scmp.eq.s32.totalorder %s15, 1
    %p115 = por %p113, %p114
    %p116 = scmp.ne.s32.totalorder %s107, %s108
    %p117 = scmp.eq.s32.totalorder %s15, 0
    %p118 = por %p116, %p117
    %p119 = scmp.ne.s32.totalorder %s107, %s108
    %p120 = scmp.eq.s32.totalorder %s16, 1
    %p121 = por %p119, %p120
    %p123 = scmp.ne.s32.totalorder %s108, %s122
    %p124 = scmp.eq.s32.totalorder %s16, 0
    %p125 = por %p123, %p124
    %s126 = ssub.s32 %s17, %s29
    %p127 = scmp.eq.s32.totalorder %s126, 0
    %s129 = sadd.s32 %s128, 1
    %s130 = scalar_select %p127, %s128, %s129
    %p133 = pneg %p127
    %p134 = scmp.eq.s32.totalorder %s10, 1
    %p135 = por %p133, %p134
    %p136 = scmp.ne.s32.totalorder %s128, %s131
    %p137 = scmp.eq.s32.totalorder %s10, 0
    %p138 = por %p136, %p137
    %p139 = scmp.ne.s32.totalorder %s128, %s131
    %p140 = scmp.eq.s32.totalorder %s15, 1
    %p141 = por %p139, %p140
    %p142 = scmp.ne.s32.totalorder %s131, %s132
    %p143 = scmp.eq.s32.totalorder %s15, 0
    %p144 = por %p142, %p143
    %p145 = scmp.ne.s32.totalorder %s131, %s132
    %p146 = scmp.eq.s32.totalorder %s16, 1
    %p147 = por %p145, %p146
    %p149 = scmp.ne.s32.totalorder %s132, %s148
    %p150 = scmp.eq.s32.totalorder %s16, 0
    %p151 = por %p149, %p150
    %p152 = scmp.le.s32.totalorder 1, %s10
    %p153 = scmp.lt.s32.totalorder %s10, 3
    %p154 = pnand %p152, %p153
    %p155 = pneg %p154
    // Predicated region
    $region9: #{_lambda_.6} parent=5 // pred_check
      _
    $region10: #{_lambda_.6} parent=5 // pred_check_branch
      %157 = sbr.rel (%p154) target = $region12
    $region11: #{_lambda_.6} parent=5 // pred_region
      %s158 = ssub.s32 %s10, 1
      // Predicated region
      $region13: #{_lambda_.6} parent=11 // pred_check
        %p159 = pneg %p76
      $region14: #{_lambda_.6} parent=11 // pred_check_branch
        %161 = sbr.rel (%p159) target = $region16
      $region15: #{_lambda_.6} parent=11 // pred_region
        %p162 = scmp.lt.s32.totalorder %s20, 0
        %s163 = scalar_select %p162, %s20, 0
        %s164 = smul.addr %s163, 4
        %s165 = scalar_lea.vmem %s1, %s164
      $region16: #{_lambda_.6} parent=11 // pred_fallthru
        _
      // Predicated region
      $region17: #{_lambda_.6} parent=11 // pred_check
        %p166 = pneg %p97
      $region18: #{_lambda_.6} parent=11 // pred_check_branch
        %168 = sbr.rel (%p166) target = $region20
      $region19: #{_lambda_.6} parent=11 // pred_region
        _
      $region20: #{_lambda_.6} parent=11 // pred_fallthru
        _
      // Predicated region
      $region21: #{_lambda_.6} parent=11 // pred_check
        %p169 = pneg %p118
      $region22: #{_lambda_.6} parent=11 // pred_check_branch
        %171 = sbr.rel (%p169) target = $region24
      $region23: #{_lambda_.6} parent=11 // pred_region
        _
      $region24: #{_lambda_.6} parent=11 // pred_fallthru
        _
    $region12: #{_lambda_.6} parent=5 // pred_fallthru
      _
    %p172 = scmp.lt.s32.totalorder %s10, 2
    // Predicated region
    $region25: #{_lambda_.6} parent=5 // pred_check
      %p173 = pneg %p172
    $region26: #{_lambda_.6} parent=5 // pred_check_branch
      %175 = sbr.rel (%p173) target = $region28
    $region27: #{_lambda_.6} parent=5 // pred_region
      // Predicated region
      $region29: #{_lambda_.6} parent=27 // pred_check
        %p176 = pneg %p44
      $region30: #{_lambda_.6} parent=27 // pred_check_branch
        %178 = sbr.rel (%p176) target = $region32
      $region31: #{_lambda_.6} parent=27 // pred_region
        %p179 = scmp.lt.s32.totalorder %s17, 1
        %s180 = scalar_select %p179, %s17, 1
        %p181 = scmp.lt.s32.totalorder %s18, 0
        %s182 = scalar_select %p181, %s18, 0
        %s183 = smul.addr %s180, 66
        %s184 = sadd.s32 %s182, %s183
        %s185 = smul.addr %s184, 8
        %s186 = scalar_lea.vmem %s0, %s185
      $region32: #{_lambda_.6} parent=27 // pred_fallthru
        _
    $region28: #{_lambda_.6} parent=5 // pred_fallthru
      _
    %p187 = scmp.le.s32.totalorder 1, %s10
    %p188 = scmp.lt.s32.totalorder %s10, 3
    %p189 = pnand %p187, %p188
    %p190 = pneg %p189
    // Predicated region
    $region33: #{_lambda_.6} parent=5 // pred_check
      _
    $region34: #{_lambda_.6} parent=5 // pred_check_branch
      %192 = sbr.rel (%p189) target = $region36
    $region35: #{_lambda_.6} parent=5 // pred_region
      %s193 = ssub.s32 %s10, 1
      %p194 = scmp.lt.s32.totalorder %s19, 1
      %s195 = scalar_select %p194, %s19, 1
      %p196 = scmp.lt.s32.totalorder %s20, 0
      %s197 = scalar_select %p196, %s20, 0
      %s198 = smul.addr %s195, 66
      %s199 = sadd.s32 %s197, %s198
      %s200 = smul.addr %s199, 8
      %s201 = scalar_lea.vmem %s0, %s200
      %p202 = pneg %p50
      %p203 = pneg %p47
      %p204 = scmp.lt.s32.totalorder %s20, 0
      %s205 = scalar_select %p204, %s20, 0
      %s206 = smul.addr %s205, 4
      %s207 = scalar_lea.vmem %s1, %s206
      %p208 = pneg %p76
      %p209 = pneg %p73
      %p210 = pneg %p97
      %p211 = pneg %p94
      %p212 = pneg %p118
      %p213 = pneg %p115
      %p214 = pneg %p144
      %p215 = pneg %p141
      %p216 = scmp.lt.s32.totalorder %s19, 1
      %s217 = scalar_select %p216, %s19, 1
      %s218 = smul.addr %s217, 32
      %s219 = smul.addr %s218, 8
      %s220 = scalar_lea.vmem %s4, %s219
      %p221 = scmp.lt.s32.totalorder %s19, 1
      %s222 = scalar_select %p221, %s19, 1
      %p223 = scmp.lt.s32.totalorder %s20, 0
      %s224 = scalar_select %p223, %s20, 0
      %s225 = smul.addr %s222, 66
      %s226 = sadd.s32 %s224, %s225
      %s227 = smul.addr %s226, 8
      %s228 = scalar_lea.vmem %s0, %s227
      %p229 = scmp.lt.s32.totalorder %s20, 0
      %s230 = scalar_select %p229, %s20, 0
      %s231 = smul.addr %s230, 4
      %s232 = scalar_lea.vmem %s1, %s231
      %p233 = scmp.lt.s32.totalorder %s19, 1
      %s234 = scalar_select %p233, %s19, 1
      %s235 = smul.addr %s234, 32
      %s236 = smul.addr %s235, 8
      %s237 = scalar_lea.vmem %s4, %s236
      %p238 = scmp.eq.s32.totalorder %s20, 0
      // Predicated region
      $region37: #{_lambda_.6} parent=35 // pred_check
        %p239 = pneg %p238
      $region38: #{_lambda_.6} parent=35 // pred_check_branch
        %241 = sbr.rel (%p239) target = $region40
      $region39: #{_lambda_.6} parent=35 // pred_region
        %vm242 = vcmask 64512
        %243 = vst.msk [vmem:[#allocation2] sm:$0xff] %vm242, 0.0
        %244 = vst.msk [vmem:[#allocation2 + $0x8] sm:$0xff] %vm242, 0.0
        %245 = vst.msk [vmem:[#allocation2 + $0x10] sm:$0xff] %vm242, 0.0
        %246 = vst.msk [vmem:[#allocation2 + $0x18] sm:$0xff] %vm242, 0.0
        %247 = vst.msk [vmem:[#allocation2 + $0x20] sm:$0xff] %vm242, 0.0
        %248 = vst.msk [vmem:[#allocation2 + $0x28] sm:$0xff] %vm242, 0.0
        %249 = vst.msk [vmem:[#allocation2 + $0x30] sm:$0xff] %vm242, 0.0
        %250 = vst.msk [vmem:[#allocation2 + $0x38] sm:$0xff] %vm242, 0.0
        %251 = vst.msk [vmem:[#allocation2 + $0x40] sm:$0xff] %vm242, 0.0
        %252 = vst.msk [vmem:[#allocation2 + $0x48] sm:$0xff] %vm242, 0.0
        %253 = vst.msk [vmem:[#allocation2 + $0x50] sm:$0xff] %vm242, 0.0
        %254 = vst.msk [vmem:[#allocation2 + $0x58] sm:$0xff] %vm242, 0.0
        %255 = vst.msk [vmem:[#allocation2 + $0x60] sm:$0xff] %vm242, 0.0
        %256 = vst.msk [vmem:[#allocation2 + $0x68] sm:$0xff] %vm242, 0.0
        %257 = vst.msk [vmem:[#allocation2 + $0x70] sm:$0xff] %vm242, 0.0
        %258 = vst.msk [vmem:[#allocation2 + $0x78] sm:$0xff] %vm242, 0.0
        %259 = vst.msk [vmem:[#allocation2 + $0x80] sm:$0xff] %vm242, 0.0
        %260 = vst.msk [vmem:[#allocation2 + $0x88] sm:$0xff] %vm242, 0.0
        %261 = vst.msk [vmem:[#allocation2 + $0x90] sm:$0xff] %vm242, 0.0
        %262 = vst.msk [vmem:[#allocation2 + $0x98] sm:$0xff] %vm242, 0.0
        %263 = vst.msk [vmem:[#allocation2 + $0xa0] sm:$0xff] %vm242, 0.0
        %264 = vst.msk [vmem:[#allocation2 + $0xa8] sm:$0xff] %vm242, 0.0
        %265 = vst.msk [vmem:[#allocation2 + $0xb0] sm:$0xff] %vm242, 0.0
        %266 = vst.msk [vmem:[#allocation2 + $0xb8] sm:$0xff] %vm242, 0.0
        %267 = vst.msk [vmem:[#allocation2 + $0xc0] sm:$0xff] %vm242, 0.0
        %268 = vst.msk [vmem:[#allocation2 + $0xc8] sm:$0xff] %vm242, 0.0
        %269 = vst.msk [vmem:[#allocation2 + $0xd0] sm:$0xff] %vm242, 0.0
        %270 = vst.msk [vmem:[#allocation2 + $0xd8] sm:$0xff] %vm242, 0.0
        %271 = vst.msk [vmem:[#allocation2 + $0xe0] sm:$0xff] %vm242, 0.0
        %272 = vst.msk [vmem:[#allocation2 + $0xe8] sm:$0xff] %vm242, 0.0
        %273 = vst.msk [vmem:[#allocation2 + $0xf0] sm:$0xff] %vm242, 0.0
        %274 = vst.msk [vmem:[#allocation2 + $0xf8] sm:$0xff] %vm242, 0.0
      $region40: #{_lambda_.6} parent=35 // pred_fallthru
        _
      %v275 = vld [vmem:[%s228] sm:$0xff]
      %v276 = vld [vmem:[%s228 + $0x8] sm:$0xff]
      %v277 = vld [vmem:[%s228 + $0x10] sm:$0x3f]
      %v278 = vld [vmem:[%s228 + $0x18] sm:$0xff]
      %v279 = vld [vmem:[%s228 + $0x20] sm:$0xff]
      %v280 = vld [vmem:[%s228 + $0x28] sm:$0x3f]
      %v281 = vld [vmem:[%s228 + $0x30] sm:$0xff]
      %v282 = vld [vmem:[%s228 + $0x38] sm:$0xff]
      %v283 = vld [vmem:[%s228 + $0x40] sm:$0x3f]
      %v284 = vld [vmem:[%s228 + $0x48] sm:$0xff]
      %v285 = vld [vmem:[%s228 + $0x50] sm:$0xff]
      %v286 = vld [vmem:[%s228 + $0x58] sm:$0x3f]
      %v287 = vld [vmem:[%s228 + $0x60] sm:$0xff]
      %v288 = vld [vmem:[%s228 + $0x68] sm:$0xff]
      %v289 = vld [vmem:[%s228 + $0x70] sm:$0x3f]
      %v290 = vld [vmem:[%s228 + $0x78] sm:$0xff]
      %v291 = vld [vmem:[%s228 + $0x80] sm:$0xff]
      %v292 = vld [vmem:[%s228 + $0x88] sm:$0x3f]
      %v293 = vld [vmem:[%s228 + $0x90] sm:$0xff]
      %v294 = vld [vmem:[%s228 + $0x98] sm:$0xff]
      %v295 = vld [vmem:[%s228 + $0xa0] sm:$0x3f]
      %v296 = vld [vmem:[%s228 + $0xa8] sm:$0xff]
      %v297 = vld [vmem:[%s228 + $0xb0] sm:$0xff]
      %v298 = vld [vmem:[%s228 + $0xb8] sm:$0x3f]
      %v299 = vld [vmem:[%s228 + $0xc0] sm:$0xff]
      %v300 = vld [vmem:[%s228 + $0xc8] sm:$0xff]
      %v301 = vld [vmem:[%s228 + $0xd0] sm:$0x3f]
      %v302 = vld [vmem:[%s228 + $0xd8] sm:$0xff]
      %v303 = vld [vmem:[%s228 + $0xe0] sm:$0xff]
      %v304 = vld [vmem:[%s228 + $0xe8] sm:$0x3f]
      %v305 = vld [vmem:[%s228 + $0xf0] sm:$0xff]
      %v306 = vld [vmem:[%s228 + $0xf8] sm:$0xff]
      %v307 = vld [vmem:[%s228 + $0x100] sm:$0x3f]
      %v308 = vld [vmem:[%s228 + $0x108] sm:$0xff]
      %v309 = vld [vmem:[%s228 + $0x110] sm:$0xff]
      %v310 = vld [vmem:[%s228 + $0x118] sm:$0x3f]
      %v311 = vld [vmem:[%s228 + $0x120] sm:$0xff]
      %v312 = vld [vmem:[%s228 + $0x128] sm:$0xff]
      %v313 = vld [vmem:[%s228 + $0x130] sm:$0x3f]
      %v314 = vld [vmem:[%s228 + $0x138] sm:$0xff]
      %v315 = vld [vmem:[%s228 + $0x140] sm:$0xff]
      %v316 = vld [vmem:[%s228 + $0x148] sm:$0x3f]
      %v317 = vld [vmem:[%s228 + $0x150] sm:$0xff]
      %v318 = vld [vmem:[%s228 + $0x158] sm:$0xff]
      %v319 = vld [vmem:[%s228 + $0x160] sm:$0x3f]
      %v320 = vld [vmem:[%s228 + $0x168] sm:$0xff]
      %v321 = vld [vmem:[%s228 + $0x170] sm:$0xff]
      %v322 = vld [vmem:[%s228 + $0x178] sm:$0x3f]
      %v323 = vld [vmem:[%s228 + $0x180] sm:$0xff]
      %v324 = vld [vmem:[%s228 + $0x188] sm:$0xff]
      %v325 = vld [vmem:[%s228 + $0x190] sm:$0x3f]
      %v326 = vld [vmem:[%s228 + $0x198] sm:$0xff]
      %v327 = vld [vmem:[%s228 + $0x1a0] sm:$0xff]
      %v328 = vld [vmem:[%s228 + $0x1a8] sm:$0x3f]
      %v329 = vld [vmem:[%s228 + $0x1b0] sm:$0xff]
      %v330 = vld [vmem:[%s228 + $0x1b8] sm:$0xff]
      %v331 = vld [vmem:[%s228 + $0x1c0] sm:$0x3f]
      %v332 = vld [vmem:[%s228 + $0x1c8] sm:$0xff]
      %v333 = vld [vmem:[%s228 + $0x1d0] sm:$0xff]
      %v334 = vld [vmem:[%s228 + $0x1d8] sm:$0x3f]
      %v335 = vld [vmem:[%s228 + $0x1e0] sm:$0xff]
      %v336 = vld [vmem:[%s228 + $0x1e8] sm:$0xff]
      %v337 = vld [vmem:[%s228 + $0x1f0] sm:$0x3f]
      %v338 = vld [vmem:[%s228 + $0x1f8] sm:$0xff]
      %v339 = vld [vmem:[%s228 + $0x200] sm:$0xff]
      %v340 = vld [vmem:[%s228 + $0x208] sm:$0x3f]
      %v341 = vld [vmem:[#allocation2] sm:$0xff]
      %v342 = vld [vmem:[#allocation2 + $0x8] sm:$0xff]
      %v343 = vld [vmem:[#allocation2 + $0x10] sm:$0xff]
      %v344 = vld [vmem:[#allocation2 + $0x18] sm:$0xff]
      %v345 = vld [vmem:[#allocation2 + $0x20] sm:$0xff]
      %v346 = vld [vmem:[#allocation2 + $0x28] sm:$0xff]
      %v347 = vld [vmem:[#allocation2 + $0x30] sm:$0xff]
      %v348 = vld [vmem:[#allocation2 + $0x38] sm:$0xff]
      %v349 = vld [vmem:[#allocation2 + $0x40] sm:$0xff]
      %v350 = vld [vmem:[#allocation2 + $0x48] sm:$0xff]
      %v351 = vld [vmem:[#allocation2 + $0x50] sm:$0xff]
      %v352 = vld [vmem:[#allocation2 + $0x58] sm:$0xff]
      %v353 = vld [vmem:[#allocation2 + $0x60] sm:$0xff]
      %v354 = vld [vmem:[#allocation2 + $0x68] sm:$0xff]
      %v355 = vld [vmem:[#allocation2 + $0x70] sm:$0xff]
      %v356 = vld [vmem:[#allocation2 + $0x78] sm:$0xff]
      %v357 = vld [vmem:[#allocation2 + $0x80] sm:$0xff]
      %v358 = vld [vmem:[#allocation2 + $0x88] sm:$0xff]
      %v359 = vld [vmem:[#allocation2 + $0x90] sm:$0xff]
      %v360 = vld [vmem:[#allocation2 + $0x98] sm:$0xff]
      %v361 = vld [vmem:[#allocation2 + $0xa0] sm:$0xff]
      %v362 = vld [vmem:[#allocation2 + $0xa8] sm:$0xff]
      %v363 = vld [vmem:[#allocation2 + $0xb0] sm:$0xff]
      %v364 = vld [vmem:[#allocation2 + $0xb8] sm:$0xff]
      %v365 = vld [vmem:[#allocation2 + $0xc0] sm:$0xff]
      %v366 = vld [vmem:[#allocation2 + $0xc8] sm:$0xff]
      %v367 = vld [vmem:[#allocation2 + $0xd0] sm:$0xff]
      %v368 = vld [vmem:[#allocation2 + $0xd8] sm:$0xff]
      %v369 = vld [vmem:[#allocation2 + $0xe0] sm:$0xff]
      %v370 = vld [vmem:[#allocation2 + $0xe8] sm:$0xff]
      %v371 = vld [vmem:[#allocation2 + $0xf0] sm:$0xff]
      %v372 = vld [vmem:[#allocation2 + $0xf8] sm:$0xff]
      %v373 = vld [vmem:[%s232] sm:$0xf]
      %vm374 = vcmask 31744
      %v376 = vsel %vm374, %v275, 0
      %v379 = vsel %vm374, %v276, 0
      %v382 = vsel %vm374, %v278, 0
      %v385 = vsel %vm374, %v279, 0
      %v388 = vsel %vm374, %v281, 0
      %v391 = vsel %vm374, %v282, 0
      %v394 = vsel %vm374, %v284, 0
      %v397 = vsel %vm374, %v285, 0
      %v400 = vsel %vm374, %v287, 0
      %v403 = vsel %vm374, %v288, 0
      %v406 = vsel %vm374, %v290, 0
      %v409 = vsel %vm374, %v291, 0
      %v412 = vsel %vm374, %v293, 0
      %v415 = vsel %vm374, %v294, 0
      %v418 = vsel %vm374, %v296, 0
      %v421 = vsel %vm374, %v297, 0
      %v424 = vsel %vm374, %v299, 0
      %v427 = vsel %vm374, %v300, 0
      %v430 = vsel %vm374, %v302, 0
      %v433 = vsel %vm374, %v303, 0
      %v436 = vsel %vm374, %v305, 0
      %v439 = vsel %vm374, %v306, 0
      %v442 = vsel %vm374, %v308, 0
      %v445 = vsel %vm374, %v309, 0
      %v448 = vsel %vm374, %v311, 0
      %v451 = vsel %vm374, %v312, 0
      %v454 = vsel %vm374, %v314, 0
      %v457 = vsel %vm374, %v315, 0
      %v460 = vsel %vm374, %v317, 0
      %v463 = vsel %vm374, %v318, 0
      %v466 = vsel %vm374, %v320, 0
      %v469 = vsel %vm374, %v321, 0
      %vm471 = vcmask 1043456
      %v473 = vsel %vm471, %v373, 0
      %475 = vmatprep.subr.mxu0 0.0
      %476 = vmatpush1.msra.mxu0 0.0
      %477 = vmatprep.subr.mxu0 0.0
      %478 = vmatpush1.msra.mxu0 0.0
      %479 = vmatprep.subr.mxu0 0.0
      %480 = vmatpush1.msra.mxu0 0.0
      %481 = vmatprep.subr.mxu0 0.0
      %482 = vmatpush1.msra.mxu0 0.0
      %483 = vmatprep.subr.mxu0 0.0
      %484 = vmatpush1.msra.mxu0 0.0
      %485 = vmatprep.subr.mxu0 0.0
      %486 = vmatpush1.msra.mxu0 0.0
      %487 = vmatprep.subr.mxu0 0.0
      %488 = vmatpush1.msra.mxu0 0.0
      %489 = vmatprep.subr.mxu0 0.0
      %490 = vmatpush1.msra.mxu0 0.0
      %491 = vmatprep.subr.mxu0 0.0
      %492 = vmatpush1.msra.mxu0 0.0
      %493 = vmatprep.subr.mxu0 0.0
      %494 = vmatpush1.msra.mxu0 0.0
      %495 = vmatprep.subr.mxu0 0.0
      %496 = vmatpush1.msra.mxu0 0.0
      %497 = vmatprep.subr.mxu0 0.0
      %498 = vmatpush1.msra.mxu0 0.0
      %499 = vmatprep.subr.mxu0 0.0
      %500 = vmatpush1.msra.mxu0 0.0
      %501 = vmatprep.subr.mxu0 0.0
      %502 = vmatpush1.msra.mxu0 0.0
      %503 = vmatprep.subr.mxu0 0.0
      %504 = vmatpush1.msra.mxu0 0.0
      %505 = vmatprep.subr.mxu0 0.0
      %506 = vmatpush1.msra.mxu0 %v473
      %507 = vmatprep.subr.mxu0 0.0
      %508 = vmatpush2.msra.mxu0 0.0
      %509 = vmatprep.subr.mxu0 0.0
      %510 = vmatpush2.msra.mxu0 0.0
      %511 = vmatprep.subr.mxu0 0.0
      %512 = vmatpush2.msra.mxu0 0.0
      %513 = vmatprep.subr.mxu0 0.0
      %514 = vmatpush2.msra.mxu0 0.0
      %515 = vmatprep.subr.mxu0 0.0
      %516 = vmatpush2.msra.mxu0 0.0
      %517 = vmatprep.subr.mxu0 0.0
      %518 = vmatpush2.msra.mxu0 0.0
      %519 = vmatprep.subr.mxu0 0.0
      %520 = vmatpush2.msra.mxu0 0.0
      %521 = vmatprep.subr.mxu0 0.0
      %522 = vmatpush2.msra.mxu0 0.0
      %523 = vmatprep.subr.mxu0 0.0
      %524 = vmatpush2.msra.mxu0 0.0
      %525 = vmatprep.subr.mxu0 0.0
      %526 = vmatpush2.msra.mxu0 0.0
      %527 = vmatprep.subr.mxu0 0.0
      %528 = vmatpush2.msra.mxu0 0.0
      %529 = vmatprep.subr.mxu0 0.0
      %530 = vmatpush2.msra.mxu0 0.0
      %531 = vmatprep.subr.mxu0 0.0
      %532 = vmatpush2.msra.mxu0 0.0
      %533 = vmatprep.subr.mxu0 0.0
      %534 = vmatpush2.msra.mxu0 0.0
      %535 = vmatprep.subr.mxu0 0.0
      %536 = vmatpush2.msra.mxu0 0.0
      %537 = vmatprep.subr.mxu0 0.0
      %538 = vmatpush2.msra.mxu0 0.0
      %539 = vmatprep.mubr.f32.mxu0 0.0
      %540 = vmatmul.mubr.f32.gmra.mxu0 %v376
      %v541 = vpop.f32.mrf.mxu0
      %v542 = vadd.f32 0.0, %v541
      %v543 = vpop.f32.mrf.mxu0
      %544 = vmatprep.mubr.f32.mxu0 0.0
      %545 = vmatmul.mubr.f32.gmra.mxu0 %v379
      %v546 = vpop.f32.mrf.mxu0
      %v547 = vadd.f32 0.0, %v546
      %v548 = vpop.f32.mrf.mxu0
      %549 = vmatprep.mubr.f32.mxu0 0.0
      %550 = vmatmul.mubr.f32.gmra.mxu0 %v382
      %v551 = vpop.f32.mrf.mxu0
      %v552 = vadd.f32 0.0, %v551
      %v553 = vpop.f32.mrf.mxu0
      %554 = vmatprep.mubr.f32.mxu0 0.0
      %555 = vmatmul.mubr.f32.gmra.mxu0 %v385
      %v556 = vpop.f32.mrf.mxu0
      %v557 = vadd.f32 0.0, %v556
      %v558 = vpop.f32.mrf.mxu0
      %559 = vmatprep.mubr.f32.mxu0 0.0
      %560 = vmatmul.mubr.f32.gmra.mxu0 %v388
      %v561 = vpop.f32.mrf.mxu0
      %v562 = vadd.f32 0.0, %v561
      %v563 = vpop.f32.mrf.mxu0
      %564 = vmatprep.mubr.f32.mxu0 0.0
      %565 = vmatmul.mubr.f32.gmra.mxu0 %v391
      %v566 = vpop.f32.mrf.mxu0
      %v567 = vadd.f32 0.0, %v566
      %v568 = vpop.f32.mrf.mxu0
      %569 = vmatprep.mubr.f32.mxu0 0.0
      %570 = vmatmul.mubr.f32.gmra.mxu0 %v394
      %v571 = vpop.f32.mrf.mxu0
      %v572 = vadd.f32 0.0, %v571
      %v573 = vpop.f32.mrf.mxu0
      %574 = vmatprep.mubr.f32.mxu0 0.0
      %575 = vmatmul.mubr.f32.gmra.mxu0 %v397
      %v576 = vpop.f32.mrf.mxu0
      %v577 = vadd.f32 0.0, %v576
      %v578 = vpop.f32.mrf.mxu0
      %579 = vmatprep.mubr.f32.mxu0 0.0
      %580 = vmatmul.mubr.f32.gmra.mxu0 %v400
      %v581 = vpop.f32.mrf.mxu0
      %v582 = vadd.f32 0.0, %v581
      %v583 = vpop.f32.mrf.mxu0
      %584 = vmatprep.mubr.f32.mxu0 0.0
      %585 = vmatmul.mubr.f32.gmra.mxu0 %v403
      %v586 = vpop.f32.mrf.mxu0
      %v587 = vadd.f32 0.0, %v586
      %v588 = vpop.f32.mrf.mxu0
      %589 = vmatprep.mubr.f32.mxu0 0.0
      %590 = vmatmul.mubr.f32.gmra.mxu0 %v406
      %v591 = vpop.f32.mrf.mxu0
      %v592 = vadd.f32 0.0, %v591
      %v593 = vpop.f32.mrf.mxu0
      %594 = vmatprep.mubr.f32.mxu0 0.0
      %595 = vmatmul.mubr.f32.gmra.mxu0 %v409
      %v596 = vpop.f32.mrf.mxu0
      %v597 = vadd.f32 0.0, %v596
      %v598 = vpop.f32.mrf.mxu0
      %599 = vmatprep.mubr.f32.mxu0 0.0
      %600 = vmatmul.mubr.f32.gmra.mxu0 %v412
      %v601 = vpop.f32.mrf.mxu0
      %v602 = vadd.f32 0.0, %v601
      %v603 = vpop.f32.mrf.mxu0
      %604 = vmatprep.mubr.f32.mxu0 0.0
      %605 = vmatmul.mubr.f32.gmra.mxu0 %v415
      %v606 = vpop.f32.mrf.mxu0
      %v607 = vadd.f32 0.0, %v606
      %v608 = vpop.f32.mrf.mxu0
      %609 = vmatprep.mubr.f32.mxu0 0.0
      %610 = vmatmul.mubr.f32.gmra.mxu0 %v418
      %v611 = vpop.f32.mrf.mxu0
      %v612 = vadd.f32 0.0, %v611
      %v613 = vpop.f32.mrf.mxu0
      %614 = vmatprep.mubr.f32.mxu0 0.0
      %615 = vmatmul.mubr.f32.gmra.mxu0 %v421
      %v616 = vpop.f32.mrf.mxu0
      %v617 = vadd.f32 0.0, %v616
      %v618 = vpop.f32.mrf.mxu0
      %619 = vmatprep.mubr.f32.mxu0 0.0
      %620 = vmatmul.mubr.f32.gmra.mxu0 %v424
      %v621 = vpop.f32.mrf.mxu0
      %v622 = vadd.f32 0.0, %v621
      %v623 = vpop.f32.mrf.mxu0
      %624 = vmatprep.mubr.f32.mxu0 0.0
      %625 = vmatmul.mubr.f32.gmra.mxu0 %v427
      %v626 = vpop.f32.mrf.mxu0
      %v627 = vadd.f32 0.0, %v626
      %v628 = vpop.f32.mrf.mxu0
      %629 = vmatprep.mubr.f32.mxu0 0.0
      %630 = vmatmul.mubr.f32.gmra.mxu0 %v430
      %v631 = vpop.f32.mrf.mxu0
      %v632 = vadd.f32 0.0, %v631
      %v633 = vpop.f32.mrf.mxu0
      %634 = vmatprep.mubr.f32.mxu0 0.0
      %635 = vmatmul.mubr.f32.gmra.mxu0 %v433
      %v636 = vpop.f32.mrf.mxu0
      %v637 = vadd.f32 0.0, %v636
      %v638 = vpop.f32.mrf.mxu0
      %639 = vmatprep.mubr.f32.mxu0 0.0
      %640 = vmatmul.mubr.f32.gmra.mxu0 %v436
      %v641 = vpop.f32.mrf.mxu0
      %v642 = vadd.f32 0.0, %v641
      %v643 = vpop.f32.mrf.mxu0
      %644 = vmatprep.mubr.f32.mxu0 0.0
      %645 = vmatmul.mubr.f32.gmra.mxu0 %v439
      %v646 = vpop.f32.mrf.mxu0
      %v647 = vadd.f32 0.0, %v646
      %v648 = vpop.f32.mrf.mxu0
      %649 = vmatprep.mubr.f32.mxu0 0.0
      %650 = vmatmul.mubr.f32.gmra.mxu0 %v442
      %v651 = vpop.f32.mrf.mxu0
      %v652 = vadd.f32 0.0, %v651
      %v653 = vpop.f32.mrf.mxu0
      %654 = vmatprep.mubr.f32.mxu0 0.0
      %655 = vmatmul.mubr.f32.gmra.mxu0 %v445
      %v656 = vpop.f32.mrf.mxu0
      %v657 = vadd.f32 0.0, %v656
      %v658 = vpop.f32.mrf.mxu0
      %659 = vmatprep.mubr.f32.mxu0 0.0
      %660 = vmatmul.mubr.f32.gmra.mxu0 %v448
      %v661 = vpop.f32.mrf.mxu0
      %v662 = vadd.f32 0.0, %v661
      %v663 = vpop.f32.mrf.mxu0
      %664 = vmatprep.mubr.f32.mxu0 0.0
      %665 = vmatmul.mubr.f32.gmra.mxu0 %v451
      %v666 = vpop.f32.mrf.mxu0
      %v667 = vadd.f32 0.0, %v666
      %v668 = vpop.f32.mrf.mxu0
      %669 = vmatprep.mubr.f32.mxu0 0.0
      %670 = vmatmul.mubr.f32.gmra.mxu0 %v454
      %v671 = vpop.f32.mrf.mxu0
      %v672 = vadd.f32 0.0, %v671
      %v673 = vpop.f32.mrf.mxu0
      %674 = vmatprep.mubr.f32.mxu0 0.0
      %675 = vmatmul.mubr.f32.gmra.mxu0 %v457
      %v676 = vpop.f32.mrf.mxu0
      %v677 = vadd.f32 0.0, %v676
      %v678 = vpop.f32.mrf.mxu0
      %679 = vmatprep.mubr.f32.mxu0 0.0
      %680 = vmatmul.mubr.f32.gmra.mxu0 %v460
      %v681 = vpop.f32.mrf.mxu0
      %v682 = vadd.f32 0.0, %v681
      %v683 = vpop.f32.mrf.mxu0
      %684 = vmatprep.mubr.f32.mxu0 0.0
      %685 = vmatmul.mubr.f32.gmra.mxu0 %v463
      %v686 = vpop.f32.mrf.mxu0
      %v687 = vadd.f32 0.0, %v686
      %v688 = vpop.f32.mrf.mxu0
      %689 = vmatprep.mubr.f32.mxu0 0.0
      %690 = vmatmul.mubr.f32.gmra.mxu0 %v466
      %v691 = vpop.f32.mrf.mxu0
      %v692 = vadd.f32 0.0, %v691
      %v693 = vpop.f32.mrf.mxu0
      %694 = vmatprep.mubr.f32.mxu0 0.0
      %695 = vmatmul.mubr.f32.gmra.mxu0 %v469
      %v696 = vpop.f32.mrf.mxu0
      %v697 = vadd.f32 0.0, %v696
      %v698 = vpop.f32.mrf.mxu0
      %699 = vdwg.mxu0
      %v700 = vadd.f32 %v341, %v542
      %v701 = vadd.f32 %v342, %v547
      %v702 = vadd.f32 %v343, %v552
      %v703 = vadd.f32 %v344, %v557
      %v704 = vadd.f32 %v345, %v562
      %v705 = vadd.f32 %v346, %v567
      %v706 = vadd.f32 %v347, %v572
      %v707 = vadd.f32 %v348, %v577
      %v708 = vadd.f32 %v349, %v582
      %v709 = vadd.f32 %v350, %v587
      %v710 = vadd.f32 %v351, %v592
      %v711 = vadd.f32 %v352, %v597
      %v712 = vadd.f32 %v353, %v602
      %v713 = vadd.f32 %v354, %v607
      %v714 = vadd.f32 %v355, %v612
      %v715 = vadd.f32 %v356, %v617
      %v716 = vadd.f32 %v357, %v622
      %v717 = vadd.f32 %v358, %v627
      %v718 = vadd.f32 %v359, %v632
      %v719 = vadd.f32 %v360, %v637
      %v720 = vadd.f32 %v361, %v642
      %v721 = vadd.f32 %v362, %v647
      %v722 = vadd.f32 %v363, %v652
      %v723 = vadd.f32 %v364, %v657
      %v724 = vadd.f32 %v365, %v662
      %v725 = vadd.f32 %v366, %v667
      %v726 = vadd.f32 %v367, %v672
      %v727 = vadd.f32 %v368, %v677
      %v728 = vadd.f32 %v369, %v682
      %v729 = vadd.f32 %v370, %v687
      %v730 = vadd.f32 %v371, %v692
      %v731 = vadd.f32 %v372, %v697
      %vm748 = vcmask 1044480
      %v749 = vrot.slane %v275, 3
      %v750 = vrot.slane %v276, 3
      %v751 = vsel %vm748, %v749, %v750
      %v752 = vrot.slane %v277, 3
      %v753 = vsel %vm748, %v750, %v752
      %v754 = vrot.slane %v278, 3
      %v755 = vrot.slane %v279, 3
      %v756 = vsel %vm748, %v754, %v755
      %v757 = vrot.slane %v280, 3
      %v758 = vsel %vm748, %v755, %v757
      %v759 = vrot.slane %v281, 3
      %v760 = vrot.slane %v282, 3
      %v761 = vsel %vm748, %v759, %v760
      %v762 = vrot.slane %v283, 3
      %v763 = vsel %vm748, %v760, %v762
      %v764 = vrot.slane %v284, 3
      %v765 = vrot.slane %v285, 3
      %v766 = vsel %vm748, %v764, %v765
      %v767 = vrot.slane %v286, 3
      %v768 = vsel %vm748, %v765, %v767
      %v769 = vrot.slane %v287, 3
      %v770 = vrot.slane %v288, 3
      %v771 = vsel %vm748, %v769, %v770
      %v772 = vrot.slane %v289, 3
      %v773 = vsel %vm748, %v770, %v772
      %v774 = vrot.slane %v290, 3
      %v775 = vrot.slane %v291, 3
      %v776 = vsel %vm748, %v774, %v775
      %v777 = vrot.slane %v292, 3
      %v778 = vsel %vm748, %v775, %v777
      %v779 = vrot.slane %v293, 3
      %v780 = vrot.slane %v294, 3
      %v781 = vsel %vm748, %v779, %v780
      %v782 = vrot.slane %v295, 3
      %v783 = vsel %vm748, %v780, %v782
      %v784 = vrot.slane %v296, 3
      %v785 = vrot.slane %v297, 3
      %v786 = vsel %vm748, %v784, %v785
      %v787 = vrot.slane %v298, 3
      %v788 = vsel %vm748, %v785, %v787
      %v789 = vrot.slane %v299, 3
      %v790 = vrot.slane %v300, 3
      %v791 = vsel %vm748, %v789, %v790
      %v792 = vrot.slane %v301, 3
      %v793 = vsel %vm748, %v790, %v792
      %v794 = vrot.slane %v302, 3
      %v795 = vrot.slane %v303, 3
      %v796 = vsel %vm748, %v794, %v795
      %v797 = vrot.slane %v304, 3
      %v798 = vsel %vm748, %v795, %v797
      %v799 = vrot.slane %v305, 3
      %v800 = vrot.slane %v306, 3
      %v801 = vsel %vm748, %v799, %v800
      %v802 = vrot.slane %v307, 3
      %v803 = vsel %vm748, %v800, %v802
      %v804 = vrot.slane %v308, 3
      %v805 = vrot.slane %v309, 3
      %v806 = vsel %vm748, %v804, %v805
      %v807 = vrot.slane %v310, 3
      %v808 = vsel %vm748, %v805, %v807
      %v809 = vrot.slane %v311, 3
      %v810 = vrot.slane %v312, 3
      %v811 = vsel %vm748, %v809, %v810
      %v812 = vrot.slane %v313, 3
      %v813 = vsel %vm748, %v810, %v812
      %v814 = vrot.slane %v314, 3
      %v815 = vrot.slane %v315, 3
      %v816 = vsel %vm748, %v814, %v815
      %v817 = vrot.slane %v316, 3
      %v818 = vsel %vm748, %v815, %v817
      %v819 = vrot.slane %v317, 3
      %v820 = vrot.slane %v318, 3
      %v821 = vsel %vm748, %v819, %v820
      %v822 = vrot.slane %v319, 3
      %v823 = vsel %vm748, %v820, %v822
      %v824 = vrot.slane %v320, 3
      %v825 = vrot.slane %v321, 3
      %v826 = vsel %vm748, %v824, %v825
      %v827 = vrot.slane %v322, 3
      %v828 = vsel %vm748, %v825, %v827
      %s829 = scalar_lea.vmem %s232, 4
      %v830 = vld [vmem:[%s829] sm:$0xf]
      %v831 = vsel %vm374, %v751, 0
      %v833 = vsel %vm374, %v753, 0
      %v835 = vsel %vm374, %v756, 0
      %v837 = vsel %vm374, %v758, 0
      %v839 = vsel %vm374, %v761, 0
      %v841 = vsel %vm374, %v763, 0
      %v843 = vsel %vm374, %v766, 0
      %v845 = vsel %vm374, %v768, 0
      %v847 = vsel %vm374, %v771, 0
      %v849 = vsel %vm374, %v773, 0
      %v851 = vsel %vm374, %v776, 0
      %v853 = vsel %vm374, %v778, 0
      %v855 = vsel %vm374, %v781, 0
      %v857 = vsel %vm374, %v783, 0
      %v859 = vsel %vm374, %v786, 0
      %v861 = vsel %vm374, %v788, 0
      %v863 = vsel %vm374, %v791, 0
      %v865 = vsel %vm374, %v793, 0
      %v867 = vsel %vm374, %v796, 0
      %v869 = vsel %vm374, %v798, 0
      %v871 = vsel %vm374, %v801, 0
      %v873 = vsel %vm374, %v803, 0
      %v875 = vsel %vm374, %v806, 0
      %v877 = vsel %vm374, %v808, 0
      %v879 = vsel %vm374, %v811, 0
      %v881 = vsel %vm374, %v813, 0
      %v883 = vsel %vm374, %v816, 0
      %v885 = vsel %vm374, %v818, 0
      %v887 = vsel %vm374, %v821, 0
      %v889 = vsel %vm374, %v823, 0
      %v891 = vsel %vm374, %v826, 0
      %v893 = vsel %vm374, %v828, 0
      %v896 = vsel %vm471, %v830, 0
      %898 = vmatprep.subr.mxu0 0.0
      %899 = vmatpush1.msra.mxu0 0.0
      %900 = vmatprep.subr.mxu0 0.0
      %901 = vmatpush1.msra.mxu0 0.0
      %902 = vmatprep.subr.mxu0 0.0
      %903 = vmatpush1.msra.mxu0 0.0
      %904 = vmatprep.subr.mxu0 0.0
      %905 = vmatpush1.msra.mxu0 0.0
      %906 = vmatprep.subr.mxu0 0.0
      %907 = vmatpush1.msra.mxu0 0.0
      %908 = vmatprep.subr.mxu0 0.0
      %909 = vmatpush1.msra.mxu0 0.0
      %910 = vmatprep.subr.mxu0 0.0
      %911 = vmatpush1.msra.mxu0 0.0
      %912 = vmatprep.subr.mxu0 0.0
      %913 = vmatpush1.msra.mxu0 0.0
      %914 = vmatprep.subr.mxu0 0.0
      %915 = vmatpush1.msra.mxu0 0.0
      %916 = vmatprep.subr.mxu0 0.0
      %917 = vmatpush1.msra.mxu0 0.0
      %918 = vmatprep.subr.mxu0 0.0
      %919 = vmatpush1.msra.mxu0 0.0
      %920 = vmatprep.subr.mxu0 0.0
      %921 = vmatpush1.msra.mxu0 0.0
      %922 = vmatprep.subr.mxu0 0.0
      %923 = vmatpush1.msra.mxu0 0.0
      %924 = vmatprep.subr.mxu0 0.0
      %925 = vmatpush1.msra.mxu0 0.0
      %926 = vmatprep.subr.mxu0 0.0
      %927 = vmatpush1.msra.mxu0 0.0
      %928 = vmatprep.subr.mxu0 0.0
      %929 = vmatpush1.msra.mxu0 %v896
      %930 = vmatprep.subr.mxu0 0.0
      %931 = vmatpush2.msra.mxu0 0.0
      %932 = vmatprep.subr.mxu0 0.0
      %933 = vmatpush2.msra.mxu0 0.0
      %934 = vmatprep.subr.mxu0 0.0
      %935 = vmatpush2.msra.mxu0 0.0
      %936 = vmatprep.subr.mxu0 0.0
      %937 = vmatpush2.msra.mxu0 0.0
      %938 = vmatprep.subr.mxu0 0.0
      %939 = vmatpush2.msra.mxu0 0.0
      %940 = vmatprep.subr.mxu0 0.0
      %941 = vmatpush2.msra.mxu0 0.0
      %942 = vmatprep.subr.mxu0 0.0
      %943 = vmatpush2.msra.mxu0 0.0
      %944 = vmatprep.subr.mxu0 0.0
      %945 = vmatpush2.msra.mxu0 0.0
      %946 = vmatprep.subr.mxu0 0.0
      %947 = vmatpush2.msra.mxu0 0.0
      %948 = vmatprep.subr.mxu0 0.0
      %949 = vmatpush2.msra.mxu0 0.0
      %950 = vmatprep.subr.mxu0 0.0
      %951 = vmatpush2.msra.mxu0 0.0
      %952 = vmatprep.subr.mxu0 0.0
      %953 = vmatpush2.msra.mxu0 0.0
      %954 = vmatprep.subr.mxu0 0.0
      %955 = vmatpush2.msra.mxu0 0.0
      %956 = vmatprep.subr.mxu0 0.0
      %957 = vmatpush2.msra.mxu0 0.0
      %958 = vmatprep.subr.mxu0 0.0
      %959 = vmatpush2.msra.mxu0 0.0
      %960 = vmatprep.subr.mxu0 0.0
      %961 = vmatpush2.msra.mxu0 0.0
      %962 = vmatprep.mubr.f32.mxu0 0.0
      %963 = vmatmul.mubr.f32.gmra.mxu0 %v831
      %v964 = vpop.f32.mrf.mxu0
      %v965 = vadd.f32 0.0, %v964
      %v966 = vpop.f32.mrf.mxu0
      %967 = vmatprep.mubr.f32.mxu0 0.0
      %968 = vmatmul.mubr.f32.gmra.mxu0 %v833
      %v969 = vpop.f32.mrf.mxu0
      %v970 = vadd.f32 0.0, %v969
      %v971 = vpop.f32.mrf.mxu0
      %972 = vmatprep.mubr.f32.mxu0 0.0
      %973 = vmatmul.mubr.f32.gmra.mxu0 %v835
      %v974 = vpop.f32.mrf.mxu0
      %v975 = vadd.f32 0.0, %v974
      %v976 = vpop.f32.mrf.mxu0
      %977 = vmatprep.mubr.f32.mxu0 0.0
      %978 = vmatmul.mubr.f32.gmra.mxu0 %v837
      %v979 = vpop.f32.mrf.mxu0
      %v980 = vadd.f32 0.0, %v979
      %v981 = vpop.f32.mrf.mxu0
      %982 = vmatprep.mubr.f32.mxu0 0.0
      %983 = vmatmul.mubr.f32.gmra.mxu0 %v839
      %v984 = vpop.f32.mrf.mxu0
      %v985 = vadd.f32 0.0, %v984
      %v986 = vpop.f32.mrf.mxu0
      %987 = vmatprep.mubr.f32.mxu0 0.0
      %988 = vmatmul.mubr.f32.gmra.mxu0 %v841
      %v989 = vpop.f32.mrf.mxu0
      %v990 = vadd.f32 0.0, %v989
      %v991 = vpop.f32.mrf.mxu0
      %992 = vmatprep.mubr.f32.mxu0 0.0
      %993 = vmatmul.mubr.f32.gmra.mxu0 %v843
      %v994 = vpop.f32.mrf.mxu0
      %v995 = vadd.f32 0.0, %v994
      %v996 = vpop.f32.mrf.mxu0
      %997 = vmatprep.mubr.f32.mxu0 0.0
      %998 = vmatmul.mubr.f32.gmra.mxu0 %v845
      %v999 = vpop.f32.mrf.mxu0
      %v1000 = vadd.f32 0.0, %v999
      %v1001 = vpop.f32.mrf.mxu0
      %1002 = vmatprep.mubr.f32.mxu0 0.0
      %1003 = vmatmul.mubr.f32.gmra.mxu0 %v847
      %v1004 = vpop.f32.mrf.mxu0
      %v1005 = vadd.f32 0.0, %v1004
      %v1006 = vpop.f32.mrf.mxu0
      %1007 = vmatprep.mubr.f32.mxu0 0.0
      %1008 = vmatmul.mubr.f32.gmra.mxu0 %v849
      %v1009 = vpop.f32.mrf.mxu0
      %v1010 = vadd.f32 0.0, %v1009
      %v1011 = vpop.f32.mrf.mxu0
      %1012 = vmatprep.mubr.f32.mxu0 0.0
      %1013 = vmatmul.mubr.f32.gmra.mxu0 %v851
      %v1014 = vpop.f32.mrf.mxu0
      %v1015 = vadd.f32 0.0, %v1014
      %v1016 = vpop.f32.mrf.mxu0
      %1017 = vmatprep.mubr.f32.mxu0 0.0
      %1018 = vmatmul.mubr.f32.gmra.mxu0 %v853
      %v1019 = vpop.f32.mrf.mxu0
      %v1020 = vadd.f32 0.0, %v1019
      %v1021 = vpop.f32.mrf.mxu0
      %1022 = vmatprep.mubr.f32.mxu0 0.0
      %1023 = vmatmul.mubr.f32.gmra.mxu0 %v855
      %v1024 = vpop.f32.mrf.mxu0
      %v1025 = vadd.f32 0.0, %v1024
      %v1026 = vpop.f32.mrf.mxu0
      %1027 = vmatprep.mubr.f32.mxu0 0.0
      %1028 = vmatmul.mubr.f32.gmra.mxu0 %v857
      %v1029 = vpop.f32.mrf.mxu0
      %v1030 = vadd.f32 0.0, %v1029
      %v1031 = vpop.f32.mrf.mxu0
      %1032 = vmatprep.mubr.f32.mxu0 0.0
      %1033 = vmatmul.mubr.f32.gmra.mxu0 %v859
      %v1034 = vpop.f32.mrf.mxu0
      %v1035 = vadd.f32 0.0, %v1034
      %v1036 = vpop.f32.mrf.mxu0
      %1037 = vmatprep.mubr.f32.mxu0 0.0
      %1038 = vmatmul.mubr.f32.gmra.mxu0 %v861
      %v1039 = vpop.f32.mrf.mxu0
      %v1040 = vadd.f32 0.0, %v1039
      %v1041 = vpop.f32.mrf.mxu0
      %1042 = vmatprep.mubr.f32.mxu0 0.0
      %1043 = vmatmul.mubr.f32.gmra.mxu0 %v863
      %v1044 = vpop.f32.mrf.mxu0
      %v1045 = vadd.f32 0.0, %v1044
      %v1046 = vpop.f32.mrf.mxu0
      %1047 = vmatprep.mubr.f32.mxu0 0.0
      %1048 = vmatmul.mubr.f32.gmra.mxu0 %v865
      %v1049 = vpop.f32.mrf.mxu0
      %v1050 = vadd.f32 0.0, %v1049
      %v1051 = vpop.f32.mrf.mxu0
      %1052 = vmatprep.mubr.f32.mxu0 0.0
      %1053 = vmatmul.mubr.f32.gmra.mxu0 %v867
      %v1054 = vpop.f32.mrf.mxu0
      %v1055 = vadd.f32 0.0, %v1054
      %v1056 = vpop.f32.mrf.mxu0
      %1057 = vmatprep.mubr.f32.mxu0 0.0
      %1058 = vmatmul.mubr.f32.gmra.mxu0 %v869
      %v1059 = vpop.f32.mrf.mxu0
      %v1060 = vadd.f32 0.0, %v1059
      %v1061 = vpop.f32.mrf.mxu0
      %1062 = vmatprep.mubr.f32.mxu0 0.0
      %1063 = vmatmul.mubr.f32.gmra.mxu0 %v871
      %v1064 = vpop.f32.mrf.mxu0
      %v1065 = vadd.f32 0.0, %v1064
      %v1066 = vpop.f32.mrf.mxu0
      %1067 = vmatprep.mubr.f32.mxu0 0.0
      %1068 = vmatmul.mubr.f32.gmra.mxu0 %v873
      %v1069 = vpop.f32.mrf.mxu0
      %v1070 = vadd.f32 0.0, %v1069
      %v1071 = vpop.f32.mrf.mxu0
      %1072 = vmatprep.mubr.f32.mxu0 0.0
      %1073 = vmatmul.mubr.f32.gmra.mxu0 %v875
      %v1074 = vpop.f32.mrf.mxu0
      %v1075 = vadd.f32 0.0, %v1074
      %v1076 = vpop.f32.mrf.mxu0
      %1077 = vmatprep.mubr.f32.mxu0 0.0
      %1078 = vmatmul.mubr.f32.gmra.mxu0 %v877
      %v1079 = vpop.f32.mrf.mxu0
      %v1080 = vadd.f32 0.0, %v1079
      %v1081 = vpop.f32.mrf.mxu0
      %1082 = vmatprep.mubr.f32.mxu0 0.0
      %1083 = vmatmul.mubr.f32.gmra.mxu0 %v879
      %v1084 = vpop.f32.mrf.mxu0
      %v1085 = vadd.f32 0.0, %v1084
      %v1086 = vpop.f32.mrf.mxu0
      %1087 = vmatprep.mubr.f32.mxu0 0.0
      %1088 = vmatmul.mubr.f32.gmra.mxu0 %v881
      %v1089 = vpop.f32.mrf.mxu0
      %v1090 = vadd.f32 0.0, %v1089
      %v1091 = vpop.f32.mrf.mxu0
      %1092 = vmatprep.mubr.f32.mxu0 0.0
      %1093 = vmatmul.mubr.f32.gmra.mxu0 %v883
      %v1094 = vpop.f32.mrf.mxu0
      %v1095 = vadd.f32 0.0, %v1094
      %v1096 = vpop.f32.mrf.mxu0
      %1097 = vmatprep.mubr.f32.mxu0 0.0
      %1098 = vmatmul.mubr.f32.gmra.mxu0 %v885
      %v1099 = vpop.f32.mrf.mxu0
      %v1100 = vadd.f32 0.0, %v1099
      %v1101 = vpop.f32.mrf.mxu0
      %1102 = vmatprep.mubr.f32.mxu0 0.0
      %1103 = vmatmul.mubr.f32.gmra.mxu0 %v887
      %v1104 = vpop.f32.mrf.mxu0
      %v1105 = vadd.f32 0.0, %v1104
      %v1106 = vpop.f32.mrf.mxu0
      %1107 = vmatprep.mubr.f32.mxu0 0.0
      %1108 = vmatmul.mubr.f32.gmra.mxu0 %v889
      %v1109 = vpop.f32.mrf.mxu0
      %v1110 = vadd.f32 0.0, %v1109
      %v1111 = vpop.f32.mrf.mxu0
      %1112 = vmatprep.mubr.f32.mxu0 0.0
      %1113 = vmatmul.mubr.f32.gmra.mxu0 %v891
      %v1114 = vpop.f32.mrf.mxu0
      %v1115 = vadd.f32 0.0, %v1114
      %v1116 = vpop.f32.mrf.mxu0
      %1117 = vmatprep.mubr.f32.mxu0 0.0
      %1118 = vmatmul.mubr.f32.gmra.mxu0 %v893
      %v1119 = vpop.f32.mrf.mxu0
      %v1120 = vadd.f32 0.0, %v1119
      %v1121 = vpop.f32.mrf.mxu0
      %1122 = vdwg.mxu0
      %v1123 = vadd.f32 %v700, %v965
      %v1124 = vadd.f32 %v701, %v970
      %v1125 = vadd.f32 %v702, %v975
      %v1126 = vadd.f32 %v703, %v980
      %v1127 = vadd.f32 %v704, %v985
      %v1128 = vadd.f32 %v705, %v990
      %v1129 = vadd.f32 %v706, %v995
      %v1130 = vadd.f32 %v707, %v1000
      %v1131 = vadd.f32 %v708, %v1005
      %v1132 = vadd.f32 %v709, %v1010
      %v1133 = vadd.f32 %v710, %v1015
      %v1134 = vadd.f32 %v711, %v1020
      %v1135 = vadd.f32 %v712, %v1025
      %v1136 = vadd.f32 %v713, %v1030
      %v1137 = vadd.f32 %v714, %v1035
      %v1138 = vadd.f32 %v715, %v1040
      %v1139 = vadd.f32 %v716, %v1045
      %v1140 = vadd.f32 %v717, %v1050
      %v1141 = vadd.f32 %v718, %v1055
      %v1142 = vadd.f32 %v719, %v1060
      %v1143 = vadd.f32 %v720, %v1065
      %v1144 = vadd.f32 %v721, %v1070
      %v1145 = vadd.f32 %v722, %v1075
      %v1146 = vadd.f32 %v723, %v1080
      %v1147 = vadd.f32 %v724, %v1085
      %v1148 = vadd.f32 %v725, %v1090
      %v1149 = vadd.f32 %v726, %v1095
      %v1150 = vadd.f32 %v727, %v1100
      %v1151 = vadd.f32 %v728, %v1105
      %v1152 = vadd.f32 %v729, %v1110
      %v1153 = vadd.f32 %v730, %v1115
      %v1154 = vadd.f32 %v731, %v1120
      %vm1155 = vcmask 1041408
      %v1156 = vrot.slane %v275, 6
      %v1157 = vrot.slane %v276, 6
      %v1158 = vsel %vm1155, %v1156, %v1157
      %v1159 = vrot.slane %v277, 6
      %v1160 = vsel %vm1155, %v1157, %v1159
      %v1161 = vrot.slane %v278, 6
      %v1162 = vrot.slane %v279, 6
      %v1163 = vsel %vm1155, %v1161, %v1162
      %v1164 = vrot.slane %v280, 6
      %v1165 = vsel %vm1155, %v1162, %v1164
      %v1166 = vrot.slane %v281, 6
      %v1167 = vrot.slane %v282, 6
      %v1168 = vsel %vm1155, %v1166, %v1167
      %v1169 = vrot.slane %v283, 6
      %v1170 = vsel %vm1155, %v1167, %v1169
      %v1171 = vrot.slane %v284, 6
      %v1172 = vrot.slane %v285, 6
      %v1173 = vsel %vm1155, %v1171, %v1172
      %v1174 = vrot.slane %v286, 6
      %v1175 = vsel %vm1155, %v1172, %v1174
      %v1176 = vrot.slane %v287, 6
      %v1177 = vrot.slane %v288, 6
      %v1178 = vsel %vm1155, %v1176, %v1177
      %v1179 = vrot.slane %v289, 6
      %v1180 = vsel %vm1155, %v1177, %v1179
      %v1181 = vrot.slane %v290, 6
      %v1182 = vrot.slane %v291, 6
      %v1183 = vsel %vm1155, %v1181, %v1182
      %v1184 = vrot.slane %v292, 6
      %v1185 = vsel %vm1155, %v1182, %v1184
      %v1186 = vrot.slane %v293, 6
      %v1187 = vrot.slane %v294, 6
      %v1188 = vsel %vm1155, %v1186, %v1187
      %v1189 = vrot.slane %v295, 6
      %v1190 = vsel %vm1155, %v1187, %v1189
      %v1191 = vrot.slane %v296, 6
      %v1192 = vrot.slane %v297, 6
      %v1193 = vsel %vm1155, %v1191, %v1192
      %v1194 = vrot.slane %v298, 6
      %v1195 = vsel %vm1155, %v1192, %v1194
      %v1196 = vrot.slane %v299, 6
      %v1197 = vrot.slane %v300, 6
      %v1198 = vsel %vm1155, %v1196, %v1197
      %v1199 = vrot.slane %v301, 6
      %v1200 = vsel %vm1155, %v1197, %v1199
      %v1201 = vrot.slane %v302, 6
      %v1202 = vrot.slane %v303, 6
      %v1203 = vsel %vm1155, %v1201, %v1202
      %v1204 = vrot.slane %v304, 6
      %v1205 = vsel %vm1155, %v1202, %v1204
      %v1206 = vrot.slane %v305, 6
      %v1207 = vrot.slane %v306, 6
      %v1208 = vsel %vm1155, %v1206, %v1207
      %v1209 = vrot.slane %v307, 6
      %v1210 = vsel %vm1155, %v1207, %v1209
      %v1211 = vrot.slane %v308, 6
      %v1212 = vrot.slane %v309, 6
      %v1213 = vsel %vm1155, %v1211, %v1212
      %v1214 = vrot.slane %v310, 6
      %v1215 = vsel %vm1155, %v1212, %v1214
      %v1216 = vrot.slane %v311, 6
      %v1217 = vrot.slane %v312, 6
      %v1218 = vsel %vm1155, %v1216, %v1217
      %v1219 = vrot.slane %v313, 6
      %v1220 = vsel %vm1155, %v1217, %v1219
      %v1221 = vrot.slane %v314, 6
      %v1222 = vrot.slane %v315, 6
      %v1223 = vsel %vm1155, %v1221, %v1222
      %v1224 = vrot.slane %v316, 6
      %v1225 = vsel %vm1155, %v1222, %v1224
      %v1226 = vrot.slane %v317, 6
      %v1227 = vrot.slane %v318, 6
      %v1228 = vsel %vm1155, %v1226, %v1227
      %v1229 = vrot.slane %v319, 6
      %v1230 = vsel %vm1155, %v1227, %v1229
      %v1231 = vrot.slane %v320, 6
      %v1232 = vrot.slane %v321, 6
      %v1233 = vsel %vm1155, %v1231, %v1232
      %v1234 = vrot.slane %v322, 6
      %v1235 = vsel %vm1155, %v1232, %v1234
      %s1236 = scalar_lea.vmem %s232, 8
      %v1237 = vld [vmem:[%s1236] sm:$0xf]
      %v1238 = vsel %vm374, %v1158, 0
      %v1240 = vsel %vm374, %v1160, 0
      %v1242 = vsel %vm374, %v1163, 0
      %v1244 = vsel %vm374, %v1165, 0
      %v1246 = vsel %vm374, %v1168, 0
      %v1248 = vsel %vm374, %v1170, 0
      %v1250 = vsel %vm374, %v1173, 0
      %v1252 = vsel %vm374, %v1175, 0
      %v1254 = vsel %vm374, %v1178, 0
      %v1256 = vsel %vm374, %v1180, 0
      %v1258 = vsel %vm374, %v1183, 0
      %v1260 = vsel %vm374, %v1185, 0
      %v1262 = vsel %vm374, %v1188, 0
      %v1264 = vsel %vm374, %v1190, 0
      %v1266 = vsel %vm374, %v1193, 0
      %v1268 = vsel %vm374, %v1195, 0
      %v1270 = vsel %vm374, %v1198, 0
      %v1272 = vsel %vm374, %v1200, 0
      %v1274 = vsel %vm374, %v1203, 0
      %v1276 = vsel %vm374, %v1205, 0
      %v1278 = vsel %vm374, %v1208, 0
      %v1280 = vsel %vm374, %v1210, 0
      %v1282 = vsel %vm374, %v1213, 0
      %v1284 = vsel %vm374, %v1215, 0
      %v1286 = vsel %vm374, %v1218, 0
      %v1288 = vsel %vm374, %v1220, 0
      %v1290 = vsel %vm374, %v1223, 0
      %v1292 = vsel %vm374, %v1225, 0
      %v1294 = vsel %vm374, %v1228, 0
      %v1296 = vsel %vm374, %v1230, 0
      %v1298 = vsel %vm374, %v1233, 0
      %v1300 = vsel %vm374, %v1235, 0
      %v1303 = vsel %vm471, %v1237, 0
      %1305 = vmatprep.subr.mxu0 0.0
      %1306 = vmatpush1.msra.mxu0 0.0
      %1307 = vmatprep.subr.mxu0 0.0
      %1308 = vmatpush1.msra.mxu0 0.0
      %1309 = vmatprep.subr.mxu0 0.0
      %1310 = vmatpush1.msra.mxu0 0.0
      %1311 = vmatprep.subr.mxu0 0.0
      %1312 = vmatpush1.msra.mxu0 0.0
      %1313 = vmatprep.subr.mxu0 0.0
      %1314 = vmatpush1.msra.mxu0 0.0
      %1315 = vmatprep.subr.mxu0 0.0
      %1316 = vmatpush1.msra.mxu0 0.0
      %1317 = vmatprep.subr.mxu0 0.0
      %1318 = vmatpush1.msra.mxu0 0.0
      %1319 = vmatprep.subr.mxu0 0.0
      %1320 = vmatpush1.msra.mxu0 0.0
      %1321 = vmatprep.subr.mxu0 0.0
      %1322 = vmatpush1.msra.mxu0 0.0
      %1323 = vmatprep.subr.mxu0 0.0
      %1324 = vmatpush1.msra.mxu0 0.0
      %1325 = vmatprep.subr.mxu0 0.0
      %1326 = vmatpush1.msra.mxu0 0.0
      %1327 = vmatprep.subr.mxu0 0.0
      %1328 = vmatpush1.msra.mxu0 0.0
      %1329 = vmatprep.subr.mxu0 0.0
      %1330 = vmatpush1.msra.mxu0 0.0
      %1331 = vmatprep.subr.mxu0 0.0
      %1332 = vmatpush1.msra.mxu0 0.0
      %1333 = vmatprep.subr.mxu0 0.0
      %1334 = vmatpush1.msra.mxu0 0.0
      %1335 = vmatprep.subr.mxu0 0.0
      %1336 = vmatpush1.msra.mxu0 %v1303
      %1337 = vmatprep.subr.mxu0 0.0
      %1338 = vmatpush2.msra.mxu0 0.0
      %1339 = vmatprep.subr.mxu0 0.0
      %1340 = vmatpush2.msra.mxu0 0.0
      %1341 = vmatprep.subr.mxu0 0.0
      %1342 = vmatpush2.msra.mxu0 0.0
      %1343 = vmatprep.subr.mxu0 0.0
      %1344 = vmatpush2.msra.mxu0 0.0
      %1345 = vmatprep.subr.mxu0 0.0
      %1346 = vmatpush2.msra.mxu0 0.0
      %1347 = vmatprep.subr.mxu0 0.0
      %1348 = vmatpush2.msra.mxu0 0.0
      %1349 = vmatprep.subr.mxu0 0.0
      %1350 = vmatpush2.msra.mxu0 0.0
      %1351 = vmatprep.subr.mxu0 0.0
      %1352 = vmatpush2.msra.mxu0 0.0
      %1353 = vmatprep.subr.mxu0 0.0
      %1354 = vmatpush2.msra.mxu0 0.0
      %1355 = vmatprep.subr.mxu0 0.0
      %1356 = vmatpush2.msra.mxu0 0.0
      %1357 = vmatprep.subr.mxu0 0.0
      %1358 = vmatpush2.msra.mxu0 0.0
      %1359 = vmatprep.subr.mxu0 0.0
      %1360 = vmatpush2.msra.mxu0 0.0
      %1361 = vmatprep.subr.mxu0 0.0
      %1362 = vmatpush2.msra.mxu0 0.0
      %1363 = vmatprep.subr.mxu0 0.0
      %1364 = vmatpush2.msra.mxu0 0.0
      %1365 = vmatprep.subr.mxu0 0.0
      %1366 = vmatpush2.msra.mxu0 0.0
      %1367 = vmatprep.subr.mxu0 0.0
      %1368 = vmatpush2.msra.mxu0 0.0
      %1369 = vmatprep.mubr.f32.mxu0 0.0
      %1370 = vmatmul.mubr.f32.gmra.mxu0 %v1238
      %v1371 = vpop.f32.mrf.mxu0
      %v1372 = vadd.f32 0.0, %v1371
      %v1373 = vpop.f32.mrf.mxu0
      %1374 = vmatprep.mubr.f32.mxu0 0.0
      %1375 = vmatmul.mubr.f32.gmra.mxu0 %v1240
      %v1376 = vpop.f32.mrf.mxu0
      %v1377 = vadd.f32 0.0, %v1376
      %v1378 = vpop.f32.mrf.mxu0
      %1379 = vmatprep.mubr.f32.mxu0 0.0
      %1380 = vmatmul.mubr.f32.gmra.mxu0 %v1242
      %v1381 = vpop.f32.mrf.mxu0
      %v1382 = vadd.f32 0.0, %v1381
      %v1383 = vpop.f32.mrf.mxu0
      %1384 = vmatprep.mubr.f32.mxu0 0.0
      %1385 = vmatmul.mubr.f32.gmra.mxu0 %v1244
      %v1386 = vpop.f32.mrf.mxu0
      %v1387 = vadd.f32 0.0, %v1386
      %v1388 = vpop.f32.mrf.mxu0
      %1389 = vmatprep.mubr.f32.mxu0 0.0
      %1390 = vmatmul.mubr.f32.gmra.mxu0 %v1246
      %v1391 = vpop.f32.mrf.mxu0
      %v1392 = vadd.f32 0.0, %v1391
      %v1393 = vpop.f32.mrf.mxu0
      %1394 = vmatprep.mubr.f32.mxu0 0.0
      %1395 = vmatmul.mubr.f32.gmra.mxu0 %v1248
      %v1396 = vpop.f32.mrf.mxu0
      %v1397 = vadd.f32 0.0, %v1396
      %v1398 = vpop.f32.mrf.mxu0
      %1399 = vmatprep.mubr.f32.mxu0 0.0
      %1400 = vmatmul.mubr.f32.gmra.mxu0 %v1250
      %v1401 = vpop.f32.mrf.mxu0
      %v1402 = vadd.f32 0.0, %v1401
      %v1403 = vpop.f32.mrf.mxu0
      %1404 = vmatprep.mubr.f32.mxu0 0.0
      %1405 = vmatmul.mubr.f32.gmra.mxu0 %v1252
      %v1406 = vpop.f32.mrf.mxu0
      %v1407 = vadd.f32 0.0, %v1406
      %v1408 = vpop.f32.mrf.mxu0
      %1409 = vmatprep.mubr.f32.mxu0 0.0
      %1410 = vmatmul.mubr.f32.gmra.mxu0 %v1254
      %v1411 = vpop.f32.mrf.mxu0
      %v1412 = vadd.f32 0.0, %v1411
      %v1413 = vpop.f32.mrf.mxu0
      %1414 = vmatprep.mubr.f32.mxu0 0.0
      %1415 = vmatmul.mubr.f32.gmra.mxu0 %v1256
      %v1416 = vpop.f32.mrf.mxu0
      %v1417 = vadd.f32 0.0, %v1416
      %v1418 = vpop.f32.mrf.mxu0
      %1419 = vmatprep.mubr.f32.mxu0 0.0
      %1420 = vmatmul.mubr.f32.gmra.mxu0 %v1258
      %v1421 = vpop.f32.mrf.mxu0
      %v1422 = vadd.f32 0.0, %v1421
      %v1423 = vpop.f32.mrf.mxu0
      %1424 = vmatprep.mubr.f32.mxu0 0.0
      %1425 = vmatmul.mubr.f32.gmra.mxu0 %v1260
      %v1426 = vpop.f32.mrf.mxu0
      %v1427 = vadd.f32 0.0, %v1426
      %v1428 = vpop.f32.mrf.mxu0
      %1429 = vmatprep.mubr.f32.mxu0 0.0
      %1430 = vmatmul.mubr.f32.gmra.mxu0 %v1262
      %v1431 = vpop.f32.mrf.mxu0
      %v1432 = vadd.f32 0.0, %v1431
      %v1433 = vpop.f32.mrf.mxu0
      %1434 = vmatprep.mubr.f32.mxu0 0.0
      %1435 = vmatmul.mubr.f32.gmra.mxu0 %v1264
      %v1436 = vpop.f32.mrf.mxu0
      %v1437 = vadd.f32 0.0, %v1436
      %v1438 = vpop.f32.mrf.mxu0
      %1439 = vmatprep.mubr.f32.mxu0 0.0
      %1440 = vmatmul.mubr.f32.gmra.mxu0 %v1266
      %v1441 = vpop.f32.mrf.mxu0
      %v1442 = vadd.f32 0.0, %v1441
      %v1443 = vpop.f32.mrf.mxu0
      %1444 = vmatprep.mubr.f32.mxu0 0.0
      %1445 = vmatmul.mubr.f32.gmra.mxu0 %v1268
      %v1446 = vpop.f32.mrf.mxu0
      %v1447 = vadd.f32 0.0, %v1446
      %v1448 = vpop.f32.mrf.mxu0
      %1449 = vmatprep.mubr.f32.mxu0 0.0
      %1450 = vmatmul.mubr.f32.gmra.mxu0 %v1270
      %v1451 = vpop.f32.mrf.mxu0
      %v1452 = vadd.f32 0.0, %v1451
      %v1453 = vpop.f32.mrf.mxu0
      %1454 = vmatprep.mubr.f32.mxu0 0.0
      %1455 = vmatmul.mubr.f32.gmra.mxu0 %v1272
      %v1456 = vpop.f32.mrf.mxu0
      %v1457 = vadd.f32 0.0, %v1456
      %v1458 = vpop.f32.mrf.mxu0
      %1459 = vmatprep.mubr.f32.mxu0 0.0
      %1460 = vmatmul.mubr.f32.gmra.mxu0 %v1274
      %v1461 = vpop.f32.mrf.mxu0
      %v1462 = vadd.f32 0.0, %v1461
      %v1463 = vpop.f32.mrf.mxu0
      %1464 = vmatprep.mubr.f32.mxu0 0.0
      %1465 = vmatmul.mubr.f32.gmra.mxu0 %v1276
      %v1466 = vpop.f32.mrf.mxu0
      %v1467 = vadd.f32 0.0, %v1466
      %v1468 = vpop.f32.mrf.mxu0
      %1469 = vmatprep.mubr.f32.mxu0 0.0
      %1470 = vmatmul.mubr.f32.gmra.mxu0 %v1278
      %v1471 = vpop.f32.mrf.mxu0
      %v1472 = vadd.f32 0.0, %v1471
      %v1473 = vpop.f32.mrf.mxu0
      %1474 = vmatprep.mubr.f32.mxu0 0.0
      %1475 = vmatmul.mubr.f32.gmra.mxu0 %v1280
      %v1476 = vpop.f32.mrf.mxu0
      %v1477 = vadd.f32 0.0, %v1476
      %v1478 = vpop.f32.mrf.mxu0
      %1479 = vmatprep.mubr.f32.mxu0 0.0
      %1480 = vmatmul.mubr.f32.gmra.mxu0 %v1282
      %v1481 = vpop.f32.mrf.mxu0
      %v1482 = vadd.f32 0.0, %v1481
      %v1483 = vpop.f32.mrf.mxu0
      %1484 = vmatprep.mubr.f32.mxu0 0.0
      %1485 = vmatmul.mubr.f32.gmra.mxu0 %v1284
      %v1486 = vpop.f32.mrf.mxu0
      %v1487 = vadd.f32 0.0, %v1486
      %v1488 = vpop.f32.mrf.mxu0
      %1489 = vmatprep.mubr.f32.mxu0 0.0
      %1490 = vmatmul.mubr.f32.gmra.mxu0 %v1286
      %v1491 = vpop.f32.mrf.mxu0
      %v1492 = vadd.f32 0.0, %v1491
      %v1493 = vpop.f32.mrf.mxu0
      %1494 = vmatprep.mubr.f32.mxu0 0.0
      %1495 = vmatmul.mubr.f32.gmra.mxu0 %v1288
      %v1496 = vpop.f32.mrf.mxu0
      %v1497 = vadd.f32 0.0, %v1496
      %v1498 = vpop.f32.mrf.mxu0
      %1499 = vmatprep.mubr.f32.mxu0 0.0
      %1500 = vmatmul.mubr.f32.gmra.mxu0 %v1290
      %v1501 = vpop.f32.mrf.mxu0
      %v1502 = vadd.f32 0.0, %v1501
      %v1503 = vpop.f32.mrf.mxu0
      %1504 = vmatprep.mubr.f32.mxu0 0.0
      %1505 = vmatmul.mubr.f32.gmra.mxu0 %v1292
      %v1506 = vpop.f32.mrf.mxu0
      %v1507 = vadd.f32 0.0, %v1506
      %v1508 = vpop.f32.mrf.mxu0
      %1509 = vmatprep.mubr.f32.mxu0 0.0
      %1510 = vmatmul.mubr.f32.gmra.mxu0 %v1294
      %v1511 = vpop.f32.mrf.mxu0
      %v1512 = vadd.f32 0.0, %v1511
      %v1513 = vpop.f32.mrf.mxu0
      %1514 = vmatprep.mubr.f32.mxu0 0.0
      %1515 = vmatmul.mubr.f32.gmra.mxu0 %v1296
      %v1516 = vpop.f32.mrf.mxu0
      %v1517 = vadd.f32 0.0, %v1516
      %v1518 = vpop.f32.mrf.mxu0
      %1519 = vmatprep.mubr.f32.mxu0 0.0
      %1520 = vmatmul.mubr.f32.gmra.mxu0 %v1298
      %v1521 = vpop.f32.mrf.mxu0
      %v1522 = vadd.f32 0.0, %v1521
      %v1523 = vpop.f32.mrf.mxu0
      %1524 = vmatprep.mubr.f32.mxu0 0.0
      %1525 = vmatmul.mubr.f32.gmra.mxu0 %v1300
      %v1526 = vpop.f32.mrf.mxu0
      %v1527 = vadd.f32 0.0, %v1526
      %v1528 = vpop.f32.mrf.mxu0
      %1529 = vdwg.mxu0
      %v1530 = vadd.f32 %v1123, %v1372
      %v1531 = vadd.f32 %v1124, %v1377
      %v1532 = vadd.f32 %v1125, %v1382
      %v1533 = vadd.f32 %v1126, %v1387
      %v1534 = vadd.f32 %v1127, %v1392
      %v1535 = vadd.f32 %v1128, %v1397
      %v1536 = vadd.f32 %v1129, %v1402
      %v1537 = vadd.f32 %v1130, %v1407
      %v1538 = vadd.f32 %v1131, %v1412
      %v1539 = vadd.f32 %v1132, %v1417
      %v1540 = vadd.f32 %v1133, %v1422
      %v1541 = vadd.f32 %v1134, %v1427
      %v1542 = vadd.f32 %v1135, %v1432
      %v1543 = vadd.f32 %v1136, %v1437
      %v1544 = vadd.f32 %v1137, %v1442
      %v1545 = vadd.f32 %v1138, %v1447
      %v1546 = vadd.f32 %v1139, %v1452
      %v1547 = vadd.f32 %v1140, %v1457
      %v1548 = vadd.f32 %v1141, %v1462
      %v1549 = vadd.f32 %v1142, %v1467
      %v1550 = vadd.f32 %v1143, %v1472
      %v1551 = vadd.f32 %v1144, %v1477
      %v1552 = vadd.f32 %v1145, %v1482
      %v1553 = vadd.f32 %v1146, %v1487
      %v1554 = vadd.f32 %v1147, %v1492
      %v1555 = vadd.f32 %v1148, %v1497
      %v1556 = vadd.f32 %v1149, %v1502
      %v1557 = vadd.f32 %v1150, %v1507
      %v1558 = vadd.f32 %v1151, %v1512
      %v1559 = vadd.f32 %v1152, %v1517
      %v1560 = vadd.f32 %v1153, %v1522
      %v1561 = vadd.f32 %v1154, %v1527
      %s1562 = scalar_lea.vmem %s232, 12
      %v1563 = vld [vmem:[%s1562] sm:$0xf]
      %v1565 = vsel %vm374, %v323, 0
      %v1568 = vsel %vm374, %v324, 0
      %v1571 = vsel %vm374, %v326, 0
      %v1574 = vsel %vm374, %v327, 0
      %v1577 = vsel %vm374, %v329, 0
      %v1580 = vsel %vm374, %v330, 0
      %v1583 = vsel %vm471, %v1563, 0
      %1585 = vmatprep.subr.mxu0 0.0
      %1586 = vmatpush1.msra.mxu0 0.0
      %1587 = vmatprep.subr.mxu0 0.0
      %1588 = vmatpush1.msra.mxu0 0.0
      %1589 = vmatprep.subr.mxu0 0.0
      %1590 = vmatpush1.msra.mxu0 0.0
      %1591 = vmatprep.subr.mxu0 0.0
      %1592 = vmatpush1.msra.mxu0 0.0
      %1593 = vmatprep.subr.mxu0 0.0
      %1594 = vmatpush1.msra.mxu0 0.0
      %1595 = vmatprep.subr.mxu0 0.0
      %1596 = vmatpush1.msra.mxu0 0.0
      %1597 = vmatprep.subr.mxu0 0.0
      %1598 = vmatpush1.msra.mxu0 0.0
      %1599 = vmatprep.subr.mxu0 0.0
      %1600 = vmatpush1.msra.mxu0 0.0
      %1601 = vmatprep.subr.mxu0 0.0
      %1602 = vmatpush1.msra.mxu0 0.0
      %1603 = vmatprep.subr.mxu0 0.0
      %1604 = vmatpush1.msra.mxu0 0.0
      %1605 = vmatprep.subr.mxu0 0.0
      %1606 = vmatpush1.msra.mxu0 0.0
      %1607 = vmatprep.subr.mxu0 0.0
      %1608 = vmatpush1.msra.mxu0 0.0
      %1609 = vmatprep.subr.mxu0 0.0
      %1610 = vmatpush1.msra.mxu0 0.0
      %1611 = vmatprep.subr.mxu0 0.0
      %1612 = vmatpush1.msra.mxu0 0.0
      %1613 = vmatprep.subr.mxu0 0.0
      %1614 = vmatpush1.msra.mxu0 0.0
      %1615 = vmatprep.subr.mxu0 0.0
      %1616 = vmatpush1.msra.mxu0 %v1583
      %1617 = vmatprep.subr.mxu0 0.0
      %1618 = vmatpush2.msra.mxu0 0.0
      %1619 = vmatprep.subr.mxu0 0.0
      %1620 = vmatpush2.msra.mxu0 0.0
      %1621 = vmatprep.subr.mxu0 0.0
      %1622 = vmatpush2.msra.mxu0 0.0
      %1623 = vmatprep.subr.mxu0 0.0
      %1624 = vmatpush2.msra.mxu0 0.0
      %1625 = vmatprep.subr.mxu0 0.0
      %1626 = vmatpush2.msra.mxu0 0.0
      %1627 = vmatprep.subr.mxu0 0.0
      %1628 = vmatpush2.msra.mxu0 0.0
      %1629 = vmatprep.subr.mxu0 0.0
      %1630 = vmatpush2.msra.mxu0 0.0
      %1631 = vmatprep.subr.mxu0 0.0
      %1632 = vmatpush2.msra.mxu0 0.0
      %1633 = vmatprep.subr.mxu0 0.0
      %1634 = vmatpush2.msra.mxu0 0.0
      %1635 = vmatprep.subr.mxu0 0.0
      %1636 = vmatpush2.msra.mxu0 0.0
      %1637 = vmatprep.subr.mxu0 0.0
      %1638 = vmatpush2.msra.mxu0 0.0
      %1639 = vmatprep.subr.mxu0 0.0
      %1640 = vmatpush2.msra.mxu0 0.0
      %1641 = vmatprep.subr.mxu0 0.0
      %1642 = vmatpush2.msra.mxu0 0.0
      %1643 = vmatprep.subr.mxu0 0.0
      %1644 = vmatpush2.msra.mxu0 0.0
      %1645 = vmatprep.subr.mxu0 0.0
      %1646 = vmatpush2.msra.mxu0 0.0
      %1647 = vmatprep.subr.mxu0 0.0
      %1648 = vmatpush2.msra.mxu0 0.0
      %1649 = vmatprep.mubr.f32.mxu0 0.0
      %1650 = vmatmul.mubr.f32.gmra.mxu0 %v394
      %v1651 = vpop.f32.mrf.mxu0
      %v1652 = vadd.f32 0.0, %v1651
      %v1653 = vpop.f32.mrf.mxu0
      %1654 = vmatprep.mubr.f32.mxu0 0.0
      %1655 = vmatmul.mubr.f32.gmra.mxu0 %v397
      %v1656 = vpop.f32.mrf.mxu0
      %v1657 = vadd.f32 0.0, %v1656
      %v1658 = vpop.f32.mrf.mxu0
      %1659 = vmatprep.mubr.f32.mxu0 0.0
      %1660 = vmatmul.mubr.f32.gmra.mxu0 %v400
      %v1661 = vpop.f32.mrf.mxu0
      %v1662 = vadd.f32 0.0, %v1661
      %v1663 = vpop.f32.mrf.mxu0
      %1664 = vmatprep.mubr.f32.mxu0 0.0
      %1665 = vmatmul.mubr.f32.gmra.mxu0 %v403
      %v1666 = vpop.f32.mrf.mxu0
      %v1667 = vadd.f32 0.0, %v1666
      %v1668 = vpop.f32.mrf.mxu0
      %1669 = vmatprep.mubr.f32.mxu0 0.0
      %1670 = vmatmul.mubr.f32.gmra.mxu0 %v406
      %v1671 = vpop.f32.mrf.mxu0
      %v1672 = vadd.f32 0.0, %v1671
      %v1673 = vpop.f32.mrf.mxu0
      %1674 = vmatprep.mubr.f32.mxu0 0.0
      %1675 = vmatmul.mubr.f32.gmra.mxu0 %v409
      %v1676 = vpop.f32.mrf.mxu0
      %v1677 = vadd.f32 0.0, %v1676
      %v1678 = vpop.f32.mrf.mxu0
      %1679 = vmatprep.mubr.f32.mxu0 0.0
      %1680 = vmatmul.mubr.f32.gmra.mxu0 %v412
      %v1681 = vpop.f32.mrf.mxu0
      %v1682 = vadd.f32 0.0, %v1681
      %v1683 = vpop.f32.mrf.mxu0
      %1684 = vmatprep.mubr.f32.mxu0 0.0
      %1685 = vmatmul.mubr.f32.gmra.mxu0 %v415
      %v1686 = vpop.f32.mrf.mxu0
      %v1687 = vadd.f32 0.0, %v1686
      %v1688 = vpop.f32.mrf.mxu0
      %1689 = vmatprep.mubr.f32.mxu0 0.0
      %1690 = vmatmul.mubr.f32.gmra.mxu0 %v418
      %v1691 = vpop.f32.mrf.mxu0
      %v1692 = vadd.f32 0.0, %v1691
      %v1693 = vpop.f32.mrf.mxu0
      %1694 = vmatprep.mubr.f32.mxu0 0.0
      %1695 = vmatmul.mubr.f32.gmra.mxu0 %v421
      %v1696 = vpop.f32.mrf.mxu0
      %v1697 = vadd.f32 0.0, %v1696
      %v1698 = vpop.f32.mrf.mxu0
      %1699 = vmatprep.mubr.f32.mxu0 0.0
      %1700 = vmatmul.mubr.f32.gmra.mxu0 %v424
      %v1701 = vpop.f32.mrf.mxu0
      %v1702 = vadd.f32 0.0, %v1701
      %v1703 = vpop.f32.mrf.mxu0
      %1704 = vmatprep.mubr.f32.mxu0 0.0
      %1705 = vmatmul.mubr.f32.gmra.mxu0 %v427
      %v1706 = vpop.f32.mrf.mxu0
      %v1707 = vadd.f32 0.0, %v1706
      %v1708 = vpop.f32.mrf.mxu0
      %1709 = vmatprep.mubr.f32.mxu0 0.0
      %1710 = vmatmul.mubr.f32.gmra.mxu0 %v430
      %v1711 = vpop.f32.mrf.mxu0
      %v1712 = vadd.f32 0.0, %v1711
      %v1713 = vpop.f32.mrf.mxu0
      %1714 = vmatprep.mubr.f32.mxu0 0.0
      %1715 = vmatmul.mubr.f32.gmra.mxu0 %v433
      %v1716 = vpop.f32.mrf.mxu0
      %v1717 = vadd.f32 0.0, %v1716
      %v1718 = vpop.f32.mrf.mxu0
      %1719 = vmatprep.mubr.f32.mxu0 0.0
      %1720 = vmatmul.mubr.f32.gmra.mxu0 %v436
      %v1721 = vpop.f32.mrf.mxu0
      %v1722 = vadd.f32 0.0, %v1721
      %v1723 = vpop.f32.mrf.mxu0
      %1724 = vmatprep.mubr.f32.mxu0 0.0
      %1725 = vmatmul.mubr.f32.gmra.mxu0 %v439
      %v1726 = vpop.f32.mrf.mxu0
      %v1727 = vadd.f32 0.0, %v1726
      %v1728 = vpop.f32.mrf.mxu0
      %1729 = vmatprep.mubr.f32.mxu0 0.0
      %1730 = vmatmul.mubr.f32.gmra.mxu0 %v442
      %v1731 = vpop.f32.mrf.mxu0
      %v1732 = vadd.f32 0.0, %v1731
      %v1733 = vpop.f32.mrf.mxu0
      %1734 = vmatprep.mubr.f32.mxu0 0.0
      %1735 = vmatmul.mubr.f32.gmra.mxu0 %v445
      %v1736 = vpop.f32.mrf.mxu0
      %v1737 = vadd.f32 0.0, %v1736
      %v1738 = vpop.f32.mrf.mxu0
      %1739 = vmatprep.mubr.f32.mxu0 0.0
      %1740 = vmatmul.mubr.f32.gmra.mxu0 %v448
      %v1741 = vpop.f32.mrf.mxu0
      %v1742 = vadd.f32 0.0, %v1741
      %v1743 = vpop.f32.mrf.mxu0
      %1744 = vmatprep.mubr.f32.mxu0 0.0
      %1745 = vmatmul.mubr.f32.gmra.mxu0 %v451
      %v1746 = vpop.f32.mrf.mxu0
      %v1747 = vadd.f32 0.0, %v1746
      %v1748 = vpop.f32.mrf.mxu0
      %1749 = vmatprep.mubr.f32.mxu0 0.0
      %1750 = vmatmul.mubr.f32.gmra.mxu0 %v454
      %v1751 = vpop.f32.mrf.mxu0
      %v1752 = vadd.f32 0.0, %v1751
      %v1753 = vpop.f32.mrf.mxu0
      %1754 = vmatprep.mubr.f32.mxu0 0.0
      %1755 = vmatmul.mubr.f32.gmra.mxu0 %v457
      %v1756 = vpop.f32.mrf.mxu0
      %v1757 = vadd.f32 0.0, %v1756
      %v1758 = vpop.f32.mrf.mxu0
      %1759 = vmatprep.mubr.f32.mxu0 0.0
      %1760 = vmatmul.mubr.f32.gmra.mxu0 %v460
      %v1761 = vpop.f32.mrf.mxu0
      %v1762 = vadd.f32 0.0, %v1761
      %v1763 = vpop.f32.mrf.mxu0
      %1764 = vmatprep.mubr.f32.mxu0 0.0
      %1765 = vmatmul.mubr.f32.gmra.mxu0 %v463
      %v1766 = vpop.f32.mrf.mxu0
      %v1767 = vadd.f32 0.0, %v1766
      %v1768 = vpop.f32.mrf.mxu0
      %1769 = vmatprep.mubr.f32.mxu0 0.0
      %1770 = vmatmul.mubr.f32.gmra.mxu0 %v466
      %v1771 = vpop.f32.mrf.mxu0
      %v1772 = vadd.f32 0.0, %v1771
      %v1773 = vpop.f32.mrf.mxu0
      %1774 = vmatprep.mubr.f32.mxu0 0.0
      %1775 = vmatmul.mubr.f32.gmra.mxu0 %v469
      %v1776 = vpop.f32.mrf.mxu0
      %v1777 = vadd.f32 0.0, %v1776
      %v1778 = vpop.f32.mrf.mxu0
      %1779 = vmatprep.mubr.f32.mxu0 0.0
      %1780 = vmatmul.mubr.f32.gmra.mxu0 %v1565
      %v1781 = vpop.f32.mrf.mxu0
      %v1782 = vadd.f32 0.0, %v1781
      %v1783 = vpop.f32.mrf.mxu0
      %1784 = vmatprep.mubr.f32.mxu0 0.0
      %1785 = vmatmul.mubr.f32.gmra.mxu0 %v1568
      %v1786 = vpop.f32.mrf.mxu0
      %v1787 = vadd.f32 0.0, %v1786
      %v1788 = vpop.f32.mrf.mxu0
      %1789 = vmatprep.mubr.f32.mxu0 0.0
      %1790 = vmatmul.mubr.f32.gmra.mxu0 %v1571
      %v1791 = vpop.f32.mrf.mxu0
      %v1792 = vadd.f32 0.0, %v1791
      %v1793 = vpop.f32.mrf.mxu0
      %1794 = vmatprep.mubr.f32.mxu0 0.0
      %1795 = vmatmul.mubr.f32.gmra.mxu0 %v1574
      %v1796 = vpop.f32.mrf.mxu0
      %v1797 = vadd.f32 0.0, %v1796
      %v1798 = vpop.f32.mrf.mxu0
      %1799 = vmatprep.mubr.f32.mxu0 0.0
      %1800 = vmatmul.mubr.f32.gmra.mxu0 %v1577
      %v1801 = vpop.f32.mrf.mxu0
      %v1802 = vadd.f32 0.0, %v1801
      %v1803 = vpop.f32.mrf.mxu0
      %1804 = vmatprep.mubr.f32.mxu0 0.0
      %1805 = vmatmul.mubr.f32.gmra.mxu0 %v1580
      %v1806 = vpop.f32.mrf.mxu0
      %v1807 = vadd.f32 0.0, %v1806
      %v1808 = vpop.f32.mrf.mxu0
      %1809 = vdwg.mxu0
      %v1810 = vadd.f32 %v1530, %v1652
      %v1811 = vadd.f32 %v1531, %v1657
      %v1812 = vadd.f32 %v1532, %v1662
      %v1813 = vadd.f32 %v1533, %v1667
      %v1814 = vadd.f32 %v1534, %v1672
      %v1815 = vadd.f32 %v1535, %v1677
      %v1816 = vadd.f32 %v1536, %v1682
      %v1817 = vadd.f32 %v1537, %v1687
      %v1818 = vadd.f32 %v1538, %v1692
      %v1819 = vadd.f32 %v1539, %v1697
      %v1820 = vadd.f32 %v1540, %v1702
      %v1821 = vadd.f32 %v1541, %v1707
      %v1822 = vadd.f32 %v1542, %v1712
      %v1823 = vadd.f32 %v1543, %v1717
      %v1824 = vadd.f32 %v1544, %v1722
      %v1825 = vadd.f32 %v1545, %v1727
      %v1826 = vadd.f32 %v1546, %v1732
      %v1827 = vadd.f32 %v1547, %v1737
      %v1828 = vadd.f32 %v1548, %v1742
      %v1829 = vadd.f32 %v1549, %v1747
      %v1830 = vadd.f32 %v1550, %v1752
      %v1831 = vadd.f32 %v1551, %v1757
      %v1832 = vadd.f32 %v1552, %v1762
      %v1833 = vadd.f32 %v1553, %v1767
      %v1834 = vadd.f32 %v1554, %v1772
      %v1835 = vadd.f32 %v1555, %v1777
      %v1836 = vadd.f32 %v1556, %v1782
      %v1837 = vadd.f32 %v1557, %v1787
      %v1838 = vadd.f32 %v1558, %v1792
      %v1839 = vadd.f32 %v1559, %v1797
      %v1840 = vadd.f32 %v1560, %v1802
      %v1841 = vadd.f32 %v1561, %v1807
      %v1845 = vrot.slane %v323, 3
      %v1846 = vrot.slane %v324, 3
      %v1847 = vsel %vm748, %v1845, %v1846
      %v1848 = vrot.slane %v325, 3
      %v1849 = vsel %vm748, %v1846, %v1848
      %v1850 = vrot.slane %v326, 3
      %v1851 = vrot.slane %v327, 3
      %v1852 = vsel %vm748, %v1850, %v1851
      %v1853 = vrot.slane %v328, 3
      %v1854 = vsel %vm748, %v1851, %v1853
      %v1855 = vrot.slane %v329, 3
      %v1856 = vrot.slane %v330, 3
      %v1857 = vsel %vm748, %v1855, %v1856
      %v1858 = vrot.slane %v331, 3
      %v1859 = vsel %vm748, %v1856, %v1858
      %s1860 = scalar_lea.vmem %s232, 16
      %v1861 = vld [vmem:[%s1860] sm:$0xf]
      %v1862 = vsel %vm374, %v1847, 0
      %v1864 = vsel %vm374, %v1849, 0
      %v1866 = vsel %vm374, %v1852, 0
      %v1868 = vsel %vm374, %v1854, 0
      %v1870 = vsel %vm374, %v1857, 0
      %v1872 = vsel %vm374, %v1859, 0
      %v1875 = vsel %vm471, %v1861, 0
      %1877 = vmatprep.subr.mxu0 0.0
      %1878 = vmatpush1.msra.mxu0 0.0
      %1879 = vmatprep.subr.mxu0 0.0
      %1880 = vmatpush1.msra.mxu0 0.0
      %1881 = vmatprep.subr.mxu0 0.0
      %1882 = vmatpush1.msra.mxu0 0.0
      %1883 = vmatprep.subr.mxu0 0.0
      %1884 = vmatpush1.msra.mxu0 0.0
      %1885 = vmatprep.subr.mxu0 0.0
      %1886 = vmatpush1.msra.mxu0 0.0
      %1887 = vmatprep.subr.mxu0 0.0
      %1888 = vmatpush1.msra.mxu0 0.0
      %1889 = vmatprep.subr.mxu0 0.0
      %1890 = vmatpush1.msra.mxu0 0.0
      %1891 = vmatprep.subr.mxu0 0.0
      %1892 = vmatpush1.msra.mxu0 0.0
      %1893 = vmatprep.subr.mxu0 0.0
      %1894 = vmatpush1.msra.mxu0 0.0
      %1895 = vmatprep.subr.mxu0 0.0
      %1896 = vmatpush1.msra.mxu0 0.0
      %1897 = vmatprep.subr.mxu0 0.0
      %1898 = vmatpush1.msra.mxu0 0.0
      %1899 = vmatprep.subr.mxu0 0.0
      %1900 = vmatpush1.msra.mxu0 0.0
      %1901 = vmatprep.subr.mxu0 0.0
      %1902 = vmatpush1.msra.mxu0 0.0
      %1903 = vmatprep.subr.mxu0 0.0
      %1904 = vmatpush1.msra.mxu0 0.0
      %1905 = vmatprep.subr.mxu0 0.0
      %1906 = vmatpush1.msra.mxu0 0.0
      %1907 = vmatprep.subr.mxu0 0.0
      %1908 = vmatpush1.msra.mxu0 %v1875
      %1909 = vmatprep.subr.mxu0 0.0
      %1910 = vmatpush2.msra.mxu0 0.0
      %1911 = vmatprep.subr.mxu0 0.0
      %1912 = vmatpush2.msra.mxu0 0.0
      %1913 = vmatprep.subr.mxu0 0.0
      %1914 = vmatpush2.msra.mxu0 0.0
      %1915 = vmatprep.subr.mxu0 0.0
      %1916 = vmatpush2.msra.mxu0 0.0
      %1917 = vmatprep.subr.mxu0 0.0
      %1918 = vmatpush2.msra.mxu0 0.0
      %1919 = vmatprep.subr.mxu0 0.0
      %1920 = vmatpush2.msra.mxu0 0.0
      %1921 = vmatprep.subr.mxu0 0.0
      %1922 = vmatpush2.msra.mxu0 0.0
      %1923 = vmatprep.subr.mxu0 0.0
      %1924 = vmatpush2.msra.mxu0 0.0
      %1925 = vmatprep.subr.mxu0 0.0
      %1926 = vmatpush2.msra.mxu0 0.0
      %1927 = vmatprep.subr.mxu0 0.0
      %1928 = vmatpush2.msra.mxu0 0.0
      %1929 = vmatprep.subr.mxu0 0.0
      %1930 = vmatpush2.msra.mxu0 0.0
      %1931 = vmatprep.subr.mxu0 0.0
      %1932 = vmatpush2.msra.mxu0 0.0
      %1933 = vmatprep.subr.mxu0 0.0
      %1934 = vmatpush2.msra.mxu0 0.0
      %1935 = vmatprep.subr.mxu0 0.0
      %1936 = vmatpush2.msra.mxu0 0.0
      %1937 = vmatprep.subr.mxu0 0.0
      %1938 = vmatpush2.msra.mxu0 0.0
      %1939 = vmatprep.subr.mxu0 0.0
      %1940 = vmatpush2.msra.mxu0 0.0
      %1941 = vmatprep.mubr.f32.mxu0 0.0
      %1942 = vmatmul.mubr.f32.gmra.mxu0 %v843
      %v1943 = vpop.f32.mrf.mxu0
      %v1944 = vadd.f32 0.0, %v1943
      %v1945 = vpop.f32.mrf.mxu0
      %1946 = vmatprep.mubr.f32.mxu0 0.0
      %1947 = vmatmul.mubr.f32.gmra.mxu0 %v845
      %v1948 = vpop.f32.mrf.mxu0
      %v1949 = vadd.f32 0.0, %v1948
      %v1950 = vpop.f32.mrf.mxu0
      %1951 = vmatprep.mubr.f32.mxu0 0.0
      %1952 = vmatmul.mubr.f32.gmra.mxu0 %v847
      %v1953 = vpop.f32.mrf.mxu0
      %v1954 = vadd.f32 0.0, %v1953
      %v1955 = vpop.f32.mrf.mxu0
      %1956 = vmatprep.mubr.f32.mxu0 0.0
      %1957 = vmatmul.mubr.f32.gmra.mxu0 %v849
      %v1958 = vpop.f32.mrf.mxu0
      %v1959 = vadd.f32 0.0, %v1958
      %v1960 = vpop.f32.mrf.mxu0
      %1961 = vmatprep.mubr.f32.mxu0 0.0
      %1962 = vmatmul.mubr.f32.gmra.mxu0 %v851
      %v1963 = vpop.f32.mrf.mxu0
      %v1964 = vadd.f32 0.0, %v1963
      %v1965 = vpop.f32.mrf.mxu0
      %1966 = vmatprep.mubr.f32.mxu0 0.0
      %1967 = vmatmul.mubr.f32.gmra.mxu0 %v853
      %v1968 = vpop.f32.mrf.mxu0
      %v1969 = vadd.f32 0.0, %v1968
      %v1970 = vpop.f32.mrf.mxu0
      %1971 = vmatprep.mubr.f32.mxu0 0.0
      %1972 = vmatmul.mubr.f32.gmra.mxu0 %v855
      %v1973 = vpop.f32.mrf.mxu0
      %v1974 = vadd.f32 0.0, %v1973
      %v1975 = vpop.f32.mrf.mxu0
      %1976 = vmatprep.mubr.f32.mxu0 0.0
      %1977 = vmatmul.mubr.f32.gmra.mxu0 %v857
      %v1978 = vpop.f32.mrf.mxu0
      %v1979 = vadd.f32 0.0, %v1978
      %v1980 = vpop.f32.mrf.mxu0
      %1981 = vmatprep.mubr.f32.mxu0 0.0
      %1982 = vmatmul.mubr.f32.gmra.mxu0 %v859
      %v1983 = vpop.f32.mrf.mxu0
      %v1984 = vadd.f32 0.0, %v1983
      %v1985 = vpop.f32.mrf.mxu0
      %1986 = vmatprep.mubr.f32.mxu0 0.0
      %1987 = vmatmul.mubr.f32.gmra.mxu0 %v861
      %v1988 = vpop.f32.mrf.mxu0
      %v1989 = vadd.f32 0.0, %v1988
      %v1990 = vpop.f32.mrf.mxu0
      %1991 = vmatprep.mubr.f32.mxu0 0.0
      %1992 = vmatmul.mubr.f32.gmra.mxu0 %v863
      %v1993 = vpop.f32.mrf.mxu0
      %v1994 = vadd.f32 0.0, %v1993
      %v1995 = vpop.f32.mrf.mxu0
      %1996 = vmatprep.mubr.f32.mxu0 0.0
      %1997 = vmatmul.mubr.f32.gmra.mxu0 %v865
      %v1998 = vpop.f32.mrf.mxu0
      %v1999 = vadd.f32 0.0, %v1998
      %v2000 = vpop.f32.mrf.mxu0
      %2001 = vmatprep.mubr.f32.mxu0 0.0
      %2002 = vmatmul.mubr.f32.gmra.mxu0 %v867
      %v2003 = vpop.f32.mrf.mxu0
      %v2004 = vadd.f32 0.0, %v2003
      %v2005 = vpop.f32.mrf.mxu0
      %2006 = vmatprep.mubr.f32.mxu0 0.0
      %2007 = vmatmul.mubr.f32.gmra.mxu0 %v869
      %v2008 = vpop.f32.mrf.mxu0
      %v2009 = vadd.f32 0.0, %v2008
      %v2010 = vpop.f32.mrf.mxu0
      %2011 = vmatprep.mubr.f32.mxu0 0.0
      %2012 = vmatmul.mubr.f32.gmra.mxu0 %v871
      %v2013 = vpop.f32.mrf.mxu0
      %v2014 = vadd.f32 0.0, %v2013
      %v2015 = vpop.f32.mrf.mxu0
      %2016 = vmatprep.mubr.f32.mxu0 0.0
      %2017 = vmatmul.mubr.f32.gmra.mxu0 %v873
      %v2018 = vpop.f32.mrf.mxu0
      %v2019 = vadd.f32 0.0, %v2018
      %v2020 = vpop.f32.mrf.mxu0
      %2021 = vmatprep.mubr.f32.mxu0 0.0
      %2022 = vmatmul.mubr.f32.gmra.mxu0 %v875
      %v2023 = vpop.f32.mrf.mxu0
      %v2024 = vadd.f32 0.0, %v2023
      %v2025 = vpop.f32.mrf.mxu0
      %2026 = vmatprep.mubr.f32.mxu0 0.0
      %2027 = vmatmul.mubr.f32.gmra.mxu0 %v877
      %v2028 = vpop.f32.mrf.mxu0
      %v2029 = vadd.f32 0.0, %v2028
      %v2030 = vpop.f32.mrf.mxu0
      %2031 = vmatprep.mubr.f32.mxu0 0.0
      %2032 = vmatmul.mubr.f32.gmra.mxu0 %v879
      %v2033 = vpop.f32.mrf.mxu0
      %v2034 = vadd.f32 0.0, %v2033
      %v2035 = vpop.f32.mrf.mxu0
      %2036 = vmatprep.mubr.f32.mxu0 0.0
      %2037 = vmatmul.mubr.f32.gmra.mxu0 %v881
      %v2038 = vpop.f32.mrf.mxu0
      %v2039 = vadd.f32 0.0, %v2038
      %v2040 = vpop.f32.mrf.mxu0
      %2041 = vmatprep.mubr.f32.mxu0 0.0
      %2042 = vmatmul.mubr.f32.gmra.mxu0 %v883
      %v2043 = vpop.f32.mrf.mxu0
      %v2044 = vadd.f32 0.0, %v2043
      %v2045 = vpop.f32.mrf.mxu0
      %2046 = vmatprep.mubr.f32.mxu0 0.0
      %2047 = vmatmul.mubr.f32.gmra.mxu0 %v885
      %v2048 = vpop.f32.mrf.mxu0
      %v2049 = vadd.f32 0.0, %v2048
      %v2050 = vpop.f32.mrf.mxu0
      %2051 = vmatprep.mubr.f32.mxu0 0.0
      %2052 = vmatmul.mubr.f32.gmra.mxu0 %v887
      %v2053 = vpop.f32.mrf.mxu0
      %v2054 = vadd.f32 0.0, %v2053
      %v2055 = vpop.f32.mrf.mxu0
      %2056 = vmatprep.mubr.f32.mxu0 0.0
      %2057 = vmatmul.mubr.f32.gmra.mxu0 %v889
      %v2058 = vpop.f32.mrf.mxu0
      %v2059 = vadd.f32 0.0, %v2058
      %v2060 = vpop.f32.mrf.mxu0
      %2061 = vmatprep.mubr.f32.mxu0 0.0
      %2062 = vmatmul.mubr.f32.gmra.mxu0 %v891
      %v2063 = vpop.f32.mrf.mxu0
      %v2064 = vadd.f32 0.0, %v2063
      %v2065 = vpop.f32.mrf.mxu0
      %2066 = vmatprep.mubr.f32.mxu0 0.0
      %2067 = vmatmul.mubr.f32.gmra.mxu0 %v893
      %v2068 = vpop.f32.mrf.mxu0
      %v2069 = vadd.f32 0.0, %v2068
      %v2070 = vpop.f32.mrf.mxu0
      %2071 = vmatprep.mubr.f32.mxu0 0.0
      %2072 = vmatmul.mubr.f32.gmra.mxu0 %v1862
      %v2073 = vpop.f32.mrf.mxu0
      %v2074 = vadd.f32 0.0, %v2073
      %v2075 = vpop.f32.mrf.mxu0
      %2076 = vmatprep.mubr.f32.mxu0 0.0
      %2077 = vmatmul.mubr.f32.gmra.mxu0 %v1864
      %v2078 = vpop.f32.mrf.mxu0
      %v2079 = vadd.f32 0.0, %v2078
      %v2080 = vpop.f32.mrf.mxu0
      %2081 = vmatprep.mubr.f32.mxu0 0.0
      %2082 = vmatmul.mubr.f32.gmra.mxu0 %v1866
      %v2083 = vpop.f32.mrf.mxu0
      %v2084 = vadd.f32 0.0, %v2083
      %v2085 = vpop.f32.mrf.mxu0
      %2086 = vmatprep.mubr.f32.mxu0 0.0
      %2087 = vmatmul.mubr.f32.gmra.mxu0 %v1868
      %v2088 = vpop.f32.mrf.mxu0
      %v2089 = vadd.f32 0.0, %v2088
      %v2090 = vpop.f32.mrf.mxu0
      %2091 = vmatprep.mubr.f32.mxu0 0.0
      %2092 = vmatmul.mubr.f32.gmra.mxu0 %v1870
      %v2093 = vpop.f32.mrf.mxu0
      %v2094 = vadd.f32 0.0, %v2093
      %v2095 = vpop.f32.mrf.mxu0
      %2096 = vmatprep.mubr.f32.mxu0 0.0
      %2097 = vmatmul.mubr.f32.gmra.mxu0 %v1872
      %v2098 = vpop.f32.mrf.mxu0
      %v2099 = vadd.f32 0.0, %v2098
      %v2100 = vpop.f32.mrf.mxu0
      %2101 = vdwg.mxu0
      %v2102 = vadd.f32 %v1810, %v1944
      %v2103 = vadd.f32 %v1811, %v1949
      %v2104 = vadd.f32 %v1812, %v1954
      %v2105 = vadd.f32 %v1813, %v1959
      %v2106 = vadd.f32 %v1814, %v1964
      %v2107 = vadd.f32 %v1815, %v1969
      %v2108 = vadd.f32 %v1816, %v1974
      %v2109 = vadd.f32 %v1817, %v1979
      %v2110 = vadd.f32 %v1818, %v1984
      %v2111 = vadd.f32 %v1819, %v1989
      %v2112 = vadd.f32 %v1820, %v1994
      %v2113 = vadd.f32 %v1821, %v1999
      %v2114 = vadd.f32 %v1822, %v2004
      %v2115 = vadd.f32 %v1823, %v2009
      %v2116 = vadd.f32 %v1824, %v2014
      %v2117 = vadd.f32 %v1825, %v2019
      %v2118 = vadd.f32 %v1826, %v2024
      %v2119 = vadd.f32 %v1827, %v2029
      %v2120 = vadd.f32 %v1828, %v2034
      %v2121 = vadd.f32 %v1829, %v2039
      %v2122 = vadd.f32 %v1830, %v2044
      %v2123 = vadd.f32 %v1831, %v2049
      %v2124 = vadd.f32 %v1832, %v2054
      %v2125 = vadd.f32 %v1833, %v2059
      %v2126 = vadd.f32 %v1834, %v2064
      %v2127 = vadd.f32 %v1835, %v2069
      %v2128 = vadd.f32 %v1836, %v2074
      %v2129 = vadd.f32 %v1837, %v2079
      %v2130 = vadd.f32 %v1838, %v2084
      %v2131 = vadd.f32 %v1839, %v2089
      %v2132 = vadd.f32 %v1840, %v2094
      %v2133 = vadd.f32 %v1841, %v2099
      %v2134 = vrot.slane %v323, 6
      %v2135 = vrot.slane %v324, 6
      %v2136 = vsel %vm1155, %v2134, %v2135
      %v2137 = vrot.slane %v325, 6
      %v2138 = vsel %vm1155, %v2135, %v2137
      %v2139 = vrot.slane %v326, 6
      %v2140 = vrot.slane %v327, 6
      %v2141 = vsel %vm1155, %v2139, %v2140
      %v2142 = vrot.slane %v328, 6
      %v2143 = vsel %vm1155, %v2140, %v2142
      %v2144 = vrot.slane %v329, 6
      %v2145 = vrot.slane %v330, 6
      %v2146 = vsel %vm1155, %v2144, %v2145
      %v2147 = vrot.slane %v331, 6
      %v2148 = vsel %vm1155, %v2145, %v2147
      %s2149 = scalar_lea.vmem %s232, 20
      %v2150 = vld [vmem:[%s2149] sm:$0xf]
      %v2151 = vsel %vm374, %v2136, 0
      %v2153 = vsel %vm374, %v2138, 0
      %v2155 = vsel %vm374, %v2141, 0
      %v2157 = vsel %vm374, %v2143, 0
      %v2159 = vsel %vm374, %v2146, 0
      %v2161 = vsel %vm374, %v2148, 0
      %v2164 = vsel %vm471, %v2150, 0
      %2166 = vmatprep.subr.mxu0 0.0
      %2167 = vmatpush1.msra.mxu0 0.0
      %2168 = vmatprep.subr.mxu0 0.0
      %2169 = vmatpush1.msra.mxu0 0.0
      %2170 = vmatprep.subr.mxu0 0.0
      %2171 = vmatpush1.msra.mxu0 0.0
      %2172 = vmatprep.subr.mxu0 0.0
      %2173 = vmatpush1.msra.mxu0 0.0
      %2174 = vmatprep.subr.mxu0 0.0
      %2175 = vmatpush1.msra.mxu0 0.0
      %2176 = vmatprep.subr.mxu0 0.0
      %2177 = vmatpush1.msra.mxu0 0.0
      %2178 = vmatprep.subr.mxu0 0.0
      %2179 = vmatpush1.msra.mxu0 0.0
      %2180 = vmatprep.subr.mxu0 0.0
      %2181 = vmatpush1.msra.mxu0 0.0
      %2182 = vmatprep.subr.mxu0 0.0
      %2183 = vmatpush1.msra.mxu0 0.0
      %2184 = vmatprep.subr.mxu0 0.0
      %2185 = vmatpush1.msra.mxu0 0.0
      %2186 = vmatprep.subr.mxu0 0.0
      %2187 = vmatpush1.msra.mxu0 0.0
      %2188 = vmatprep.subr.mxu0 0.0
      %2189 = vmatpush1.msra.mxu0 0.0
      %2190 = vmatprep.subr.mxu0 0.0
      %2191 = vmatpush1.msra.mxu0 0.0
      %2192 = vmatprep.subr.mxu0 0.0
      %2193 = vmatpush1.msra.mxu0 0.0
      %2194 = vmatprep.subr.mxu0 0.0
      %2195 = vmatpush1.msra.mxu0 0.0
      %2196 = vmatprep.subr.mxu0 0.0
      %2197 = vmatpush1.msra.mxu0 %v2164
      %2198 = vmatprep.subr.mxu0 0.0
      %2199 = vmatpush2.msra.mxu0 0.0
      %2200 = vmatprep.subr.mxu0 0.0
      %2201 = vmatpush2.msra.mxu0 0.0
      %2202 = vmatprep.subr.mxu0 0.0
      %2203 = vmatpush2.msra.mxu0 0.0
      %2204 = vmatprep.subr.mxu0 0.0
      %2205 = vmatpush2.msra.mxu0 0.0
      %2206 = vmatprep.subr.mxu0 0.0
      %2207 = vmatpush2.msra.mxu0 0.0
      %2208 = vmatprep.subr.mxu0 0.0
      %2209 = vmatpush2.msra.mxu0 0.0
      %2210 = vmatprep.subr.mxu0 0.0
      %2211 = vmatpush2.msra.mxu0 0.0
      %2212 = vmatprep.subr.mxu0 0.0
      %2213 = vmatpush2.msra.mxu0 0.0
      %2214 = vmatprep.subr.mxu0 0.0
      %2215 = vmatpush2.msra.mxu0 0.0
      %2216 = vmatprep.subr.mxu0 0.0
      %2217 = vmatpush2.msra.mxu0 0.0
      %2218 = vmatprep.subr.mxu0 0.0
      %2219 = vmatpush2.msra.mxu0 0.0
      %2220 = vmatprep.subr.mxu0 0.0
      %2221 = vmatpush2.msra.mxu0 0.0
      %2222 = vmatprep.subr.mxu0 0.0
      %2223 = vmatpush2.msra.mxu0 0.0
      %2224 = vmatprep.subr.mxu0 0.0
      %2225 = vmatpush2.msra.mxu0 0.0
      %2226 = vmatprep.subr.mxu0 0.0
      %2227 = vmatpush2.msra.mxu0 0.0
      %2228 = vmatprep.subr.mxu0 0.0
      %2229 = vmatpush2.msra.mxu0 0.0
      %2230 = vmatprep.mubr.f32.mxu0 0.0
      %2231 = vmatmul.mubr.f32.gmra.mxu0 %v1250
      %v2232 = vpop.f32.mrf.mxu0
      %v2233 = vadd.f32 0.0, %v2232
      %v2234 = vpop.f32.mrf.mxu0
      %2235 = vmatprep.mubr.f32.mxu0 0.0
      %2236 = vmatmul.mubr.f32.gmra.mxu0 %v1252
      %v2237 = vpop.f32.mrf.mxu0
      %v2238 = vadd.f32 0.0, %v2237
      %v2239 = vpop.f32.mrf.mxu0
      %2240 = vmatprep.mubr.f32.mxu0 0.0
      %2241 = vmatmul.mubr.f32.gmra.mxu0 %v1254
      %v2242 = vpop.f32.mrf.mxu0
      %v2243 = vadd.f32 0.0, %v2242
      %v2244 = vpop.f32.mrf.mxu0
      %2245 = vmatprep.mubr.f32.mxu0 0.0
      %2246 = vmatmul.mubr.f32.gmra.mxu0 %v1256
      %v2247 = vpop.f32.mrf.mxu0
      %v2248 = vadd.f32 0.0, %v2247
      %v2249 = vpop.f32.mrf.mxu0
      %2250 = vmatprep.mubr.f32.mxu0 0.0
      %2251 = vmatmul.mubr.f32.gmra.mxu0 %v1258
      %v2252 = vpop.f32.mrf.mxu0
      %v2253 = vadd.f32 0.0, %v2252
      %v2254 = vpop.f32.mrf.mxu0
      %2255 = vmatprep.mubr.f32.mxu0 0.0
      %2256 = vmatmul.mubr.f32.gmra.mxu0 %v1260
      %v2257 = vpop.f32.mrf.mxu0
      %v2258 = vadd.f32 0.0, %v2257
      %v2259 = vpop.f32.mrf.mxu0
      %2260 = vmatprep.mubr.f32.mxu0 0.0
      %2261 = vmatmul.mubr.f32.gmra.mxu0 %v1262
      %v2262 = vpop.f32.mrf.mxu0
      %v2263 = vadd.f32 0.0, %v2262
      %v2264 = vpop.f32.mrf.mxu0
      %2265 = vmatprep.mubr.f32.mxu0 0.0
      %2266 = vmatmul.mubr.f32.gmra.mxu0 %v1264
      %v2267 = vpop.f32.mrf.mxu0
      %v2268 = vadd.f32 0.0, %v2267
      %v2269 = vpop.f32.mrf.mxu0
      %2270 = vmatprep.mubr.f32.mxu0 0.0
      %2271 = vmatmul.mubr.f32.gmra.mxu0 %v1266
      %v2272 = vpop.f32.mrf.mxu0
      %v2273 = vadd.f32 0.0, %v2272
      %v2274 = vpop.f32.mrf.mxu0
      %2275 = vmatprep.mubr.f32.mxu0 0.0
      %2276 = vmatmul.mubr.f32.gmra.mxu0 %v1268
      %v2277 = vpop.f32.mrf.mxu0
      %v2278 = vadd.f32 0.0, %v2277
      %v2279 = vpop.f32.mrf.mxu0
      %2280 = vmatprep.mubr.f32.mxu0 0.0
      %2281 = vmatmul.mubr.f32.gmra.mxu0 %v1270
      %v2282 = vpop.f32.mrf.mxu0
      %v2283 = vadd.f32 0.0, %v2282
      %v2284 = vpop.f32.mrf.mxu0
      %2285 = vmatprep.mubr.f32.mxu0 0.0
      %2286 = vmatmul.mubr.f32.gmra.mxu0 %v1272
      %v2287 = vpop.f32.mrf.mxu0
      %v2288 = vadd.f32 0.0, %v2287
      %v2289 = vpop.f32.mrf.mxu0
      %2290 = vmatprep.mubr.f32.mxu0 0.0
      %2291 = vmatmul.mubr.f32.gmra.mxu0 %v1274
      %v2292 = vpop.f32.mrf.mxu0
      %v2293 = vadd.f32 0.0, %v2292
      %v2294 = vpop.f32.mrf.mxu0
      %2295 = vmatprep.mubr.f32.mxu0 0.0
      %2296 = vmatmul.mubr.f32.gmra.mxu0 %v1276
      %v2297 = vpop.f32.mrf.mxu0
      %v2298 = vadd.f32 0.0, %v2297
      %v2299 = vpop.f32.mrf.mxu0
      %2300 = vmatprep.mubr.f32.mxu0 0.0
      %2301 = vmatmul.mubr.f32.gmra.mxu0 %v1278
      %v2302 = vpop.f32.mrf.mxu0
      %v2303 = vadd.f32 0.0, %v2302
      %v2304 = vpop.f32.mrf.mxu0
      %2305 = vmatprep.mubr.f32.mxu0 0.0
      %2306 = vmatmul.mubr.f32.gmra.mxu0 %v1280
      %v2307 = vpop.f32.mrf.mxu0
      %v2308 = vadd.f32 0.0, %v2307
      %v2309 = vpop.f32.mrf.mxu0
      %2310 = vmatprep.mubr.f32.mxu0 0.0
      %2311 = vmatmul.mubr.f32.gmra.mxu0 %v1282
      %v2312 = vpop.f32.mrf.mxu0
      %v2313 = vadd.f32 0.0, %v2312
      %v2314 = vpop.f32.mrf.mxu0
      %2315 = vmatprep.mubr.f32.mxu0 0.0
      %2316 = vmatmul.mubr.f32.gmra.mxu0 %v1284
      %v2317 = vpop.f32.mrf.mxu0
      %v2318 = vadd.f32 0.0, %v2317
      %v2319 = vpop.f32.mrf.mxu0
      %2320 = vmatprep.mubr.f32.mxu0 0.0
      %2321 = vmatmul.mubr.f32.gmra.mxu0 %v1286
      %v2322 = vpop.f32.mrf.mxu0
      %v2323 = vadd.f32 0.0, %v2322
      %v2324 = vpop.f32.mrf.mxu0
      %2325 = vmatprep.mubr.f32.mxu0 0.0
      %2326 = vmatmul.mubr.f32.gmra.mxu0 %v1288
      %v2327 = vpop.f32.mrf.mxu0
      %v2328 = vadd.f32 0.0, %v2327
      %v2329 = vpop.f32.mrf.mxu0
      %2330 = vmatprep.mubr.f32.mxu0 0.0
      %2331 = vmatmul.mubr.f32.gmra.mxu0 %v1290
      %v2332 = vpop.f32.mrf.mxu0
      %v2333 = vadd.f32 0.0, %v2332
      %v2334 = vpop.f32.mrf.mxu0
      %2335 = vmatprep.mubr.f32.mxu0 0.0
      %2336 = vmatmul.mubr.f32.gmra.mxu0 %v1292
      %v2337 = vpop.f32.mrf.mxu0
      %v2338 = vadd.f32 0.0, %v2337
      %v2339 = vpop.f32.mrf.mxu0
      %2340 = vmatprep.mubr.f32.mxu0 0.0
      %2341 = vmatmul.mubr.f32.gmra.mxu0 %v1294
      %v2342 = vpop.f32.mrf.mxu0
      %v2343 = vadd.f32 0.0, %v2342
      %v2344 = vpop.f32.mrf.mxu0
      %2345 = vmatprep.mubr.f32.mxu0 0.0
      %2346 = vmatmul.mubr.f32.gmra.mxu0 %v1296
      %v2347 = vpop.f32.mrf.mxu0
      %v2348 = vadd.f32 0.0, %v2347
      %v2349 = vpop.f32.mrf.mxu0
      %2350 = vmatprep.mubr.f32.mxu0 0.0
      %2351 = vmatmul.mubr.f32.gmra.mxu0 %v1298
      %v2352 = vpop.f32.mrf.mxu0
      %v2353 = vadd.f32 0.0, %v2352
      %v2354 = vpop.f32.mrf.mxu0
      %2355 = vmatprep.mubr.f32.mxu0 0.0
      %2356 = vmatmul.mubr.f32.gmra.mxu0 %v1300
      %v2357 = vpop.f32.mrf.mxu0
      %v2358 = vadd.f32 0.0, %v2357
      %v2359 = vpop.f32.mrf.mxu0
      %2360 = vmatprep.mubr.f32.mxu0 0.0
      %2361 = vmatmul.mubr.f32.gmra.mxu0 %v2151
      %v2362 = vpop.f32.mrf.mxu0
      %v2363 = vadd.f32 0.0, %v2362
      %v2364 = vpop.f32.mrf.mxu0
      %2365 = vmatprep.mubr.f32.mxu0 0.0
      %2366 = vmatmul.mubr.f32.gmra.mxu0 %v2153
      %v2367 = vpop.f32.mrf.mxu0
      %v2368 = vadd.f32 0.0, %v2367
      %v2369 = vpop.f32.mrf.mxu0
      %2370 = vmatprep.mubr.f32.mxu0 0.0
      %2371 = vmatmul.mubr.f32.gmra.mxu0 %v2155
      %v2372 = vpop.f32.mrf.mxu0
      %v2373 = vadd.f32 0.0, %v2372
      %v2374 = vpop.f32.mrf.mxu0
      %2375 = vmatprep.mubr.f32.mxu0 0.0
      %2376 = vmatmul.mubr.f32.gmra.mxu0 %v2157
      %v2377 = vpop.f32.mrf.mxu0
      %v2378 = vadd.f32 0.0, %v2377
      %v2379 = vpop.f32.mrf.mxu0
      %2380 = vmatprep.mubr.f32.mxu0 0.0
      %2381 = vmatmul.mubr.f32.gmra.mxu0 %v2159
      %v2382 = vpop.f32.mrf.mxu0
      %v2383 = vadd.f32 0.0, %v2382
      %v2384 = vpop.f32.mrf.mxu0
      %2385 = vmatprep.mubr.f32.mxu0 0.0
      %2386 = vmatmul.mubr.f32.gmra.mxu0 %v2161
      %v2387 = vpop.f32.mrf.mxu0
      %v2388 = vadd.f32 0.0, %v2387
      %v2389 = vpop.f32.mrf.mxu0
      %2390 = vdwg.mxu0
      %v2391 = vadd.f32 %v2102, %v2233
      %v2392 = vadd.f32 %v2103, %v2238
      %v2393 = vadd.f32 %v2104, %v2243
      %v2394 = vadd.f32 %v2105, %v2248
      %v2395 = vadd.f32 %v2106, %v2253
      %v2396 = vadd.f32 %v2107, %v2258
      %v2397 = vadd.f32 %v2108, %v2263
      %v2398 = vadd.f32 %v2109, %v2268
      %v2399 = vadd.f32 %v2110, %v2273
      %v2400 = vadd.f32 %v2111, %v2278
      %v2401 = vadd.f32 %v2112, %v2283
      %v2402 = vadd.f32 %v2113, %v2288
      %v2403 = vadd.f32 %v2114, %v2293
      %v2404 = vadd.f32 %v2115, %v2298
      %v2405 = vadd.f32 %v2116, %v2303
      %v2406 = vadd.f32 %v2117, %v2308
      %v2407 = vadd.f32 %v2118, %v2313
      %v2408 = vadd.f32 %v2119, %v2318
      %v2409 = vadd.f32 %v2120, %v2323
      %v2410 = vadd.f32 %v2121, %v2328
      %v2411 = vadd.f32 %v2122, %v2333
      %v2412 = vadd.f32 %v2123, %v2338
      %v2413 = vadd.f32 %v2124, %v2343
      %v2414 = vadd.f32 %v2125, %v2348
      %v2415 = vadd.f32 %v2126, %v2353
      %v2416 = vadd.f32 %v2127, %v2358
      %v2417 = vadd.f32 %v2128, %v2363
      %v2418 = vadd.f32 %v2129, %v2368
      %v2419 = vadd.f32 %v2130, %v2373
      %v2420 = vadd.f32 %v2131, %v2378
      %v2421 = vadd.f32 %v2132, %v2383
      %v2422 = vadd.f32 %v2133, %v2388
      %s2423 = scalar_lea.vmem %s232, 24
      %v2424 = vld [vmem:[%s2423] sm:$0xf]
      %v2426 = vsel %vm374, %v332, 0
      %v2429 = vsel %vm374, %v333, 0
      %v2432 = vsel %vm374, %v335, 0
      %v2435 = vsel %vm374, %v336, 0
      %v2438 = vsel %vm374, %v338, 0
      %v2441 = vsel %vm374, %v339, 0
      %v2444 = vsel %vm471, %v2424, 0
      %2446 = vmatprep.subr.mxu0 0.0
      %2447 = vmatpush1.msra.mxu0 0.0
      %2448 = vmatprep.subr.mxu0 0.0
      %2449 = vmatpush1.msra.mxu0 0.0
      %2450 = vmatprep.subr.mxu0 0.0
      %2451 = vmatpush1.msra.mxu0 0.0
      %2452 = vmatprep.subr.mxu0 0.0
      %2453 = vmatpush1.msra.mxu0 0.0
      %2454 = vmatprep.subr.mxu0 0.0
      %2455 = vmatpush1.msra.mxu0 0.0
      %2456 = vmatprep.subr.mxu0 0.0
      %2457 = vmatpush1.msra.mxu0 0.0
      %2458 = vmatprep.subr.mxu0 0.0
      %2459 = vmatpush1.msra.mxu0 0.0
      %2460 = vmatprep.subr.mxu0 0.0
      %2461 = vmatpush1.msra.mxu0 0.0
      %2462 = vmatprep.subr.mxu0 0.0
      %2463 = vmatpush1.msra.mxu0 0.0
      %2464 = vmatprep.subr.mxu0 0.0
      %2465 = vmatpush1.msra.mxu0 0.0
      %2466 = vmatprep.subr.mxu0 0.0
      %2467 = vmatpush1.msra.mxu0 0.0
      %2468 = vmatprep.subr.mxu0 0.0
      %2469 = vmatpush1.msra.mxu0 0.0
      %2470 = vmatprep.subr.mxu0 0.0
      %2471 = vmatpush1.msra.mxu0 0.0
      %2472 = vmatprep.subr.mxu0 0.0
      %2473 = vmatpush1.msra.mxu0 0.0
      %2474 = vmatprep.subr.mxu0 0.0
      %2475 = vmatpush1.msra.mxu0 0.0
      %2476 = vmatprep.subr.mxu0 0.0
      %2477 = vmatpush1.msra.mxu0 %v2444
      %2478 = vmatprep.subr.mxu0 0.0
      %2479 = vmatpush2.msra.mxu0 0.0
      %2480 = vmatprep.subr.mxu0 0.0
      %2481 = vmatpush2.msra.mxu0 0.0
      %2482 = vmatprep.subr.mxu0 0.0
      %2483 = vmatpush2.msra.mxu0 0.0
      %2484 = vmatprep.subr.mxu0 0.0
      %2485 = vmatpush2.msra.mxu0 0.0
      %2486 = vmatprep.subr.mxu0 0.0
      %2487 = vmatpush2.msra.mxu0 0.0
      %2488 = vmatprep.subr.mxu0 0.0
      %2489 = vmatpush2.msra.mxu0 0.0
      %2490 = vmatprep.subr.mxu0 0.0
      %2491 = vmatpush2.msra.mxu0 0.0
      %2492 = vmatprep.subr.mxu0 0.0
      %2493 = vmatpush2.msra.mxu0 0.0
      %2494 = vmatprep.subr.mxu0 0.0
      %2495 = vmatpush2.msra.mxu0 0.0
      %2496 = vmatprep.subr.mxu0 0.0
      %2497 = vmatpush2.msra.mxu0 0.0
      %2498 = vmatprep.subr.mxu0 0.0
      %2499 = vmatpush2.msra.mxu0 0.0
      %2500 = vmatprep.subr.mxu0 0.0
      %2501 = vmatpush2.msra.mxu0 0.0
      %2502 = vmatprep.subr.mxu0 0.0
      %2503 = vmatpush2.msra.mxu0 0.0
      %2504 = vmatprep.subr.mxu0 0.0
      %2505 = vmatpush2.msra.mxu0 0.0
      %2506 = vmatprep.subr.mxu0 0.0
      %2507 = vmatpush2.msra.mxu0 0.0
      %2508 = vmatprep.subr.mxu0 0.0
      %2509 = vmatpush2.msra.mxu0 0.0
      %2510 = vmatprep.mubr.f32.mxu0 0.0
      %2511 = vmatmul.mubr.f32.gmra.mxu0 %v412
      %v2512 = vpop.f32.mrf.mxu0
      %v2513 = vadd.f32 0.0, %v2512
      %v2514 = vpop.f32.mrf.mxu0
      %2515 = vmatprep.mubr.f32.mxu0 0.0
      %2516 = vmatmul.mubr.f32.gmra.mxu0 %v415
      %v2517 = vpop.f32.mrf.mxu0
      %v2518 = vadd.f32 0.0, %v2517
      %v2519 = vpop.f32.mrf.mxu0
      %2520 = vmatprep.mubr.f32.mxu0 0.0
      %2521 = vmatmul.mubr.f32.gmra.mxu0 %v418
      %v2522 = vpop.f32.mrf.mxu0
      %v2523 = vadd.f32 0.0, %v2522
      %v2524 = vpop.f32.mrf.mxu0
      %2525 = vmatprep.mubr.f32.mxu0 0.0
      %2526 = vmatmul.mubr.f32.gmra.mxu0 %v421
      %v2527 = vpop.f32.mrf.mxu0
      %v2528 = vadd.f32 0.0, %v2527
      %v2529 = vpop.f32.mrf.mxu0
      %2530 = vmatprep.mubr.f32.mxu0 0.0
      %2531 = vmatmul.mubr.f32.gmra.mxu0 %v424
      %v2532 = vpop.f32.mrf.mxu0
      %v2533 = vadd.f32 0.0, %v2532
      %v2534 = vpop.f32.mrf.mxu0
      %2535 = vmatprep.mubr.f32.mxu0 0.0
      %2536 = vmatmul.mubr.f32.gmra.mxu0 %v427
      %v2537 = vpop.f32.mrf.mxu0
      %v2538 = vadd.f32 0.0, %v2537
      %v2539 = vpop.f32.mrf.mxu0
      %2540 = vmatprep.mubr.f32.mxu0 0.0
      %2541 = vmatmul.mubr.f32.gmra.mxu0 %v430
      %v2542 = vpop.f32.mrf.mxu0
      %v2543 = vadd.f32 0.0, %v2542
      %v2544 = vpop.f32.mrf.mxu0
      %2545 = vmatprep.mubr.f32.mxu0 0.0
      %2546 = vmatmul.mubr.f32.gmra.mxu0 %v433
      %v2547 = vpop.f32.mrf.mxu0
      %v2548 = vadd.f32 0.0, %v2547
      %v2549 = vpop.f32.mrf.mxu0
      %2550 = vmatprep.mubr.f32.mxu0 0.0
      %2551 = vmatmul.mubr.f32.gmra.mxu0 %v436
      %v2552 = vpop.f32.mrf.mxu0
      %v2553 = vadd.f32 0.0, %v2552
      %v2554 = vpop.f32.mrf.mxu0
      %2555 = vmatprep.mubr.f32.mxu0 0.0
      %2556 = vmatmul.mubr.f32.gmra.mxu0 %v439
      %v2557 = vpop.f32.mrf.mxu0
      %v2558 = vadd.f32 0.0, %v2557
      %v2559 = vpop.f32.mrf.mxu0
      %2560 = vmatprep.mubr.f32.mxu0 0.0
      %2561 = vmatmul.mubr.f32.gmra.mxu0 %v442
      %v2562 = vpop.f32.mrf.mxu0
      %v2563 = vadd.f32 0.0, %v2562
      %v2564 = vpop.f32.mrf.mxu0
      %2565 = vmatprep.mubr.f32.mxu0 0.0
      %2566 = vmatmul.mubr.f32.gmra.mxu0 %v445
      %v2567 = vpop.f32.mrf.mxu0
      %v2568 = vadd.f32 0.0, %v2567
      %v2569 = vpop.f32.mrf.mxu0
      %2570 = vmatprep.mubr.f32.mxu0 0.0
      %2571 = vmatmul.mubr.f32.gmra.mxu0 %v448
      %v2572 = vpop.f32.mrf.mxu0
      %v2573 = vadd.f32 0.0, %v2572
      %v2574 = vpop.f32.mrf.mxu0
      %2575 = vmatprep.mubr.f32.mxu0 0.0
      %2576 = vmatmul.mubr.f32.gmra.mxu0 %v451
      %v2577 = vpop.f32.mrf.mxu0
      %v2578 = vadd.f32 0.0, %v2577
      %v2579 = vpop.f32.mrf.mxu0
      %2580 = vmatprep.mubr.f32.mxu0 0.0
      %2581 = vmatmul.mubr.f32.gmra.mxu0 %v454
      %v2582 = vpop.f32.mrf.mxu0
      %v2583 = vadd.f32 0.0, %v2582
      %v2584 = vpop.f32.mrf.mxu0
      %2585 = vmatprep.mubr.f32.mxu0 0.0
      %2586 = vmatmul.mubr.f32.gmra.mxu0 %v457
      %v2587 = vpop.f32.mrf.mxu0
      %v2588 = vadd.f32 0.0, %v2587
      %v2589 = vpop.f32.mrf.mxu0
      %2590 = vmatprep.mubr.f32.mxu0 0.0
      %2591 = vmatmul.mubr.f32.gmra.mxu0 %v460
      %v2592 = vpop.f32.mrf.mxu0
      %v2593 = vadd.f32 0.0, %v2592
      %v2594 = vpop.f32.mrf.mxu0
      %2595 = vmatprep.mubr.f32.mxu0 0.0
      %2596 = vmatmul.mubr.f32.gmra.mxu0 %v463
      %v2597 = vpop.f32.mrf.mxu0
      %v2598 = vadd.f32 0.0, %v2597
      %v2599 = vpop.f32.mrf.mxu0
      %2600 = vmatprep.mubr.f32.mxu0 0.0
      %2601 = vmatmul.mubr.f32.gmra.mxu0 %v466
      %v2602 = vpop.f32.mrf.mxu0
      %v2603 = vadd.f32 0.0, %v2602
      %v2604 = vpop.f32.mrf.mxu0
      %2605 = vmatprep.mubr.f32.mxu0 0.0
      %2606 = vmatmul.mubr.f32.gmra.mxu0 %v469
      %v2607 = vpop.f32.mrf.mxu0
      %v2608 = vadd.f32 0.0, %v2607
      %v2609 = vpop.f32.mrf.mxu0
      %2610 = vmatprep.mubr.f32.mxu0 0.0
      %2611 = vmatmul.mubr.f32.gmra.mxu0 %v1565
      %v2612 = vpop.f32.mrf.mxu0
      %v2613 = vadd.f32 0.0, %v2612
      %v2614 = vpop.f32.mrf.mxu0
      %2615 = vmatprep.mubr.f32.mxu0 0.0
      %2616 = vmatmul.mubr.f32.gmra.mxu0 %v1568
      %v2617 = vpop.f32.mrf.mxu0
      %v2618 = vadd.f32 0.0, %v2617
      %v2619 = vpop.f32.mrf.mxu0
      %2620 = vmatprep.mubr.f32.mxu0 0.0
      %2621 = vmatmul.mubr.f32.gmra.mxu0 %v1571
      %v2622 = vpop.f32.mrf.mxu0
      %v2623 = vadd.f32 0.0, %v2622
      %v2624 = vpop.f32.mrf.mxu0
      %2625 = vmatprep.mubr.f32.mxu0 0.0
      %2626 = vmatmul.mubr.f32.gmra.mxu0 %v1574
      %v2627 = vpop.f32.mrf.mxu0
      %v2628 = vadd.f32 0.0, %v2627
      %v2629 = vpop.f32.mrf.mxu0
      %2630 = vmatprep.mubr.f32.mxu0 0.0
      %2631 = vmatmul.mubr.f32.gmra.mxu0 %v1577
      %v2632 = vpop.f32.mrf.mxu0
      %v2633 = vadd.f32 0.0, %v2632
      %v2634 = vpop.f32.mrf.mxu0
      %2635 = vmatprep.mubr.f32.mxu0 0.0
      %2636 = vmatmul.mubr.f32.gmra.mxu0 %v1580
      %v2637 = vpop.f32.mrf.mxu0
      %v2638 = vadd.f32 0.0, %v2637
      %v2639 = vpop.f32.mrf.mxu0
      %2640 = vmatprep.mubr.f32.mxu0 0.0
      %2641 = vmatmul.mubr.f32.gmra.mxu0 %v2426
      %v2642 = vpop.f32.mrf.mxu0
      %v2643 = vadd.f32 0.0, %v2642
      %v2644 = vpop.f32.mrf.mxu0
      %2645 = vmatprep.mubr.f32.mxu0 0.0
      %2646 = vmatmul.mubr.f32.gmra.mxu0 %v2429
      %v2647 = vpop.f32.mrf.mxu0
      %v2648 = vadd.f32 0.0, %v2647
      %v2649 = vpop.f32.mrf.mxu0
      %2650 = vmatprep.mubr.f32.mxu0 0.0
      %2651 = vmatmul.mubr.f32.gmra.mxu0 %v2432
      %v2652 = vpop.f32.mrf.mxu0
      %v2653 = vadd.f32 0.0, %v2652
      %v2654 = vpop.f32.mrf.mxu0
      %2655 = vmatprep.mubr.f32.mxu0 0.0
      %2656 = vmatmul.mubr.f32.gmra.mxu0 %v2435
      %v2657 = vpop.f32.mrf.mxu0
      %v2658 = vadd.f32 0.0, %v2657
      %v2659 = vpop.f32.mrf.mxu0
      %2660 = vmatprep.mubr.f32.mxu0 0.0
      %2661 = vmatmul.mubr.f32.gmra.mxu0 %v2438
      %v2662 = vpop.f32.mrf.mxu0
      %v2663 = vadd.f32 0.0, %v2662
      %v2664 = vpop.f32.mrf.mxu0
      %2665 = vmatprep.mubr.f32.mxu0 0.0
      %2666 = vmatmul.mubr.f32.gmra.mxu0 %v2441
      %v2667 = vpop.f32.mrf.mxu0
      %v2668 = vadd.f32 0.0, %v2667
      %v2669 = vpop.f32.mrf.mxu0
      %2670 = vdwg.mxu0
      %v2671 = vadd.f32 %v2391, %v2513
      %v2672 = vadd.f32 %v2392, %v2518
      %v2673 = vadd.f32 %v2393, %v2523
      %v2674 = vadd.f32 %v2394, %v2528
      %v2675 = vadd.f32 %v2395, %v2533
      %v2676 = vadd.f32 %v2396, %v2538
      %v2677 = vadd.f32 %v2397, %v2543
      %v2678 = vadd.f32 %v2398, %v2548
      %v2679 = vadd.f32 %v2399, %v2553
      %v2680 = vadd.f32 %v2400, %v2558
      %v2681 = vadd.f32 %v2401, %v2563
      %v2682 = vadd.f32 %v2402, %v2568
      %v2683 = vadd.f32 %v2403, %v2573
      %v2684 = vadd.f32 %v2404, %v2578
      %v2685 = vadd.f32 %v2405, %v2583
      %v2686 = vadd.f32 %v2406, %v2588
      %v2687 = vadd.f32 %v2407, %v2593
      %v2688 = vadd.f32 %v2408, %v2598
      %v2689 = vadd.f32 %v2409, %v2603
      %v2690 = vadd.f32 %v2410, %v2608
      %v2691 = vadd.f32 %v2411, %v2613
      %v2692 = vadd.f32 %v2412, %v2618
      %v2693 = vadd.f32 %v2413, %v2623
      %v2694 = vadd.f32 %v2414, %v2628
      %v2695 = vadd.f32 %v2415, %v2633
      %v2696 = vadd.f32 %v2416, %v2638
      %v2697 = vadd.f32 %v2417, %v2643
      %v2698 = vadd.f32 %v2418, %v2648
      %v2699 = vadd.f32 %v2419, %v2653
      %v2700 = vadd.f32 %v2420, %v2658
      %v2701 = vadd.f32 %v2421, %v2663
      %v2702 = vadd.f32 %v2422, %v2668
      %v2706 = vrot.slane %v332, 3
      %v2707 = vrot.slane %v333, 3
      %v2708 = vsel %vm748, %v2706, %v2707
      %v2709 = vrot.slane %v334, 3
      %v2710 = vsel %vm748, %v2707, %v2709
      %v2711 = vrot.slane %v335, 3
      %v2712 = vrot.slane %v336, 3
      %v2713 = vsel %vm748, %v2711, %v2712
      %v2714 = vrot.slane %v337, 3
      %v2715 = vsel %vm748, %v2712, %v2714
      %v2716 = vrot.slane %v338, 3
      %v2717 = vrot.slane %v339, 3
      %v2718 = vsel %vm748, %v2716, %v2717
      %v2719 = vrot.slane %v340, 3
      %v2720 = vsel %vm748, %v2717, %v2719
      %s2721 = scalar_lea.vmem %s232, 28
      %v2722 = vld [vmem:[%s2721] sm:$0xf]
      %v2723 = vsel %vm374, %v2708, 0
      %v2725 = vsel %vm374, %v2710, 0
      %v2727 = vsel %vm374, %v2713, 0
      %v2729 = vsel %vm374, %v2715, 0
      %v2731 = vsel %vm374, %v2718, 0
      %v2733 = vsel %vm374, %v2720, 0
      %v2736 = vsel %vm471, %v2722, 0
      %2738 = vmatprep.subr.mxu0 0.0
      %2739 = vmatpush1.msra.mxu0 0.0
      %2740 = vmatprep.subr.mxu0 0.0
      %2741 = vmatpush1.msra.mxu0 0.0
      %2742 = vmatprep.subr.mxu0 0.0
      %2743 = vmatpush1.msra.mxu0 0.0
      %2744 = vmatprep.subr.mxu0 0.0
      %2745 = vmatpush1.msra.mxu0 0.0
      %2746 = vmatprep.subr.mxu0 0.0
      %2747 = vmatpush1.msra.mxu0 0.0
      %2748 = vmatprep.subr.mxu0 0.0
      %2749 = vmatpush1.msra.mxu0 0.0
      %2750 = vmatprep.subr.mxu0 0.0
      %2751 = vmatpush1.msra.mxu0 0.0
      %2752 = vmatprep.subr.mxu0 0.0
      %2753 = vmatpush1.msra.mxu0 0.0
      %2754 = vmatprep.subr.mxu0 0.0
      %2755 = vmatpush1.msra.mxu0 0.0
      %2756 = vmatprep.subr.mxu0 0.0
      %2757 = vmatpush1.msra.mxu0 0.0
      %2758 = vmatprep.subr.mxu0 0.0
      %2759 = vmatpush1.msra.mxu0 0.0
      %2760 = vmatprep.subr.mxu0 0.0
      %2761 = vmatpush1.msra.mxu0 0.0
      %2762 = vmatprep.subr.mxu0 0.0
      %2763 = vmatpush1.msra.mxu0 0.0
      %2764 = vmatprep.subr.mxu0 0.0
      %2765 = vmatpush1.msra.mxu0 0.0
      %2766 = vmatprep.subr.mxu0 0.0
      %2767 = vmatpush1.msra.mxu0 0.0
      %2768 = vmatprep.subr.mxu0 0.0
      %2769 = vmatpush1.msra.mxu0 %v2736
      %2770 = vmatprep.subr.mxu0 0.0
      %2771 = vmatpush2.msra.mxu0 0.0
      %2772 = vmatprep.subr.mxu0 0.0
      %2773 = vmatpush2.msra.mxu0 0.0
      %2774 = vmatprep.subr.mxu0 0.0
      %2775 = vmatpush2.msra.mxu0 0.0
      %2776 = vmatprep.subr.mxu0 0.0
      %2777 = vmatpush2.msra.mxu0 0.0
      %2778 = vmatprep.subr.mxu0 0.0
      %2779 = vmatpush2.msra.mxu0 0.0
      %2780 = vmatprep.subr.mxu0 0.0
      %2781 = vmatpush2.msra.mxu0 0.0
      %2782 = vmatprep.subr.mxu0 0.0
      %2783 = vmatpush2.msra.mxu0 0.0
      %2784 = vmatprep.subr.mxu0 0.0
      %2785 = vmatpush2.msra.mxu0 0.0
      %2786 = vmatprep.subr.mxu0 0.0
      %2787 = vmatpush2.msra.mxu0 0.0
      %2788 = vmatprep.subr.mxu0 0.0
      %2789 = vmatpush2.msra.mxu0 0.0
      %2790 = vmatprep.subr.mxu0 0.0
      %2791 = vmatpush2.msra.mxu0 0.0
      %2792 = vmatprep.subr.mxu0 0.0
      %2793 = vmatpush2.msra.mxu0 0.0
      %2794 = vmatprep.subr.mxu0 0.0
      %2795 = vmatpush2.msra.mxu0 0.0
      %2796 = vmatprep.subr.mxu0 0.0
      %2797 = vmatpush2.msra.mxu0 0.0
      %2798 = vmatprep.subr.mxu0 0.0
      %2799 = vmatpush2.msra.mxu0 0.0
      %2800 = vmatprep.subr.mxu0 0.0
      %2801 = vmatpush2.msra.mxu0 0.0
      %2802 = vmatprep.mubr.f32.mxu0 0.0
      %2803 = vmatmul.mubr.f32.gmra.mxu0 %v855
      %v2804 = vpop.f32.mrf.mxu0
      %v2805 = vadd.f32 0.0, %v2804
      %v2806 = vpop.f32.mrf.mxu0
      %2807 = vmatprep.mubr.f32.mxu0 0.0
      %2808 = vmatmul.mubr.f32.gmra.mxu0 %v857
      %v2809 = vpop.f32.mrf.mxu0
      %v2810 = vadd.f32 0.0, %v2809
      %v2811 = vpop.f32.mrf.mxu0
      %2812 = vmatprep.mubr.f32.mxu0 0.0
      %2813 = vmatmul.mubr.f32.gmra.mxu0 %v859
      %v2814 = vpop.f32.mrf.mxu0
      %v2815 = vadd.f32 0.0, %v2814
      %v2816 = vpop.f32.mrf.mxu0
      %2817 = vmatprep.mubr.f32.mxu0 0.0
      %2818 = vmatmul.mubr.f32.gmra.mxu0 %v861
      %v2819 = vpop.f32.mrf.mxu0
      %v2820 = vadd.f32 0.0, %v2819
      %v2821 = vpop.f32.mrf.mxu0
      %2822 = vmatprep.mubr.f32.mxu0 0.0
      %2823 = vmatmul.mubr.f32.gmra.mxu0 %v863
      %v2824 = vpop.f32.mrf.mxu0
      %v2825 = vadd.f32 0.0, %v2824
      %v2826 = vpop.f32.mrf.mxu0
      %2827 = vmatprep.mubr.f32.mxu0 0.0
      %2828 = vmatmul.mubr.f32.gmra.mxu0 %v865
      %v2829 = vpop.f32.mrf.mxu0
      %v2830 = vadd.f32 0.0, %v2829
      %v2831 = vpop.f32.mrf.mxu0
      %2832 = vmatprep.mubr.f32.mxu0 0.0
      %2833 = vmatmul.mubr.f32.gmra.mxu0 %v867
      %v2834 = vpop.f32.mrf.mxu0
      %v2835 = vadd.f32 0.0, %v2834
      %v2836 = vpop.f32.mrf.mxu0
      %2837 = vmatprep.mubr.f32.mxu0 0.0
      %2838 = vmatmul.mubr.f32.gmra.mxu0 %v869
      %v2839 = vpop.f32.mrf.mxu0
      %v2840 = vadd.f32 0.0, %v2839
      %v2841 = vpop.f32.mrf.mxu0
      %2842 = vmatprep.mubr.f32.mxu0 0.0
      %2843 = vmatmul.mubr.f32.gmra.mxu0 %v871
      %v2844 = vpop.f32.mrf.mxu0
      %v2845 = vadd.f32 0.0, %v2844
      %v2846 = vpop.f32.mrf.mxu0
      %2847 = vmatprep.mubr.f32.mxu0 0.0
      %2848 = vmatmul.mubr.f32.gmra.mxu0 %v873
      %v2849 = vpop.f32.mrf.mxu0
      %v2850 = vadd.f32 0.0, %v2849
      %v2851 = vpop.f32.mrf.mxu0
      %2852 = vmatprep.mubr.f32.mxu0 0.0
      %2853 = vmatmul.mubr.f32.gmra.mxu0 %v875
      %v2854 = vpop.f32.mrf.mxu0
      %v2855 = vadd.f32 0.0, %v2854
      %v2856 = vpop.f32.mrf.mxu0
      %2857 = vmatprep.mubr.f32.mxu0 0.0
      %2858 = vmatmul.mubr.f32.gmra.mxu0 %v877
      %v2859 = vpop.f32.mrf.mxu0
      %v2860 = vadd.f32 0.0, %v2859
      %v2861 = vpop.f32.mrf.mxu0
      %2862 = vmatprep.mubr.f32.mxu0 0.0
      %2863 = vmatmul.mubr.f32.gmra.mxu0 %v879
      %v2864 = vpop.f32.mrf.mxu0
      %v2865 = vadd.f32 0.0, %v2864
      %v2866 = vpop.f32.mrf.mxu0
      %2867 = vmatprep.mubr.f32.mxu0 0.0
      %2868 = vmatmul.mubr.f32.gmra.mxu0 %v881
      %v2869 = vpop.f32.mrf.mxu0
      %v2870 = vadd.f32 0.0, %v2869
      %v2871 = vpop.f32.mrf.mxu0
      %2872 = vmatprep.mubr.f32.mxu0 0.0
      %2873 = vmatmul.mubr.f32.gmra.mxu0 %v883
      %v2874 = vpop.f32.mrf.mxu0
      %v2875 = vadd.f32 0.0, %v2874
      %v2876 = vpop.f32.mrf.mxu0
      %2877 = vmatprep.mubr.f32.mxu0 0.0
      %2878 = vmatmul.mubr.f32.gmra.mxu0 %v885
      %v2879 = vpop.f32.mrf.mxu0
      %v2880 = vadd.f32 0.0, %v2879
      %v2881 = vpop.f32.mrf.mxu0
      %2882 = vmatprep.mubr.f32.mxu0 0.0
      %2883 = vmatmul.mubr.f32.gmra.mxu0 %v887
      %v2884 = vpop.f32.mrf.mxu0
      %v2885 = vadd.f32 0.0, %v2884
      %v2886 = vpop.f32.mrf.mxu0
      %2887 = vmatprep.mubr.f32.mxu0 0.0
      %2888 = vmatmul.mubr.f32.gmra.mxu0 %v889
      %v2889 = vpop.f32.mrf.mxu0
      %v2890 = vadd.f32 0.0, %v2889
      %v2891 = vpop.f32.mrf.mxu0
      %2892 = vmatprep.mubr.f32.mxu0 0.0
      %2893 = vmatmul.mubr.f32.gmra.mxu0 %v891
      %v2894 = vpop.f32.mrf.mxu0
      %v2895 = vadd.f32 0.0, %v2894
      %v2896 = vpop.f32.mrf.mxu0
      %2897 = vmatprep.mubr.f32.mxu0 0.0
      %2898 = vmatmul.mubr.f32.gmra.mxu0 %v893
      %v2899 = vpop.f32.mrf.mxu0
      %v2900 = vadd.f32 0.0, %v2899
      %v2901 = vpop.f32.mrf.mxu0
      %2902 = vmatprep.mubr.f32.mxu0 0.0
      %2903 = vmatmul.mubr.f32.gmra.mxu0 %v1862
      %v2904 = vpop.f32.mrf.mxu0
      %v2905 = vadd.f32 0.0, %v2904
      %v2906 = vpop.f32.mrf.mxu0
      %2907 = vmatprep.mubr.f32.mxu0 0.0
      %2908 = vmatmul.mubr.f32.gmra.mxu0 %v1864
      %v2909 = vpop.f32.mrf.mxu0
      %v2910 = vadd.f32 0.0, %v2909
      %v2911 = vpop.f32.mrf.mxu0
      %2912 = vmatprep.mubr.f32.mxu0 0.0
      %2913 = vmatmul.mubr.f32.gmra.mxu0 %v1866
      %v2914 = vpop.f32.mrf.mxu0
      %v2915 = vadd.f32 0.0, %v2914
      %v2916 = vpop.f32.mrf.mxu0
      %2917 = vmatprep.mubr.f32.mxu0 0.0
      %2918 = vmatmul.mubr.f32.gmra.mxu0 %v1868
      %v2919 = vpop.f32.mrf.mxu0
      %v2920 = vadd.f32 0.0, %v2919
      %v2921 = vpop.f32.mrf.mxu0
      %2922 = vmatprep.mubr.f32.mxu0 0.0
      %2923 = vmatmul.mubr.f32.gmra.mxu0 %v1870
      %v2924 = vpop.f32.mrf.mxu0
      %v2925 = vadd.f32 0.0, %v2924
      %v2926 = vpop.f32.mrf.mxu0
      %2927 = vmatprep.mubr.f32.mxu0 0.0
      %2928 = vmatmul.mubr.f32.gmra.mxu0 %v1872
      %v2929 = vpop.f32.mrf.mxu0
      %v2930 = vadd.f32 0.0, %v2929
      %v2931 = vpop.f32.mrf.mxu0
      %2932 = vmatprep.mubr.f32.mxu0 0.0
      %2933 = vmatmul.mubr.f32.gmra.mxu0 %v2723
      %v2934 = vpop.f32.mrf.mxu0
      %v2935 = vadd.f32 0.0, %v2934
      %v2936 = vpop.f32.mrf.mxu0
      %2937 = vmatprep.mubr.f32.mxu0 0.0
      %2938 = vmatmul.mubr.f32.gmra.mxu0 %v2725
      %v2939 = vpop.f32.mrf.mxu0
      %v2940 = vadd.f32 0.0, %v2939
      %v2941 = vpop.f32.mrf.mxu0
      %2942 = vmatprep.mubr.f32.mxu0 0.0
      %2943 = vmatmul.mubr.f32.gmra.mxu0 %v2727
      %v2944 = vpop.f32.mrf.mxu0
      %v2945 = vadd.f32 0.0, %v2944
      %v2946 = vpop.f32.mrf.mxu0
      %2947 = vmatprep.mubr.f32.mxu0 0.0
      %2948 = vmatmul.mubr.f32.gmra.mxu0 %v2729
      %v2949 = vpop.f32.mrf.mxu0
      %v2950 = vadd.f32 0.0, %v2949
      %v2951 = vpop.f32.mrf.mxu0
      %2952 = vmatprep.mubr.f32.mxu0 0.0
      %2953 = vmatmul.mubr.f32.gmra.mxu0 %v2731
      %v2954 = vpop.f32.mrf.mxu0
      %v2955 = vadd.f32 0.0, %v2954
      %v2956 = vpop.f32.mrf.mxu0
      %2957 = vmatprep.mubr.f32.mxu0 0.0
      %2958 = vmatmul.mubr.f32.gmra.mxu0 %v2733
      %v2959 = vpop.f32.mrf.mxu0
      %v2960 = vadd.f32 0.0, %v2959
      %v2961 = vpop.f32.mrf.mxu0
      %2962 = vdwg.mxu0
      %v2963 = vadd.f32 %v2671, %v2805
      %v2964 = vadd.f32 %v2672, %v2810
      %v2965 = vadd.f32 %v2673, %v2815
      %v2966 = vadd.f32 %v2674, %v2820
      %v2967 = vadd.f32 %v2675, %v2825
      %v2968 = vadd.f32 %v2676, %v2830
      %v2969 = vadd.f32 %v2677, %v2835
      %v2970 = vadd.f32 %v2678, %v2840
      %v2971 = vadd.f32 %v2679, %v2845
      %v2972 = vadd.f32 %v2680, %v2850
      %v2973 = vadd.f32 %v2681, %v2855
      %v2974 = vadd.f32 %v2682, %v2860
      %v2975 = vadd.f32 %v2683, %v2865
      %v2976 = vadd.f32 %v2684, %v2870
      %v2977 = vadd.f32 %v2685, %v2875
      %v2978 = vadd.f32 %v2686, %v2880
      %v2979 = vadd.f32 %v2687, %v2885
      %v2980 = vadd.f32 %v2688, %v2890
      %v2981 = vadd.f32 %v2689, %v2895
      %v2982 = vadd.f32 %v2690, %v2900
      %v2983 = vadd.f32 %v2691, %v2905
      %v2984 = vadd.f32 %v2692, %v2910
      %v2985 = vadd.f32 %v2693, %v2915
      %v2986 = vadd.f32 %v2694, %v2920
      %v2987 = vadd.f32 %v2695, %v2925
      %v2988 = vadd.f32 %v2696, %v2930
      %v2989 = vadd.f32 %v2697, %v2935
      %v2990 = vadd.f32 %v2698, %v2940
      %v2991 = vadd.f32 %v2699, %v2945
      %v2992 = vadd.f32 %v2700, %v2950
      %v2993 = vadd.f32 %v2701, %v2955
      %v2994 = vadd.f32 %v2702, %v2960
      %v2995 = vrot.slane %v332, 6
      %v2996 = vrot.slane %v333, 6
      %v2997 = vsel %vm1155, %v2995, %v2996
      %v2998 = vrot.slane %v334, 6
      %v2999 = vsel %vm1155, %v2996, %v2998
      %v3000 = vrot.slane %v335, 6
      %v3001 = vrot.slane %v336, 6
      %v3002 = vsel %vm1155, %v3000, %v3001
      %v3003 = vrot.slane %v337, 6
      %v3004 = vsel %vm1155, %v3001, %v3003
      %v3005 = vrot.slane %v338, 6
      %v3006 = vrot.slane %v339, 6
      %v3007 = vsel %vm1155, %v3005, %v3006
      %v3008 = vrot.slane %v340, 6
      %v3009 = vsel %vm1155, %v3006, %v3008
      %s3010 = scalar_lea.vmem %s232, 32
      %v3011 = vld [vmem:[%s3010] sm:$0xf]
      %v3012 = vsel %vm374, %v2997, 0
      %v3014 = vsel %vm374, %v2999, 0
      %v3016 = vsel %vm374, %v3002, 0
      %v3018 = vsel %vm374, %v3004, 0
      %v3020 = vsel %vm374, %v3007, 0
      %v3022 = vsel %vm374, %v3009, 0
      %v3025 = vsel %vm471, %v3011, 0
      %3027 = vmatprep.subr.mxu0 0.0
      %3028 = vmatpush1.msra.mxu0 0.0
      %3029 = vmatprep.subr.mxu0 0.0
      %3030 = vmatpush1.msra.mxu0 0.0
      %3031 = vmatprep.subr.mxu0 0.0
      %3032 = vmatpush1.msra.mxu0 0.0
      %3033 = vmatprep.subr.mxu0 0.0
      %3034 = vmatpush1.msra.mxu0 0.0
      %3035 = vmatprep.subr.mxu0 0.0
      %3036 = vmatpush1.msra.mxu0 0.0
      %3037 = vmatprep.subr.mxu0 0.0
      %3038 = vmatpush1.msra.mxu0 0.0
      %3039 = vmatprep.subr.mxu0 0.0
      %3040 = vmatpush1.msra.mxu0 0.0
      %3041 = vmatprep.subr.mxu0 0.0
      %3042 = vmatpush1.msra.mxu0 0.0
      %3043 = vmatprep.subr.mxu0 0.0
      %3044 = vmatpush1.msra.mxu0 0.0
      %3045 = vmatprep.subr.mxu0 0.0
      %3046 = vmatpush1.msra.mxu0 0.0
      %3047 = vmatprep.subr.mxu0 0.0
      %3048 = vmatpush1.msra.mxu0 0.0
      %3049 = vmatprep.subr.mxu0 0.0
      %3050 = vmatpush1.msra.mxu0 0.0
      %3051 = vmatprep.subr.mxu0 0.0
      %3052 = vmatpush1.msra.mxu0 0.0
      %3053 = vmatprep.subr.mxu0 0.0
      %3054 = vmatpush1.msra.mxu0 0.0
      %3055 = vmatprep.subr.mxu0 0.0
      %3056 = vmatpush1.msra.mxu0 0.0
      %3057 = vmatprep.subr.mxu0 0.0
      %3058 = vmatpush1.msra.mxu0 %v3025
      %3059 = vmatprep.subr.mxu0 0.0
      %3060 = vmatpush2.msra.mxu0 0.0
      %3061 = vmatprep.subr.mxu0 0.0
      %3062 = vmatpush2.msra.mxu0 0.0
      %3063 = vmatprep.subr.mxu0 0.0
      %3064 = vmatpush2.msra.mxu0 0.0
      %3065 = vmatprep.subr.mxu0 0.0
      %3066 = vmatpush2.msra.mxu0 0.0
      %3067 = vmatprep.subr.mxu0 0.0
      %3068 = vmatpush2.msra.mxu0 0.0
      %3069 = vmatprep.subr.mxu0 0.0
      %3070 = vmatpush2.msra.mxu0 0.0
      %3071 = vmatprep.subr.mxu0 0.0
      %3072 = vmatpush2.msra.mxu0 0.0
      %3073 = vmatprep.subr.mxu0 0.0
      %3074 = vmatpush2.msra.mxu0 0.0
      %3075 = vmatprep.subr.mxu0 0.0
      %3076 = vmatpush2.msra.mxu0 0.0
      %3077 = vmatprep.subr.mxu0 0.0
      %3078 = vmatpush2.msra.mxu0 0.0
      %3079 = vmatprep.subr.mxu0 0.0
      %3080 = vmatpush2.msra.mxu0 0.0
      %3081 = vmatprep.subr.mxu0 0.0
      %3082 = vmatpush2.msra.mxu0 0.0
      %3083 = vmatprep.subr.mxu0 0.0
      %3084 = vmatpush2.msra.mxu0 0.0
      %3085 = vmatprep.subr.mxu0 0.0
      %3086 = vmatpush2.msra.mxu0 0.0
      %3087 = vmatprep.subr.mxu0 0.0
      %3088 = vmatpush2.msra.mxu0 0.0
      %3089 = vmatprep.subr.mxu0 0.0
      %3090 = vmatpush2.msra.mxu0 0.0
      %3091 = vmatprep.mubr.f32.mxu0 0.0
      %3092 = vmatmul.mubr.f32.gmra.mxu0 %v1262
      %v3093 = vpop.f32.mrf.mxu0
      %v3094 = vadd.f32 0.0, %v3093
      %v3095 = vpop.f32.mrf.mxu0
      %3096 = vmatprep.mubr.f32.mxu0 0.0
      %3097 = vmatmul.mubr.f32.gmra.mxu0 %v1264
      %v3098 = vpop.f32.mrf.mxu0
      %v3099 = vadd.f32 0.0, %v3098
      %v3100 = vpop.f32.mrf.mxu0
      %3101 = vmatprep.mubr.f32.mxu0 0.0
      %3102 = vmatmul.mubr.f32.gmra.mxu0 %v1266
      %v3103 = vpop.f32.mrf.mxu0
      %v3104 = vadd.f32 0.0, %v3103
      %v3105 = vpop.f32.mrf.mxu0
      %3106 = vmatprep.mubr.f32.mxu0 0.0
      %3107 = vmatmul.mubr.f32.gmra.mxu0 %v1268
      %v3108 = vpop.f32.mrf.mxu0
      %v3109 = vadd.f32 0.0, %v3108
      %v3110 = vpop.f32.mrf.mxu0
      %3111 = vmatprep.mubr.f32.mxu0 0.0
      %3112 = vmatmul.mubr.f32.gmra.mxu0 %v1270
      %v3113 = vpop.f32.mrf.mxu0
      %v3114 = vadd.f32 0.0, %v3113
      %v3115 = vpop.f32.mrf.mxu0
      %3116 = vmatprep.mubr.f32.mxu0 0.0
      %3117 = vmatmul.mubr.f32.gmra.mxu0 %v1272
      %v3118 = vpop.f32.mrf.mxu0
      %v3119 = vadd.f32 0.0, %v3118
      %v3120 = vpop.f32.mrf.mxu0
      %3121 = vmatprep.mubr.f32.mxu0 0.0
      %3122 = vmatmul.mubr.f32.gmra.mxu0 %v1274
      %v3123 = vpop.f32.mrf.mxu0
      %v3124 = vadd.f32 0.0, %v3123
      %v3125 = vpop.f32.mrf.mxu0
      %3126 = vmatprep.mubr.f32.mxu0 0.0
      %3127 = vmatmul.mubr.f32.gmra.mxu0 %v1276
      %v3128 = vpop.f32.mrf.mxu0
      %v3129 = vadd.f32 0.0, %v3128
      %v3130 = vpop.f32.mrf.mxu0
      %3131 = vmatprep.mubr.f32.mxu0 0.0
      %3132 = vmatmul.mubr.f32.gmra.mxu0 %v1278
      %v3133 = vpop.f32.mrf.mxu0
      %v3134 = vadd.f32 0.0, %v3133
      %v3135 = vpop.f32.mrf.mxu0
      %3136 = vmatprep.mubr.f32.mxu0 0.0
      %3137 = vmatmul.mubr.f32.gmra.mxu0 %v1280
      %v3138 = vpop.f32.mrf.mxu0
      %v3139 = vadd.f32 0.0, %v3138
      %v3140 = vpop.f32.mrf.mxu0
      %3141 = vmatprep.mubr.f32.mxu0 0.0
      %3142 = vmatmul.mubr.f32.gmra.mxu0 %v1282
      %v3143 = vpop.f32.mrf.mxu0
      %v3144 = vadd.f32 0.0, %v3143
      %v3145 = vpop.f32.mrf.mxu0
      %3146 = vmatprep.mubr.f32.mxu0 0.0
      %3147 = vmatmul.mubr.f32.gmra.mxu0 %v1284
      %v3148 = vpop.f32.mrf.mxu0
      %v3149 = vadd.f32 0.0, %v3148
      %v3150 = vpop.f32.mrf.mxu0
      %3151 = vmatprep.mubr.f32.mxu0 0.0
      %3152 = vmatmul.mubr.f32.gmra.mxu0 %v1286
      %v3153 = vpop.f32.mrf.mxu0
      %v3154 = vadd.f32 0.0, %v3153
      %v3155 = vpop.f32.mrf.mxu0
      %3156 = vmatprep.mubr.f32.mxu0 0.0
      %3157 = vmatmul.mubr.f32.gmra.mxu0 %v1288
      %v3158 = vpop.f32.mrf.mxu0
      %v3159 = vadd.f32 0.0, %v3158
      %v3160 = vpop.f32.mrf.mxu0
      %3161 = vmatprep.mubr.f32.mxu0 0.0
      %3162 = vmatmul.mubr.f32.gmra.mxu0 %v1290
      %v3163 = vpop.f32.mrf.mxu0
      %v3164 = vadd.f32 0.0, %v3163
      %v3165 = vpop.f32.mrf.mxu0
      %3166 = vmatprep.mubr.f32.mxu0 0.0
      %3167 = vmatmul.mubr.f32.gmra.mxu0 %v1292
      %v3168 = vpop.f32.mrf.mxu0
      %v3169 = vadd.f32 0.0, %v3168
      %v3170 = vpop.f32.mrf.mxu0
      %3171 = vmatprep.mubr.f32.mxu0 0.0
      %3172 = vmatmul.mubr.f32.gmra.mxu0 %v1294
      %v3173 = vpop.f32.mrf.mxu0
      %v3174 = vadd.f32 0.0, %v3173
      %v3175 = vpop.f32.mrf.mxu0
      %3176 = vmatprep.mubr.f32.mxu0 0.0
      %3177 = vmatmul.mubr.f32.gmra.mxu0 %v1296
      %v3178 = vpop.f32.mrf.mxu0
      %v3179 = vadd.f32 0.0, %v3178
      %v3180 = vpop.f32.mrf.mxu0
      %3181 = vmatprep.mubr.f32.mxu0 0.0
      %3182 = vmatmul.mubr.f32.gmra.mxu0 %v1298
      %v3183 = vpop.f32.mrf.mxu0
      %v3184 = vadd.f32 0.0, %v3183
      %v3185 = vpop.f32.mrf.mxu0
      %3186 = vmatprep.mubr.f32.mxu0 0.0
      %3187 = vmatmul.mubr.f32.gmra.mxu0 %v1300
      %v3188 = vpop.f32.mrf.mxu0
      %v3189 = vadd.f32 0.0, %v3188
      %v3190 = vpop.f32.mrf.mxu0
      %3191 = vmatprep.mubr.f32.mxu0 0.0
      %3192 = vmatmul.mubr.f32.gmra.mxu0 %v2151
      %v3193 = vpop.f32.mrf.mxu0
      %v3194 = vadd.f32 0.0, %v3193
      %v3195 = vpop.f32.mrf.mxu0
      %3196 = vmatprep.mubr.f32.mxu0 0.0
      %3197 = vmatmul.mubr.f32.gmra.mxu0 %v2153
      %v3198 = vpop.f32.mrf.mxu0
      %v3199 = vadd.f32 0.0, %v3198
      %v3200 = vpop.f32.mrf.mxu0
      %3201 = vmatprep.mubr.f32.mxu0 0.0
      %3202 = vmatmul.mubr.f32.gmra.mxu0 %v2155
      %v3203 = vpop.f32.mrf.mxu0
      %v3204 = vadd.f32 0.0, %v3203
      %v3205 = vpop.f32.mrf.mxu0
      %3206 = vmatprep.mubr.f32.mxu0 0.0
      %3207 = vmatmul.mubr.f32.gmra.mxu0 %v2157
      %v3208 = vpop.f32.mrf.mxu0
      %v3209 = vadd.f32 0.0, %v3208
      %v3210 = vpop.f32.mrf.mxu0
      %3211 = vmatprep.mubr.f32.mxu0 0.0
      %3212 = vmatmul.mubr.f32.gmra.mxu0 %v2159
      %v3213 = vpop.f32.mrf.mxu0
      %v3214 = vadd.f32 0.0, %v3213
      %v3215 = vpop.f32.mrf.mxu0
      %3216 = vmatprep.mubr.f32.mxu0 0.0
      %3217 = vmatmul.mubr.f32.gmra.mxu0 %v2161
      %v3218 = vpop.f32.mrf.mxu0
      %v3219 = vadd.f32 0.0, %v3218
      %v3220 = vpop.f32.mrf.mxu0
      %3221 = vmatprep.mubr.f32.mxu0 0.0
      %3222 = vmatmul.mubr.f32.gmra.mxu0 %v3012
      %v3223 = vpop.f32.mrf.mxu0
      %v3224 = vadd.f32 0.0, %v3223
      %v3225 = vpop.f32.mrf.mxu0
      %3226 = vmatprep.mubr.f32.mxu0 0.0
      %3227 = vmatmul.mubr.f32.gmra.mxu0 %v3014
      %v3228 = vpop.f32.mrf.mxu0
      %v3229 = vadd.f32 0.0, %v3228
      %v3230 = vpop.f32.mrf.mxu0
      %3231 = vmatprep.mubr.f32.mxu0 0.0
      %3232 = vmatmul.mubr.f32.gmra.mxu0 %v3016
      %v3233 = vpop.f32.mrf.mxu0
      %v3234 = vadd.f32 0.0, %v3233
      %v3235 = vpop.f32.mrf.mxu0
      %3236 = vmatprep.mubr.f32.mxu0 0.0
      %3237 = vmatmul.mubr.f32.gmra.mxu0 %v3018
      %v3238 = vpop.f32.mrf.mxu0
      %v3239 = vadd.f32 0.0, %v3238
      %v3240 = vpop.f32.mrf.mxu0
      %3241 = vmatprep.mubr.f32.mxu0 0.0
      %3242 = vmatmul.mubr.f32.gmra.mxu0 %v3020
      %v3243 = vpop.f32.mrf.mxu0
      %v3244 = vadd.f32 0.0, %v3243
      %v3245 = vpop.f32.mrf.mxu0
      %3246 = vmatprep.mubr.f32.mxu0 0.0
      %3247 = vmatmul.mubr.f32.gmra.mxu0 %v3022
      %v3248 = vpop.f32.mrf.mxu0
      %v3249 = vadd.f32 0.0, %v3248
      %v3250 = vpop.f32.mrf.mxu0
      %3251 = vdwg.mxu0
      %v3252 = vadd.f32 %v2963, %v3094
      %v3253 = vadd.f32 %v2964, %v3099
      %v3254 = vadd.f32 %v2965, %v3104
      %v3255 = vadd.f32 %v2966, %v3109
      %v3256 = vadd.f32 %v2967, %v3114
      %v3257 = vadd.f32 %v2968, %v3119
      %v3258 = vadd.f32 %v2969, %v3124
      %v3259 = vadd.f32 %v2970, %v3129
      %v3260 = vadd.f32 %v2971, %v3134
      %v3261 = vadd.f32 %v2972, %v3139
      %v3262 = vadd.f32 %v2973, %v3144
      %v3263 = vadd.f32 %v2974, %v3149
      %v3264 = vadd.f32 %v2975, %v3154
      %v3265 = vadd.f32 %v2976, %v3159
      %v3266 = vadd.f32 %v2977, %v3164
      %v3267 = vadd.f32 %v2978, %v3169
      %v3268 = vadd.f32 %v2979, %v3174
      %v3269 = vadd.f32 %v2980, %v3179
      %v3270 = vadd.f32 %v2981, %v3184
      %v3271 = vadd.f32 %v2982, %v3189
      %v3272 = vadd.f32 %v2983, %v3194
      %v3273 = vadd.f32 %v2984, %v3199
      %v3274 = vadd.f32 %v2985, %v3204
      %v3275 = vadd.f32 %v2986, %v3209
      %v3276 = vadd.f32 %v2987, %v3214
      %v3277 = vadd.f32 %v2988, %v3219
      %v3278 = vadd.f32 %v2989, %v3224
      %v3279 = vadd.f32 %v2990, %v3229
      %v3280 = vadd.f32 %v2991, %v3234
      %v3281 = vadd.f32 %v2992, %v3239
      %v3282 = vadd.f32 %v2993, %v3244
      %v3283 = vadd.f32 %v2994, %v3249
      %vm3284 = vcmask 64512
      %3285 = vst.msk [vmem:[#allocation2] sm:$0xff] %vm3284, %v3252
      %3286 = vst.msk [vmem:[#allocation2 + $0x8] sm:$0xff] %vm3284, %v3253
      %3287 = vst.msk [vmem:[#allocation2 + $0x10] sm:$0xff] %vm3284, %v3254
      %3288 = vst.msk [vmem:[#allocation2 + $0x18] sm:$0xff] %vm3284, %v3255
      %3289 = vst.msk [vmem:[#allocation2 + $0x20] sm:$0xff] %vm3284, %v3256
      %3290 = vst.msk [vmem:[#allocation2 + $0x28] sm:$0xff] %vm3284, %v3257
      %3291 = vst.msk [vmem:[#allocation2 + $0x30] sm:$0xff] %vm3284, %v3258
      %3292 = vst.msk [vmem:[#allocation2 + $0x38] sm:$0xff] %vm3284, %v3259
      %3293 = vst.msk [vmem:[#allocation2 + $0x40] sm:$0xff] %vm3284, %v3260
      %3294 = vst.msk [vmem:[#allocation2 + $0x48] sm:$0xff] %vm3284, %v3261
      %3295 = vst.msk [vmem:[#allocation2 + $0x50] sm:$0xff] %vm3284, %v3262
      %3296 = vst.msk [vmem:[#allocation2 + $0x58] sm:$0xff] %vm3284, %v3263
      %3297 = vst.msk [vmem:[#allocation2 + $0x60] sm:$0xff] %vm3284, %v3264
      %3298 = vst.msk [vmem:[#allocation2 + $0x68] sm:$0xff] %vm3284, %v3265
      %3299 = vst.msk [vmem:[#allocation2 + $0x70] sm:$0xff] %vm3284, %v3266
      %3300 = vst.msk [vmem:[#allocation2 + $0x78] sm:$0xff] %vm3284, %v3267
      %3301 = vst.msk [vmem:[#allocation2 + $0x80] sm:$0xff] %vm3284, %v3268
      %3302 = vst.msk [vmem:[#allocation2 + $0x88] sm:$0xff] %vm3284, %v3269
      %3303 = vst.msk [vmem:[#allocation2 + $0x90] sm:$0xff] %vm3284, %v3270
      %3304 = vst.msk [vmem:[#allocation2 + $0x98] sm:$0xff] %vm3284, %v3271
      %3305 = vst.msk [vmem:[#allocation2 + $0xa0] sm:$0xff] %vm3284, %v3272
      %3306 = vst.msk [vmem:[#allocation2 + $0xa8] sm:$0xff] %vm3284, %v3273
      %3307 = vst.msk [vmem:[#allocation2 + $0xb0] sm:$0xff] %vm3284, %v3274
      %3308 = vst.msk [vmem:[#allocation2 + $0xb8] sm:$0xff] %vm3284, %v3275
      %3309 = vst.msk [vmem:[#allocation2 + $0xc0] sm:$0xff] %vm3284, %v3276
      %3310 = vst.msk [vmem:[#allocation2 + $0xc8] sm:$0xff] %vm3284, %v3277
      %3311 = vst.msk [vmem:[#allocation2 + $0xd0] sm:$0xff] %vm3284, %v3278
      %3312 = vst.msk [vmem:[#allocation2 + $0xd8] sm:$0xff] %vm3284, %v3279
      %3313 = vst.msk [vmem:[#allocation2 + $0xe0] sm:$0xff] %vm3284, %v3280
      %3314 = vst.msk [vmem:[#allocation2 + $0xe8] sm:$0xff] %vm3284, %v3281
      %3315 = vst.msk [vmem:[#allocation2 + $0xf0] sm:$0xff] %vm3284, %v3282
      %3316 = vst.msk [vmem:[#allocation2 + $0xf8] sm:$0xff] %vm3284, %v3283
      // Predicated region
      $region41: #{_lambda_.6} parent=35 // pred_check
        %p3317 = pneg %p238
      $region42: #{_lambda_.6} parent=35 // pred_check_branch
        %3319 = sbr.rel (%p3317) target = $region44
      $region43: #{_lambda_.6} parent=35 // pred_region
        %v3320 = vld [vmem:[#allocation2] sm:$0xff]
        %v3321 = vld [vmem:[#allocation2 + $0x8] sm:$0xff]
        %v3322 = vld [vmem:[#allocation2 + $0x10] sm:$0xff]
        %v3323 = vld [vmem:[#allocation2 + $0x18] sm:$0xff]
        %v3324 = vld [vmem:[#allocation2 + $0x20] sm:$0xff]
        %v3325 = vld [vmem:[#allocation2 + $0x28] sm:$0xff]
        %v3326 = vld [vmem:[#allocation2 + $0x30] sm:$0xff]
        %v3327 = vld [vmem:[#allocation2 + $0x38] sm:$0xff]
        %v3328 = vld [vmem:[#allocation2 + $0x40] sm:$0xff]
        %v3329 = vld [vmem:[#allocation2 + $0x48] sm:$0xff]
        %v3330 = vld [vmem:[#allocation2 + $0x50] sm:$0xff]
        %v3331 = vld [vmem:[#allocation2 + $0x58] sm:$0xff]
        %v3332 = vld [vmem:[#allocation2 + $0x60] sm:$0xff]
        %v3333 = vld [vmem:[#allocation2 + $0x68] sm:$0xff]
        %v3334 = vld [vmem:[#allocation2 + $0x70] sm:$0xff]
        %v3335 = vld [vmem:[#allocation2 + $0x78] sm:$0xff]
        %v3336 = vld [vmem:[#allocation2 + $0x80] sm:$0xff]
        %v3337 = vld [vmem:[#allocation2 + $0x88] sm:$0xff]
        %v3338 = vld [vmem:[#allocation2 + $0x90] sm:$0xff]
        %v3339 = vld [vmem:[#allocation2 + $0x98] sm:$0xff]
        %v3340 = vld [vmem:[#allocation2 + $0xa0] sm:$0xff]
        %v3341 = vld [vmem:[#allocation2 + $0xa8] sm:$0xff]
        %v3342 = vld [vmem:[#allocation2 + $0xb0] sm:$0xff]
        %v3343 = vld [vmem:[#allocation2 + $0xb8] sm:$0xff]
        %v3344 = vld [vmem:[#allocation2 + $0xc0] sm:$0xff]
        %v3345 = vld [vmem:[#allocation2 + $0xc8] sm:$0xff]
        %v3346 = vld [vmem:[#allocation2 + $0xd0] sm:$0xff]
        %v3347 = vld [vmem:[#allocation2 + $0xd8] sm:$0xff]
        %v3348 = vld [vmem:[#allocation2 + $0xe0] sm:$0xff]
        %v3349 = vld [vmem:[#allocation2 + $0xe8] sm:$0xff]
        %v3350 = vld [vmem:[#allocation2 + $0xf0] sm:$0xff]
        %v3351 = vld [vmem:[#allocation2 + $0xf8] sm:$0xff]
        %v3352 = vld [vmem:[%s2] sm:$0x1]
        %v3354 = vlaneseq
        %v3355 = vshrl.u32 %v3354, 7
        %v3356 = vsub.s32 0, %v3355
        %v3357 = vrot.slane %v3352, %v3356
        %v3359 = vmul.f32 %v3320, %v3357
        %v3360 = vmul.f32 %v3321, %v3357
        %v3361 = vmul.f32 %v3322, %v3357
        %v3362 = vmul.f32 %v3323, %v3357
        %v3363 = vmul.f32 %v3324, %v3357
        %v3364 = vmul.f32 %v3325, %v3357
        %v3365 = vmul.f32 %v3326, %v3357
        %v3366 = vmul.f32 %v3327, %v3357
        %v3367 = vmul.f32 %v3328, %v3357
        %v3368 = vmul.f32 %v3329, %v3357
        %v3369 = vmul.f32 %v3330, %v3357
        %v3370 = vmul.f32 %v3331, %v3357
        %v3371 = vmul.f32 %v3332, %v3357
        %v3372 = vmul.f32 %v3333, %v3357
        %v3373 = vmul.f32 %v3334, %v3357
        %v3374 = vmul.f32 %v3335, %v3357
        %v3375 = vmul.f32 %v3336, %v3357
        %v3376 = vmul.f32 %v3337, %v3357
        %v3377 = vmul.f32 %v3338, %v3357
        %v3378 = vmul.f32 %v3339, %v3357
        %v3379 = vmul.f32 %v3340, %v3357
        %v3380 = vmul.f32 %v3341, %v3357
        %v3381 = vmul.f32 %v3342, %v3357
        %v3382 = vmul.f32 %v3343, %v3357
        %v3383 = vmul.f32 %v3344, %v3357
        %v3384 = vmul.f32 %v3345, %v3357
        %v3385 = vmul.f32 %v3346, %v3357
        %v3386 = vmul.f32 %v3347, %v3357
        %v3387 = vmul.f32 %v3348, %v3357
        %v3388 = vmul.f32 %v3349, %v3357
        %v3389 = vmul.f32 %v3350, %v3357
        %v3390 = vmul.f32 %v3351, %v3357
        %v3391 = vld [vmem:[%s3] sm:$0x1]
        %v3393 = vlaneseq
        %v3394 = vshrl.u32 %v3393, 7
        %v3395 = vsub.s32 0, %v3394
        %v3396 = vrot.slane %v3391, %v3395
        %v3398 = vadd.f32 %v3359, %v3396
        %v3399 = vadd.f32 %v3360, %v3396
        %v3400 = vadd.f32 %v3361, %v3396
        %v3401 = vadd.f32 %v3362, %v3396
        %v3402 = vadd.f32 %v3363, %v3396
        %v3403 = vadd.f32 %v3364, %v3396
        %v3404 = vadd.f32 %v3365, %v3396
        %v3405 = vadd.f32 %v3366, %v3396
        %v3406 = vadd.f32 %v3367, %v3396
        %v3407 = vadd.f32 %v3368, %v3396
        %v3408 = vadd.f32 %v3369, %v3396
        %v3409 = vadd.f32 %v3370, %v3396
        %v3410 = vadd.f32 %v3371, %v3396
        %v3411 = vadd.f32 %v3372, %v3396
        %v3412 = vadd.f32 %v3373, %v3396
        %v3413 = vadd.f32 %v3374, %v3396
        %v3414 = vadd.f32 %v3375, %v3396
        %v3415 = vadd.f32 %v3376, %v3396
        %v3416 = vadd.f32 %v3377, %v3396
        %v3417 = vadd.f32 %v3378, %v3396
        %v3418 = vadd.f32 %v3379, %v3396
        %v3419 = vadd.f32 %v3380, %v3396
        %v3420 = vadd.f32 %v3381, %v3396
        %v3421 = vadd.f32 %v3382, %v3396
        %v3422 = vadd.f32 %v3383, %v3396
        %v3423 = vadd.f32 %v3384, %v3396
        %v3424 = vadd.f32 %v3385, %v3396
        %v3425 = vadd.f32 %v3386, %v3396
        %v3426 = vadd.f32 %v3387, %v3396
        %v3427 = vadd.f32 %v3388, %v3396
        %v3428 = vadd.f32 %v3389, %v3396
        %v3429 = vadd.f32 %v3390, %v3396
        %v3430 = vmax.f32 %v3398, 0.0
        %v3431 = vmax.f32 %v3399, 0.0
        %v3432 = vmax.f32 %v3400, 0.0
        %v3433 = vmax.f32 %v3401, 0.0
        %v3434 = vmax.f32 %v3402, 0.0
        %v3435 = vmax.f32 %v3403, 0.0
        %v3436 = vmax.f32 %v3404, 0.0
        %v3437 = vmax.f32 %v3405, 0.0
        %v3438 = vmax.f32 %v3406, 0.0
        %v3439 = vmax.f32 %v3407, 0.0
        %v3440 = vmax.f32 %v3408, 0.0
        %v3441 = vmax.f32 %v3409, 0.0
        %v3442 = vmax.f32 %v3410, 0.0
        %v3443 = vmax.f32 %v3411, 0.0
        %v3444 = vmax.f32 %v3412, 0.0
        %v3445 = vmax.f32 %v3413, 0.0
        %v3446 = vmax.f32 %v3414, 0.0
        %v3447 = vmax.f32 %v3415, 0.0
        %v3448 = vmax.f32 %v3416, 0.0
        %v3449 = vmax.f32 %v3417, 0.0
        %v3450 = vmax.f32 %v3418, 0.0
        %v3451 = vmax.f32 %v3419, 0.0
        %v3452 = vmax.f32 %v3420, 0.0
        %v3453 = vmax.f32 %v3421, 0.0
        %v3454 = vmax.f32 %v3422, 0.0
        %v3455 = vmax.f32 %v3423, 0.0
        %v3456 = vmax.f32 %v3424, 0.0
        %v3457 = vmax.f32 %v3425, 0.0
        %v3458 = vmax.f32 %v3426, 0.0
        %v3459 = vmax.f32 %v3427, 0.0
        %v3460 = vmax.f32 %v3428, 0.0
        %v3461 = vmax.f32 %v3429, 0.0
        %3462 = vst.msk [vmem:[%s237] sm:$0xff] %vm3284, %v3430
        %3463 = vst.msk [vmem:[%s237 + $0x8] sm:$0xff] %vm3284, %v3431
        %3464 = vst.msk [vmem:[%s237 + $0x10] sm:$0xff] %vm3284, %v3432
        %3465 = vst.msk [vmem:[%s237 + $0x18] sm:$0xff] %vm3284, %v3433
        %3466 = vst.msk [vmem:[%s237 + $0x20] sm:$0xff] %vm3284, %v3434
        %3467 = vst.msk [vmem:[%s237 + $0x28] sm:$0xff] %vm3284, %v3435
        %3468 = vst.msk [vmem:[%s237 + $0x30] sm:$0xff] %vm3284, %v3436
        %3469 = vst.msk [vmem:[%s237 + $0x38] sm:$0xff] %vm3284, %v3437
        %3470 = vst.msk [vmem:[%s237 + $0x40] sm:$0xff] %vm3284, %v3438
        %3471 = vst.msk [vmem:[%s237 + $0x48] sm:$0xff] %vm3284, %v3439
        %3472 = vst.msk [vmem:[%s237 + $0x50] sm:$0xff] %vm3284, %v3440
        %3473 = vst.msk [vmem:[%s237 + $0x58] sm:$0xff] %vm3284, %v3441
        %3474 = vst.msk [vmem:[%s237 + $0x60] sm:$0xff] %vm3284, %v3442
        %3475 = vst.msk [vmem:[%s237 + $0x68] sm:$0xff] %vm3284, %v3443
        %3476 = vst.msk [vmem:[%s237 + $0x70] sm:$0xff] %vm3284, %v3444
        %3477 = vst.msk [vmem:[%s237 + $0x78] sm:$0xff] %vm3284, %v3445
        %3478 = vst.msk [vmem:[%s237 + $0x80] sm:$0xff] %vm3284, %v3446
        %3479 = vst.msk [vmem:[%s237 + $0x88] sm:$0xff] %vm3284, %v3447
        %3480 = vst.msk [vmem:[%s237 + $0x90] sm:$0xff] %vm3284, %v3448
        %3481 = vst.msk [vmem:[%s237 + $0x98] sm:$0xff] %vm3284, %v3449
        %3482 = vst.msk [vmem:[%s237 + $0xa0] sm:$0xff] %vm3284, %v3450
        %3483 = vst.msk [vmem:[%s237 + $0xa8] sm:$0xff] %vm3284, %v3451
        %3484 = vst.msk [vmem:[%s237 + $0xb0] sm:$0xff] %vm3284, %v3452
        %3485 = vst.msk [vmem:[%s237 + $0xb8] sm:$0xff] %vm3284, %v3453
        %3486 = vst.msk [vmem:[%s237 + $0xc0] sm:$0xff] %vm3284, %v3454
        %3487 = vst.msk [vmem:[%s237 + $0xc8] sm:$0xff] %vm3284, %v3455
        %3488 = vst.msk [vmem:[%s237 + $0xd0] sm:$0xff] %vm3284, %v3456
        %3489 = vst.msk [vmem:[%s237 + $0xd8] sm:$0xff] %vm3284, %v3457
        %3490 = vst.msk [vmem:[%s237 + $0xe0] sm:$0xff] %vm3284, %v3458
        %3491 = vst.msk [vmem:[%s237 + $0xe8] sm:$0xff] %vm3284, %v3459
        %3492 = vst.msk [vmem:[%s237 + $0xf0] sm:$0xff] %vm3284, %v3460
        %3493 = vst.msk [vmem:[%s237 + $0xf8] sm:$0xff] %vm3284, %v3461
      $region44: #{_lambda_.6} parent=35 // pred_fallthru
        _
      %p3494 = scmp.lt.s32.totalorder %s19, 1
      %s3495 = scalar_select %p3494, %s19, 1
      %s3496 = smul.addr %s3495, 32
      %s3497 = smul.addr %s3496, 8
      %s3498 = scalar_lea.vmem %s4, %s3497
      // Predicated region
      $region45: #{_lambda_.6} parent=35 // pred_check
        %p3499 = pneg %p141
      $region46: #{_lambda_.6} parent=35 // pred_check_branch
        %3501 = sbr.rel (%p3499) target = $region48
      $region47: #{_lambda_.6} parent=35 // pred_region
        _
      $region48: #{_lambda_.6} parent=35 // pred_fallthru
        _
    $region36: #{_lambda_.6} parent=5 // pred_fallthru
      _
    %p3502 = scmp.le.s32.totalorder 2, %s10
    // Predicated region
    $region49: #{_lambda_.6} parent=5 // pred_check
      %p3503 = pneg %p3502
    $region50: #{_lambda_.6} parent=5 // pred_check_branch
      %3505 = sbr.rel (%p3503) target = $region52
    $region51: #{_lambda_.6} parent=5 // pred_region
      %s3506 = ssub.s32 %s10, 2
      // Predicated region
      $region53: #{_lambda_.6} parent=51 // pred_check
        %p3507 = pneg %p147
      $region54: #{_lambda_.6} parent=51 // pred_check_branch
        %3509 = sbr.rel (%p3507) target = $region56
      $region55: #{_lambda_.6} parent=51 // pred_region
        %p3510 = scmp.lt.s32.totalorder %s21, 1
        %s3511 = scalar_select %p3510, %s21, 1
        %s3512 = smul.addr %s3511, 32
        %s3513 = smul.addr %s3512, 8
        %s3514 = scalar_lea.vmem %s4, %s3513
      $region56: #{_lambda_.6} parent=51 // pred_fallthru
        _
    $region52: #{_lambda_.6} parent=5 // pred_fallthru
      _
  $region6: #{_lambda_.6} parent=0 // loop_footer
    %s14 = sadd.s32 1, %s10
  $region7: #{_lambda_.6} parent=0 // loop_footer_branch
    %9 = sbr.rel target = $region3
  $region8: #{_lambda_.6} parent=0 // loop_exit
    _

</llo_original>
